<compile_context>
chip_gen: v7x
topology: tpu7x:2x2x1
jax: 0.10.0
libtpu: 0.0.40
codegen_flags: <defaults>
</compile_context>

<pallas_src>
import jax
import jax.numpy as jnp
from jax import lax
from jax.experimental import pallas as pl
from jax.experimental.pallas import tpu as pltpu


# ------------------------------ fused kernel -------------------------------

def _feature_cnn_kernel(x1_ref, w1_ref, b1_ref, w2_ref, b2_ref, w3_ref, b3_ref,
                        o_ref, h1buf, p1pad, colbuf, h2buf, p2buf):
    """One batch tile of the full FeatureCNN forward, VMEM-resident.

      x1_ref : (9, nb*256)  f32   conv1 patches, K on sublanes, col = n*256 + h*16 + w
      w1_ref : (9, 32)      f32   conv1 weight  (ky*3+kx, cout)
      b1_ref : (1, 32)      f32
      w2_ref : (288, 64)    f32   conv2 weight  ((ky*3+kx)*32 + cin, cout)
      b2_ref : (1, 64)      f32
      w3_ref : (1024, 128)  f32   linear weight ((h*4+w)*64 + cin, cout)
      b3_ref : (1, 128)     f32
      o_ref  : (nb, 128)    f32
    """
    nb = o_ref.shape[0]

    # ---- conv1 (3x3, Cin=1, pad=1) + bias + ReLU --------------------------------
    # Contract the sublane K=9 axis directly so the result comes out (nb*256, 32);
    # no transpose of the conv1 output is needed.
    h1 = lax.dot_general(x1_ref[...], w1_ref[...],
                         dimension_numbers=(((0,), (0,)), ((), ())),
                         preferred_element_type=jnp.float32)          # (nb*256, 32)
    h1buf[...] = jnp.maximum(h1 + b1_ref[...], 0.0).reshape(nb, 16, 16, 32)

    # ---- maxpool 2x2 -> (nb, 8, 8, 32): four stride-2 views, three maxes --------
    p1 = jnp.maximum(
        jnp.maximum(h1buf[:, pl.ds(0, 8, 2), pl.ds(0, 8, 2), :],
                    h1buf[:, pl.ds(0, 8, 2), pl.ds(1, 8, 2), :]),
        jnp.maximum(h1buf[:, pl.ds(1, 8, 2), pl.ds(0, 8, 2), :],
                    h1buf[:, pl.ds(1, 8, 2), pl.ds(1, 8, 2), :]))     # (nb, 8, 8, 32)

    # ---- conv2 (3x3, 32->64, pad=1): in-kernel im2col, then ONE K=288 matmul ----
    # Only the border strips are re-zeroed each step (interior fully overwritten).
    # NOTE: zeroing once under pl.when(program_id==0) would be wrong with
    # ("parallel",) semantics -- each TensorCore has its own scratch buffers.
    p1pad[:, 0:1, :, :] = jnp.zeros((nb, 1, 10, 32), jnp.float32)
    p1pad[:, 9:10, :, :] = jnp.zeros((nb, 1, 10, 32), jnp.float32)
    p1pad[:, 1:9, 0:1, :] = jnp.zeros((nb, 8, 1, 32), jnp.float32)
    p1pad[:, 1:9, 9:10, :] = jnp.zeros((nb, 8, 1, 32), jnp.float32)
    p1pad[:, 1:9, 1:9, :] = p1

    for idx in range(9):                       # 9 plain stores, then one big dot
        ky, kx = idx // 3, idx % 3
        colbuf[:, idx * 32:(idx + 1) * 32] = (
            p1pad[:, ky:ky + 8, kx:kx + 8, :].reshape(nb * 64, 32))
    h2 = jnp.dot(colbuf[...], w2_ref[...],
                 preferred_element_type=jnp.float32)                  # (nb*64, 64)
    h2buf[...] = jnp.maximum(h2 + b2_ref[...], 0.0).reshape(nb, 8, 8, 64)

    # ---- maxpool 2x2 -> (nb, 4, 4, 64), packed lane-dense into (nb, 1024) -------
    p2 = jnp.maximum(
        jnp.maximum(h2buf[:, pl.ds(0, 4, 2), pl.ds(0, 4, 2), :],
                    h2buf[:, pl.ds(0, 4, 2), pl.ds(1, 4, 2), :]),
        jnp.maximum(h2buf[:, pl.ds(1, 4, 2), pl.ds(0, 4, 2), :],
                    h2buf[:, pl.ds(1, 4, 2), pl.ds(1, 4, 2), :]))     # (nb, 4, 4, 64)
    for s in range(16):                        # columns ordered (h*4+w)*64 + cin
        p2buf[:, s * 64:(s + 1) * 64] = p2[:, s // 4, s % 4, :]

    # ---- Linear(1024 -> 128): ONE lane-dense matmul -----------------------------
    o_ref[...] = jnp.dot(p2buf[...], w3_ref[...],
                         preferred_element_type=jnp.float32) + b3_ref[...]


# ------------------------------- host glue ---------------------------------

def _pick_tile(n, max_tile=128):
    """Batch tile: largest multiple-of-8 divisor of n (<= max_tile), preferring an
    even number of tiles so ("parallel",) can split work across two TensorCores."""
    if n % 8 != 0:
        return n                      # small/ragged batches: one full-batch tile
    divs = [d for d in range(8, min(n, max_tile) + 1, 8) if n % d == 0]
    even = [d for d in divs if (n // d) % 2 == 0]
    return (even or divs)[-1]


def prepare_params(p):
    """One-time conversion of PyTorch-layout weights into kernel layouts (f32)."""
    w1 = p["w1"].reshape(32, 9).T.astype(jnp.float32)                 # (ky*3+kx, cout)
    b1 = p["b1"].reshape(1, 32).astype(jnp.float32)
    # (cout, cin, 3, 3) -> (ky, kx, cin, cout) -> (288, 64); rows = (ky*3+kx)*32 + cin.
    w2 = jnp.transpose(p["w2"], (2, 3, 1, 0)).reshape(288, 64).astype(jnp.float32)
    b2 = p["b2"].reshape(1, 64).astype(jnp.float32)
    # PyTorch flatten order is (C,H,W); permute once so the NHWC kernel needs no
    # flatten transpose: rows ordered (h*4+w)*64 + cin.
    w3 = (p["w3"].reshape(128, 64, 4, 4).transpose(2, 3, 1, 0)
          .reshape(1024, 128).astype(jnp.float32))
    b3 = p["b3"].reshape(1, 128).astype(jnp.float32)
    return {"w1": w1, "b1": b1, "w2": w2, "b2": b2, "w3": w3, "b3": b3}


@jax.jit
def feature_cnn_forward(x_nchw, kp):
    n, cin, h, w = x_nchw.shape
    assert (cin, h, w) == (1, 16, 16), "FeatureCNN expects (N, 1, 16, 16) input"
    nb = _pick_tile(n)

    # conv1 patch matrix with K=9 on the SUBLANE axis: (9, N*256), col = n*256 + h*16 + w.
    xp = jnp.pad(x_nchw[:, 0].astype(jnp.float32), ((0, 0), (1, 1), (1, 1)))  # (N,18,18)
    x1 = jnp.stack([xp[:, ky:ky + 16, kx:kx + 16].reshape(n * 256)
                    for ky in range(3) for kx in range(3)], axis=0)           # (9, N*256)

    return pl.pallas_call(
        _feature_cnn_kernel,
        out_shape=jax.ShapeDtypeStruct((n, 128), jnp.float32),
        grid=(n // nb,),
        in_specs=[
            pl.BlockSpec((9, nb * 256), lambda i: (0, i)),     # conv1 patches (per tile)
            pl.BlockSpec((9, 32), lambda i: (0, 0)),           # w1
            pl.BlockSpec((1, 32), lambda i: (0, 0)),           # b1
            pl.BlockSpec((288, 64), lambda i: (0, 0)),         # w2 (im2col layout)
            pl.BlockSpec((1, 64), lambda i: (0, 0)),           # b2
            pl.BlockSpec((1024, 128), lambda i: (0, 0)),       # w3 (flatten-free layout)
            pl.BlockSpec((1, 128), lambda i: (0, 0)),          # b3
        ],
        out_specs=pl.BlockSpec((nb, 128), lambda i: (i, 0)),
        scratch_shapes=[
            pltpu.VMEM((nb, 16, 16, 32), jnp.float32),         # conv1 + ReLU (NHWC)
            pltpu.VMEM((nb, 10, 10, 32), jnp.float32),         # zero-padded pool1 output
            pltpu.VMEM((nb * 64, 288), jnp.float32),           # conv2 im2col (K=288)
            pltpu.VMEM((nb, 8, 8, 64), jnp.float32),           # conv2 + ReLU (NHWC)
            pltpu.VMEM((nb, 1024), jnp.float32),               # pooled features (lane-dense)
        ],
        compiler_params=pltpu.CompilerParams(
            dimension_semantics=("parallel",),
            vmem_limit_bytes=48 * 1024 * 1024),
    )(x1, kp["w1"], kp["b1"], kp["w2"], kp["b2"], kp["w3"], kp["b3"])


# -------------------------- params / reference -----------------------------

def init_params(key):
    k1, k2, k3, k4, k5, k6 = jax.random.split(key, 6)
    return {
        "w1": 0.10 * jax.random.normal(k1, (32, 1, 3, 3), jnp.float32),
        "b1": 0.10 * jax.random.normal(k2, (32,), jnp.float32),
        "w2": 0.05 * jax.random.normal(k3, (64, 32, 3, 3), jnp.float32),
        "b2": 0.10 * jax.random.normal(k4, (64,), jnp.float32),
        "w3": 0.02 * jax.random.normal(k5, (128, 64 * 4 * 4), jnp.float32),
        "b3": 0.10 * jax.random.normal(k6, (128,), jnp.float32),
    }


def reference_forward(x_nchw, p):
    """Pure-JAX (lax) replica of the PyTorch forward, f32 throughout."""
    dn = ("NCHW", "OIHW", "NCHW")
    y = lax.conv_general_dilated(x_nchw, p["w1"], (1, 1), "SAME", dimension_numbers=dn)
    y = jnp.maximum(y + p["b1"][None, :, None, None], 0.0)
    y = lax.reduce_window(y, -jnp.inf, lax.max, (1, 1, 2, 2), (1, 1, 2, 2), "VALID")
    y = lax.conv_general_dilated(y, p["w2"], (1, 1), "SAME", dimension_numbers=dn)
    y = jnp.maximum(y + p["b2"][None, :, None, None], 0.0)
    y = lax.reduce_window(y, -jnp.inf, lax.max, (1, 1, 2, 2), (1, 1, 2, 2), "VALID")
    y = y.reshape(y.shape[0], -1)
    return y @ p["w3"].T + p["b3"]


if __name__ == "__main__":
    key = jax.random.PRNGKey(0)
    kx, kp = jax.random.split(key)
    # NCHW input matching the PyTorch module: 1 channel, 16x16 (-> 64*4*4 flat).
    # Batch 16 -> 2 batch tiles (exercises the parallel batch-tile grid axis).
    x = jax.random.normal(kx, (16, 1, 16, 16), jnp.float32)
    params = init_params(kp)
    kparams = prepare_params(params)

    out = jax.block_until_ready(feature_cnn_forward(x, kparams))
    assert out.shape == (16, 128), out.shape

    ref = reference_forward(x, params)
    max_err = float(jnp.max(jnp.abs(out - ref)))
    assert jnp.allclose(out, ref, rtol=1e-3, atol=1e-3), max_err
    print("KERNEL_OK")
</pallas_src>

<mosaic_0001>
module attributes {stable_mosaic.version = 11 : i64} {
  func.func @_feature_cnn_kernel(%arg0: i32, %arg1: memref<9x2048xf32, #tpu.memory_space<vmem>>, %arg2: memref<9x32xf32, #tpu.memory_space<vmem>>, %arg3: memref<1x32xf32, #tpu.memory_space<vmem>>, %arg4: memref<288x64xf32, #tpu.memory_space<vmem>>, %arg5: memref<1x64xf32, #tpu.memory_space<vmem>>, %arg6: memref<1024x128xf32, #tpu.memory_space<vmem>>, %arg7: memref<1x128xf32, #tpu.memory_space<vmem>>, %arg8: memref<8x128xf32, #tpu.memory_space<vmem>>, %arg9: memref<8x16x16x32xf32, #tpu.memory_space<vmem>>, %arg10: memref<8x10x10x32xf32, #tpu.memory_space<vmem>>, %arg11: memref<512x288xf32, #tpu.memory_space<vmem>>, %arg12: memref<8x8x8x64xf32, #tpu.memory_space<vmem>>, %arg13: memref<8x1024xf32, #tpu.memory_space<vmem>>) attributes {dimension_semantics = [#tpu.dimension_semantics<parallel>], iteration_bounds = array<i64: 2>, scalar_prefetch = 0 : i64, scratch_operands = 5 : i64, tpu.core_type = #tpu.core_type<tc>, window_params = [{transform_indices = @transform_0, window_bounds = array<i64: 9, 2048>}, {pipeline_mode = #tpu.pipeline_mode<synchronous>, transform_indices = @transform_1, window_bounds = array<i64: 9, 32>}, {pipeline_mode = #tpu.pipeline_mode<synchronous>, transform_indices = @transform_2, window_bounds = array<i64: 1, 32>}, {pipeline_mode = #tpu.pipeline_mode<synchronous>, transform_indices = @transform_3, window_bounds = array<i64: 288, 64>}, {pipeline_mode = #tpu.pipeline_mode<synchronous>, transform_indices = @transform_4, window_bounds = array<i64: 1, 64>}, {pipeline_mode = #tpu.pipeline_mode<synchronous>, transform_indices = @transform_5, window_bounds = array<i64: 1024, 128>}, {pipeline_mode = #tpu.pipeline_mode<synchronous>, transform_indices = @transform_6, window_bounds = array<i64: 1, 128>}, {transform_indices = @transform_7, window_bounds = array<i64: 8, 128>}]} {
    %c0 = arith.constant 0 : index
    %c0_0 = arith.constant 0 : index
    %0 = vector.load %arg1[%c0, %c0_0] : memref<9x2048xf32, #tpu.memory_space<vmem>>, vector<9x2048xf32>
    %c0_1 = arith.constant 0 : index
    %c0_2 = arith.constant 0 : index
    %1 = vector.load %arg2[%c0_1, %c0_2] : memref<9x32xf32, #tpu.memory_space<vmem>>, vector<9x32xf32>
    %cst = arith.constant dense<0.000000e+00> : vector<2048x32xf32>
    %2 = tpu.matmul %0, %1, %cst {dimension_numbers = #tpu.dot_dimension_numbers<[0], [0], [1], [1], [0, 1, 1, 1], [], []>} : vector<9x2048xf32>, vector<9x32xf32>, vector<2048x32xf32> -> vector<2048x32xf32>
    %c0_3 = arith.constant 0 : index
    %c0_4 = arith.constant 0 : index
    %3 = vector.load %arg3[%c0_3, %c0_4] : memref<1x32xf32, #tpu.memory_space<vmem>>, vector<1x32xf32>
    %4 = vector.broadcast %3 : vector<1x32xf32> to vector<2048x32xf32>
    %5 = arith.addf %2, %4 : vector<2048x32xf32>
    %cst_5 = arith.constant 0.000000e+00 : f32
    %6 = vector.broadcast %cst_5 : f32 to vector<2048x32xf32>
    %7 = arith.maximumf %5, %6 : vector<2048x32xf32>
    %8 = vector.shape_cast %7 : vector<2048x32xf32> to vector<8x16x16x32xf32>
    %c0_6 = arith.constant 0 : index
    %c0_7 = arith.constant 0 : index
    %c0_8 = arith.constant 0 : index
    %c0_9 = arith.constant 0 : index
    %9 = vector.load %arg9[%c0_6, %c0_7, %c0_8, %c0_9] : memref<8x16x16x32xf32, #tpu.memory_space<vmem>>, vector<8x16x16x32xf32>
    tpu.vector_store %arg9[%c0_6, %c0_7, %c0_8, %c0_9], %8 {strides = array<i32>} : memref<8x16x16x32xf32, #tpu.memory_space<vmem>>, vector<8x16x16x32xf32>,
    %c0_10 = arith.constant 0 : index
    %c0_11 = arith.constant 0 : index
    %c0_12 = arith.constant 0 : index
    %c0_13 = arith.constant 0 : index
    %10 = tpu.strided_load %arg9[%c0_10, %c0_11, %c0_12, %c0_13] {strides = array<i32: 1, 2, 2, 1>} : memref<8x16x16x32xf32, #tpu.memory_space<vmem>>, vector<8x8x8x32xf32>
    %c0_14 = arith.constant 0 : index
    %c0_15 = arith.constant 0 : index
    %c1 = arith.constant 1 : index
    %c0_16 = arith.constant 0 : index
    %11 = tpu.strided_load %arg9[%c0_14, %c0_15, %c1, %c0_16] {strides = array<i32: 1, 2, 2, 1>} : memref<8x16x16x32xf32, #tpu.memory_space<vmem>>, vector<8x8x8x32xf32>
    %12 = arith.maximumf %10, %11 : vector<8x8x8x32xf32>
    %c0_17 = arith.constant 0 : index
    %c1_18 = arith.constant 1 : index
    %c0_19 = arith.constant 0 : index
    %c0_20 = arith.constant 0 : index
    %13 = tpu.strided_load %arg9[%c0_17, %c1_18, %c0_19, %c0_20] {strides = array<i32: 1, 2, 2, 1>} : memref<8x16x16x32xf32, #tpu.memory_space<vmem>>, vector<8x8x8x32xf32>
    %c0_21 = arith.constant 0 : index
    %c1_22 = arith.constant 1 : index
    %c1_23 = arith.constant 1 : index
    %c0_24 = arith.constant 0 : index
    %14 = tpu.strided_load %arg9[%c0_21, %c1_22, %c1_23, %c0_24] {strides = array<i32: 1, 2, 2, 1>} : memref<8x16x16x32xf32, #tpu.memory_space<vmem>>, vector<8x8x8x32xf32>
    %15 = arith.maximumf %13, %14 : vector<8x8x8x32xf32>
    %16 = arith.maximumf %12, %15 : vector<8x8x8x32xf32>
    %cst_25 = arith.constant 0.000000e+00 : f32
    %17 = vector.broadcast %cst_25 : f32 to vector<8x1x10x32xf32>
    %c0_26 = arith.constant 0 : index
    %c0_27 = arith.constant 0 : index
    %c0_28 = arith.constant 0 : index
    %c0_29 = arith.constant 0 : index
    %18 = vector.load %arg10[%c0_26, %c0_27, %c0_28, %c0_29] : memref<8x10x10x32xf32, #tpu.memory_space<vmem>>, vector<8x1x10x32xf32>
    tpu.vector_store %arg10[%c0_26, %c0_27, %c0_28, %c0_29], %17 {strides = array<i32>} : memref<8x10x10x32xf32, #tpu.memory_space<vmem>>, vector<8x1x10x32xf32>,
    %cst_30 = arith.constant 0.000000e+00 : f32
    %19 = vector.broadcast %cst_30 : f32 to vector<8x1x10x32xf32>
    %c0_31 = arith.constant 0 : index
    %c9 = arith.constant 9 : index
    %c0_32 = arith.constant 0 : index
    %c0_33 = arith.constant 0 : index
    %20 = vector.load %arg10[%c0_31, %c9, %c0_32, %c0_33] : memref<8x10x10x32xf32, #tpu.memory_space<vmem>>, vector<8x1x10x32xf32>
    tpu.vector_store %arg10[%c0_31, %c9, %c0_32, %c0_33], %19 {strides = array<i32>} : memref<8x10x10x32xf32, #tpu.memory_space<vmem>>, vector<8x1x10x32xf32>,
    %cst_34 = arith.constant 0.000000e+00 : f32
    %21 = vector.broadcast %cst_34 : f32 to vector<8x8x1x32xf32>
    %c0_35 = arith.constant 0 : index
    %c1_36 = arith.constant 1 : index
    %c0_37 = arith.constant 0 : index
    %c0_38 = arith.constant 0 : index
    %22 = vector.load %arg10[%c0_35, %c1_36, %c0_37, %c0_38] : memref<8x10x10x32xf32, #tpu.memory_space<vmem>>, vector<8x8x1x32xf32>
    tpu.vector_store %arg10[%c0_35, %c1_36, %c0_37, %c0_38], %21 {strides = array<i32>} : memref<8x10x10x32xf32, #tpu.memory_space<vmem>>, vector<8x8x1x32xf32>,
    %cst_39 = arith.constant 0.000000e+00 : f32
    %23 = vector.broadcast %cst_39 : f32 to vector<8x8x1x32xf32>
    %c0_40 = arith.constant 0 : index
    %c1_41 = arith.constant 1 : index
    %c9_42 = arith.constant 9 : index
    %c0_43 = arith.constant 0 : index
    %24 = vector.load %arg10[%c0_40, %c1_41, %c9_42, %c0_43] : memref<8x10x10x32xf32, #tpu.memory_space<vmem>>, vector<8x8x1x32xf32>
    tpu.vector_store %arg10[%c0_40, %c1_41, %c9_42, %c0_43], %23 {strides = array<i32>} : memref<8x10x10x32xf32, #tpu.memory_space<vmem>>, vector<8x8x1x32xf32>,
    %c0_44 = arith.constant 0 : index
    %c1_45 = arith.constant 1 : index
    %c1_46 = arith.constant 1 : index
    %c0_47 = arith.constant 0 : index
    %25 = vector.load %arg10[%c0_44, %c1_45, %c1_46, %c0_47] : memref<8x10x10x32xf32, #tpu.memory_space<vmem>>, vector<8x8x8x32xf32>
    tpu.vector_store %arg10[%c0_44, %c1_45, %c1_46, %c0_47], %16 {strides = array<i32>} : memref<8x10x10x32xf32, #tpu.memory_space<vmem>>, vector<8x8x8x32xf32>,
    %c0_48 = arith.constant 0 : index
    %c0_49 = arith.constant 0 : index
    %c0_50 = arith.constant 0 : index
    %c0_51 = arith.constant 0 : index
    %26 = vector.load %arg10[%c0_48, %c0_49, %c0_50, %c0_51] : memref<8x10x10x32xf32, #tpu.memory_space<vmem>>, vector<8x8x8x32xf32>
    %27 = vector.shape_cast %26 : vector<8x8x8x32xf32> to vector<512x32xf32>
    %c0_52 = arith.constant 0 : index
    %c0_53 = arith.constant 0 : index
    %28 = vector.load %arg11[%c0_52, %c0_53] : memref<512x288xf32, #tpu.memory_space<vmem>>, vector<512x32xf32>
    tpu.vector_store %arg11[%c0_52, %c0_53], %27 {strides = array<i32>} : memref<512x288xf32, #tpu.memory_space<vmem>>, vector<512x32xf32>,
    %c0_54 = arith.constant 0 : index
    %c0_55 = arith.constant 0 : index
    %c1_56 = arith.constant 1 : index
    %c0_57 = arith.constant 0 : index
    %29 = vector.load %arg10[%c0_54, %c0_55, %c1_56, %c0_57] : memref<8x10x10x32xf32, #tpu.memory_space<vmem>>, vector<8x8x8x32xf32>
    %30 = vector.shape_cast %29 : vector<8x8x8x32xf32> to vector<512x32xf32>
    %c0_58 = arith.constant 0 : index
    %c32 = arith.constant 32 : index
    %31 = vector.load %arg11[%c0_58, %c32] : memref<512x288xf32, #tpu.memory_space<vmem>>, vector<512x32xf32>
    tpu.vector_store %arg11[%c0_58, %c32], %30 {strides = array<i32>} : memref<512x288xf32, #tpu.memory_space<vmem>>, vector<512x32xf32>,
    %c0_59 = arith.constant 0 : index
    %c0_60 = arith.constant 0 : index
    %c2 = arith.constant 2 : index
    %c0_61 = arith.constant 0 : index
    %32 = vector.load %arg10[%c0_59, %c0_60, %c2, %c0_61] : memref<8x10x10x32xf32, #tpu.memory_space<vmem>>, vector<8x8x8x32xf32>
    %33 = vector.shape_cast %32 : vector<8x8x8x32xf32> to vector<512x32xf32>
    %c0_62 = arith.constant 0 : index
    %c64 = arith.constant 64 : index
    %34 = vector.load %arg11[%c0_62, %c64] : memref<512x288xf32, #tpu.memory_space<vmem>>, vector<512x32xf32>
    tpu.vector_store %arg11[%c0_62, %c64], %33 {strides = array<i32>} : memref<512x288xf32, #tpu.memory_space<vmem>>, vector<512x32xf32>,
    %c0_63 = arith.constant 0 : index
    %c1_64 = arith.constant 1 : index
    %c0_65 = arith.constant 0 : index
    %c0_66 = arith.constant 0 : index
    %35 = vector.load %arg10[%c0_63, %c1_64, %c0_65, %c0_66] : memref<8x10x10x32xf32, #tpu.memory_space<vmem>>, vector<8x8x8x32xf32>
    %36 = vector.shape_cast %35 : vector<8x8x8x32xf32> to vector<512x32xf32>
    %c0_67 = arith.constant 0 : index
    %c96 = arith.constant 96 : index
    %37 = vector.load %arg11[%c0_67, %c96] : memref<512x288xf32, #tpu.memory_space<vmem>>, vector<512x32xf32>
    tpu.vector_store %arg11[%c0_67, %c96], %36 {strides = array<i32>} : memref<512x288xf32, #tpu.memory_space<vmem>>, vector<512x32xf32>,
    %c0_68 = arith.constant 0 : index
    %c1_69 = arith.constant 1 : index
    %c1_70 = arith.constant 1 : index
    %c0_71 = arith.constant 0 : index
    %38 = vector.load %arg10[%c0_68, %c1_69, %c1_70, %c0_71] : memref<8x10x10x32xf32, #tpu.memory_space<vmem>>, vector<8x8x8x32xf32>
    %39 = vector.shape_cast %38 : vector<8x8x8x32xf32> to vector<512x32xf32>
    %c0_72 = arith.constant 0 : index
    %c128 = arith.constant 128 : index
    %40 = vector.load %arg11[%c0_72, %c128] : memref<512x288xf32, #tpu.memory_space<vmem>>, vector<512x32xf32>
    tpu.vector_store %arg11[%c0_72, %c128], %39 {strides = array<i32>} : memref<512x288xf32, #tpu.memory_space<vmem>>, vector<512x32xf32>,
    %c0_73 = arith.constant 0 : index
    %c1_74 = arith.constant 1 : index
    %c2_75 = arith.constant 2 : index
    %c0_76 = arith.constant 0 : index
    %41 = vector.load %arg10[%c0_73, %c1_74, %c2_75, %c0_76] : memref<8x10x10x32xf32, #tpu.memory_space<vmem>>, vector<8x8x8x32xf32>
    %42 = vector.shape_cast %41 : vector<8x8x8x32xf32> to vector<512x32xf32>
    %c0_77 = arith.constant 0 : index
    %c160 = arith.constant 160 : index
    %43 = vector.load %arg11[%c0_77, %c160] : memref<512x288xf32, #tpu.memory_space<vmem>>, vector<512x32xf32>
    tpu.vector_store %arg11[%c0_77, %c160], %42 {strides = array<i32>} : memref<512x288xf32, #tpu.memory_space<vmem>>, vector<512x32xf32>,
    %c0_78 = arith.constant 0 : index
    %c2_79 = arith.constant 2 : index
    %c0_80 = arith.constant 0 : index
    %c0_81 = arith.constant 0 : index
    %44 = vector.load %arg10[%c0_78, %c2_79, %c0_80, %c0_81] : memref<8x10x10x32xf32, #tpu.memory_space<vmem>>, vector<8x8x8x32xf32>
    %45 = vector.shape_cast %44 : vector<8x8x8x32xf32> to vector<512x32xf32>
    %c0_82 = arith.constant 0 : index
    %c192 = arith.constant 192 : index
    %46 = vector.load %arg11[%c0_82, %c192] : memref<512x288xf32, #tpu.memory_space<vmem>>, vector<512x32xf32>
    tpu.vector_store %arg11[%c0_82, %c192], %45 {strides = array<i32>} : memref<512x288xf32, #tpu.memory_space<vmem>>, vector<512x32xf32>,
    %c0_83 = arith.constant 0 : index
    %c2_84 = arith.constant 2 : index
    %c1_85 = arith.constant 1 : index
    %c0_86 = arith.constant 0 : index
    %47 = vector.load %arg10[%c0_83, %c2_84, %c1_85, %c0_86] : memref<8x10x10x32xf32, #tpu.memory_space<vmem>>, vector<8x8x8x32xf32>
    %48 = vector.shape_cast %47 : vector<8x8x8x32xf32> to vector<512x32xf32>
    %c0_87 = arith.constant 0 : index
    %c224 = arith.constant 224 : index
    %49 = vector.load %arg11[%c0_87, %c224] : memref<512x288xf32, #tpu.memory_space<vmem>>, vector<512x32xf32>
    tpu.vector_store %arg11[%c0_87, %c224], %48 {strides = array<i32>} : memref<512x288xf32, #tpu.memory_space<vmem>>, vector<512x32xf32>,
    %c0_88 = arith.constant 0 : index
    %c2_89 = arith.constant 2 : index
    %c2_90 = arith.constant 2 : index
    %c0_91 = arith.constant 0 : index
    %50 = vector.load %arg10[%c0_88, %c2_89, %c2_90, %c0_91] : memref<8x10x10x32xf32, #tpu.memory_space<vmem>>, vector<8x8x8x32xf32>
    %51 = vector.shape_cast %50 : vector<8x8x8x32xf32> to vector<512x32xf32>
    %c0_92 = arith.constant 0 : index
    %c256 = arith.constant 256 : index
    %52 = vector.load %arg11[%c0_92, %c256] : memref<512x288xf32, #tpu.memory_space<vmem>>, vector<512x32xf32>
    tpu.vector_store %arg11[%c0_92, %c256], %51 {strides = array<i32>} : memref<512x288xf32, #tpu.memory_space<vmem>>, vector<512x32xf32>,
    %c0_93 = arith.constant 0 : index
    %c0_94 = arith.constant 0 : index
    %53 = vector.load %arg11[%c0_93, %c0_94] : memref<512x288xf32, #tpu.memory_space<vmem>>, vector<512x288xf32>
    %c0_95 = arith.constant 0 : index
    %c0_96 = arith.constant 0 : index
    %54 = vector.load %arg4[%c0_95, %c0_96] : memref<288x64xf32, #tpu.memory_space<vmem>>, vector<288x64xf32>
    %cst_97 = arith.constant dense<0.000000e+00> : vector<512x64xf32>
    %55 = tpu.matmul %53, %54, %cst_97 {dimension_numbers = #tpu.dot_dimension_numbers<[1], [0], [0], [1], [0, 0, 1, 1], [], []>} : vector<512x288xf32>, vector<288x64xf32>, vector<512x64xf32> -> vector<512x64xf32>
    %c0_98 = arith.constant 0 : index
    %c0_99 = arith.constant 0 : index
    %56 = vector.load %arg5[%c0_98, %c0_99] : memref<1x64xf32, #tpu.memory_space<vmem>>, vector<1x64xf32>
    %57 = vector.broadcast %56 : vector<1x64xf32> to vector<512x64xf32>
    %58 = arith.addf %55, %57 : vector<512x64xf32>
    %cst_100 = arith.constant 0.000000e+00 : f32
    %59 = vector.broadcast %cst_100 : f32 to vector<512x64xf32>
    %60 = arith.maximumf %58, %59 : vector<512x64xf32>
    %61 = vector.shape_cast %60 : vector<512x64xf32> to vector<8x8x8x64xf32>
    %c0_101 = arith.constant 0 : index
    %c0_102 = arith.constant 0 : index
    %c0_103 = arith.constant 0 : index
    %c0_104 = arith.constant 0 : index
    %62 = vector.load %arg12[%c0_101, %c0_102, %c0_103, %c0_104] : memref<8x8x8x64xf32, #tpu.memory_space<vmem>>, vector<8x8x8x64xf32>
    tpu.vector_store %arg12[%c0_101, %c0_102, %c0_103, %c0_104], %61 {strides = array<i32>} : memref<8x8x8x64xf32, #tpu.memory_space<vmem>>, vector<8x8x8x64xf32>,
    %c0_105 = arith.constant 0 : index
    %c0_106 = arith.constant 0 : index
    %c0_107 = arith.constant 0 : index
    %c0_108 = arith.constant 0 : index
    %63 = tpu.strided_load %arg12[%c0_105, %c0_106, %c0_107, %c0_108] {strides = array<i32: 1, 2, 2, 1>} : memref<8x8x8x64xf32, #tpu.memory_space<vmem>>, vector<8x4x4x64xf32>
    %c0_109 = arith.constant 0 : index
    %c0_110 = arith.constant 0 : index
    %c1_111 = arith.constant 1 : index
    %c0_112 = arith.constant 0 : index
    %64 = tpu.strided_load %arg12[%c0_109, %c0_110, %c1_111, %c0_112] {strides = array<i32: 1, 2, 2, 1>} : memref<8x8x8x64xf32, #tpu.memory_space<vmem>>, vector<8x4x4x64xf32>
    %65 = arith.maximumf %63, %64 : vector<8x4x4x64xf32>
    %c0_113 = arith.constant 0 : index
    %c1_114 = arith.constant 1 : index
    %c0_115 = arith.constant 0 : index
    %c0_116 = arith.constant 0 : index
    %66 = tpu.strided_load %arg12[%c0_113, %c1_114, %c0_115, %c0_116] {strides = array<i32: 1, 2, 2, 1>} : memref<8x8x8x64xf32, #tpu.memory_space<vmem>>, vector<8x4x4x64xf32>
    %c0_117 = arith.constant 0 : index
    %c1_118 = arith.constant 1 : index
    %c1_119 = arith.constant 1 : index
    %c0_120 = arith.constant 0 : index
    %67 = tpu.strided_load %arg12[%c0_117, %c1_118, %c1_119, %c0_120] {strides = array<i32: 1, 2, 2, 1>} : memref<8x8x8x64xf32, #tpu.memory_space<vmem>>, vector<8x4x4x64xf32>
    %68 = arith.maximumf %66, %67 : vector<8x4x4x64xf32>
    %69 = arith.maximumf %65, %68 : vector<8x4x4x64xf32>
    %70 = vector.extract_strided_slice %69 {offsets = [0, 0, 0, 0], sizes = [8, 1, 1, 64], strides = [1, 1, 1, 1]} : vector<8x4x4x64xf32> to vector<8x1x1x64xf32>
    %71 = vector.shape_cast %70 : vector<8x1x1x64xf32> to vector<8x64xf32>
    %c0_121 = arith.constant 0 : index
    %c0_122 = arith.constant 0 : index
    %72 = vector.load %arg13[%c0_121, %c0_122] : memref<8x1024xf32, #tpu.memory_space<vmem>>, vector<8x64xf32>
    tpu.vector_store %arg13[%c0_121, %c0_122], %71 {strides = array<i32>} : memref<8x1024xf32, #tpu.memory_space<vmem>>, vector<8x64xf32>,
    %73 = vector.extract_strided_slice %69 {offsets = [0, 0, 1, 0], sizes = [8, 1, 1, 64], strides = [1, 1, 1, 1]} : vector<8x4x4x64xf32> to vector<8x1x1x64xf32>
    %74 = vector.shape_cast %73 : vector<8x1x1x64xf32> to vector<8x64xf32>
    %c0_123 = arith.constant 0 : index
    %c64_124 = arith.constant 64 : index
    %75 = vector.load %arg13[%c0_123, %c64_124] : memref<8x1024xf32, #tpu.memory_space<vmem>>, vector<8x64xf32>
    tpu.vector_store %arg13[%c0_123, %c64_124], %74 {strides = array<i32>} : memref<8x1024xf32, #tpu.memory_space<vmem>>, vector<8x64xf32>,
    %76 = vector.extract_strided_slice %69 {offsets = [0, 0, 2, 0], sizes = [8, 1, 1, 64], strides = [1, 1, 1, 1]} : vector<8x4x4x64xf32> to vector<8x1x1x64xf32>
    %77 = vector.shape_cast %76 : vector<8x1x1x64xf32> to vector<8x64xf32>
    %c0_125 = arith.constant 0 : index
    %c128_126 = arith.constant 128 : index
    %78 = vector.load %arg13[%c0_125, %c128_126] : memref<8x1024xf32, #tpu.memory_space<vmem>>, vector<8x64xf32>
    tpu.vector_store %arg13[%c0_125, %c128_126], %77 {strides = array<i32>} : memref<8x1024xf32, #tpu.memory_space<vmem>>, vector<8x64xf32>,
    %79 = vector.extract_strided_slice %69 {offsets = [0, 0, 3, 0], sizes = [8, 1, 1, 64], strides = [1, 1, 1, 1]} : vector<8x4x4x64xf32> to vector<8x1x1x64xf32>
    %80 = vector.shape_cast %79 : vector<8x1x1x64xf32> to vector<8x64xf32>
    %c0_127 = arith.constant 0 : index
    %c192_128 = arith.constant 192 : index
    %81 = vector.load %arg13[%c0_127, %c192_128] : memref<8x1024xf32, #tpu.memory_space<vmem>>, vector<8x64xf32>
    tpu.vector_store %arg13[%c0_127, %c192_128], %80 {strides = array<i32>} : memref<8x1024xf32, #tpu.memory_space<vmem>>, vector<8x64xf32>,
    %82 = vector.extract_strided_slice %69 {offsets = [0, 1, 0, 0], sizes = [8, 1, 1, 64], strides = [1, 1, 1, 1]} : vector<8x4x4x64xf32> to vector<8x1x1x64xf32>
    %83 = vector.shape_cast %82 : vector<8x1x1x64xf32> to vector<8x64xf32>
    %c0_129 = arith.constant 0 : index
    %c256_130 = arith.constant 256 : index
    %84 = vector.load %arg13[%c0_129, %c256_130] : memref<8x1024xf32, #tpu.memory_space<vmem>>, vector<8x64xf32>
    tpu.vector_store %arg13[%c0_129, %c256_130], %83 {strides = array<i32>} : memref<8x1024xf32, #tpu.memory_space<vmem>>, vector<8x64xf32>,
    %85 = vector.extract_strided_slice %69 {offsets = [0, 1, 1, 0], sizes = [8, 1, 1, 64], strides = [1, 1, 1, 1]} : vector<8x4x4x64xf32> to vector<8x1x1x64xf32>
    %86 = vector.shape_cast %85 : vector<8x1x1x64xf32> to vector<8x64xf32>
    %c0_131 = arith.constant 0 : index
    %c320 = arith.constant 320 : index
    %87 = vector.load %arg13[%c0_131, %c320] : memref<8x1024xf32, #tpu.memory_space<vmem>>, vector<8x64xf32>
    tpu.vector_store %arg13[%c0_131, %c320], %86 {strides = array<i32>} : memref<8x1024xf32, #tpu.memory_space<vmem>>, vector<8x64xf32>,
    %88 = vector.extract_strided_slice %69 {offsets = [0, 1, 2, 0], sizes = [8, 1, 1, 64], strides = [1, 1, 1, 1]} : vector<8x4x4x64xf32> to vector<8x1x1x64xf32>
    %89 = vector.shape_cast %88 : vector<8x1x1x64xf32> to vector<8x64xf32>
    %c0_132 = arith.constant 0 : index
    %c384 = arith.constant 384 : index
    %90 = vector.load %arg13[%c0_132, %c384] : memref<8x1024xf32, #tpu.memory_space<vmem>>, vector<8x64xf32>
    tpu.vector_store %arg13[%c0_132, %c384], %89 {strides = array<i32>} : memref<8x1024xf32, #tpu.memory_space<vmem>>, vector<8x64xf32>,
    %91 = vector.extract_strided_slice %69 {offsets = [0, 1, 3, 0], sizes = [8, 1, 1, 64], strides = [1, 1, 1, 1]} : vector<8x4x4x64xf32> to vector<8x1x1x64xf32>
    %92 = vector.shape_cast %91 : vector<8x1x1x64xf32> to vector<8x64xf32>
    %c0_133 = arith.constant 0 : index
    %c448 = arith.constant 448 : index
    %93 = vector.load %arg13[%c0_133, %c448] : memref<8x1024xf32, #tpu.memory_space<vmem>>, vector<8x64xf32>
    tpu.vector_store %arg13[%c0_133, %c448], %92 {strides = array<i32>} : memref<8x1024xf32, #tpu.memory_space<vmem>>, vector<8x64xf32>,
    %94 = vector.extract_strided_slice %69 {offsets = [0, 2, 0, 0], sizes = [8, 1, 1, 64], strides = [1, 1, 1, 1]} : vector<8x4x4x64xf32> to vector<8x1x1x64xf32>
    %95 = vector.shape_cast %94 : vector<8x1x1x64xf32> to vector<8x64xf32>
    %c0_134 = arith.constant 0 : index
    %c512 = arith.constant 512 : index
    %96 = vector.load %arg13[%c0_134, %c512] : memref<8x1024xf32, #tpu.memory_space<vmem>>, vector<8x64xf32>
    tpu.vector_store %arg13[%c0_134, %c512], %95 {strides = array<i32>} : memref<8x1024xf32, #tpu.memory_space<vmem>>, vector<8x64xf32>,
    %97 = vector.extract_strided_slice %69 {offsets = [0, 2, 1, 0], sizes = [8, 1, 1, 64], strides = [1, 1, 1, 1]} : vector<8x4x4x64xf32> to vector<8x1x1x64xf32>
    %98 = vector.shape_cast %97 : vector<8x1x1x64xf32> to vector<8x64xf32>
    %c0_135 = arith.constant 0 : index
    %c576 = arith.constant 576 : index
    %99 = vector.load %arg13[%c0_135, %c576] : memref<8x1024xf32, #tpu.memory_space<vmem>>, vector<8x64xf32>
    tpu.vector_store %arg13[%c0_135, %c576], %98 {strides = array<i32>} : memref<8x1024xf32, #tpu.memory_space<vmem>>, vector<8x64xf32>,
    %100 = vector.extract_strided_slice %69 {offsets = [0, 2, 2, 0], sizes = [8, 1, 1, 64], strides = [1, 1, 1, 1]} : vector<8x4x4x64xf32> to vector<8x1x1x64xf32>
    %101 = vector.shape_cast %100 : vector<8x1x1x64xf32> to vector<8x64xf32>
    %c0_136 = arith.constant 0 : index
    %c640 = arith.constant 640 : index
    %102 = vector.load %arg13[%c0_136, %c640] : memref<8x1024xf32, #tpu.memory_space<vmem>>, vector<8x64xf32>
    tpu.vector_store %arg13[%c0_136, %c640], %101 {strides = array<i32>} : memref<8x1024xf32, #tpu.memory_space<vmem>>, vector<8x64xf32>,
    %103 = vector.extract_strided_slice %69 {offsets = [0, 2, 3, 0], sizes = [8, 1, 1, 64], strides = [1, 1, 1, 1]} : vector<8x4x4x64xf32> to vector<8x1x1x64xf32>
    %104 = vector.shape_cast %103 : vector<8x1x1x64xf32> to vector<8x64xf32>
    %c0_137 = arith.constant 0 : index
    %c704 = arith.constant 704 : index
    %105 = vector.load %arg13[%c0_137, %c704] : memref<8x1024xf32, #tpu.memory_space<vmem>>, vector<8x64xf32>
    tpu.vector_store %arg13[%c0_137, %c704], %104 {strides = array<i32>} : memref<8x1024xf32, #tpu.memory_space<vmem>>, vector<8x64xf32>,
    %106 = vector.extract_strided_slice %69 {offsets = [0, 3, 0, 0], sizes = [8, 1, 1, 64], strides = [1, 1, 1, 1]} : vector<8x4x4x64xf32> to vector<8x1x1x64xf32>
    %107 = vector.shape_cast %106 : vector<8x1x1x64xf32> to vector<8x64xf32>
    %c0_138 = arith.constant 0 : index
    %c768 = arith.constant 768 : index
    %108 = vector.load %arg13[%c0_138, %c768] : memref<8x1024xf32, #tpu.memory_space<vmem>>, vector<8x64xf32>
    tpu.vector_store %arg13[%c0_138, %c768], %107 {strides = array<i32>} : memref<8x1024xf32, #tpu.memory_space<vmem>>, vector<8x64xf32>,
    %109 = vector.extract_strided_slice %69 {offsets = [0, 3, 1, 0], sizes = [8, 1, 1, 64], strides = [1, 1, 1, 1]} : vector<8x4x4x64xf32> to vector<8x1x1x64xf32>
    %110 = vector.shape_cast %109 : vector<8x1x1x64xf32> to vector<8x64xf32>
    %c0_139 = arith.constant 0 : index
    %c832 = arith.constant 832 : index
    %111 = vector.load %arg13[%c0_139, %c832] : memref<8x1024xf32, #tpu.memory_space<vmem>>, vector<8x64xf32>
    tpu.vector_store %arg13[%c0_139, %c832], %110 {strides = array<i32>} : memref<8x1024xf32, #tpu.memory_space<vmem>>, vector<8x64xf32>,
    %112 = vector.extract_strided_slice %69 {offsets = [0, 3, 2, 0], sizes = [8, 1, 1, 64], strides = [1, 1, 1, 1]} : vector<8x4x4x64xf32> to vector<8x1x1x64xf32>
    %113 = vector.shape_cast %112 : vector<8x1x1x64xf32> to vector<8x64xf32>
    %c0_140 = arith.constant 0 : index
    %c896 = arith.constant 896 : index
    %114 = vector.load %arg13[%c0_140, %c896] : memref<8x1024xf32, #tpu.memory_space<vmem>>, vector<8x64xf32>
    tpu.vector_store %arg13[%c0_140, %c896], %113 {strides = array<i32>} : memref<8x1024xf32, #tpu.memory_space<vmem>>, vector<8x64xf32>,
    %115 = vector.extract_strided_slice %69 {offsets = [0, 3, 3, 0], sizes = [8, 1, 1, 64], strides = [1, 1, 1, 1]} : vector<8x4x4x64xf32> to vector<8x1x1x64xf32>
    %116 = vector.shape_cast %115 : vector<8x1x1x64xf32> to vector<8x64xf32>
    %c0_141 = arith.constant 0 : index
    %c960 = arith.constant 960 : index
    %117 = vector.load %arg13[%c0_141, %c960] : memref<8x1024xf32, #tpu.memory_space<vmem>>, vector<8x64xf32>
    tpu.vector_store %arg13[%c0_141, %c960], %116 {strides = array<i32>} : memref<8x1024xf32, #tpu.memory_space<vmem>>, vector<8x64xf32>,
    %c0_142 = arith.constant 0 : index
    %c0_143 = arith.constant 0 : index
    %118 = vector.load %arg13[%c0_142, %c0_143] : memref<8x1024xf32, #tpu.memory_space<vmem>>, vector<8x1024xf32>
    %c0_144 = arith.constant 0 : index
    %c0_145 = arith.constant 0 : index
    %119 = vector.load %arg6[%c0_144, %c0_145] : memref<1024x128xf32, #tpu.memory_space<vmem>>, vector<1024x128xf32>
    %cst_146 = arith.constant dense<0.000000e+00> : vector<8x128xf32>
    %120 = tpu.matmul %118, %119, %cst_146 {dimension_numbers = #tpu.dot_dimension_numbers<[1], [0], [0], [1], [0, 0, 1, 1], [], []>} : vector<8x1024xf32>, vector<1024x128xf32>, vector<8x128xf32> -> vector<8x128xf32>
    %c0_147 = arith.constant 0 : index
    %c0_148 = arith.constant 0 : index
    %121 = vector.load %arg7[%c0_147, %c0_148] : memref<1x128xf32, #tpu.memory_space<vmem>>, vector<1x128xf32>
    %122 = vector.broadcast %121 : vector<1x128xf32> to vector<8x128xf32>
    %123 = arith.addf %120, %122 : vector<8x128xf32>
    %c0_149 = arith.constant 0 : index
    %c0_150 = arith.constant 0 : index
    %124 = vector.load %arg8[%c0_149, %c0_150] : memref<8x128xf32, #tpu.memory_space<vmem>>, vector<8x128xf32>
    tpu.vector_store %arg8[%c0_149, %c0_150], %123 {strides = array<i32>} : memref<8x128xf32, #tpu.memory_space<vmem>>, vector<8x128xf32>,
    return
  }
  func.func @transform_0(%arg0: i32) -> (i32, i32) {
    %c0_i32 = arith.constant 0 : i32
    %c0_i32_0 = arith.constant 0 : i32
    return %c0_i32, %arg0 : i32, i32
  }
  func.func @transform_1(%arg0: i32) -> (i32, i32) {
    %c0_i32 = arith.constant 0 : i32
    %c0_i32_0 = arith.constant 0 : i32
    %c0_i32_1 = arith.constant 0 : i32
    return %c0_i32, %c0_i32_0 : i32, i32
  }
  func.func @transform_2(%arg0: i32) -> (i32, i32) {
    %c0_i32 = arith.constant 0 : i32
    %c0_i32_0 = arith.constant 0 : i32
    %c0_i32_1 = arith.constant 0 : i32
    return %c0_i32, %c0_i32_0 : i32, i32
  }
  func.func @transform_3(%arg0: i32) -> (i32, i32) {
    %c0_i32 = arith.constant 0 : i32
    %c0_i32_0 = arith.constant 0 : i32
    %c0_i32_1 = arith.constant 0 : i32
    return %c0_i32, %c0_i32_0 : i32, i32
  }
  func.func @transform_4(%arg0: i32) -> (i32, i32) {
    %c0_i32 = arith.constant 0 : i32
    %c0_i32_0 = arith.constant 0 : i32
    %c0_i32_1 = arith.constant 0 : i32
    return %c0_i32, %c0_i32_0 : i32, i32
  }
  func.func @transform_5(%arg0: i32) -> (i32, i32) {
    %c0_i32 = arith.constant 0 : i32
    %c0_i32_0 = arith.constant 0 : i32
    %c0_i32_1 = arith.constant 0 : i32
    return %c0_i32, %c0_i32_0 : i32, i32
  }
  func.func @transform_6(%arg0: i32) -> (i32, i32) {
    %c0_i32 = arith.constant 0 : i32
    %c0_i32_0 = arith.constant 0 : i32
    %c0_i32_1 = arith.constant 0 : i32
    return %c0_i32, %c0_i32_0 : i32, i32
  }
  func.func @transform_7(%arg0: i32) -> (i32, i32) {
    %c0_i32 = arith.constant 0 : i32
    %c0_i32_0 = arith.constant 0 : i32
    return %arg0, %c0_i32 : i32, i32
  }
}

</mosaic_0001>

<llo_original>
// kernel: feature_cnn_forward.1
$region0: #{feature_cnn_forward.1}
  #allocation0 [shape = 'u32[]', space=smem, size = 0x4, offset = 0x4, fixed_abs, tag = 'smem constant byte address 0x4 - core index']
  #allocation1 [shape = 'u32[144,128]{1,0:T(1,128)}', space=vmem, size = 0x12000, scoped, tag = 'internal scratch']
  #allocation2 [shape = 'f32[8,16,16,32]{3,2,1,0:T(8,128)}', space=vmem, size = 0x100000, scoped, tag = 'scratch operand']
  #allocation3 [shape = 'f32[8,10,10,32]{3,2,1,0:T(8,128)}', space=vmem, size = 0xa0000, scoped, tag = 'scratch operand']
  #allocation4 [shape = 'f32[512,288]{1,0:T(8,128)}', space=vmem, size = 0xc0000, scoped, tag = 'scratch operand']
  #allocation5 [shape = 'f32[8,8,8,64]{3,2,1,0:T(8,128)}', space=vmem, size = 0x40000, scoped, tag = 'scratch operand']
  #allocation6 [shape = 'f32[8,1024]{1,0:T(8,128)}', space=vmem, size = 0x8000, scoped, tag = 'scratch operand']
  %s0 = inlined_call_operand.vmem [shape: f32[9,4096], index: 0, kind: input, shape index: {}]
  %s1 = inlined_call_operand.vmem [shape: f32[9,32], index: 1, kind: input, shape index: {}]
  %s2 = inlined_call_operand.vmem [shape: f32[1,32], index: 2, kind: input, shape index: {}]
  %s3 = inlined_call_operand.vmem [shape: f32[288,64], index: 3, kind: input, shape index: {}]
  %s4 = inlined_call_operand.vmem [shape: f32[1,64], index: 4, kind: input, shape index: {}]
  %s5 = inlined_call_operand.vmem [shape: f32[1024,128], index: 5, kind: input, shape index: {}]
  %s6 = inlined_call_operand.vmem [shape: f32[1,128], index: 6, kind: input, shape index: {}]
  %s7 = inlined_call_operand.hbm [shape: f32[16,128], index: 7, kind: output, shape index: {}]
  %s8 = sld [smem:[#allocation0]]
  $region84: #{feature_cnn_forward.1} parent=0
    _
  %s10 = ssub.s32 1, %s8
  %s11 = scalar_select 0, %s10, %s8
  $region1: #{feature_cnn_forward.1} parent=0
    #allocation7 [shape = 'u8[262144]{0}', space=vmem, size = 0x40000, scoped, tag = 'input window, operand 0']
    #allocation8 [shape = 'u8[8192]{0}', space=vmem, size = 0x2000, scoped, tag = 'output window, operand 0']
    #allocation9 [shape = 's32[2]{0}', space=sflag, size = 0x8, scoped, tag = 'scoped memory for feature_cnn_forward.1']
    %12 = vsyncpa [#allocation9], 0
    %s13 = scalar_lea.sflag [#allocation9], 1
    %14 = vsyncpa %s13, 0
    loop: start=0, step=1, limit=4
    $region2: #{feature_cnn_forward.1} parent=1 // loop_pre_header
      _
    $region3: #{feature_cnn_forward.1} parent=1 // loop_header
      %s16 = sphi 0, %s20
      %p17 = scmp.ge.s32.totalorder %s16, 4
      %s26 = sphi 0, %s28
      %s29 = sphi 0, %s26
      %s30 = sphi 0, %s29
      %s46 = sphi 0, %s30
      %s50 = sphi 0, %s50
      %s52 = sphi 0, %s50
      %s53 = sphi 0, %s52
      %s67 = sphi 0, %s53
      %s71 = sphi 0, %s71
      %s73 = sphi 0, %s71
      %s74 = sphi 0, %s73
      %s88 = sphi 0, %s74
      %s92 = sphi 0, %s92
      %s94 = sphi 0, %s92
      %s95 = sphi 0, %s94
      %s109 = sphi 0, %s95
      %s113 = sphi 0, %s113
      %s115 = sphi 0, %s113
      %s116 = sphi 0, %s115
      %s130 = sphi 0, %s116
      %s134 = sphi 0, %s134
      %s136 = sphi 0, %s134
      %s137 = sphi 0, %s136
      %s151 = sphi 0, %s137
      %s155 = sphi 0, %s155
      %s157 = sphi 0, %s155
      %s158 = sphi 0, %s157
      %s172 = sphi 0, %s158
      %s178 = sphi 0, %s180
      %s181 = sphi 0, %s178
      %s182 = sphi 0, %s181
      %s198 = sphi 0, %s182
    $region4: #{feature_cnn_forward.1} parent=1 // loop_header_branch
      %19 = sbr.rel (%p17) target = $region8
    $region5: #{feature_cnn_forward.1} parent=1 // loop_body
      %s21 = ssub.s32 %s16, 1
      %s22 = ssub.s32 %s16, 2
      %s23 = sadd.s32 %s16, 1
      %s24 = ssub.s32 %s16, %s23
      %p25 = scmp.eq.s32.totalorder %s24, 0
      %s27 = sadd.s32 %s26, 1
      %s28 = scalar_select %p25, %s26, %s27
      %p31 = pneg %p25
      %p32 = scmp.eq.s32.totalorder %s16, 1
      %p33 = por %p31, %p32
      %p34 = scmp.ne.s32.totalorder %s26, %s29
      %p35 = scmp.eq.s32.totalorder %s16, 0
      %p36 = por %p34, %p35
      %p37 = scmp.ne.s32.totalorder %s26, %s29
      %p38 = scmp.eq.s32.totalorder %s21, 1
      %p39 = por %p37, %p38
      %p40 = scmp.ne.s32.totalorder %s29, %s30
      %p41 = scmp.eq.s32.totalorder %s21, 0
      %p42 = por %p40, %p41
      %p43 = scmp.ne.s32.totalorder %s29, %s30
      %p44 = scmp.eq.s32.totalorder %s22, 1
      %p45 = por %p43, %p44
      %p47 = scmp.ne.s32.totalorder %s30, %s46
      %p48 = scmp.eq.s32.totalorder %s22, 0
      %p49 = por %p47, %p48
      %s51 = sadd.s32 %s50, 1
      %p54 = scmp.eq.s32.totalorder %s16, 1
      %p55 = scmp.ne.s32.totalorder %s50, %s52
      %p56 = scmp.eq.s32.totalorder %s16, 0
      %p57 = por %p55, %p56
      %p58 = scmp.ne.s32.totalorder %s50, %s52
      %p59 = scmp.eq.s32.totalorder %s21, 1
      %p60 = por %p58, %p59
      %p61 = scmp.ne.s32.totalorder %s52, %s53
      %p62 = scmp.eq.s32.totalorder %s21, 0
      %p63 = por %p61, %p62
      %p64 = scmp.ne.s32.totalorder %s52, %s53
      %p65 = scmp.eq.s32.totalorder %s22, 1
      %p66 = por %p64, %p65
      %p68 = scmp.ne.s32.totalorder %s53, %s67
      %p69 = scmp.eq.s32.totalorder %s22, 0
      %p70 = por %p68, %p69
      %s72 = sadd.s32 %s71, 1
      %p75 = scmp.eq.s32.totalorder %s16, 1
      %p76 = scmp.ne.s32.totalorder %s71, %s73
      %p77 = scmp.eq.s32.totalorder %s16, 0
      %p78 = por %p76, %p77
      %p79 = scmp.ne.s32.totalorder %s71, %s73
      %p80 = scmp.eq.s32.totalorder %s21, 1
      %p81 = por %p79, %p80
      %p82 = scmp.ne.s32.totalorder %s73, %s74
      %p83 = scmp.eq.s32.totalorder %s21, 0
      %p84 = por %p82, %p83
      %p85 = scmp.ne.s32.totalorder %s73, %s74
      %p86 = scmp.eq.s32.totalorder %s22, 1
      %p87 = por %p85, %p86
      %p89 = scmp.ne.s32.totalorder %s74, %s88
      %p90 = scmp.eq.s32.totalorder %s22, 0
      %p91 = por %p89, %p90
      %s93 = sadd.s32 %s92, 1
      %p96 = scmp.eq.s32.totalorder %s16, 1
      %p97 = scmp.ne.s32.totalorder %s92, %s94
      %p98 = scmp.eq.s32.totalorder %s16, 0
      %p99 = por %p97, %p98
      %p100 = scmp.ne.s32.totalorder %s92, %s94
      %p101 = scmp.eq.s32.totalorder %s21, 1
      %p102 = por %p100, %p101
      %p103 = scmp.ne.s32.totalorder %s94, %s95
      %p104 = scmp.eq.s32.totalorder %s21, 0
      %p105 = por %p103, %p104
      %p106 = scmp.ne.s32.totalorder %s94, %s95
      %p107 = scmp.eq.s32.totalorder %s22, 1
      %p108 = por %p106, %p107
      %p110 = scmp.ne.s32.totalorder %s95, %s109
      %p111 = scmp.eq.s32.totalorder %s22, 0
      %p112 = por %p110, %p111
      %s114 = sadd.s32 %s113, 1
      %p117 = scmp.eq.s32.totalorder %s16, 1
      %p118 = scmp.ne.s32.totalorder %s113, %s115
      %p119 = scmp.eq.s32.totalorder %s16, 0
      %p120 = por %p118, %p119
      %p121 = scmp.ne.s32.totalorder %s113, %s115
      %p122 = scmp.eq.s32.totalorder %s21, 1
      %p123 = por %p121, %p122
      %p124 = scmp.ne.s32.totalorder %s115, %s116
      %p125 = scmp.eq.s32.totalorder %s21, 0
      %p126 = por %p124, %p125
      %p127 = scmp.ne.s32.totalorder %s115, %s116
      %p128 = scmp.eq.s32.totalorder %s22, 1
      %p129 = por %p127, %p128
      %p131 = scmp.ne.s32.totalorder %s116, %s130
      %p132 = scmp.eq.s32.totalorder %s22, 0
      %p133 = por %p131, %p132
      %s135 = sadd.s32 %s134, 1
      %p138 = scmp.eq.s32.totalorder %s16, 1
      %p139 = scmp.ne.s32.totalorder %s134, %s136
      %p140 = scmp.eq.s32.totalorder %s16, 0
      %p141 = por %p139, %p140
      %p142 = scmp.ne.s32.totalorder %s134, %s136
      %p143 = scmp.eq.s32.totalorder %s21, 1
      %p144 = por %p142, %p143
      %p145 = scmp.ne.s32.totalorder %s136, %s137
      %p146 = scmp.eq.s32.totalorder %s21, 0
      %p147 = por %p145, %p146
      %p148 = scmp.ne.s32.totalorder %s136, %s137
      %p149 = scmp.eq.s32.totalorder %s22, 1
      %p150 = por %p148, %p149
      %p152 = scmp.ne.s32.totalorder %s137, %s151
      %p153 = scmp.eq.s32.totalorder %s22, 0
      %p154 = por %p152, %p153
      %s156 = sadd.s32 %s155, 1
      %p159 = scmp.eq.s32.totalorder %s16, 1
      %p160 = scmp.ne.s32.totalorder %s155, %s157
      %p161 = scmp.eq.s32.totalorder %s16, 0
      %p162 = por %p160, %p161
      %p163 = scmp.ne.s32.totalorder %s155, %s157
      %p164 = scmp.eq.s32.totalorder %s21, 1
      %p165 = por %p163, %p164
      %p166 = scmp.ne.s32.totalorder %s157, %s158
      %p167 = scmp.eq.s32.totalorder %s21, 0
      %p168 = por %p166, %p167
      %p169 = scmp.ne.s32.totalorder %s157, %s158
      %p170 = scmp.eq.s32.totalorder %s22, 1
      %p171 = por %p169, %p170
      %p173 = scmp.ne.s32.totalorder %s158, %s172
      %p174 = scmp.eq.s32.totalorder %s22, 0
      %p175 = por %p173, %p174
      %s176 = ssub.s32 %s16, %s23
      %p177 = scmp.eq.s32.totalorder %s176, 0
      %s179 = sadd.s32 %s178, 1
      %s180 = scalar_select %p177, %s178, %s179
      %p183 = pneg %p177
      %p184 = scmp.eq.s32.totalorder %s16, 1
      %p185 = por %p183, %p184
      %p186 = scmp.ne.s32.totalorder %s178, %s181
      %p187 = scmp.eq.s32.totalorder %s16, 0
      %p188 = por %p186, %p187
      %p189 = scmp.ne.s32.totalorder %s178, %s181
      %p190 = scmp.eq.s32.totalorder %s21, 1
      %p191 = por %p189, %p190
      %p192 = scmp.ne.s32.totalorder %s181, %s182
      %p193 = scmp.eq.s32.totalorder %s21, 0
      %p194 = por %p192, %p193
      %p195 = scmp.ne.s32.totalorder %s181, %s182
      %p196 = scmp.eq.s32.totalorder %s22, 1
      %p197 = por %p195, %p196
      %p199 = scmp.ne.s32.totalorder %s182, %s198
      %p200 = scmp.eq.s32.totalorder %s22, 0
      %p201 = por %p199, %p200
      %p202 = scmp.le.s32.totalorder 1, %s16
      %p203 = scmp.lt.s32.totalorder %s16, 3
      %p204 = pnand %p202, %p203
      %p205 = pneg %p204
      // Predicated region
      $region9: #{feature_cnn_forward.1} parent=5 // pred_check
        _
      $region10: #{feature_cnn_forward.1} parent=5 // pred_check_branch
        %207 = sbr.rel (%p204) target = $region12
      $region11: #{feature_cnn_forward.1} parent=5 // pred_region
        %s208 = ssub.s32 %s16, 1
        // Predicated region
        $region13: #{feature_cnn_forward.1} parent=11 // pred_check
          %p209 = pneg %p63
        $region14: #{feature_cnn_forward.1} parent=11 // pred_check_branch
          %211 = sbr.rel (%p209) target = $region16
        $region15: #{feature_cnn_forward.1} parent=11 // pred_region
          _
        $region16: #{feature_cnn_forward.1} parent=11 // pred_fallthru
          _
        // Predicated region
        $region17: #{feature_cnn_forward.1} parent=11 // pred_check
          %p212 = pneg %p84
        $region18: #{feature_cnn_forward.1} parent=11 // pred_check_branch
          %214 = sbr.rel (%p212) target = $region20
        $region19: #{feature_cnn_forward.1} parent=11 // pred_region
          _
        $region20: #{feature_cnn_forward.1} parent=11 // pred_fallthru
          _
        // Predicated region
        $region21: #{feature_cnn_forward.1} parent=11 // pred_check
          %p215 = pneg %p105
        $region22: #{feature_cnn_forward.1} parent=11 // pred_check_branch
          %217 = sbr.rel (%p215) target = $region24
        $region23: #{feature_cnn_forward.1} parent=11 // pred_region
          _
        $region24: #{feature_cnn_forward.1} parent=11 // pred_fallthru
          _
        // Predicated region
        $region25: #{feature_cnn_forward.1} parent=11 // pred_check
          %p218 = pneg %p126
        $region26: #{feature_cnn_forward.1} parent=11 // pred_check_branch
          %220 = sbr.rel (%p218) target = $region28
        $region27: #{feature_cnn_forward.1} parent=11 // pred_region
          _
        $region28: #{feature_cnn_forward.1} parent=11 // pred_fallthru
          _
        // Predicated region
        $region29: #{feature_cnn_forward.1} parent=11 // pred_check
          %p221 = pneg %p147
        $region30: #{feature_cnn_forward.1} parent=11 // pred_check_branch
          %223 = sbr.rel (%p221) target = $region32
        $region31: #{feature_cnn_forward.1} parent=11 // pred_region
          _
        $region32: #{feature_cnn_forward.1} parent=11 // pred_fallthru
          _
        // Predicated region
        $region33: #{feature_cnn_forward.1} parent=11 // pred_check
          %p224 = pneg %p168
        $region34: #{feature_cnn_forward.1} parent=11 // pred_check_branch
          %226 = sbr.rel (%p224) target = $region36
        $region35: #{feature_cnn_forward.1} parent=11 // pred_region
          _
        $region36: #{feature_cnn_forward.1} parent=11 // pred_fallthru
          _
      $region12: #{feature_cnn_forward.1} parent=5 // pred_fallthru
        _
      %p227 = scmp.lt.s32.totalorder %s16, 2
      // Predicated region
      $region37: #{feature_cnn_forward.1} parent=5 // pred_check
        %p228 = pneg %p227
      $region38: #{feature_cnn_forward.1} parent=5 // pred_check_branch
        %230 = sbr.rel (%p228) target = $region40
      $region39: #{feature_cnn_forward.1} parent=5 // pred_region
        // Predicated region
        $region41: #{feature_cnn_forward.1} parent=39 // pred_check
          %p231 = pneg %p36
        $region42: #{feature_cnn_forward.1} parent=39 // pred_check_branch
          %233 = sbr.rel (%p231) target = $region44
        $region43: #{feature_cnn_forward.1} parent=39 // pred_region
          %s234 = sand.u32 %s26, 1
          %s235 = sand.u32 %s26, 1
          %s236 = smul.addr %s235, 256
          %s237 = scalar_lea.vmem [#allocation7], %s236
          %s238 = smul.u32 16, %s16
          %s239 = smul.addr %s238, 8
          %s240 = scalar_lea.vmem %s0, %s239
          // Predicated region
          $region45: #{feature_cnn_forward.1} parent=43 // pred_check
            _
          $region46: #{feature_cnn_forward.1} parent=43 // pred_check_branch
            %242 = sbr.rel (0) target = $region48
          $region47: #{feature_cnn_forward.1} parent=43 // pred_region
            // Predicated region
            $region49: #{feature_cnn_forward.1} parent=47 // pred_check
              _
            $region50: #{feature_cnn_forward.1} parent=47 // pred_check_branch
              %244 = sbr.rel (0) target = $region52
            $region51: #{feature_cnn_forward.1} parent=47 // pred_region
              loop: start=0, step=1, limit=1
              $region53: #{feature_cnn_forward.1} parent=51 // loop_pre_header
                _
              $region54: #{feature_cnn_forward.1} parent=51 // loop_header
                %s246 = sphi 0, %s250
                %p247 = scmp.ge.s32.totalorder %s246, 1
                %s251 = sphi %s240, %s240
                %s252 = sphi %s237, %s237
              $region55: #{feature_cnn_forward.1} parent=51 // loop_header_branch
                %249 = sbr.rel (%p247) target = $region59
              $region56: #{feature_cnn_forward.1} parent=51 // loop_body
                %v253 = vld [vmem:[%s251] sm:$0xff]
                %254 = vst [vmem:[%s252] sm:$0xff] %v253
                %v255 = vld [vmem:[%s251 + $0x8] sm:$0xff]
                %256 = vst [vmem:[%s252 + $0x8] sm:$0xff] %v255
                %v257 = vld [vmem:[%s251 + $0x10] sm:$0xff]
                %258 = vst [vmem:[%s252 + $0x10] sm:$0xff] %v257
                %v259 = vld [vmem:[%s251 + $0x18] sm:$0xff]
                %260 = vst [vmem:[%s252 + $0x18] sm:$0xff] %v259
                %v261 = vld [vmem:[%s251 + $0x20] sm:$0xff]
                %262 = vst [vmem:[%s252 + $0x20] sm:$0xff] %v261
                %v263 = vld [vmem:[%s251 + $0x28] sm:$0xff]
                %264 = vst [vmem:[%s252 + $0x28] sm:$0xff] %v263
                %v265 = vld [vmem:[%s251 + $0x30] sm:$0xff]
                %266 = vst [vmem:[%s252 + $0x30] sm:$0xff] %v265
                %v267 = vld [vmem:[%s251 + $0x38] sm:$0xff]
                %268 = vst [vmem:[%s252 + $0x38] sm:$0xff] %v267
                %v269 = vld [vmem:[%s251 + $0x40] sm:$0xff]
                %270 = vst [vmem:[%s252 + $0x40] sm:$0xff] %v269
                %v271 = vld [vmem:[%s251 + $0x48] sm:$0xff]
                %272 = vst [vmem:[%s252 + $0x48] sm:$0xff] %v271
                %v273 = vld [vmem:[%s251 + $0x50] sm:$0xff]
                %274 = vst [vmem:[%s252 + $0x50] sm:$0xff] %v273
                %v275 = vld [vmem:[%s251 + $0x58] sm:$0xff]
                %276 = vst [vmem:[%s252 + $0x58] sm:$0xff] %v275
                %v277 = vld [vmem:[%s251 + $0x60] sm:$0xff]
                %278 = vst [vmem:[%s252 + $0x60] sm:$0xff] %v277
                %v279 = vld [vmem:[%s251 + $0x68] sm:$0xff]
                %280 = vst [vmem:[%s252 + $0x68] sm:$0xff] %v279
                %v281 = vld [vmem:[%s251 + $0x70] sm:$0xff]
                %282 = vst [vmem:[%s252 + $0x70] sm:$0xff] %v281
                %v283 = vld [vmem:[%s251 + $0x78] sm:$0xff]
                %284 = vst [vmem:[%s252 + $0x78] sm:$0xff] %v283
                %v285 = vld [vmem:[%s251 + $0x100] sm:$0xff]
                %286 = vst [vmem:[%s252 + $0x80] sm:$0xff] %v285
                %v287 = vld [vmem:[%s251 + $0x108] sm:$0xff]
                %288 = vst [vmem:[%s252 + $0x88] sm:$0xff] %v287
                %v289 = vld [vmem:[%s251 + $0x110] sm:$0xff]
                %290 = vst [vmem:[%s252 + $0x90] sm:$0xff] %v289
                %v291 = vld [vmem:[%s251 + $0x118] sm:$0xff]
                %292 = vst [vmem:[%s252 + $0x98] sm:$0xff] %v291
                %v293 = vld [vmem:[%s251 + $0x120] sm:$0xff]
                %294 = vst [vmem:[%s252 + $0xa0] sm:$0xff] %v293
                %v295 = vld [vmem:[%s251 + $0x128] sm:$0xff]
                %296 = vst [vmem:[%s252 + $0xa8] sm:$0xff] %v295
                %v297 = vld [vmem:[%s251 + $0x130] sm:$0xff]
                %298 = vst [vmem:[%s252 + $0xb0] sm:$0xff] %v297
                %v299 = vld [vmem:[%s251 + $0x138] sm:$0xff]
                %300 = vst [vmem:[%s252 + $0xb8] sm:$0xff] %v299
                %v301 = vld [vmem:[%s251 + $0x140] sm:$0xff]
                %302 = vst [vmem:[%s252 + $0xc0] sm:$0xff] %v301
                %v303 = vld [vmem:[%s251 + $0x148] sm:$0xff]
                %304 = vst [vmem:[%s252 + $0xc8] sm:$0xff] %v303
                %v305 = vld [vmem:[%s251 + $0x150] sm:$0xff]
                %306 = vst [vmem:[%s252 + $0xd0] sm:$0xff] %v305
                %v307 = vld [vmem:[%s251 + $0x158] sm:$0xff]
                %308 = vst [vmem:[%s252 + $0xd8] sm:$0xff] %v307
                %v309 = vld [vmem:[%s251 + $0x160] sm:$0xff]
                %310 = vst [vmem:[%s252 + $0xe0] sm:$0xff] %v309
                %v311 = vld [vmem:[%s251 + $0x168] sm:$0xff]
                %312 = vst [vmem:[%s252 + $0xe8] sm:$0xff] %v311
                %v313 = vld [vmem:[%s251 + $0x170] sm:$0xff]
                %314 = vst [vmem:[%s252 + $0xf0] sm:$0xff] %v313
                %v315 = vld [vmem:[%s251 + $0x178] sm:$0xff]
                %316 = vst [vmem:[%s252 + $0xf8] sm:$0xff] %v315
              $region57: #{feature_cnn_forward.1} parent=51 // loop_footer
                %s250 = sadd.s32 1, %s246
              $region58: #{feature_cnn_forward.1} parent=51 // loop_footer_branch
                %245 = sbr.rel target = $region54
              $region59: #{feature_cnn_forward.1} parent=51 // loop_exit
                _
            $region52: #{feature_cnn_forward.1} parent=47 // pred_fallthru
              _
            // Predicated region
            $region60: #{feature_cnn_forward.1} parent=47 // pred_check
              _
            $region61: #{feature_cnn_forward.1} parent=47 // pred_check_branch
              %318 = sbr.rel target = $region63
            $region62: #{feature_cnn_forward.1} parent=47 // pred_region
              _
            $region63: #{feature_cnn_forward.1} parent=47 // pred_fallthru
              _
          $region48: #{feature_cnn_forward.1} parent=43 // pred_fallthru
            _
          %319 = vnop
        $region44: #{feature_cnn_forward.1} parent=39 // pred_fallthru
          _
      $region40: #{feature_cnn_forward.1} parent=5 // pred_fallthru
        _
      %p320 = scmp.le.s32.totalorder 1, %s16
      %p321 = scmp.lt.s32.totalorder %s16, 3
      %p322 = pnand %p320, %p321
      %p323 = pneg %p322
      // Predicated region
      $region64: #{feature_cnn_forward.1} parent=5 // pred_check
        _
      $region65: #{feature_cnn_forward.1} parent=5 // pred_check_branch
        %325 = sbr.rel (%p322) target = $region67
      $region66: #{feature_cnn_forward.1} parent=5 // pred_region
        %s326 = ssub.s32 %s16, 1
        %s327 = sand.u32 %s29, 1
        %s328 = sand.u32 %s29, 1
        %s329 = smul.addr %s328, 256
        %s330 = scalar_lea.vmem [#allocation7], %s329
        // Predicated region
        $region68: #{feature_cnn_forward.1} parent=66 // pred_check
          %p331 = pneg %p42
        $region69: #{feature_cnn_forward.1} parent=66 // pred_check_branch
          %333 = sbr.rel (%p331) target = $region71
        $region70: #{feature_cnn_forward.1} parent=66 // pred_region
          _
        $region71: #{feature_cnn_forward.1} parent=66 // pred_fallthru
          _
        %s334 = sand.u32 %s29, 1
        %s335 = sand.u32 %s29, 1
        %s336 = smul.addr %s335, 256
        %s337 = scalar_lea.vmem [#allocation7], %s336
        %p338 = pneg %p42
        %p339 = pneg %p39
        %p340 = pneg %p63
        %p341 = pneg %p60
        %p342 = pneg %p84
        %p343 = pneg %p81
        %p344 = pneg %p105
        %p345 = pneg %p102
        %p346 = pneg %p126
        %p347 = pneg %p123
        %p348 = pneg %p147
        %p349 = pneg %p144
        %p350 = pneg %p168
        %p351 = pneg %p165
        %p352 = pneg %p194
        %p353 = pneg %p191
        %s354 = sand.u32 %s181, 1
        %s355 = scalar_lea.sflag [#allocation9], %s354
        %s356 = sand.u32 %s181, 1
        %s357 = smul.addr %s356, 8
        %s358 = scalar_lea.vmem [#allocation8], %s357
        %s359 = smul.u32 16, %s21
        %v360 = vld [vmem:[%s330] sm:$0xff]
        %v361 = vld [vmem:[%s330 + $0x8] sm:$0xff]
        %v362 = vld [vmem:[%s330 + $0x10] sm:$0xff]
        %v363 = vld [vmem:[%s330 + $0x18] sm:$0xff]
        %v364 = vld [vmem:[%s330 + $0x20] sm:$0xff]
        %v365 = vld [vmem:[%s330 + $0x28] sm:$0xff]
        %v366 = vld [vmem:[%s330 + $0x30] sm:$0xff]
        %v367 = vld [vmem:[%s330 + $0x38] sm:$0xff]
        %v368 = vld [vmem:[%s330 + $0x40] sm:$0xff]
        %v369 = vld [vmem:[%s330 + $0x48] sm:$0xff]
        %v370 = vld [vmem:[%s330 + $0x50] sm:$0xff]
        %v371 = vld [vmem:[%s330 + $0x58] sm:$0xff]
        %v372 = vld [vmem:[%s330 + $0x60] sm:$0xff]
        %v373 = vld [vmem:[%s330 + $0x68] sm:$0xff]
        %v374 = vld [vmem:[%s330 + $0x70] sm:$0xff]
        %v375 = vld [vmem:[%s330 + $0x78] sm:$0xff]
        %v376 = vld [vmem:[%s330 + $0x80] sm:$0x1]
        %v377 = vld [vmem:[%s330 + $0x88] sm:$0x1]
        %v378 = vld [vmem:[%s330 + $0x90] sm:$0x1]
        %v379 = vld [vmem:[%s330 + $0x98] sm:$0x1]
        %v380 = vld [vmem:[%s330 + $0xa0] sm:$0x1]
        %v381 = vld [vmem:[%s330 + $0xa8] sm:$0x1]
        %v382 = vld [vmem:[%s330 + $0xb0] sm:$0x1]
        %v383 = vld [vmem:[%s330 + $0xb8] sm:$0x1]
        %v384 = vld [vmem:[%s330 + $0xc0] sm:$0x1]
        %v385 = vld [vmem:[%s330 + $0xc8] sm:$0x1]
        %v386 = vld [vmem:[%s330 + $0xd0] sm:$0x1]
        %v387 = vld [vmem:[%s330 + $0xd8] sm:$0x1]
        %v388 = vld [vmem:[%s330 + $0xe0] sm:$0x1]
        %v389 = vld [vmem:[%s330 + $0xe8] sm:$0x1]
        %v390 = vld [vmem:[%s330 + $0xf0] sm:$0x1]
        %v391 = vld [vmem:[%s330 + $0xf8] sm:$0x1]
        %v392 = vld [vmem:[%s1] sm:$0xff]
        %v393 = vld [vmem:[%s1 + $0x8] sm:$0x1]
        %v394 = vld [vmem:[%s2] sm:$0x1]
        %v396 = vlaneseq
        %v397 = vshrl.u32 %v396, 7
        %v398 = vsub.s32 0, %v397
        %v399 = vrot.slane %v394, %v398
        %401 = vxpose.xlu0.b32.start [1/16] %v360, 128
        %402 = vxpose.xlu0.b32.cont [2/16] %v376, 128
        %403 = vxpose.xlu0.b32.cont [3/16] 0.0, 128
        %404 = vxpose.xlu0.b32.cont [4/16] 0.0, 128
        %405 = vxpose.xlu0.b32.cont [5/16] 0.0, 128
        %406 = vxpose.xlu0.b32.cont [6/16] 0.0, 128
        %407 = vxpose.xlu0.b32.cont [7/16] 0.0, 128
        %408 = vxpose.xlu0.b32.cont [8/16] 0.0, 128
        %409 = vxpose.xlu0.b32.cont [9/16] 0.0, 128
        %410 = vxpose.xlu0.b32.cont [10/16] 0.0, 128
        %411 = vxpose.xlu0.b32.cont [11/16] 0.0, 128
        %412 = vxpose.xlu0.b32.cont [12/16] 0.0, 128
        %413 = vxpose.xlu0.b32.cont [13/16] 0.0, 128
        %414 = vxpose.xlu0.b32.cont [14/16] 0.0, 128
        %415 = vxpose.xlu0.b32.cont [15/16] 0.0, 128
        %416 = vxpose.xlu0.b32.end [16/16] 0.0, 128
        %v417 = vpop.trf.xlu0
        %v418 = vpop.trf.xlu0
        %v419 = vpop.trf.xlu0
        %v420 = vpop.trf.xlu0
        %v421 = vpop.trf.xlu0
        %v422 = vpop.trf.xlu0
        %v423 = vpop.trf.xlu0
        %v424 = vpop.trf.xlu0
        %v425 = vpop.trf.xlu0
        %v426 = vpop.trf.xlu0
        %v427 = vpop.trf.xlu0
        %v428 = vpop.trf.xlu0
        %v429 = vpop.trf.xlu0
        %v430 = vpop.trf.xlu0
        %v431 = vpop.trf.xlu0
        %v432 = vpop.trf.xlu0
        %433 = vxpose.xlu0.b32.start [1/16] %v361, 128
        %434 = vxpose.xlu0.b32.cont [2/16] %v377, 128
        %435 = vxpose.xlu0.b32.cont [3/16] 0.0, 128
        %436 = vxpose.xlu0.b32.cont [4/16] 0.0, 128
        %437 = vxpose.xlu0.b32.cont [5/16] 0.0, 128
        %438 = vxpose.xlu0.b32.cont [6/16] 0.0, 128
        %439 = vxpose.xlu0.b32.cont [7/16] 0.0, 128
        %440 = vxpose.xlu0.b32.cont [8/16] 0.0, 128
        %441 = vxpose.xlu0.b32.cont [9/16] 0.0, 128
        %442 = vxpose.xlu0.b32.cont [10/16] 0.0, 128
        %443 = vxpose.xlu0.b32.cont [11/16] 0.0, 128
        %444 = vxpose.xlu0.b32.cont [12/16] 0.0, 128
        %445 = vxpose.xlu0.b32.cont [13/16] 0.0, 128
        %446 = vxpose.xlu0.b32.cont [14/16] 0.0, 128
        %447 = vxpose.xlu0.b32.cont [15/16] 0.0, 128
        %448 = vxpose.xlu0.b32.end [16/16] 0.0, 128
        %v449 = vpop.trf.xlu0
        %v450 = vpop.trf.xlu0
        %v451 = vpop.trf.xlu0
        %v452 = vpop.trf.xlu0
        %v453 = vpop.trf.xlu0
        %v454 = vpop.trf.xlu0
        %v455 = vpop.trf.xlu0
        %v456 = vpop.trf.xlu0
        %v457 = vpop.trf.xlu0
        %v458 = vpop.trf.xlu0
        %v459 = vpop.trf.xlu0
        %v460 = vpop.trf.xlu0
        %v461 = vpop.trf.xlu0
        %v462 = vpop.trf.xlu0
        %v463 = vpop.trf.xlu0
        %v464 = vpop.trf.xlu0
        %465 = vxpose.xlu0.b32.start [1/16] %v362, 128
        %466 = vxpose.xlu0.b32.cont [2/16] %v378, 128
        %467 = vxpose.xlu0.b32.cont [3/16] 0.0, 128
        %468 = vxpose.xlu0.b32.cont [4/16] 0.0, 128
        %469 = vxpose.xlu0.b32.cont [5/16] 0.0, 128
        %470 = vxpose.xlu0.b32.cont [6/16] 0.0, 128
        %471 = vxpose.xlu0.b32.cont [7/16] 0.0, 128
        %472 = vxpose.xlu0.b32.cont [8/16] 0.0, 128
        %473 = vxpose.xlu0.b32.cont [9/16] 0.0, 128
        %474 = vxpose.xlu0.b32.cont [10/16] 0.0, 128
        %475 = vxpose.xlu0.b32.cont [11/16] 0.0, 128
        %476 = vxpose.xlu0.b32.cont [12/16] 0.0, 128
        %477 = vxpose.xlu0.b32.cont [13/16] 0.0, 128
        %478 = vxpose.xlu0.b32.cont [14/16] 0.0, 128
        %479 = vxpose.xlu0.b32.cont [15/16] 0.0, 128
        %480 = vxpose.xlu0.b32.end [16/16] 0.0, 128
        %v481 = vpop.trf.xlu0
        %v482 = vpop.trf.xlu0
        %v483 = vpop.trf.xlu0
        %v484 = vpop.trf.xlu0
        %v485 = vpop.trf.xlu0
        %v486 = vpop.trf.xlu0
        %v487 = vpop.trf.xlu0
        %v488 = vpop.trf.xlu0
        %v489 = vpop.trf.xlu0
        %v490 = vpop.trf.xlu0
        %v491 = vpop.trf.xlu0
        %v492 = vpop.trf.xlu0
        %v493 = vpop.trf.xlu0
        %v494 = vpop.trf.xlu0
        %v495 = vpop.trf.xlu0
        %v496 = vpop.trf.xlu0
        %497 = vxpose.xlu0.b32.start [1/16] %v363, 128
        %498 = vxpose.xlu0.b32.cont [2/16] %v379, 128
        %499 = vxpose.xlu0.b32.cont [3/16] 0.0, 128
        %500 = vxpose.xlu0.b32.cont [4/16] 0.0, 128
        %501 = vxpose.xlu0.b32.cont [5/16] 0.0, 128
        %502 = vxpose.xlu0.b32.cont [6/16] 0.0, 128
        %503 = vxpose.xlu0.b32.cont [7/16] 0.0, 128
        %504 = vxpose.xlu0.b32.cont [8/16] 0.0, 128
        %505 = vxpose.xlu0.b32.cont [9/16] 0.0, 128
        %506 = vxpose.xlu0.b32.cont [10/16] 0.0, 128
        %507 = vxpose.xlu0.b32.cont [11/16] 0.0, 128
        %508 = vxpose.xlu0.b32.cont [12/16] 0.0, 128
        %509 = vxpose.xlu0.b32.cont [13/16] 0.0, 128
        %510 = vxpose.xlu0.b32.cont [14/16] 0.0, 128
        %511 = vxpose.xlu0.b32.cont [15/16] 0.0, 128
        %512 = vxpose.xlu0.b32.end [16/16] 0.0, 128
        %v513 = vpop.trf.xlu0
        %v514 = vpop.trf.xlu0
        %v515 = vpop.trf.xlu0
        %v516 = vpop.trf.xlu0
        %v517 = vpop.trf.xlu0
        %v518 = vpop.trf.xlu0
        %v519 = vpop.trf.xlu0
        %v520 = vpop.trf.xlu0
        %v521 = vpop.trf.xlu0
        %v522 = vpop.trf.xlu0
        %v523 = vpop.trf.xlu0
        %v524 = vpop.trf.xlu0
        %v525 = vpop.trf.xlu0
        %v526 = vpop.trf.xlu0
        %v527 = vpop.trf.xlu0
        %v528 = vpop.trf.xlu0
        %529 = vxpose.xlu0.b32.start [1/16] %v364, 128
        %530 = vxpose.xlu0.b32.cont [2/16] %v380, 128
        %531 = vxpose.xlu0.b32.cont [3/16] 0.0, 128
        %532 = vxpose.xlu0.b32.cont [4/16] 0.0, 128
        %533 = vxpose.xlu0.b32.cont [5/16] 0.0, 128
        %534 = vxpose.xlu0.b32.cont [6/16] 0.0, 128
        %535 = vxpose.xlu0.b32.cont [7/16] 0.0, 128
        %536 = vxpose.xlu0.b32.cont [8/16] 0.0, 128
        %537 = vxpose.xlu0.b32.cont [9/16] 0.0, 128
        %538 = vxpose.xlu0.b32.cont [10/16] 0.0, 128
        %539 = vxpose.xlu0.b32.cont [11/16] 0.0, 128
        %540 = vxpose.xlu0.b32.cont [12/16] 0.0, 128
        %541 = vxpose.xlu0.b32.cont [13/16] 0.0, 128
        %542 = vxpose.xlu0.b32.cont [14/16] 0.0, 128
        %543 = vxpose.xlu0.b32.cont [15/16] 0.0, 128
        %544 = vxpose.xlu0.b32.end [16/16] 0.0, 128
        %v545 = vpop.trf.xlu0
        %v546 = vpop.trf.xlu0
        %v547 = vpop.trf.xlu0
        %v548 = vpop.trf.xlu0
        %v549 = vpop.trf.xlu0
        %v550 = vpop.trf.xlu0
        %v551 = vpop.trf.xlu0
        %v552 = vpop.trf.xlu0
        %v553 = vpop.trf.xlu0
        %v554 = vpop.trf.xlu0
        %v555 = vpop.trf.xlu0
        %v556 = vpop.trf.xlu0
        %v557 = vpop.trf.xlu0
        %v558 = vpop.trf.xlu0
        %v559 = vpop.trf.xlu0
        %v560 = vpop.trf.xlu0
        %561 = vxpose.xlu0.b32.start [1/16] %v365, 128
        %562 = vxpose.xlu0.b32.cont [2/16] %v381, 128
        %563 = vxpose.xlu0.b32.cont [3/16] 0.0, 128
        %564 = vxpose.xlu0.b32.cont [4/16] 0.0, 128
        %565 = vxpose.xlu0.b32.cont [5/16] 0.0, 128
        %566 = vxpose.xlu0.b32.cont [6/16] 0.0, 128
        %567 = vxpose.xlu0.b32.cont [7/16] 0.0, 128
        %568 = vxpose.xlu0.b32.cont [8/16] 0.0, 128
        %569 = vxpose.xlu0.b32.cont [9/16] 0.0, 128
        %570 = vxpose.xlu0.b32.cont [10/16] 0.0, 128
        %571 = vxpose.xlu0.b32.cont [11/16] 0.0, 128
        %572 = vxpose.xlu0.b32.cont [12/16] 0.0, 128
        %573 = vxpose.xlu0.b32.cont [13/16] 0.0, 128
        %574 = vxpose.xlu0.b32.cont [14/16] 0.0, 128
        %575 = vxpose.xlu0.b32.cont [15/16] 0.0, 128
        %576 = vxpose.xlu0.b32.end [16/16] 0.0, 128
        %v577 = vpop.trf.xlu0
        %v578 = vpop.trf.xlu0
        %v579 = vpop.trf.xlu0
        %v580 = vpop.trf.xlu0
        %v581 = vpop.trf.xlu0
        %v582 = vpop.trf.xlu0
        %v583 = vpop.trf.xlu0
        %v584 = vpop.trf.xlu0
        %v585 = vpop.trf.xlu0
        %v586 = vpop.trf.xlu0
        %v587 = vpop.trf.xlu0
        %v588 = vpop.trf.xlu0
        %v589 = vpop.trf.xlu0
        %v590 = vpop.trf.xlu0
        %v591 = vpop.trf.xlu0
        %v592 = vpop.trf.xlu0
        %593 = vxpose.xlu0.b32.start [1/16] %v366, 128
        %594 = vxpose.xlu0.b32.cont [2/16] %v382, 128
        %595 = vxpose.xlu0.b32.cont [3/16] 0.0, 128
        %596 = vxpose.xlu0.b32.cont [4/16] 0.0, 128
        %597 = vxpose.xlu0.b32.cont [5/16] 0.0, 128
        %598 = vxpose.xlu0.b32.cont [6/16] 0.0, 128
        %599 = vxpose.xlu0.b32.cont [7/16] 0.0, 128
        %600 = vxpose.xlu0.b32.cont [8/16] 0.0, 128
        %601 = vxpose.xlu0.b32.cont [9/16] 0.0, 128
        %602 = vxpose.xlu0.b32.cont [10/16] 0.0, 128
        %603 = vxpose.xlu0.b32.cont [11/16] 0.0, 128
        %604 = vxpose.xlu0.b32.cont [12/16] 0.0, 128
        %605 = vxpose.xlu0.b32.cont [13/16] 0.0, 128
        %606 = vxpose.xlu0.b32.cont [14/16] 0.0, 128
        %607 = vxpose.xlu0.b32.cont [15/16] 0.0, 128
        %608 = vxpose.xlu0.b32.end [16/16] 0.0, 128
        %v609 = vpop.trf.xlu0
        %v610 = vpop.trf.xlu0
        %v611 = vpop.trf.xlu0
        %v612 = vpop.trf.xlu0
        %v613 = vpop.trf.xlu0
        %v614 = vpop.trf.xlu0
        %v615 = vpop.trf.xlu0
        %v616 = vpop.trf.xlu0
        %v617 = vpop.trf.xlu0
        %v618 = vpop.trf.xlu0
        %v619 = vpop.trf.xlu0
        %v620 = vpop.trf.xlu0
        %v621 = vpop.trf.xlu0
        %v622 = vpop.trf.xlu0
        %v623 = vpop.trf.xlu0
        %v624 = vpop.trf.xlu0
        %625 = vxpose.xlu0.b32.start [1/16] %v367, 128
        %626 = vxpose.xlu0.b32.cont [2/16] %v383, 128
        %627 = vxpose.xlu0.b32.cont [3/16] 0.0, 128
        %628 = vxpose.xlu0.b32.cont [4/16] 0.0, 128
        %629 = vxpose.xlu0.b32.cont [5/16] 0.0, 128
        %630 = vxpose.xlu0.b32.cont [6/16] 0.0, 128
        %631 = vxpose.xlu0.b32.cont [7/16] 0.0, 128
        %632 = vxpose.xlu0.b32.cont [8/16] 0.0, 128
        %633 = vxpose.xlu0.b32.cont [9/16] 0.0, 128
        %634 = vxpose.xlu0.b32.cont [10/16] 0.0, 128
        %635 = vxpose.xlu0.b32.cont [11/16] 0.0, 128
        %636 = vxpose.xlu0.b32.cont [12/16] 0.0, 128
        %637 = vxpose.xlu0.b32.cont [13/16] 0.0, 128
        %638 = vxpose.xlu0.b32.cont [14/16] 0.0, 128
        %639 = vxpose.xlu0.b32.cont [15/16] 0.0, 128
        %640 = vxpose.xlu0.b32.end [16/16] 0.0, 128
        %v641 = vpop.trf.xlu0
        %v642 = vpop.trf.xlu0
        %v643 = vpop.trf.xlu0
        %v644 = vpop.trf.xlu0
        %v645 = vpop.trf.xlu0
        %v646 = vpop.trf.xlu0
        %v647 = vpop.trf.xlu0
        %v648 = vpop.trf.xlu0
        %v649 = vpop.trf.xlu0
        %v650 = vpop.trf.xlu0
        %v651 = vpop.trf.xlu0
        %v652 = vpop.trf.xlu0
        %v653 = vpop.trf.xlu0
        %v654 = vpop.trf.xlu0
        %v655 = vpop.trf.xlu0
        %v656 = vpop.trf.xlu0
        %657 = vxpose.xlu0.b32.start [1/16] %v368, 128
        %658 = vxpose.xlu0.b32.cont [2/16] %v384, 128
        %659 = vxpose.xlu0.b32.cont [3/16] 0.0, 128
        %660 = vxpose.xlu0.b32.cont [4/16] 0.0, 128
        %661 = vxpose.xlu0.b32.cont [5/16] 0.0, 128
        %662 = vxpose.xlu0.b32.cont [6/16] 0.0, 128
        %663 = vxpose.xlu0.b32.cont [7/16] 0.0, 128
        %664 = vxpose.xlu0.b32.cont [8/16] 0.0, 128
        %665 = vxpose.xlu0.b32.cont [9/16] 0.0, 128
        %666 = vxpose.xlu0.b32.cont [10/16] 0.0, 128
        %667 = vxpose.xlu0.b32.cont [11/16] 0.0, 128
        %668 = vxpose.xlu0.b32.cont [12/16] 0.0, 128
        %669 = vxpose.xlu0.b32.cont [13/16] 0.0, 128
        %670 = vxpose.xlu0.b32.cont [14/16] 0.0, 128
        %671 = vxpose.xlu0.b32.cont [15/16] 0.0, 128
        %672 = vxpose.xlu0.b32.end [16/16] 0.0, 128
        %v673 = vpop.trf.xlu0
        %v674 = vpop.trf.xlu0
        %v675 = vpop.trf.xlu0
        %v676 = vpop.trf.xlu0
        %v677 = vpop.trf.xlu0
        %v678 = vpop.trf.xlu0
        %v679 = vpop.trf.xlu0
        %v680 = vpop.trf.xlu0
        %v681 = vpop.trf.xlu0
        %v682 = vpop.trf.xlu0
        %v683 = vpop.trf.xlu0
        %v684 = vpop.trf.xlu0
        %v685 = vpop.trf.xlu0
        %v686 = vpop.trf.xlu0
        %v687 = vpop.trf.xlu0
        %v688 = vpop.trf.xlu0
        %689 = vxpose.xlu0.b32.start [1/16] %v369, 128
        %690 = vxpose.xlu0.b32.cont [2/16] %v385, 128
        %691 = vxpose.xlu0.b32.cont [3/16] 0.0, 128
        %692 = vxpose.xlu0.b32.cont [4/16] 0.0, 128
        %693 = vxpose.xlu0.b32.cont [5/16] 0.0, 128
        %694 = vxpose.xlu0.b32.cont [6/16] 0.0, 128
        %695 = vxpose.xlu0.b32.cont [7/16] 0.0, 128
        %696 = vxpose.xlu0.b32.cont [8/16] 0.0, 128
        %697 = vxpose.xlu0.b32.cont [9/16] 0.0, 128
        %698 = vxpose.xlu0.b32.cont [10/16] 0.0, 128
        %699 = vxpose.xlu0.b32.cont [11/16] 0.0, 128
        %700 = vxpose.xlu0.b32.cont [12/16] 0.0, 128
        %701 = vxpose.xlu0.b32.cont [13/16] 0.0, 128
        %702 = vxpose.xlu0.b32.cont [14/16] 0.0, 128
        %703 = vxpose.xlu0.b32.cont [15/16] 0.0, 128
        %704 = vxpose.xlu0.b32.end [16/16] 0.0, 128
        %v705 = vpop.trf.xlu0
        %v706 = vpop.trf.xlu0
        %v707 = vpop.trf.xlu0
        %v708 = vpop.trf.xlu0
        %v709 = vpop.trf.xlu0
        %v710 = vpop.trf.xlu0
        %v711 = vpop.trf.xlu0
        %v712 = vpop.trf.xlu0
        %v713 = vpop.trf.xlu0
        %v714 = vpop.trf.xlu0
        %v715 = vpop.trf.xlu0
        %v716 = vpop.trf.xlu0
        %v717 = vpop.trf.xlu0
        %v718 = vpop.trf.xlu0
        %v719 = vpop.trf.xlu0
        %v720 = vpop.trf.xlu0
        %721 = vxpose.xlu0.b32.start [1/16] %v370, 128
        %722 = vxpose.xlu0.b32.cont [2/16] %v386, 128
        %723 = vxpose.xlu0.b32.cont [3/16] 0.0, 128
        %724 = vxpose.xlu0.b32.cont [4/16] 0.0, 128
        %725 = vxpose.xlu0.b32.cont [5/16] 0.0, 128
        %726 = vxpose.xlu0.b32.cont [6/16] 0.0, 128
        %727 = vxpose.xlu0.b32.cont [7/16] 0.0, 128
        %728 = vxpose.xlu0.b32.cont [8/16] 0.0, 128
        %729 = vxpose.xlu0.b32.cont [9/16] 0.0, 128
        %730 = vxpose.xlu0.b32.cont [10/16] 0.0, 128
        %731 = vxpose.xlu0.b32.cont [11/16] 0.0, 128
        %732 = vxpose.xlu0.b32.cont [12/16] 0.0, 128
        %733 = vxpose.xlu0.b32.cont [13/16] 0.0, 128
        %734 = vxpose.xlu0.b32.cont [14/16] 0.0, 128
        %735 = vxpose.xlu0.b32.cont [15/16] 0.0, 128
        %736 = vxpose.xlu0.b32.end [16/16] 0.0, 128
        %v737 = vpop.trf.xlu0
        %v738 = vpop.trf.xlu0
        %v739 = vpop.trf.xlu0
        %v740 = vpop.trf.xlu0
        %v741 = vpop.trf.xlu0
        %v742 = vpop.trf.xlu0
        %v743 = vpop.trf.xlu0
        %v744 = vpop.trf.xlu0
        %v745 = vpop.trf.xlu0
        %v746 = vpop.trf.xlu0
        %v747 = vpop.trf.xlu0
        %v748 = vpop.trf.xlu0
        %v749 = vpop.trf.xlu0
        %v750 = vpop.trf.xlu0
        %v751 = vpop.trf.xlu0
        %v752 = vpop.trf.xlu0
        %753 = vxpose.xlu0.b32.start [1/16] %v371, 128
        %754 = vxpose.xlu0.b32.cont [2/16] %v387, 128
        %755 = vxpose.xlu0.b32.cont [3/16] 0.0, 128
        %756 = vxpose.xlu0.b32.cont [4/16] 0.0, 128
        %757 = vxpose.xlu0.b32.cont [5/16] 0.0, 128
        %758 = vxpose.xlu0.b32.cont [6/16] 0.0, 128
        %759 = vxpose.xlu0.b32.cont [7/16] 0.0, 128
        %760 = vxpose.xlu0.b32.cont [8/16] 0.0, 128
        %761 = vxpose.xlu0.b32.cont [9/16] 0.0, 128
        %762 = vxpose.xlu0.b32.cont [10/16] 0.0, 128
        %763 = vxpose.xlu0.b32.cont [11/16] 0.0, 128
        %764 = vxpose.xlu0.b32.cont [12/16] 0.0, 128
        %765 = vxpose.xlu0.b32.cont [13/16] 0.0, 128
        %766 = vxpose.xlu0.b32.cont [14/16] 0.0, 128
        %767 = vxpose.xlu0.b32.cont [15/16] 0.0, 128
        %768 = vxpose.xlu0.b32.end [16/16] 0.0, 128
        %v769 = vpop.trf.xlu0
        %v770 = vpop.trf.xlu0
        %v771 = vpop.trf.xlu0
        %v772 = vpop.trf.xlu0
        %v773 = vpop.trf.xlu0
        %v774 = vpop.trf.xlu0
        %v775 = vpop.trf.xlu0
        %v776 = vpop.trf.xlu0
        %v777 = vpop.trf.xlu0
        %v778 = vpop.trf.xlu0
        %v779 = vpop.trf.xlu0
        %v780 = vpop.trf.xlu0
        %v781 = vpop.trf.xlu0
        %v782 = vpop.trf.xlu0
        %v783 = vpop.trf.xlu0
        %v784 = vpop.trf.xlu0
        %785 = vxpose.xlu0.b32.start [1/16] %v372, 128
        %786 = vxpose.xlu0.b32.cont [2/16] %v388, 128
        %787 = vxpose.xlu0.b32.cont [3/16] 0.0, 128
        %788 = vxpose.xlu0.b32.cont [4/16] 0.0, 128
        %789 = vxpose.xlu0.b32.cont [5/16] 0.0, 128
        %790 = vxpose.xlu0.b32.cont [6/16] 0.0, 128
        %791 = vxpose.xlu0.b32.cont [7/16] 0.0, 128
        %792 = vxpose.xlu0.b32.cont [8/16] 0.0, 128
        %793 = vxpose.xlu0.b32.cont [9/16] 0.0, 128
        %794 = vxpose.xlu0.b32.cont [10/16] 0.0, 128
        %795 = vxpose.xlu0.b32.cont [11/16] 0.0, 128
        %796 = vxpose.xlu0.b32.cont [12/16] 0.0, 128
        %797 = vxpose.xlu0.b32.cont [13/16] 0.0, 128
        %798 = vxpose.xlu0.b32.cont [14/16] 0.0, 128
        %799 = vxpose.xlu0.b32.cont [15/16] 0.0, 128
        %800 = vxpose.xlu0.b32.end [16/16] 0.0, 128
        %v801 = vpop.trf.xlu0
        %v802 = vpop.trf.xlu0
        %v803 = vpop.trf.xlu0
        %v804 = vpop.trf.xlu0
        %v805 = vpop.trf.xlu0
        %v806 = vpop.trf.xlu0
        %v807 = vpop.trf.xlu0
        %v808 = vpop.trf.xlu0
        %v809 = vpop.trf.xlu0
        %v810 = vpop.trf.xlu0
        %v811 = vpop.trf.xlu0
        %v812 = vpop.trf.xlu0
        %v813 = vpop.trf.xlu0
        %v814 = vpop.trf.xlu0
        %v815 = vpop.trf.xlu0
        %v816 = vpop.trf.xlu0
        %817 = vxpose.xlu0.b32.start [1/16] %v373, 128
        %818 = vxpose.xlu0.b32.cont [2/16] %v389, 128
        %819 = vxpose.xlu0.b32.cont [3/16] 0.0, 128
        %820 = vxpose.xlu0.b32.cont [4/16] 0.0, 128
        %821 = vxpose.xlu0.b32.cont [5/16] 0.0, 128
        %822 = vxpose.xlu0.b32.cont [6/16] 0.0, 128
        %823 = vxpose.xlu0.b32.cont [7/16] 0.0, 128
        %824 = vxpose.xlu0.b32.cont [8/16] 0.0, 128
        %825 = vxpose.xlu0.b32.cont [9/16] 0.0, 128
        %826 = vxpose.xlu0.b32.cont [10/16] 0.0, 128
        %827 = vxpose.xlu0.b32.cont [11/16] 0.0, 128
        %828 = vxpose.xlu0.b32.cont [12/16] 0.0, 128
        %829 = vxpose.xlu0.b32.cont [13/16] 0.0, 128
        %830 = vxpose.xlu0.b32.cont [14/16] 0.0, 128
        %831 = vxpose.xlu0.b32.cont [15/16] 0.0, 128
        %832 = vxpose.xlu0.b32.end [16/16] 0.0, 128
        %v833 = vpop.trf.xlu0
        %v834 = vpop.trf.xlu0
        %v835 = vpop.trf.xlu0
        %v836 = vpop.trf.xlu0
        %v837 = vpop.trf.xlu0
        %v838 = vpop.trf.xlu0
        %v839 = vpop.trf.xlu0
        %v840 = vpop.trf.xlu0
        %v841 = vpop.trf.xlu0
        %v842 = vpop.trf.xlu0
        %v843 = vpop.trf.xlu0
        %v844 = vpop.trf.xlu0
        %v845 = vpop.trf.xlu0
        %v846 = vpop.trf.xlu0
        %v847 = vpop.trf.xlu0
        %v848 = vpop.trf.xlu0
        %849 = vxpose.xlu0.b32.start [1/16] %v374, 128
        %850 = vxpose.xlu0.b32.cont [2/16] %v390, 128
        %851 = vxpose.xlu0.b32.cont [3/16] 0.0, 128
        %852 = vxpose.xlu0.b32.cont [4/16] 0.0, 128
        %853 = vxpose.xlu0.b32.cont [5/16] 0.0, 128
        %854 = vxpose.xlu0.b32.cont [6/16] 0.0, 128
        %855 = vxpose.xlu0.b32.cont [7/16] 0.0, 128
        %856 = vxpose.xlu0.b32.cont [8/16] 0.0, 128
        %857 = vxpose.xlu0.b32.cont [9/16] 0.0, 128
        %858 = vxpose.xlu0.b32.cont [10/16] 0.0, 128
        %859 = vxpose.xlu0.b32.cont [11/16] 0.0, 128
        %860 = vxpose.xlu0.b32.cont [12/16] 0.0, 128
        %861 = vxpose.xlu0.b32.cont [13/16] 0.0, 128
        %862 = vxpose.xlu0.b32.cont [14/16] 0.0, 128
        %863 = vxpose.xlu0.b32.cont [15/16] 0.0, 128
        %864 = vxpose.xlu0.b32.end [16/16] 0.0, 128
        %v865 = vpop.trf.xlu0
        %v866 = vpop.trf.xlu0
        %v867 = vpop.trf.xlu0
        %v868 = vpop.trf.xlu0
        %v869 = vpop.trf.xlu0
        %v870 = vpop.trf.xlu0
        %v871 = vpop.trf.xlu0
        %v872 = vpop.trf.xlu0
        %v873 = vpop.trf.xlu0
        %v874 = vpop.trf.xlu0
        %v875 = vpop.trf.xlu0
        %v876 = vpop.trf.xlu0
        %v877 = vpop.trf.xlu0
        %v878 = vpop.trf.xlu0
        %v879 = vpop.trf.xlu0
        %v880 = vpop.trf.xlu0
        %881 = vxpose.xlu0.b32.start [1/16] %v375, 128
        %882 = vxpose.xlu0.b32.cont [2/16] %v391, 128
        %883 = vxpose.xlu0.b32.cont [3/16] 0.0, 128
        %884 = vxpose.xlu0.b32.cont [4/16] 0.0, 128
        %885 = vxpose.xlu0.b32.cont [5/16] 0.0, 128
        %886 = vxpose.xlu0.b32.cont [6/16] 0.0, 128
        %887 = vxpose.xlu0.b32.cont [7/16] 0.0, 128
        %888 = vxpose.xlu0.b32.cont [8/16] 0.0, 128
        %889 = vxpose.xlu0.b32.cont [9/16] 0.0, 128
        %890 = vxpose.xlu0.b32.cont [10/16] 0.0, 128
        %891 = vxpose.xlu0.b32.cont [11/16] 0.0, 128
        %892 = vxpose.xlu0.b32.cont [12/16] 0.0, 128
        %893 = vxpose.xlu0.b32.cont [13/16] 0.0, 128
        %894 = vxpose.xlu0.b32.cont [14/16] 0.0, 128
        %895 = vxpose.xlu0.b32.cont [15/16] 0.0, 128
        %896 = vxpose.xlu0.b32.end [16/16] 0.0, 128
        %v897 = vpop.trf.xlu0
        %v898 = vpop.trf.xlu0
        %v899 = vpop.trf.xlu0
        %v900 = vpop.trf.xlu0
        %v901 = vpop.trf.xlu0
        %v902 = vpop.trf.xlu0
        %v903 = vpop.trf.xlu0
        %v904 = vpop.trf.xlu0
        %v905 = vpop.trf.xlu0
        %v906 = vpop.trf.xlu0
        %v907 = vpop.trf.xlu0
        %v908 = vpop.trf.xlu0
        %v909 = vpop.trf.xlu0
        %v910 = vpop.trf.xlu0
        %v911 = vpop.trf.xlu0
        %v912 = vpop.trf.xlu0
        %vm913 = vcmask 72704
        %v915 = vsel %vm913, %v417, 0
        %v918 = vsel %vm913, %v418, 0
        %v921 = vsel %vm913, %v419, 0
        %v924 = vsel %vm913, %v420, 0
        %v927 = vsel %vm913, %v421, 0
        %v930 = vsel %vm913, %v422, 0
        %v933 = vsel %vm913, %v423, 0
        %v936 = vsel %vm913, %v424, 0
        %v939 = vsel %vm913, %v425, 0
        %v942 = vsel %vm913, %v426, 0
        %v945 = vsel %vm913, %v427, 0
        %v948 = vsel %vm913, %v428, 0
        %v951 = vsel %vm913, %v429, 0
        %v954 = vsel %vm913, %v430, 0
        %v957 = vsel %vm913, %v431, 0
        %v960 = vsel %vm913, %v432, 0
        %v963 = vsel %vm913, %v449, 0
        %v966 = vsel %vm913, %v450, 0
        %v969 = vsel %vm913, %v451, 0
        %v972 = vsel %vm913, %v452, 0
        %v975 = vsel %vm913, %v453, 0
        %v978 = vsel %vm913, %v454, 0
        %v981 = vsel %vm913, %v455, 0
        %v984 = vsel %vm913, %v456, 0
        %v987 = vsel %vm913, %v457, 0
        %v990 = vsel %vm913, %v458, 0
        %v993 = vsel %vm913, %v459, 0
        %v996 = vsel %vm913, %v460, 0
        %v999 = vsel %vm913, %v461, 0
        %v1002 = vsel %vm913, %v462, 0
        %v1005 = vsel %vm913, %v463, 0
        %v1008 = vsel %vm913, %v464, 0
        %v1011 = vsel %vm913, %v481, 0
        %v1014 = vsel %vm913, %v482, 0
        %v1017 = vsel %vm913, %v483, 0
        %v1020 = vsel %vm913, %v484, 0
        %v1023 = vsel %vm913, %v485, 0
        %v1026 = vsel %vm913, %v486, 0
        %v1029 = vsel %vm913, %v487, 0
        %v1032 = vsel %vm913, %v488, 0
        %v1035 = vsel %vm913, %v489, 0
        %v1038 = vsel %vm913, %v490, 0
        %v1041 = vsel %vm913, %v491, 0
        %v1044 = vsel %vm913, %v492, 0
        %v1047 = vsel %vm913, %v493, 0
        %v1050 = vsel %vm913, %v494, 0
        %v1053 = vsel %vm913, %v495, 0
        %v1056 = vsel %vm913, %v496, 0
        %v1059 = vsel %vm913, %v513, 0
        %v1062 = vsel %vm913, %v514, 0
        %v1065 = vsel %vm913, %v515, 0
        %v1068 = vsel %vm913, %v516, 0
        %v1071 = vsel %vm913, %v517, 0
        %v1074 = vsel %vm913, %v518, 0
        %v1077 = vsel %vm913, %v519, 0
        %v1080 = vsel %vm913, %v520, 0
        %v1083 = vsel %vm913, %v521, 0
        %v1086 = vsel %vm913, %v522, 0
        %v1089 = vsel %vm913, %v523, 0
        %v1092 = vsel %vm913, %v524, 0
        %v1095 = vsel %vm913, %v525, 0
        %v1098 = vsel %vm913, %v526, 0
        %v1101 = vsel %vm913, %v527, 0
        %v1104 = vsel %vm913, %v528, 0
        %v1107 = vsel %vm913, %v545, 0
        %v1110 = vsel %vm913, %v546, 0
        %v1113 = vsel %vm913, %v547, 0
        %v1116 = vsel %vm913, %v548, 0
        %v1119 = vsel %vm913, %v549, 0
        %v1122 = vsel %vm913, %v550, 0
        %v1125 = vsel %vm913, %v551, 0
        %v1128 = vsel %vm913, %v552, 0
        %v1131 = vsel %vm913, %v553, 0
        %v1134 = vsel %vm913, %v554, 0
        %v1137 = vsel %vm913, %v555, 0
        %v1140 = vsel %vm913, %v556, 0
        %v1143 = vsel %vm913, %v557, 0
        %v1146 = vsel %vm913, %v558, 0
        %v1149 = vsel %vm913, %v559, 0
        %v1152 = vsel %vm913, %v560, 0
        %v1155 = vsel %vm913, %v577, 0
        %v1158 = vsel %vm913, %v578, 0
        %v1161 = vsel %vm913, %v579, 0
        %v1164 = vsel %vm913, %v580, 0
        %v1167 = vsel %vm913, %v581, 0
        %v1170 = vsel %vm913, %v582, 0
        %v1173 = vsel %vm913, %v583, 0
        %v1176 = vsel %vm913, %v584, 0
        %v1179 = vsel %vm913, %v585, 0
        %v1182 = vsel %vm913, %v586, 0
        %v1185 = vsel %vm913, %v587, 0
        %v1188 = vsel %vm913, %v588, 0
        %v1191 = vsel %vm913, %v589, 0
        %v1194 = vsel %vm913, %v590, 0
        %v1197 = vsel %vm913, %v591, 0
        %v1200 = vsel %vm913, %v592, 0
        %v1203 = vsel %vm913, %v609, 0
        %v1206 = vsel %vm913, %v610, 0
        %v1209 = vsel %vm913, %v611, 0
        %v1212 = vsel %vm913, %v612, 0
        %v1215 = vsel %vm913, %v613, 0
        %v1218 = vsel %vm913, %v614, 0
        %v1221 = vsel %vm913, %v615, 0
        %v1224 = vsel %vm913, %v616, 0
        %v1227 = vsel %vm913, %v617, 0
        %v1230 = vsel %vm913, %v618, 0
        %v1233 = vsel %vm913, %v619, 0
        %v1236 = vsel %vm913, %v620, 0
        %v1239 = vsel %vm913, %v621, 0
        %v1242 = vsel %vm913, %v622, 0
        %v1245 = vsel %vm913, %v623, 0
        %v1248 = vsel %vm913, %v624, 0
        %v1251 = vsel %vm913, %v641, 0
        %v1254 = vsel %vm913, %v642, 0
        %v1257 = vsel %vm913, %v643, 0
        %v1260 = vsel %vm913, %v644, 0
        %v1263 = vsel %vm913, %v645, 0
        %v1266 = vsel %vm913, %v646, 0
        %v1269 = vsel %vm913, %v647, 0
        %v1272 = vsel %vm913, %v648, 0
        %v1275 = vsel %vm913, %v649, 0
        %v1278 = vsel %vm913, %v650, 0
        %v1281 = vsel %vm913, %v651, 0
        %v1284 = vsel %vm913, %v652, 0
        %v1287 = vsel %vm913, %v653, 0
        %v1290 = vsel %vm913, %v654, 0
        %v1293 = vsel %vm913, %v655, 0
        %v1296 = vsel %vm913, %v656, 0
        %v1299 = vsel %vm913, %v673, 0
        %v1302 = vsel %vm913, %v674, 0
        %v1305 = vsel %vm913, %v675, 0
        %v1308 = vsel %vm913, %v676, 0
        %v1311 = vsel %vm913, %v677, 0
        %v1314 = vsel %vm913, %v678, 0
        %v1317 = vsel %vm913, %v679, 0
        %v1320 = vsel %vm913, %v680, 0
        %v1323 = vsel %vm913, %v681, 0
        %v1326 = vsel %vm913, %v682, 0
        %v1329 = vsel %vm913, %v683, 0
        %v1332 = vsel %vm913, %v684, 0
        %v1335 = vsel %vm913, %v685, 0
        %v1338 = vsel %vm913, %v686, 0
        %v1341 = vsel %vm913, %v687, 0
        %v1344 = vsel %vm913, %v688, 0
        %v1347 = vsel %vm913, %v705, 0
        %v1350 = vsel %vm913, %v706, 0
        %v1353 = vsel %vm913, %v707, 0
        %v1356 = vsel %vm913, %v708, 0
        %v1359 = vsel %vm913, %v709, 0
        %v1362 = vsel %vm913, %v710, 0
        %v1365 = vsel %vm913, %v711, 0
        %v1368 = vsel %vm913, %v712, 0
        %v1371 = vsel %vm913, %v713, 0
        %v1374 = vsel %vm913, %v714, 0
        %v1377 = vsel %vm913, %v715, 0
        %v1380 = vsel %vm913, %v716, 0
        %v1383 = vsel %vm913, %v717, 0
        %v1386 = vsel %vm913, %v718, 0
        %v1389 = vsel %vm913, %v719, 0
        %v1392 = vsel %vm913, %v720, 0
        %v1395 = vsel %vm913, %v737, 0
        %v1398 = vsel %vm913, %v738, 0
        %v1401 = vsel %vm913, %v739, 0
        %v1404 = vsel %vm913, %v740, 0
        %v1407 = vsel %vm913, %v741, 0
        %v1410 = vsel %vm913, %v742, 0
        %v1413 = vsel %vm913, %v743, 0
        %v1416 = vsel %vm913, %v744, 0
        %v1419 = vsel %vm913, %v745, 0
        %v1422 = vsel %vm913, %v746, 0
        %v1425 = vsel %vm913, %v747, 0
        %v1428 = vsel %vm913, %v748, 0
        %v1431 = vsel %vm913, %v749, 0
        %v1434 = vsel %vm913, %v750, 0
        %v1437 = vsel %vm913, %v751, 0
        %v1440 = vsel %vm913, %v752, 0
        %v1443 = vsel %vm913, %v769, 0
        %v1446 = vsel %vm913, %v770, 0
        %v1449 = vsel %vm913, %v771, 0
        %v1452 = vsel %vm913, %v772, 0
        %v1455 = vsel %vm913, %v773, 0
        %v1458 = vsel %vm913, %v774, 0
        %v1461 = vsel %vm913, %v775, 0
        %v1464 = vsel %vm913, %v776, 0
        %v1467 = vsel %vm913, %v777, 0
        %v1470 = vsel %vm913, %v778, 0
        %v1473 = vsel %vm913, %v779, 0
        %v1476 = vsel %vm913, %v780, 0
        %v1479 = vsel %vm913, %v781, 0
        %v1482 = vsel %vm913, %v782, 0
        %v1485 = vsel %vm913, %v783, 0
        %v1488 = vsel %vm913, %v784, 0
        %v1491 = vsel %vm913, %v801, 0
        %v1494 = vsel %vm913, %v802, 0
        %v1497 = vsel %vm913, %v803, 0
        %v1500 = vsel %vm913, %v804, 0
        %v1503 = vsel %vm913, %v805, 0
        %v1506 = vsel %vm913, %v806, 0
        %v1509 = vsel %vm913, %v807, 0
        %v1512 = vsel %vm913, %v808, 0
        %v1515 = vsel %vm913, %v809, 0
        %v1518 = vsel %vm913, %v810, 0
        %v1521 = vsel %vm913, %v811, 0
        %v1524 = vsel %vm913, %v812, 0
        %v1527 = vsel %vm913, %v813, 0
        %v1530 = vsel %vm913, %v814, 0
        %v1533 = vsel %vm913, %v815, 0
        %v1536 = vsel %vm913, %v816, 0
        %v1539 = vsel %vm913, %v833, 0
        %v1542 = vsel %vm913, %v834, 0
        %v1545 = vsel %vm913, %v835, 0
        %v1548 = vsel %vm913, %v836, 0
        %v1551 = vsel %vm913, %v837, 0
        %v1554 = vsel %vm913, %v838, 0
        %v1557 = vsel %vm913, %v839, 0
        %v1560 = vsel %vm913, %v840, 0
        %v1563 = vsel %vm913, %v841, 0
        %v1566 = vsel %vm913, %v842, 0
        %v1569 = vsel %vm913, %v843, 0
        %v1572 = vsel %vm913, %v844, 0
        %v1575 = vsel %vm913, %v845, 0
        %v1578 = vsel %vm913, %v846, 0
        %v1581 = vsel %vm913, %v847, 0
        %v1584 = vsel %vm913, %v848, 0
        %v1587 = vsel %vm913, %v865, 0
        %v1590 = vsel %vm913, %v866, 0
        %v1593 = vsel %vm913, %v867, 0
        %v1596 = vsel %vm913, %v868, 0
        %v1599 = vsel %vm913, %v869, 0
        %v1602 = vsel %vm913, %v870, 0
        %v1605 = vsel %vm913, %v871, 0
        %v1608 = vsel %vm913, %v872, 0
        %v1611 = vsel %vm913, %v873, 0
        %v1614 = vsel %vm913, %v874, 0
        %v1617 = vsel %vm913, %v875, 0
        %v1620 = vsel %vm913, %v876, 0
        %v1623 = vsel %vm913, %v877, 0
        %v1626 = vsel %vm913, %v878, 0
        %v1629 = vsel %vm913, %v879, 0
        %v1632 = vsel %vm913, %v880, 0
        %v1635 = vsel %vm913, %v897, 0
        %v1638 = vsel %vm913, %v898, 0
        %v1641 = vsel %vm913, %v899, 0
        %v1644 = vsel %vm913, %v900, 0
        %v1647 = vsel %vm913, %v901, 0
        %v1650 = vsel %vm913, %v902, 0
        %v1653 = vsel %vm913, %v903, 0
        %v1656 = vsel %vm913, %v904, 0
        %v1659 = vsel %vm913, %v905, 0
        %v1662 = vsel %vm913, %v906, 0
        %v1665 = vsel %vm913, %v907, 0
        %v1668 = vsel %vm913, %v908, 0
        %v1671 = vsel %vm913, %v909, 0
        %v1674 = vsel %vm913, %v910, 0
        %v1677 = vsel %vm913, %v911, 0
        %v1680 = vsel %vm913, %v912, 0
        %vm1682 = vcmask 1040384
        %v1684 = vsel %vm1682, %v393, 0
        %1686 = vmatprep.subr.mxu0 0.0
        %1687 = vmatpush1.msra.mxu0 %v392
        %1688 = vmatprep.subr.mxu0 0.0
        %1689 = vmatpush1.msra.mxu0 %v1684
        %1690 = vmatprep.subr.mxu0 0.0
        %1691 = vmatpush1.msra.mxu0 0.0
        %1692 = vmatprep.subr.mxu0 0.0
        %1693 = vmatpush1.msra.mxu0 0.0
        %1694 = vmatprep.subr.mxu0 0.0
        %1695 = vmatpush1.msra.mxu0 0.0
        %1696 = vmatprep.subr.mxu0 0.0
        %1697 = vmatpush1.msra.mxu0 0.0
        %1698 = vmatprep.subr.mxu0 0.0
        %1699 = vmatpush1.msra.mxu0 0.0
        %1700 = vmatprep.subr.mxu0 0.0
        %1701 = vmatpush1.msra.mxu0 0.0
        %1702 = vmatprep.subr.mxu0 0.0
        %1703 = vmatpush1.msra.mxu0 0.0
        %1704 = vmatprep.subr.mxu0 0.0
        %1705 = vmatpush1.msra.mxu0 0.0
        %1706 = vmatprep.subr.mxu0 0.0
        %1707 = vmatpush1.msra.mxu0 0.0
        %1708 = vmatprep.subr.mxu0 0.0
        %1709 = vmatpush1.msra.mxu0 0.0
        %1710 = vmatprep.subr.mxu0 0.0
        %1711 = vmatpush1.msra.mxu0 0.0
        %1712 = vmatprep.subr.mxu0 0.0
        %1713 = vmatpush1.msra.mxu0 0.0
        %1714 = vmatprep.subr.mxu0 0.0
        %1715 = vmatpush1.msra.mxu0 0.0
        %1716 = vmatprep.subr.mxu0 0.0
        %1717 = vmatpush1.msra.mxu0 0.0
        %1718 = vmatprep.subr.mxu0 0.0
        %1719 = vmatpush1.msra.mxu0 0.0
        %1720 = vmatprep.subr.mxu0 0.0
        %1721 = vmatpush1.msra.mxu0 0.0
        %1722 = vmatprep.subr.mxu0 0.0
        %1723 = vmatpush1.msra.mxu0 0.0
        %1724 = vmatprep.subr.mxu0 0.0
        %1725 = vmatpush1.msra.mxu0 0.0
        %1726 = vmatprep.subr.mxu0 0.0
        %1727 = vmatpush1.msra.mxu0 0.0
        %1728 = vmatprep.subr.mxu0 0.0
        %1729 = vmatpush1.msra.mxu0 0.0
        %1730 = vmatprep.subr.mxu0 0.0
        %1731 = vmatpush1.msra.mxu0 0.0
        %1732 = vmatprep.subr.mxu0 0.0
        %1733 = vmatpush1.msra.mxu0 0.0
        %1734 = vmatprep.subr.mxu0 0.0
        %1735 = vmatpush1.msra.mxu0 0.0
        %1736 = vmatprep.subr.mxu0 0.0
        %1737 = vmatpush1.msra.mxu0 0.0
        %1738 = vmatprep.subr.mxu0 0.0
        %1739 = vmatpush1.msra.mxu0 0.0
        %1740 = vmatprep.subr.mxu0 0.0
        %1741 = vmatpush1.msra.mxu0 0.0
        %1742 = vmatprep.subr.mxu0 0.0
        %1743 = vmatpush1.msra.mxu0 0.0
        %1744 = vmatprep.subr.mxu0 0.0
        %1745 = vmatpush1.msra.mxu0 0.0
        %1746 = vmatprep.subr.mxu0 0.0
        %1747 = vmatpush1.msra.mxu0 0.0
        %1748 = vmatprep.subr.mxu0 0.0
        %1749 = vmatpush1.msra.mxu0 0.0
        %1750 = vmatprep.mubr.f32.mxu0 0.0
        %1751 = vmatmul.mubr.f32.gmra.mrb[0].mxu0 %v915
        %v1752 = vpop.f32.mrb[0].mxu0
        %v1753 = vadd.f32 %v399, %v1752
        %v1754 = vpop.f32.mrb[0].mxu0
        %1755 = vmatprep.mubr.f32.mxu0 0.0
        %1756 = vmatmul.mubr.f32.gmra.mrb[0].mxu0 %v918
        %v1757 = vpop.f32.mrb[0].mxu0
        %v1758 = vadd.f32 %v399, %v1757
        %v1759 = vpop.f32.mrb[0].mxu0
        %1760 = vmatprep.mubr.f32.mxu0 0.0
        %1761 = vmatmul.mubr.f32.gmra.mrb[0].mxu0 %v921
        %v1762 = vpop.f32.mrb[0].mxu0
        %v1763 = vadd.f32 %v399, %v1762
        %v1764 = vpop.f32.mrb[0].mxu0
        %1765 = vmatprep.mubr.f32.mxu0 0.0
        %1766 = vmatmul.mubr.f32.gmra.mrb[0].mxu0 %v924
        %v1767 = vpop.f32.mrb[0].mxu0
        %v1768 = vadd.f32 %v399, %v1767
        %v1769 = vpop.f32.mrb[0].mxu0
        %1770 = vmatprep.mubr.f32.mxu0 0.0
        %1771 = vmatmul.mubr.f32.gmra.mrb[0].mxu0 %v927
        %v1772 = vpop.f32.mrb[0].mxu0
        %v1773 = vadd.f32 %v399, %v1772
        %v1774 = vpop.f32.mrb[0].mxu0
        %1775 = vmatprep.mubr.f32.mxu0 0.0
        %1776 = vmatmul.mubr.f32.gmra.mrb[0].mxu0 %v930
        %v1777 = vpop.f32.mrb[0].mxu0
        %v1778 = vadd.f32 %v399, %v1777
        %v1779 = vpop.f32.mrb[0].mxu0
        %1780 = vmatprep.mubr.f32.mxu0 0.0
        %1781 = vmatmul.mubr.f32.gmra.mrb[0].mxu0 %v933
        %v1782 = vpop.f32.mrb[0].mxu0
        %v1783 = vadd.f32 %v399, %v1782
        %v1784 = vpop.f32.mrb[0].mxu0
        %1785 = vmatprep.mubr.f32.mxu0 0.0
        %1786 = vmatmul.mubr.f32.gmra.mrb[0].mxu0 %v936
        %v1787 = vpop.f32.mrb[0].mxu0
        %v1788 = vadd.f32 %v399, %v1787
        %v1789 = vpop.f32.mrb[0].mxu0
        %1790 = vmatprep.mubr.f32.mxu0 0.0
        %1791 = vmatmul.mubr.f32.gmra.mrb[0].mxu0 %v939
        %v1792 = vpop.f32.mrb[0].mxu0
        %v1793 = vadd.f32 %v399, %v1792
        %v1794 = vpop.f32.mrb[0].mxu0
        %1795 = vmatprep.mubr.f32.mxu0 0.0
        %1796 = vmatmul.mubr.f32.gmra.mrb[0].mxu0 %v942
        %v1797 = vpop.f32.mrb[0].mxu0
        %v1798 = vadd.f32 %v399, %v1797
        %v1799 = vpop.f32.mrb[0].mxu0
        %1800 = vmatprep.mubr.f32.mxu0 0.0
        %1801 = vmatmul.mubr.f32.gmra.mrb[0].mxu0 %v945
        %v1802 = vpop.f32.mrb[0].mxu0
        %v1803 = vadd.f32 %v399, %v1802
        %v1804 = vpop.f32.mrb[0].mxu0
        %1805 = vmatprep.mubr.f32.mxu0 0.0
        %1806 = vmatmul.mubr.f32.gmra.mrb[0].mxu0 %v948
        %v1807 = vpop.f32.mrb[0].mxu0
        %v1808 = vadd.f32 %v399, %v1807
        %v1809 = vpop.f32.mrb[0].mxu0
        %1810 = vmatprep.mubr.f32.mxu0 0.0
        %1811 = vmatmul.mubr.f32.gmra.mrb[0].mxu0 %v951
        %v1812 = vpop.f32.mrb[0].mxu0
        %v1813 = vadd.f32 %v399, %v1812
        %v1814 = vpop.f32.mrb[0].mxu0
        %1815 = vmatprep.mubr.f32.mxu0 0.0
        %1816 = vmatmul.mubr.f32.gmra.mrb[0].mxu0 %v954
        %v1817 = vpop.f32.mrb[0].mxu0
        %v1818 = vadd.f32 %v399, %v1817
        %v1819 = vpop.f32.mrb[0].mxu0
        %1820 = vmatprep.mubr.f32.mxu0 0.0
        %1821 = vmatmul.mubr.f32.gmra.mrb[0].mxu0 %v957
        %v1822 = vpop.f32.mrb[0].mxu0
        %v1823 = vadd.f32 %v399, %v1822
        %v1824 = vpop.f32.mrb[0].mxu0
        %1825 = vmatprep.mubr.f32.mxu0 0.0
        %1826 = vmatmul.mubr.f32.gmra.mrb[0].mxu0 %v960
        %v1827 = vpop.f32.mrb[0].mxu0
        %v1828 = vadd.f32 %v399, %v1827
        %v1829 = vpop.f32.mrb[0].mxu0
        %1830 = vmatprep.mubr.f32.mxu0 0.0
        %1831 = vmatmul.mubr.f32.gmra.mrb[0].mxu0 %v963
        %v1832 = vpop.f32.mrb[0].mxu0
        %v1833 = vadd.f32 %v399, %v1832
        %v1834 = vpop.f32.mrb[0].mxu0
        %1835 = vmatprep.mubr.f32.mxu0 0.0
        %1836 = vmatmul.mubr.f32.gmra.mrb[0].mxu0 %v966
        %v1837 = vpop.f32.mrb[0].mxu0
        %v1838 = vadd.f32 %v399, %v1837
        %v1839 = vpop.f32.mrb[0].mxu0
        %1840 = vmatprep.mubr.f32.mxu0 0.0
        %1841 = vmatmul.mubr.f32.gmra.mrb[0].mxu0 %v969
        %v1842 = vpop.f32.mrb[0].mxu0
        %v1843 = vadd.f32 %v399, %v1842
        %v1844 = vpop.f32.mrb[0].mxu0
        %1845 = vmatprep.mubr.f32.mxu0 0.0
        %1846 = vmatmul.mubr.f32.gmra.mrb[0].mxu0 %v972
        %v1847 = vpop.f32.mrb[0].mxu0
        %v1848 = vadd.f32 %v399, %v1847
        %v1849 = vpop.f32.mrb[0].mxu0
        %1850 = vmatprep.mubr.f32.mxu0 0.0
        %1851 = vmatmul.mubr.f32.gmra.mrb[0].mxu0 %v975
        %v1852 = vpop.f32.mrb[0].mxu0
        %v1853 = vadd.f32 %v399, %v1852
        %v1854 = vpop.f32.mrb[0].mxu0
        %1855 = vmatprep.mubr.f32.mxu0 0.0
        %1856 = vmatmul.mubr.f32.gmra.mrb[0].mxu0 %v978
        %v1857 = vpop.f32.mrb[0].mxu0
        %v1858 = vadd.f32 %v399, %v1857
        %v1859 = vpop.f32.mrb[0].mxu0
        %1860 = vmatprep.mubr.f32.mxu0 0.0
        %1861 = vmatmul.mubr.f32.gmra.mrb[0].mxu0 %v981
        %v1862 = vpop.f32.mrb[0].mxu0
        %v1863 = vadd.f32 %v399, %v1862
        %v1864 = vpop.f32.mrb[0].mxu0
        %1865 = vmatprep.mubr.f32.mxu0 0.0
        %1866 = vmatmul.mubr.f32.gmra.mrb[0].mxu0 %v984
        %v1867 = vpop.f32.mrb[0].mxu0
        %v1868 = vadd.f32 %v399, %v1867
        %v1869 = vpop.f32.mrb[0].mxu0
        %1870 = vmatprep.mubr.f32.mxu0 0.0
        %1871 = vmatmul.mubr.f32.gmra.mrb[0].mxu0 %v987
        %v1872 = vpop.f32.mrb[0].mxu0
        %v1873 = vadd.f32 %v399, %v1872
        %v1874 = vpop.f32.mrb[0].mxu0
        %1875 = vmatprep.mubr.f32.mxu0 0.0
        %1876 = vmatmul.mubr.f32.gmra.mrb[0].mxu0 %v990
        %v1877 = vpop.f32.mrb[0].mxu0
        %v1878 = vadd.f32 %v399, %v1877
        %v1879 = vpop.f32.mrb[0].mxu0
        %1880 = vmatprep.mubr.f32.mxu0 0.0
        %1881 = vmatmul.mubr.f32.gmra.mrb[0].mxu0 %v993
        %v1882 = vpop.f32.mrb[0].mxu0
        %v1883 = vadd.f32 %v399, %v1882
        %v1884 = vpop.f32.mrb[0].mxu0
        %1885 = vmatprep.mubr.f32.mxu0 0.0
        %1886 = vmatmul.mubr.f32.gmra.mrb[0].mxu0 %v996
        %v1887 = vpop.f32.mrb[0].mxu0
        %v1888 = vadd.f32 %v399, %v1887
        %v1889 = vpop.f32.mrb[0].mxu0
        %1890 = vmatprep.mubr.f32.mxu0 0.0
        %1891 = vmatmul.mubr.f32.gmra.mrb[0].mxu0 %v999
        %v1892 = vpop.f32.mrb[0].mxu0
        %v1893 = vadd.f32 %v399, %v1892
        %v1894 = vpop.f32.mrb[0].mxu0
        %1895 = vmatprep.mubr.f32.mxu0 0.0
        %1896 = vmatmul.mubr.f32.gmra.mrb[0].mxu0 %v1002
        %v1897 = vpop.f32.mrb[0].mxu0
        %v1898 = vadd.f32 %v399, %v1897
        %v1899 = vpop.f32.mrb[0].mxu0
        %1900 = vmatprep.mubr.f32.mxu0 0.0
        %1901 = vmatmul.mubr.f32.gmra.mrb[0].mxu0 %v1005
        %v1902 = vpop.f32.mrb[0].mxu0
        %v1903 = vadd.f32 %v399, %v1902
        %v1904 = vpop.f32.mrb[0].mxu0
        %1905 = vmatprep.mubr.f32.mxu0 0.0
        %1906 = vmatmul.mubr.f32.gmra.mrb[0].mxu0 %v1008
        %v1907 = vpop.f32.mrb[0].mxu0
        %v1908 = vadd.f32 %v399, %v1907
        %v1909 = vpop.f32.mrb[0].mxu0
        %1910 = vmatprep.mubr.f32.mxu0 0.0
        %1911 = vmatmul.mubr.f32.gmra.mrb[0].mxu0 %v1011
        %v1912 = vpop.f32.mrb[0].mxu0
        %v1913 = vadd.f32 %v399, %v1912
        %v1914 = vpop.f32.mrb[0].mxu0
        %1915 = vmatprep.mubr.f32.mxu0 0.0
        %1916 = vmatmul.mubr.f32.gmra.mrb[0].mxu0 %v1014
        %v1917 = vpop.f32.mrb[0].mxu0
        %v1918 = vadd.f32 %v399, %v1917
        %v1919 = vpop.f32.mrb[0].mxu0
        %1920 = vmatprep.mubr.f32.mxu0 0.0
        %1921 = vmatmul.mubr.f32.gmra.mrb[0].mxu0 %v1017
        %v1922 = vpop.f32.mrb[0].mxu0
        %v1923 = vadd.f32 %v399, %v1922
        %v1924 = vpop.f32.mrb[0].mxu0
        %1925 = vmatprep.mubr.f32.mxu0 0.0
        %1926 = vmatmul.mubr.f32.gmra.mrb[0].mxu0 %v1020
        %v1927 = vpop.f32.mrb[0].mxu0
        %v1928 = vadd.f32 %v399, %v1927
        %v1929 = vpop.f32.mrb[0].mxu0
        %1930 = vmatprep.mubr.f32.mxu0 0.0
        %1931 = vmatmul.mubr.f32.gmra.mrb[0].mxu0 %v1023
        %v1932 = vpop.f32.mrb[0].mxu0
        %v1933 = vadd.f32 %v399, %v1932
        %v1934 = vpop.f32.mrb[0].mxu0
        %1935 = vmatprep.mubr.f32.mxu0 0.0
        %1936 = vmatmul.mubr.f32.gmra.mrb[0].mxu0 %v1026
        %v1937 = vpop.f32.mrb[0].mxu0
        %v1938 = vadd.f32 %v399, %v1937
        %v1939 = vpop.f32.mrb[0].mxu0
        %1940 = vmatprep.mubr.f32.mxu0 0.0
        %1941 = vmatmul.mubr.f32.gmra.mrb[0].mxu0 %v1029
        %v1942 = vpop.f32.mrb[0].mxu0
        %v1943 = vadd.f32 %v399, %v1942
        %v1944 = vpop.f32.mrb[0].mxu0
        %1945 = vmatprep.mubr.f32.mxu0 0.0
        %1946 = vmatmul.mubr.f32.gmra.mrb[0].mxu0 %v1032
        %v1947 = vpop.f32.mrb[0].mxu0
        %v1948 = vadd.f32 %v399, %v1947
        %v1949 = vpop.f32.mrb[0].mxu0
        %1950 = vmatprep.mubr.f32.mxu0 0.0
        %1951 = vmatmul.mubr.f32.gmra.mrb[0].mxu0 %v1035
        %v1952 = vpop.f32.mrb[0].mxu0
        %v1953 = vadd.f32 %v399, %v1952
        %v1954 = vpop.f32.mrb[0].mxu0
        %1955 = vmatprep.mubr.f32.mxu0 0.0
        %1956 = vmatmul.mubr.f32.gmra.mrb[0].mxu0 %v1038
        %v1957 = vpop.f32.mrb[0].mxu0
        %v1958 = vadd.f32 %v399, %v1957
        %v1959 = vpop.f32.mrb[0].mxu0
        %1960 = vmatprep.mubr.f32.mxu0 0.0
        %1961 = vmatmul.mubr.f32.gmra.mrb[0].mxu0 %v1041
        %v1962 = vpop.f32.mrb[0].mxu0
        %v1963 = vadd.f32 %v399, %v1962
        %v1964 = vpop.f32.mrb[0].mxu0
        %1965 = vmatprep.mubr.f32.mxu0 0.0
        %1966 = vmatmul.mubr.f32.gmra.mrb[0].mxu0 %v1044
        %v1967 = vpop.f32.mrb[0].mxu0
        %v1968 = vadd.f32 %v399, %v1967
        %v1969 = vpop.f32.mrb[0].mxu0
        %1970 = vmatprep.mubr.f32.mxu0 0.0
        %1971 = vmatmul.mubr.f32.gmra.mrb[0].mxu0 %v1047
        %v1972 = vpop.f32.mrb[0].mxu0
        %v1973 = vadd.f32 %v399, %v1972
        %v1974 = vpop.f32.mrb[0].mxu0
        %1975 = vmatprep.mubr.f32.mxu0 0.0
        %1976 = vmatmul.mubr.f32.gmra.mrb[0].mxu0 %v1050
        %v1977 = vpop.f32.mrb[0].mxu0
        %v1978 = vadd.f32 %v399, %v1977
        %v1979 = vpop.f32.mrb[0].mxu0
        %1980 = vmatprep.mubr.f32.mxu0 0.0
        %1981 = vmatmul.mubr.f32.gmra.mrb[0].mxu0 %v1053
        %v1982 = vpop.f32.mrb[0].mxu0
        %v1983 = vadd.f32 %v399, %v1982
        %v1984 = vpop.f32.mrb[0].mxu0
        %1985 = vmatprep.mubr.f32.mxu0 0.0
        %1986 = vmatmul.mubr.f32.gmra.mrb[0].mxu0 %v1056
        %v1987 = vpop.f32.mrb[0].mxu0
        %v1988 = vadd.f32 %v399, %v1987
        %v1989 = vpop.f32.mrb[0].mxu0
        %1990 = vmatprep.mubr.f32.mxu0 0.0
        %1991 = vmatmul.mubr.f32.gmra.mrb[0].mxu0 %v1059
        %v1992 = vpop.f32.mrb[0].mxu0
        %v1993 = vadd.f32 %v399, %v1992
        %v1994 = vpop.f32.mrb[0].mxu0
        %1995 = vmatprep.mubr.f32.mxu0 0.0
        %1996 = vmatmul.mubr.f32.gmra.mrb[0].mxu0 %v1062
        %v1997 = vpop.f32.mrb[0].mxu0
        %v1998 = vadd.f32 %v399, %v1997
        %v1999 = vpop.f32.mrb[0].mxu0
        %2000 = vmatprep.mubr.f32.mxu0 0.0
        %2001 = vmatmul.mubr.f32.gmra.mrb[0].mxu0 %v1065
        %v2002 = vpop.f32.mrb[0].mxu0
        %v2003 = vadd.f32 %v399, %v2002
        %v2004 = vpop.f32.mrb[0].mxu0
        %2005 = vmatprep.mubr.f32.mxu0 0.0
        %2006 = vmatmul.mubr.f32.gmra.mrb[0].mxu0 %v1068
        %v2007 = vpop.f32.mrb[0].mxu0
        %v2008 = vadd.f32 %v399, %v2007
        %v2009 = vpop.f32.mrb[0].mxu0
        %2010 = vmatprep.mubr.f32.mxu0 0.0
        %2011 = vmatmul.mubr.f32.gmra.mrb[0].mxu0 %v1071
        %v2012 = vpop.f32.mrb[0].mxu0
        %v2013 = vadd.f32 %v399, %v2012
        %v2014 = vpop.f32.mrb[0].mxu0
        %2015 = vmatprep.mubr.f32.mxu0 0.0
        %2016 = vmatmul.mubr.f32.gmra.mrb[0].mxu0 %v1074
        %v2017 = vpop.f32.mrb[0].mxu0
        %v2018 = vadd.f32 %v399, %v2017
        %v2019 = vpop.f32.mrb[0].mxu0
        %2020 = vmatprep.mubr.f32.mxu0 0.0
        %2021 = vmatmul.mubr.f32.gmra.mrb[0].mxu0 %v1077
        %v2022 = vpop.f32.mrb[0].mxu0
        %v2023 = vadd.f32 %v399, %v2022
        %v2024 = vpop.f32.mrb[0].mxu0
        %2025 = vmatprep.mubr.f32.mxu0 0.0
        %2026 = vmatmul.mubr.f32.gmra.mrb[0].mxu0 %v1080
        %v2027 = vpop.f32.mrb[0].mxu0
        %v2028 = vadd.f32 %v399, %v2027
        %v2029 = vpop.f32.mrb[0].mxu0
        %2030 = vmatprep.mubr.f32.mxu0 0.0
        %2031 = vmatmul.mubr.f32.gmra.mrb[0].mxu0 %v1083
        %v2032 = vpop.f32.mrb[0].mxu0
        %v2033 = vadd.f32 %v399, %v2032
        %v2034 = vpop.f32.mrb[0].mxu0
        %2035 = vmatprep.mubr.f32.mxu0 0.0
        %2036 = vmatmul.mubr.f32.gmra.mrb[0].mxu0 %v1086
        %v2037 = vpop.f32.mrb[0].mxu0
        %v2038 = vadd.f32 %v399, %v2037
        %v2039 = vpop.f32.mrb[0].mxu0
        %2040 = vmatprep.mubr.f32.mxu0 0.0
        %2041 = vmatmul.mubr.f32.gmra.mrb[0].mxu0 %v1089
        %v2042 = vpop.f32.mrb[0].mxu0
        %v2043 = vadd.f32 %v399, %v2042
        %v2044 = vpop.f32.mrb[0].mxu0
        %2045 = vmatprep.mubr.f32.mxu0 0.0
        %2046 = vmatmul.mubr.f32.gmra.mrb[0].mxu0 %v1092
        %v2047 = vpop.f32.mrb[0].mxu0
        %v2048 = vadd.f32 %v399, %v2047
        %v2049 = vpop.f32.mrb[0].mxu0
        %2050 = vmatprep.mubr.f32.mxu0 0.0
        %2051 = vmatmul.mubr.f32.gmra.mrb[0].mxu0 %v1095
        %v2052 = vpop.f32.mrb[0].mxu0
        %v2053 = vadd.f32 %v399, %v2052
        %v2054 = vpop.f32.mrb[0].mxu0
        %2055 = vmatprep.mubr.f32.mxu0 0.0
        %2056 = vmatmul.mubr.f32.gmra.mrb[0].mxu0 %v1098
        %v2057 = vpop.f32.mrb[0].mxu0
        %v2058 = vadd.f32 %v399, %v2057
        %v2059 = vpop.f32.mrb[0].mxu0
        %2060 = vmatprep.mubr.f32.mxu0 0.0
        %2061 = vmatmul.mubr.f32.gmra.mrb[0].mxu0 %v1101
        %v2062 = vpop.f32.mrb[0].mxu0
        %v2063 = vadd.f32 %v399, %v2062
        %v2064 = vpop.f32.mrb[0].mxu0
        %2065 = vmatprep.mubr.f32.mxu0 0.0
        %2066 = vmatmul.mubr.f32.gmra.mrb[0].mxu0 %v1104
        %v2067 = vpop.f32.mrb[0].mxu0
        %v2068 = vadd.f32 %v399, %v2067
        %v2069 = vpop.f32.mrb[0].mxu0
        %2070 = vmatprep.mubr.f32.mxu0 0.0
        %2071 = vmatmul.mubr.f32.gmra.mrb[0].mxu0 %v1107
        %v2072 = vpop.f32.mrb[0].mxu0
        %v2073 = vadd.f32 %v399, %v2072
        %v2074 = vpop.f32.mrb[0].mxu0
        %2075 = vmatprep.mubr.f32.mxu0 0.0
        %2076 = vmatmul.mubr.f32.gmra.mrb[0].mxu0 %v1110
        %v2077 = vpop.f32.mrb[0].mxu0
        %v2078 = vadd.f32 %v399, %v2077
        %v2079 = vpop.f32.mrb[0].mxu0
        %2080 = vmatprep.mubr.f32.mxu0 0.0
        %2081 = vmatmul.mubr.f32.gmra.mrb[0].mxu0 %v1113
        %v2082 = vpop.f32.mrb[0].mxu0
        %v2083 = vadd.f32 %v399, %v2082
        %v2084 = vpop.f32.mrb[0].mxu0
        %2085 = vmatprep.mubr.f32.mxu0 0.0
        %2086 = vmatmul.mubr.f32.gmra.mrb[0].mxu0 %v1116
        %v2087 = vpop.f32.mrb[0].mxu0
        %v2088 = vadd.f32 %v399, %v2087
        %v2089 = vpop.f32.mrb[0].mxu0
        %2090 = vmatprep.mubr.f32.mxu0 0.0
        %2091 = vmatmul.mubr.f32.gmra.mrb[0].mxu0 %v1119
        %v2092 = vpop.f32.mrb[0].mxu0
        %v2093 = vadd.f32 %v399, %v2092
        %v2094 = vpop.f32.mrb[0].mxu0
        %2095 = vmatprep.mubr.f32.mxu0 0.0
        %2096 = vmatmul.mubr.f32.gmra.mrb[0].mxu0 %v1122
        %v2097 = vpop.f32.mrb[0].mxu0
        %v2098 = vadd.f32 %v399, %v2097
        %v2099 = vpop.f32.mrb[0].mxu0
        %2100 = vmatprep.mubr.f32.mxu0 0.0
        %2101 = vmatmul.mubr.f32.gmra.mrb[0].mxu0 %v1125
        %v2102 = vpop.f32.mrb[0].mxu0
        %v2103 = vadd.f32 %v399, %v2102
        %v2104 = vpop.f32.mrb[0].mxu0
        %2105 = vmatprep.mubr.f32.mxu0 0.0
        %2106 = vmatmul.mubr.f32.gmra.mrb[0].mxu0 %v1128
        %v2107 = vpop.f32.mrb[0].mxu0
        %v2108 = vadd.f32 %v399, %v2107
        %v2109 = vpop.f32.mrb[0].mxu0
        %2110 = vmatprep.mubr.f32.mxu0 0.0
        %2111 = vmatmul.mubr.f32.gmra.mrb[0].mxu0 %v1131
        %v2112 = vpop.f32.mrb[0].mxu0
        %v2113 = vadd.f32 %v399, %v2112
        %v2114 = vpop.f32.mrb[0].mxu0
        %2115 = vmatprep.mubr.f32.mxu0 0.0
        %2116 = vmatmul.mubr.f32.gmra.mrb[0].mxu0 %v1134
        %v2117 = vpop.f32.mrb[0].mxu0
        %v2118 = vadd.f32 %v399, %v2117
        %v2119 = vpop.f32.mrb[0].mxu0
        %2120 = vmatprep.mubr.f32.mxu0 0.0
        %2121 = vmatmul.mubr.f32.gmra.mrb[0].mxu0 %v1137
        %v2122 = vpop.f32.mrb[0].mxu0
        %v2123 = vadd.f32 %v399, %v2122
        %v2124 = vpop.f32.mrb[0].mxu0
        %2125 = vmatprep.mubr.f32.mxu0 0.0
        %2126 = vmatmul.mubr.f32.gmra.mrb[0].mxu0 %v1140
        %v2127 = vpop.f32.mrb[0].mxu0
        %v2128 = vadd.f32 %v399, %v2127
        %v2129 = vpop.f32.mrb[0].mxu0
        %2130 = vmatprep.mubr.f32.mxu0 0.0
        %2131 = vmatmul.mubr.f32.gmra.mrb[0].mxu0 %v1143
        %v2132 = vpop.f32.mrb[0].mxu0
        %v2133 = vadd.f32 %v399, %v2132
        %v2134 = vpop.f32.mrb[0].mxu0
        %2135 = vmatprep.mubr.f32.mxu0 0.0
        %2136 = vmatmul.mubr.f32.gmra.mrb[0].mxu0 %v1146
        %v2137 = vpop.f32.mrb[0].mxu0
        %v2138 = vadd.f32 %v399, %v2137
        %v2139 = vpop.f32.mrb[0].mxu0
        %2140 = vmatprep.mubr.f32.mxu0 0.0
        %2141 = vmatmul.mubr.f32.gmra.mrb[0].mxu0 %v1149
        %v2142 = vpop.f32.mrb[0].mxu0
        %v2143 = vadd.f32 %v399, %v2142
        %v2144 = vpop.f32.mrb[0].mxu0
        %2145 = vmatprep.mubr.f32.mxu0 0.0
        %2146 = vmatmul.mubr.f32.gmra.mrb[0].mxu0 %v1152
        %v2147 = vpop.f32.mrb[0].mxu0
        %v2148 = vadd.f32 %v399, %v2147
        %v2149 = vpop.f32.mrb[0].mxu0
        %2150 = vmatprep.mubr.f32.mxu0 0.0
        %2151 = vmatmul.mubr.f32.gmra.mrb[0].mxu0 %v1155
        %v2152 = vpop.f32.mrb[0].mxu0
        %v2153 = vadd.f32 %v399, %v2152
        %v2154 = vpop.f32.mrb[0].mxu0
        %2155 = vmatprep.mubr.f32.mxu0 0.0
        %2156 = vmatmul.mubr.f32.gmra.mrb[0].mxu0 %v1158
        %v2157 = vpop.f32.mrb[0].mxu0
        %v2158 = vadd.f32 %v399, %v2157
        %v2159 = vpop.f32.mrb[0].mxu0
        %2160 = vmatprep.mubr.f32.mxu0 0.0
        %2161 = vmatmul.mubr.f32.gmra.mrb[0].mxu0 %v1161
        %v2162 = vpop.f32.mrb[0].mxu0
        %v2163 = vadd.f32 %v399, %v2162
        %v2164 = vpop.f32.mrb[0].mxu0
        %2165 = vmatprep.mubr.f32.mxu0 0.0
        %2166 = vmatmul.mubr.f32.gmra.mrb[0].mxu0 %v1164
        %v2167 = vpop.f32.mrb[0].mxu0
        %v2168 = vadd.f32 %v399, %v2167
        %v2169 = vpop.f32.mrb[0].mxu0
        %2170 = vmatprep.mubr.f32.mxu0 0.0
        %2171 = vmatmul.mubr.f32.gmra.mrb[0].mxu0 %v1167
        %v2172 = vpop.f32.mrb[0].mxu0
        %v2173 = vadd.f32 %v399, %v2172
        %v2174 = vpop.f32.mrb[0].mxu0
        %2175 = vmatprep.mubr.f32.mxu0 0.0
        %2176 = vmatmul.mubr.f32.gmra.mrb[0].mxu0 %v1170
        %v2177 = vpop.f32.mrb[0].mxu0
        %v2178 = vadd.f32 %v399, %v2177
        %v2179 = vpop.f32.mrb[0].mxu0
        %2180 = vmatprep.mubr.f32.mxu0 0.0
        %2181 = vmatmul.mubr.f32.gmra.mrb[0].mxu0 %v1173
        %v2182 = vpop.f32.mrb[0].mxu0
        %v2183 = vadd.f32 %v399, %v2182
        %v2184 = vpop.f32.mrb[0].mxu0
        %2185 = vmatprep.mubr.f32.mxu0 0.0
        %2186 = vmatmul.mubr.f32.gmra.mrb[0].mxu0 %v1176
        %v2187 = vpop.f32.mrb[0].mxu0
        %v2188 = vadd.f32 %v399, %v2187
        %v2189 = vpop.f32.mrb[0].mxu0
        %2190 = vmatprep.mubr.f32.mxu0 0.0
        %2191 = vmatmul.mubr.f32.gmra.mrb[0].mxu0 %v1179
        %v2192 = vpop.f32.mrb[0].mxu0
        %v2193 = vadd.f32 %v399, %v2192
        %v2194 = vpop.f32.mrb[0].mxu0
        %2195 = vmatprep.mubr.f32.mxu0 0.0
        %2196 = vmatmul.mubr.f32.gmra.mrb[0].mxu0 %v1182
        %v2197 = vpop.f32.mrb[0].mxu0
        %v2198 = vadd.f32 %v399, %v2197
        %v2199 = vpop.f32.mrb[0].mxu0
        %2200 = vmatprep.mubr.f32.mxu0 0.0
        %2201 = vmatmul.mubr.f32.gmra.mrb[0].mxu0 %v1185
        %v2202 = vpop.f32.mrb[0].mxu0
        %v2203 = vadd.f32 %v399, %v2202
        %v2204 = vpop.f32.mrb[0].mxu0
        %2205 = vmatprep.mubr.f32.mxu0 0.0
        %2206 = vmatmul.mubr.f32.gmra.mrb[0].mxu0 %v1188
        %v2207 = vpop.f32.mrb[0].mxu0
        %v2208 = vadd.f32 %v399, %v2207
        %v2209 = vpop.f32.mrb[0].mxu0
        %2210 = vmatprep.mubr.f32.mxu0 0.0
        %2211 = vmatmul.mubr.f32.gmra.mrb[0].mxu0 %v1191
        %v2212 = vpop.f32.mrb[0].mxu0
        %v2213 = vadd.f32 %v399, %v2212
        %v2214 = vpop.f32.mrb[0].mxu0
        %2215 = vmatprep.mubr.f32.mxu0 0.0
        %2216 = vmatmul.mubr.f32.gmra.mrb[0].mxu0 %v1194
        %v2217 = vpop.f32.mrb[0].mxu0
        %v2218 = vadd.f32 %v399, %v2217
        %v2219 = vpop.f32.mrb[0].mxu0
        %2220 = vmatprep.mubr.f32.mxu0 0.0
        %2221 = vmatmul.mubr.f32.gmra.mrb[0].mxu0 %v1197
        %v2222 = vpop.f32.mrb[0].mxu0
        %v2223 = vadd.f32 %v399, %v2222
        %v2224 = vpop.f32.mrb[0].mxu0
        %2225 = vmatprep.mubr.f32.mxu0 0.0
        %2226 = vmatmul.mubr.f32.gmra.mrb[0].mxu0 %v1200
        %v2227 = vpop.f32.mrb[0].mxu0
        %v2228 = vadd.f32 %v399, %v2227
        %v2229 = vpop.f32.mrb[0].mxu0
        %2230 = vmatprep.mubr.f32.mxu0 0.0
        %2231 = vmatmul.mubr.f32.gmra.mrb[0].mxu0 %v1203
        %v2232 = vpop.f32.mrb[0].mxu0
        %v2233 = vadd.f32 %v399, %v2232
        %v2234 = vpop.f32.mrb[0].mxu0
        %2235 = vmatprep.mubr.f32.mxu0 0.0
        %2236 = vmatmul.mubr.f32.gmra.mrb[0].mxu0 %v1206
        %v2237 = vpop.f32.mrb[0].mxu0
        %v2238 = vadd.f32 %v399, %v2237
        %v2239 = vpop.f32.mrb[0].mxu0
        %2240 = vmatprep.mubr.f32.mxu0 0.0
        %2241 = vmatmul.mubr.f32.gmra.mrb[0].mxu0 %v1209
        %v2242 = vpop.f32.mrb[0].mxu0
        %v2243 = vadd.f32 %v399, %v2242
        %v2244 = vpop.f32.mrb[0].mxu0
        %2245 = vmatprep.mubr.f32.mxu0 0.0
        %2246 = vmatmul.mubr.f32.gmra.mrb[0].mxu0 %v1212
        %v2247 = vpop.f32.mrb[0].mxu0
        %v2248 = vadd.f32 %v399, %v2247
        %v2249 = vpop.f32.mrb[0].mxu0
        %2250 = vmatprep.mubr.f32.mxu0 0.0
        %2251 = vmatmul.mubr.f32.gmra.mrb[0].mxu0 %v1215
        %v2252 = vpop.f32.mrb[0].mxu0
        %v2253 = vadd.f32 %v399, %v2252
        %v2254 = vpop.f32.mrb[0].mxu0
        %2255 = vmatprep.mubr.f32.mxu0 0.0
        %2256 = vmatmul.mubr.f32.gmra.mrb[0].mxu0 %v1218
        %v2257 = vpop.f32.mrb[0].mxu0
        %v2258 = vadd.f32 %v399, %v2257
        %v2259 = vpop.f32.mrb[0].mxu0
        %2260 = vmatprep.mubr.f32.mxu0 0.0
        %2261 = vmatmul.mubr.f32.gmra.mrb[0].mxu0 %v1221
        %v2262 = vpop.f32.mrb[0].mxu0
        %v2263 = vadd.f32 %v399, %v2262
        %v2264 = vpop.f32.mrb[0].mxu0
        %2265 = vmatprep.mubr.f32.mxu0 0.0
        %2266 = vmatmul.mubr.f32.gmra.mrb[0].mxu0 %v1224
        %v2267 = vpop.f32.mrb[0].mxu0
        %v2268 = vadd.f32 %v399, %v2267
        %v2269 = vpop.f32.mrb[0].mxu0
        %2270 = vmatprep.mubr.f32.mxu0 0.0
        %2271 = vmatmul.mubr.f32.gmra.mrb[0].mxu0 %v1227
        %v2272 = vpop.f32.mrb[0].mxu0
        %v2273 = vadd.f32 %v399, %v2272
        %v2274 = vpop.f32.mrb[0].mxu0
        %2275 = vmatprep.mubr.f32.mxu0 0.0
        %2276 = vmatmul.mubr.f32.gmra.mrb[0].mxu0 %v1230
        %v2277 = vpop.f32.mrb[0].mxu0
        %v2278 = vadd.f32 %v399, %v2277
        %v2279 = vpop.f32.mrb[0].mxu0
        %2280 = vmatprep.mubr.f32.mxu0 0.0
        %2281 = vmatmul.mubr.f32.gmra.mrb[0].mxu0 %v1233
        %v2282 = vpop.f32.mrb[0].mxu0
        %v2283 = vadd.f32 %v399, %v2282
        %v2284 = vpop.f32.mrb[0].mxu0
        %2285 = vmatprep.mubr.f32.mxu0 0.0
        %2286 = vmatmul.mubr.f32.gmra.mrb[0].mxu0 %v1236
        %v2287 = vpop.f32.mrb[0].mxu0
        %v2288 = vadd.f32 %v399, %v2287
        %v2289 = vpop.f32.mrb[0].mxu0
        %2290 = vmatprep.mubr.f32.mxu0 0.0
        %2291 = vmatmul.mubr.f32.gmra.mrb[0].mxu0 %v1239
        %v2292 = vpop.f32.mrb[0].mxu0
        %v2293 = vadd.f32 %v399, %v2292
        %v2294 = vpop.f32.mrb[0].mxu0
        %2295 = vmatprep.mubr.f32.mxu0 0.0
        %2296 = vmatmul.mubr.f32.gmra.mrb[0].mxu0 %v1242
        %v2297 = vpop.f32.mrb[0].mxu0
        %v2298 = vadd.f32 %v399, %v2297
        %v2299 = vpop.f32.mrb[0].mxu0
        %2300 = vmatprep.mubr.f32.mxu0 0.0
        %2301 = vmatmul.mubr.f32.gmra.mrb[0].mxu0 %v1245
        %v2302 = vpop.f32.mrb[0].mxu0
        %v2303 = vadd.f32 %v399, %v2302
        %v2304 = vpop.f32.mrb[0].mxu0
        %2305 = vmatprep.mubr.f32.mxu0 0.0
        %2306 = vmatmul.mubr.f32.gmra.mrb[0].mxu0 %v1248
        %v2307 = vpop.f32.mrb[0].mxu0
        %v2308 = vadd.f32 %v399, %v2307
        %v2309 = vpop.f32.mrb[0].mxu0
        %2310 = vmatprep.mubr.f32.mxu0 0.0
        %2311 = vmatmul.mubr.f32.gmra.mrb[0].mxu0 %v1251
        %v2312 = vpop.f32.mrb[0].mxu0
        %v2313 = vadd.f32 %v399, %v2312
        %v2314 = vpop.f32.mrb[0].mxu0
        %2315 = vmatprep.mubr.f32.mxu0 0.0
        %2316 = vmatmul.mubr.f32.gmra.mrb[0].mxu0 %v1254
        %v2317 = vpop.f32.mrb[0].mxu0
        %v2318 = vadd.f32 %v399, %v2317
        %v2319 = vpop.f32.mrb[0].mxu0
        %2320 = vmatprep.mubr.f32.mxu0 0.0
        %2321 = vmatmul.mubr.f32.gmra.mrb[0].mxu0 %v1257
        %v2322 = vpop.f32.mrb[0].mxu0
        %v2323 = vadd.f32 %v399, %v2322
        %v2324 = vpop.f32.mrb[0].mxu0
        %2325 = vmatprep.mubr.f32.mxu0 0.0
        %2326 = vmatmul.mubr.f32.gmra.mrb[0].mxu0 %v1260
        %v2327 = vpop.f32.mrb[0].mxu0
        %v2328 = vadd.f32 %v399, %v2327
        %v2329 = vpop.f32.mrb[0].mxu0
        %2330 = vmatprep.mubr.f32.mxu0 0.0
        %2331 = vmatmul.mubr.f32.gmra.mrb[0].mxu0 %v1263
        %v2332 = vpop.f32.mrb[0].mxu0
        %v2333 = vadd.f32 %v399, %v2332
        %v2334 = vpop.f32.mrb[0].mxu0
        %2335 = vmatprep.mubr.f32.mxu0 0.0
        %2336 = vmatmul.mubr.f32.gmra.mrb[0].mxu0 %v1266
        %v2337 = vpop.f32.mrb[0].mxu0
        %v2338 = vadd.f32 %v399, %v2337
        %v2339 = vpop.f32.mrb[0].mxu0
        %2340 = vmatprep.mubr.f32.mxu0 0.0
        %2341 = vmatmul.mubr.f32.gmra.mrb[0].mxu0 %v1269
        %v2342 = vpop.f32.mrb[0].mxu0
        %v2343 = vadd.f32 %v399, %v2342
        %v2344 = vpop.f32.mrb[0].mxu0
        %2345 = vmatprep.mubr.f32.mxu0 0.0
        %2346 = vmatmul.mubr.f32.gmra.mrb[0].mxu0 %v1272
        %v2347 = vpop.f32.mrb[0].mxu0
        %v2348 = vadd.f32 %v399, %v2347
        %v2349 = vpop.f32.mrb[0].mxu0
        %2350 = vmatprep.mubr.f32.mxu0 0.0
        %2351 = vmatmul.mubr.f32.gmra.mrb[0].mxu0 %v1275
        %v2352 = vpop.f32.mrb[0].mxu0
        %v2353 = vadd.f32 %v399, %v2352
        %v2354 = vpop.f32.mrb[0].mxu0
        %2355 = vmatprep.mubr.f32.mxu0 0.0
        %2356 = vmatmul.mubr.f32.gmra.mrb[0].mxu0 %v1278
        %v2357 = vpop.f32.mrb[0].mxu0
        %v2358 = vadd.f32 %v399, %v2357
        %v2359 = vpop.f32.mrb[0].mxu0
        %2360 = vmatprep.mubr.f32.mxu0 0.0
        %2361 = vmatmul.mubr.f32.gmra.mrb[0].mxu0 %v1281
        %v2362 = vpop.f32.mrb[0].mxu0
        %v2363 = vadd.f32 %v399, %v2362
        %v2364 = vpop.f32.mrb[0].mxu0
        %2365 = vmatprep.mubr.f32.mxu0 0.0
        %2366 = vmatmul.mubr.f32.gmra.mrb[0].mxu0 %v1284
        %v2367 = vpop.f32.mrb[0].mxu0
        %v2368 = vadd.f32 %v399, %v2367
        %v2369 = vpop.f32.mrb[0].mxu0
        %2370 = vmatprep.mubr.f32.mxu0 0.0
        %2371 = vmatmul.mubr.f32.gmra.mrb[0].mxu0 %v1287
        %v2372 = vpop.f32.mrb[0].mxu0
        %v2373 = vadd.f32 %v399, %v2372
        %v2374 = vpop.f32.mrb[0].mxu0
        %2375 = vmatprep.mubr.f32.mxu0 0.0
        %2376 = vmatmul.mubr.f32.gmra.mrb[0].mxu0 %v1290
        %v2377 = vpop.f32.mrb[0].mxu0
        %v2378 = vadd.f32 %v399, %v2377
        %v2379 = vpop.f32.mrb[0].mxu0
        %2380 = vmatprep.mubr.f32.mxu0 0.0
        %2381 = vmatmul.mubr.f32.gmra.mrb[0].mxu0 %v1293
        %v2382 = vpop.f32.mrb[0].mxu0
        %v2383 = vadd.f32 %v399, %v2382
        %v2384 = vpop.f32.mrb[0].mxu0
        %2385 = vmatprep.mubr.f32.mxu0 0.0
        %2386 = vmatmul.mubr.f32.gmra.mrb[0].mxu0 %v1296
        %v2387 = vpop.f32.mrb[0].mxu0
        %v2388 = vadd.f32 %v399, %v2387
        %v2389 = vpop.f32.mrb[0].mxu0
        %2390 = vmatprep.mubr.f32.mxu0 0.0
        %2391 = vmatmul.mubr.f32.gmra.mrb[0].mxu0 %v1299
        %v2392 = vpop.f32.mrb[0].mxu0
        %v2393 = vadd.f32 %v399, %v2392
        %v2394 = vpop.f32.mrb[0].mxu0
        %2395 = vmatprep.mubr.f32.mxu0 0.0
        %2396 = vmatmul.mubr.f32.gmra.mrb[0].mxu0 %v1302
        %v2397 = vpop.f32.mrb[0].mxu0
        %v2398 = vadd.f32 %v399, %v2397
        %v2399 = vpop.f32.mrb[0].mxu0
        %2400 = vmatprep.mubr.f32.mxu0 0.0
        %2401 = vmatmul.mubr.f32.gmra.mrb[0].mxu0 %v1305
        %v2402 = vpop.f32.mrb[0].mxu0
        %v2403 = vadd.f32 %v399, %v2402
        %v2404 = vpop.f32.mrb[0].mxu0
        %2405 = vmatprep.mubr.f32.mxu0 0.0
        %2406 = vmatmul.mubr.f32.gmra.mrb[0].mxu0 %v1308
        %v2407 = vpop.f32.mrb[0].mxu0
        %v2408 = vadd.f32 %v399, %v2407
        %v2409 = vpop.f32.mrb[0].mxu0
        %2410 = vmatprep.mubr.f32.mxu0 0.0
        %2411 = vmatmul.mubr.f32.gmra.mrb[0].mxu0 %v1311
        %v2412 = vpop.f32.mrb[0].mxu0
        %v2413 = vadd.f32 %v399, %v2412
        %v2414 = vpop.f32.mrb[0].mxu0
        %2415 = vmatprep.mubr.f32.mxu0 0.0
        %2416 = vmatmul.mubr.f32.gmra.mrb[0].mxu0 %v1314
        %v2417 = vpop.f32.mrb[0].mxu0
        %v2418 = vadd.f32 %v399, %v2417
        %v2419 = vpop.f32.mrb[0].mxu0
        %2420 = vmatprep.mubr.f32.mxu0 0.0
        %2421 = vmatmul.mubr.f32.gmra.mrb[0].mxu0 %v1317
        %v2422 = vpop.f32.mrb[0].mxu0
        %v2423 = vadd.f32 %v399, %v2422
        %v2424 = vpop.f32.mrb[0].mxu0
        %2425 = vmatprep.mubr.f32.mxu0 0.0
        %2426 = vmatmul.mubr.f32.gmra.mrb[0].mxu0 %v1320
        %v2427 = vpop.f32.mrb[0].mxu0
        %v2428 = vadd.f32 %v399, %v2427
        %v2429 = vpop.f32.mrb[0].mxu0
        %2430 = vmatprep.mubr.f32.mxu0 0.0
        %2431 = vmatmul.mubr.f32.gmra.mrb[0].mxu0 %v1323
        %v2432 = vpop.f32.mrb[0].mxu0
        %v2433 = vadd.f32 %v399, %v2432
        %v2434 = vpop.f32.mrb[0].mxu0
        %2435 = vmatprep.mubr.f32.mxu0 0.0
        %2436 = vmatmul.mubr.f32.gmra.mrb[0].mxu0 %v1326
        %v2437 = vpop.f32.mrb[0].mxu0
        %v2438 = vadd.f32 %v399, %v2437
        %v2439 = vpop.f32.mrb[0].mxu0
        %2440 = vmatprep.mubr.f32.mxu0 0.0
        %2441 = vmatmul.mubr.f32.gmra.mrb[0].mxu0 %v1329
        %v2442 = vpop.f32.mrb[0].mxu0
        %v2443 = vadd.f32 %v399, %v2442
        %v2444 = vpop.f32.mrb[0].mxu0
        %2445 = vmatprep.mubr.f32.mxu0 0.0
        %2446 = vmatmul.mubr.f32.gmra.mrb[0].mxu0 %v1332
        %v2447 = vpop.f32.mrb[0].mxu0
        %v2448 = vadd.f32 %v399, %v2447
        %v2449 = vpop.f32.mrb[0].mxu0
        %2450 = vmatprep.mubr.f32.mxu0 0.0
        %2451 = vmatmul.mubr.f32.gmra.mrb[0].mxu0 %v1335
        %v2452 = vpop.f32.mrb[0].mxu0
        %v2453 = vadd.f32 %v399, %v2452
        %v2454 = vpop.f32.mrb[0].mxu0
        %2455 = vmatprep.mubr.f32.mxu0 0.0
        %2456 = vmatmul.mubr.f32.gmra.mrb[0].mxu0 %v1338
        %v2457 = vpop.f32.mrb[0].mxu0
        %v2458 = vadd.f32 %v399, %v2457
        %v2459 = vpop.f32.mrb[0].mxu0
        %2460 = vmatprep.mubr.f32.mxu0 0.0
        %2461 = vmatmul.mubr.f32.gmra.mrb[0].mxu0 %v1341
        %v2462 = vpop.f32.mrb[0].mxu0
        %v2463 = vadd.f32 %v399, %v2462
        %v2464 = vpop.f32.mrb[0].mxu0
        %2465 = vmatprep.mubr.f32.mxu0 0.0
        %2466 = vmatmul.mubr.f32.gmra.mrb[0].mxu0 %v1344
        %v2467 = vpop.f32.mrb[0].mxu0
        %v2468 = vadd.f32 %v399, %v2467
        %v2469 = vpop.f32.mrb[0].mxu0
        %2470 = vmatprep.mubr.f32.mxu0 0.0
        %2471 = vmatmul.mubr.f32.gmra.mrb[0].mxu0 %v1347
        %v2472 = vpop.f32.mrb[0].mxu0
        %v2473 = vadd.f32 %v399, %v2472
        %v2474 = vpop.f32.mrb[0].mxu0
        %2475 = vmatprep.mubr.f32.mxu0 0.0
        %2476 = vmatmul.mubr.f32.gmra.mrb[0].mxu0 %v1350
        %v2477 = vpop.f32.mrb[0].mxu0
        %v2478 = vadd.f32 %v399, %v2477
        %v2479 = vpop.f32.mrb[0].mxu0
        %2480 = vmatprep.mubr.f32.mxu0 0.0
        %2481 = vmatmul.mubr.f32.gmra.mrb[0].mxu0 %v1353
        %v2482 = vpop.f32.mrb[0].mxu0
        %v2483 = vadd.f32 %v399, %v2482
        %v2484 = vpop.f32.mrb[0].mxu0
        %2485 = vmatprep.mubr.f32.mxu0 0.0
        %2486 = vmatmul.mubr.f32.gmra.mrb[0].mxu0 %v1356
        %v2487 = vpop.f32.mrb[0].mxu0
        %v2488 = vadd.f32 %v399, %v2487
        %v2489 = vpop.f32.mrb[0].mxu0
        %2490 = vmatprep.mubr.f32.mxu0 0.0
        %2491 = vmatmul.mubr.f32.gmra.mrb[0].mxu0 %v1359
        %v2492 = vpop.f32.mrb[0].mxu0
        %v2493 = vadd.f32 %v399, %v2492
        %v2494 = vpop.f32.mrb[0].mxu0
        %2495 = vmatprep.mubr.f32.mxu0 0.0
        %2496 = vmatmul.mubr.f32.gmra.mrb[0].mxu0 %v1362
        %v2497 = vpop.f32.mrb[0].mxu0
        %v2498 = vadd.f32 %v399, %v2497
        %v2499 = vpop.f32.mrb[0].mxu0
        %2500 = vmatprep.mubr.f32.mxu0 0.0
        %2501 = vmatmul.mubr.f32.gmra.mrb[0].mxu0 %v1365
        %v2502 = vpop.f32.mrb[0].mxu0
        %v2503 = vadd.f32 %v399, %v2502
        %v2504 = vpop.f32.mrb[0].mxu0
        %2505 = vmatprep.mubr.f32.mxu0 0.0
        %2506 = vmatmul.mubr.f32.gmra.mrb[0].mxu0 %v1368
        %v2507 = vpop.f32.mrb[0].mxu0
        %v2508 = vadd.f32 %v399, %v2507
        %v2509 = vpop.f32.mrb[0].mxu0
        %2510 = vmatprep.mubr.f32.mxu0 0.0
        %2511 = vmatmul.mubr.f32.gmra.mrb[0].mxu0 %v1371
        %v2512 = vpop.f32.mrb[0].mxu0
        %v2513 = vadd.f32 %v399, %v2512
        %v2514 = vpop.f32.mrb[0].mxu0
        %2515 = vmatprep.mubr.f32.mxu0 0.0
        %2516 = vmatmul.mubr.f32.gmra.mrb[0].mxu0 %v1374
        %v2517 = vpop.f32.mrb[0].mxu0
        %v2518 = vadd.f32 %v399, %v2517
        %v2519 = vpop.f32.mrb[0].mxu0
        %2520 = vmatprep.mubr.f32.mxu0 0.0
        %2521 = vmatmul.mubr.f32.gmra.mrb[0].mxu0 %v1377
        %v2522 = vpop.f32.mrb[0].mxu0
        %v2523 = vadd.f32 %v399, %v2522
        %v2524 = vpop.f32.mrb[0].mxu0
        %2525 = vmatprep.mubr.f32.mxu0 0.0
        %2526 = vmatmul.mubr.f32.gmra.mrb[0].mxu0 %v1380
        %v2527 = vpop.f32.mrb[0].mxu0
        %v2528 = vadd.f32 %v399, %v2527
        %v2529 = vpop.f32.mrb[0].mxu0
        %2530 = vmatprep.mubr.f32.mxu0 0.0
        %2531 = vmatmul.mubr.f32.gmra.mrb[0].mxu0 %v1383
        %v2532 = vpop.f32.mrb[0].mxu0
        %v2533 = vadd.f32 %v399, %v2532
        %v2534 = vpop.f32.mrb[0].mxu0
        %2535 = vmatprep.mubr.f32.mxu0 0.0
        %2536 = vmatmul.mubr.f32.gmra.mrb[0].mxu0 %v1386
        %v2537 = vpop.f32.mrb[0].mxu0
        %v2538 = vadd.f32 %v399, %v2537
        %v2539 = vpop.f32.mrb[0].mxu0
        %2540 = vmatprep.mubr.f32.mxu0 0.0
        %2541 = vmatmul.mubr.f32.gmra.mrb[0].mxu0 %v1389
        %v2542 = vpop.f32.mrb[0].mxu0
        %v2543 = vadd.f32 %v399, %v2542
        %v2544 = vpop.f32.mrb[0].mxu0
        %2545 = vmatprep.mubr.f32.mxu0 0.0
        %2546 = vmatmul.mubr.f32.gmra.mrb[0].mxu0 %v1392
        %v2547 = vpop.f32.mrb[0].mxu0
        %v2548 = vadd.f32 %v399, %v2547
        %v2549 = vpop.f32.mrb[0].mxu0
        %2550 = vmatprep.mubr.f32.mxu0 0.0
        %2551 = vmatmul.mubr.f32.gmra.mrb[0].mxu0 %v1395
        %v2552 = vpop.f32.mrb[0].mxu0
        %v2553 = vadd.f32 %v399, %v2552
        %v2554 = vpop.f32.mrb[0].mxu0
        %2555 = vmatprep.mubr.f32.mxu0 0.0
        %2556 = vmatmul.mubr.f32.gmra.mrb[0].mxu0 %v1398
        %v2557 = vpop.f32.mrb[0].mxu0
        %v2558 = vadd.f32 %v399, %v2557
        %v2559 = vpop.f32.mrb[0].mxu0
        %2560 = vmatprep.mubr.f32.mxu0 0.0
        %2561 = vmatmul.mubr.f32.gmra.mrb[0].mxu0 %v1401
        %v2562 = vpop.f32.mrb[0].mxu0
        %v2563 = vadd.f32 %v399, %v2562
        %v2564 = vpop.f32.mrb[0].mxu0
        %2565 = vmatprep.mubr.f32.mxu0 0.0
        %2566 = vmatmul.mubr.f32.gmra.mrb[0].mxu0 %v1404
        %v2567 = vpop.f32.mrb[0].mxu0
        %v2568 = vadd.f32 %v399, %v2567
        %v2569 = vpop.f32.mrb[0].mxu0
        %2570 = vmatprep.mubr.f32.mxu0 0.0
        %2571 = vmatmul.mubr.f32.gmra.mrb[0].mxu0 %v1407
        %v2572 = vpop.f32.mrb[0].mxu0
        %v2573 = vadd.f32 %v399, %v2572
        %v2574 = vpop.f32.mrb[0].mxu0
        %2575 = vmatprep.mubr.f32.mxu0 0.0
        %2576 = vmatmul.mubr.f32.gmra.mrb[0].mxu0 %v1410
        %v2577 = vpop.f32.mrb[0].mxu0
        %v2578 = vadd.f32 %v399, %v2577
        %v2579 = vpop.f32.mrb[0].mxu0
        %2580 = vmatprep.mubr.f32.mxu0 0.0
        %2581 = vmatmul.mubr.f32.gmra.mrb[0].mxu0 %v1413
        %v2582 = vpop.f32.mrb[0].mxu0
        %v2583 = vadd.f32 %v399, %v2582
        %v2584 = vpop.f32.mrb[0].mxu0
        %2585 = vmatprep.mubr.f32.mxu0 0.0
        %2586 = vmatmul.mubr.f32.gmra.mrb[0].mxu0 %v1416
        %v2587 = vpop.f32.mrb[0].mxu0
        %v2588 = vadd.f32 %v399, %v2587
        %v2589 = vpop.f32.mrb[0].mxu0
        %2590 = vmatprep.mubr.f32.mxu0 0.0
        %2591 = vmatmul.mubr.f32.gmra.mrb[0].mxu0 %v1419
        %v2592 = vpop.f32.mrb[0].mxu0
        %v2593 = vadd.f32 %v399, %v2592
        %v2594 = vpop.f32.mrb[0].mxu0
        %2595 = vmatprep.mubr.f32.mxu0 0.0
        %2596 = vmatmul.mubr.f32.gmra.mrb[0].mxu0 %v1422
        %v2597 = vpop.f32.mrb[0].mxu0
        %v2598 = vadd.f32 %v399, %v2597
        %v2599 = vpop.f32.mrb[0].mxu0
        %2600 = vmatprep.mubr.f32.mxu0 0.0
        %2601 = vmatmul.mubr.f32.gmra.mrb[0].mxu0 %v1425
        %v2602 = vpop.f32.mrb[0].mxu0
        %v2603 = vadd.f32 %v399, %v2602
        %v2604 = vpop.f32.mrb[0].mxu0
        %2605 = vmatprep.mubr.f32.mxu0 0.0
        %2606 = vmatmul.mubr.f32.gmra.mrb[0].mxu0 %v1428
        %v2607 = vpop.f32.mrb[0].mxu0
        %v2608 = vadd.f32 %v399, %v2607
        %v2609 = vpop.f32.mrb[0].mxu0
        %2610 = vmatprep.mubr.f32.mxu0 0.0
        %2611 = vmatmul.mubr.f32.gmra.mrb[0].mxu0 %v1431
        %v2612 = vpop.f32.mrb[0].mxu0
        %v2613 = vadd.f32 %v399, %v2612
        %v2614 = vpop.f32.mrb[0].mxu0
        %2615 = vmatprep.mubr.f32.mxu0 0.0
        %2616 = vmatmul.mubr.f32.gmra.mrb[0].mxu0 %v1434
        %v2617 = vpop.f32.mrb[0].mxu0
        %v2618 = vadd.f32 %v399, %v2617
        %v2619 = vpop.f32.mrb[0].mxu0
        %2620 = vmatprep.mubr.f32.mxu0 0.0
        %2621 = vmatmul.mubr.f32.gmra.mrb[0].mxu0 %v1437
        %v2622 = vpop.f32.mrb[0].mxu0
        %v2623 = vadd.f32 %v399, %v2622
        %v2624 = vpop.f32.mrb[0].mxu0
        %2625 = vmatprep.mubr.f32.mxu0 0.0
        %2626 = vmatmul.mubr.f32.gmra.mrb[0].mxu0 %v1440
        %v2627 = vpop.f32.mrb[0].mxu0
        %v2628 = vadd.f32 %v399, %v2627
        %v2629 = vpop.f32.mrb[0].mxu0
        %2630 = vmatprep.mubr.f32.mxu0 0.0
        %2631 = vmatmul.mubr.f32.gmra.mrb[0].mxu0 %v1443
        %v2632 = vpop.f32.mrb[0].mxu0
        %v2633 = vadd.f32 %v399, %v2632
        %v2634 = vpop.f32.mrb[0].mxu0
        %2635 = vmatprep.mubr.f32.mxu0 0.0
        %2636 = vmatmul.mubr.f32.gmra.mrb[0].mxu0 %v1446
        %v2637 = vpop.f32.mrb[0].mxu0
        %v2638 = vadd.f32 %v399, %v2637
        %v2639 = vpop.f32.mrb[0].mxu0
        %2640 = vmatprep.mubr.f32.mxu0 0.0
        %2641 = vmatmul.mubr.f32.gmra.mrb[0].mxu0 %v1449
        %v2642 = vpop.f32.mrb[0].mxu0
        %v2643 = vadd.f32 %v399, %v2642
        %v2644 = vpop.f32.mrb[0].mxu0
        %2645 = vmatprep.mubr.f32.mxu0 0.0
        %2646 = vmatmul.mubr.f32.gmra.mrb[0].mxu0 %v1452
        %v2647 = vpop.f32.mrb[0].mxu0
        %v2648 = vadd.f32 %v399, %v2647
        %v2649 = vpop.f32.mrb[0].mxu0
        %2650 = vmatprep.mubr.f32.mxu0 0.0
        %2651 = vmatmul.mubr.f32.gmra.mrb[0].mxu0 %v1455
        %v2652 = vpop.f32.mrb[0].mxu0
        %v2653 = vadd.f32 %v399, %v2652
        %v2654 = vpop.f32.mrb[0].mxu0
        %2655 = vmatprep.mubr.f32.mxu0 0.0
        %2656 = vmatmul.mubr.f32.gmra.mrb[0].mxu0 %v1458
        %v2657 = vpop.f32.mrb[0].mxu0
        %v2658 = vadd.f32 %v399, %v2657
        %v2659 = vpop.f32.mrb[0].mxu0
        %2660 = vmatprep.mubr.f32.mxu0 0.0
        %2661 = vmatmul.mubr.f32.gmra.mrb[0].mxu0 %v1461
        %v2662 = vpop.f32.mrb[0].mxu0
        %v2663 = vadd.f32 %v399, %v2662
        %v2664 = vpop.f32.mrb[0].mxu0
        %2665 = vmatprep.mubr.f32.mxu0 0.0
        %2666 = vmatmul.mubr.f32.gmra.mrb[0].mxu0 %v1464
        %v2667 = vpop.f32.mrb[0].mxu0
        %v2668 = vadd.f32 %v399, %v2667
        %v2669 = vpop.f32.mrb[0].mxu0
        %2670 = vmatprep.mubr.f32.mxu0 0.0
        %2671 = vmatmul.mubr.f32.gmra.mrb[0].mxu0 %v1467
        %v2672 = vpop.f32.mrb[0].mxu0
        %v2673 = vadd.f32 %v399, %v2672
        %v2674 = vpop.f32.mrb[0].mxu0
        %2675 = vmatprep.mubr.f32.mxu0 0.0
        %2676 = vmatmul.mubr.f32.gmra.mrb[0].mxu0 %v1470
        %v2677 = vpop.f32.mrb[0].mxu0
        %v2678 = vadd.f32 %v399, %v2677
        %v2679 = vpop.f32.mrb[0].mxu0
        %2680 = vmatprep.mubr.f32.mxu0 0.0
        %2681 = vmatmul.mubr.f32.gmra.mrb[0].mxu0 %v1473
        %v2682 = vpop.f32.mrb[0].mxu0
        %v2683 = vadd.f32 %v399, %v2682
        %v2684 = vpop.f32.mrb[0].mxu0
        %2685 = vmatprep.mubr.f32.mxu0 0.0
        %2686 = vmatmul.mubr.f32.gmra.mrb[0].mxu0 %v1476
        %v2687 = vpop.f32.mrb[0].mxu0
        %v2688 = vadd.f32 %v399, %v2687
        %v2689 = vpop.f32.mrb[0].mxu0
        %2690 = vmatprep.mubr.f32.mxu0 0.0
        %2691 = vmatmul.mubr.f32.gmra.mrb[0].mxu0 %v1479
        %v2692 = vpop.f32.mrb[0].mxu0
        %v2693 = vadd.f32 %v399, %v2692
        %v2694 = vpop.f32.mrb[0].mxu0
        %2695 = vmatprep.mubr.f32.mxu0 0.0
        %2696 = vmatmul.mubr.f32.gmra.mrb[0].mxu0 %v1482
        %v2697 = vpop.f32.mrb[0].mxu0
        %v2698 = vadd.f32 %v399, %v2697
        %v2699 = vpop.f32.mrb[0].mxu0
        %2700 = vmatprep.mubr.f32.mxu0 0.0
        %2701 = vmatmul.mubr.f32.gmra.mrb[0].mxu0 %v1485
        %v2702 = vpop.f32.mrb[0].mxu0
        %v2703 = vadd.f32 %v399, %v2702
        %v2704 = vpop.f32.mrb[0].mxu0
        %2705 = vmatprep.mubr.f32.mxu0 0.0
        %2706 = vmatmul.mubr.f32.gmra.mrb[0].mxu0 %v1488
        %v2707 = vpop.f32.mrb[0].mxu0
        %v2708 = vadd.f32 %v399, %v2707
        %v2709 = vpop.f32.mrb[0].mxu0
        %2710 = vmatprep.mubr.f32.mxu0 0.0
        %2711 = vmatmul.mubr.f32.gmra.mrb[0].mxu0 %v1491
        %v2712 = vpop.f32.mrb[0].mxu0
        %v2713 = vadd.f32 %v399, %v2712
        %v2714 = vpop.f32.mrb[0].mxu0
        %2715 = vmatprep.mubr.f32.mxu0 0.0
        %2716 = vmatmul.mubr.f32.gmra.mrb[0].mxu0 %v1494
        %v2717 = vpop.f32.mrb[0].mxu0
        %v2718 = vadd.f32 %v399, %v2717
        %v2719 = vpop.f32.mrb[0].mxu0
        %2720 = vmatprep.mubr.f32.mxu0 0.0
        %2721 = vmatmul.mubr.f32.gmra.mrb[0].mxu0 %v1497
        %v2722 = vpop.f32.mrb[0].mxu0
        %v2723 = vadd.f32 %v399, %v2722
        %v2724 = vpop.f32.mrb[0].mxu0
        %2725 = vmatprep.mubr.f32.mxu0 0.0
        %2726 = vmatmul.mubr.f32.gmra.mrb[0].mxu0 %v1500
        %v2727 = vpop.f32.mrb[0].mxu0
        %v2728 = vadd.f32 %v399, %v2727
        %v2729 = vpop.f32.mrb[0].mxu0
        %2730 = vmatprep.mubr.f32.mxu0 0.0
        %2731 = vmatmul.mubr.f32.gmra.mrb[0].mxu0 %v1503
        %v2732 = vpop.f32.mrb[0].mxu0
        %v2733 = vadd.f32 %v399, %v2732
        %v2734 = vpop.f32.mrb[0].mxu0
        %2735 = vmatprep.mubr.f32.mxu0 0.0
        %2736 = vmatmul.mubr.f32.gmra.mrb[0].mxu0 %v1506
        %v2737 = vpop.f32.mrb[0].mxu0
        %v2738 = vadd.f32 %v399, %v2737
        %v2739 = vpop.f32.mrb[0].mxu0
        %2740 = vmatprep.mubr.f32.mxu0 0.0
        %2741 = vmatmul.mubr.f32.gmra.mrb[0].mxu0 %v1509
        %v2742 = vpop.f32.mrb[0].mxu0
        %v2743 = vadd.f32 %v399, %v2742
        %v2744 = vpop.f32.mrb[0].mxu0
        %2745 = vmatprep.mubr.f32.mxu0 0.0
        %2746 = vmatmul.mubr.f32.gmra.mrb[0].mxu0 %v1512
        %v2747 = vpop.f32.mrb[0].mxu0
        %v2748 = vadd.f32 %v399, %v2747
        %v2749 = vpop.f32.mrb[0].mxu0
        %2750 = vmatprep.mubr.f32.mxu0 0.0
        %2751 = vmatmul.mubr.f32.gmra.mrb[0].mxu0 %v1515
        %v2752 = vpop.f32.mrb[0].mxu0
        %v2753 = vadd.f32 %v399, %v2752
        %v2754 = vpop.f32.mrb[0].mxu0
        %2755 = vmatprep.mubr.f32.mxu0 0.0
        %2756 = vmatmul.mubr.f32.gmra.mrb[0].mxu0 %v1518
        %v2757 = vpop.f32.mrb[0].mxu0
        %v2758 = vadd.f32 %v399, %v2757
        %v2759 = vpop.f32.mrb[0].mxu0
        %2760 = vmatprep.mubr.f32.mxu0 0.0
        %2761 = vmatmul.mubr.f32.gmra.mrb[0].mxu0 %v1521
        %v2762 = vpop.f32.mrb[0].mxu0
        %v2763 = vadd.f32 %v399, %v2762
        %v2764 = vpop.f32.mrb[0].mxu0
        %2765 = vmatprep.mubr.f32.mxu0 0.0
        %2766 = vmatmul.mubr.f32.gmra.mrb[0].mxu0 %v1524
        %v2767 = vpop.f32.mrb[0].mxu0
        %v2768 = vadd.f32 %v399, %v2767
        %v2769 = vpop.f32.mrb[0].mxu0
        %2770 = vmatprep.mubr.f32.mxu0 0.0
        %2771 = vmatmul.mubr.f32.gmra.mrb[0].mxu0 %v1527
        %v2772 = vpop.f32.mrb[0].mxu0
        %v2773 = vadd.f32 %v399, %v2772
        %v2774 = vpop.f32.mrb[0].mxu0
        %2775 = vmatprep.mubr.f32.mxu0 0.0
        %2776 = vmatmul.mubr.f32.gmra.mrb[0].mxu0 %v1530
        %v2777 = vpop.f32.mrb[0].mxu0
        %v2778 = vadd.f32 %v399, %v2777
        %v2779 = vpop.f32.mrb[0].mxu0
        %2780 = vmatprep.mubr.f32.mxu0 0.0
        %2781 = vmatmul.mubr.f32.gmra.mrb[0].mxu0 %v1533
        %v2782 = vpop.f32.mrb[0].mxu0
        %v2783 = vadd.f32 %v399, %v2782
        %v2784 = vpop.f32.mrb[0].mxu0
        %2785 = vmatprep.mubr.f32.mxu0 0.0
        %2786 = vmatmul.mubr.f32.gmra.mrb[0].mxu0 %v1536
        %v2787 = vpop.f32.mrb[0].mxu0
        %v2788 = vadd.f32 %v399, %v2787
        %v2789 = vpop.f32.mrb[0].mxu0
        %2790 = vmatprep.mubr.f32.mxu0 0.0
        %2791 = vmatmul.mubr.f32.gmra.mrb[0].mxu0 %v1539
        %v2792 = vpop.f32.mrb[0].mxu0
        %v2793 = vadd.f32 %v399, %v2792
        %v2794 = vpop.f32.mrb[0].mxu0
        %2795 = vmatprep.mubr.f32.mxu0 0.0
        %2796 = vmatmul.mubr.f32.gmra.mrb[0].mxu0 %v1542
        %v2797 = vpop.f32.mrb[0].mxu0
        %v2798 = vadd.f32 %v399, %v2797
        %v2799 = vpop.f32.mrb[0].mxu0
        %2800 = vmatprep.mubr.f32.mxu0 0.0
        %2801 = vmatmul.mubr.f32.gmra.mrb[0].mxu0 %v1545
        %v2802 = vpop.f32.mrb[0].mxu0
        %v2803 = vadd.f32 %v399, %v2802
        %v2804 = vpop.f32.mrb[0].mxu0
        %2805 = vmatprep.mubr.f32.mxu0 0.0
        %2806 = vmatmul.mubr.f32.gmra.mrb[0].mxu0 %v1548
        %v2807 = vpop.f32.mrb[0].mxu0
        %v2808 = vadd.f32 %v399, %v2807
        %v2809 = vpop.f32.mrb[0].mxu0
        %2810 = vmatprep.mubr.f32.mxu0 0.0
        %2811 = vmatmul.mubr.f32.gmra.mrb[0].mxu0 %v1551
        %v2812 = vpop.f32.mrb[0].mxu0
        %v2813 = vadd.f32 %v399, %v2812
        %v2814 = vpop.f32.mrb[0].mxu0
        %2815 = vmatprep.mubr.f32.mxu0 0.0
        %2816 = vmatmul.mubr.f32.gmra.mrb[0].mxu0 %v1554
        %v2817 = vpop.f32.mrb[0].mxu0
        %v2818 = vadd.f32 %v399, %v2817
        %v2819 = vpop.f32.mrb[0].mxu0
        %2820 = vmatprep.mubr.f32.mxu0 0.0
        %2821 = vmatmul.mubr.f32.gmra.mrb[0].mxu0 %v1557
        %v2822 = vpop.f32.mrb[0].mxu0
        %v2823 = vadd.f32 %v399, %v2822
        %v2824 = vpop.f32.mrb[0].mxu0
        %2825 = vmatprep.mubr.f32.mxu0 0.0
        %2826 = vmatmul.mubr.f32.gmra.mrb[0].mxu0 %v1560
        %v2827 = vpop.f32.mrb[0].mxu0
        %v2828 = vadd.f32 %v399, %v2827
        %v2829 = vpop.f32.mrb[0].mxu0
        %2830 = vmatprep.mubr.f32.mxu0 0.0
        %2831 = vmatmul.mubr.f32.gmra.mrb[0].mxu0 %v1563
        %v2832 = vpop.f32.mrb[0].mxu0
        %v2833 = vadd.f32 %v399, %v2832
        %v2834 = vpop.f32.mrb[0].mxu0
        %2835 = vmatprep.mubr.f32.mxu0 0.0
        %2836 = vmatmul.mubr.f32.gmra.mrb[0].mxu0 %v1566
        %v2837 = vpop.f32.mrb[0].mxu0
        %v2838 = vadd.f32 %v399, %v2837
        %v2839 = vpop.f32.mrb[0].mxu0
        %2840 = vmatprep.mubr.f32.mxu0 0.0
        %2841 = vmatmul.mubr.f32.gmra.mrb[0].mxu0 %v1569
        %v2842 = vpop.f32.mrb[0].mxu0
        %v2843 = vadd.f32 %v399, %v2842
        %v2844 = vpop.f32.mrb[0].mxu0
        %2845 = vmatprep.mubr.f32.mxu0 0.0
        %2846 = vmatmul.mubr.f32.gmra.mrb[0].mxu0 %v1572
        %v2847 = vpop.f32.mrb[0].mxu0
        %v2848 = vadd.f32 %v399, %v2847
        %v2849 = vpop.f32.mrb[0].mxu0
        %2850 = vmatprep.mubr.f32.mxu0 0.0
        %2851 = vmatmul.mubr.f32.gmra.mrb[0].mxu0 %v1575
        %v2852 = vpop.f32.mrb[0].mxu0
        %v2853 = vadd.f32 %v399, %v2852
        %v2854 = vpop.f32.mrb[0].mxu0
        %2855 = vmatprep.mubr.f32.mxu0 0.0
        %2856 = vmatmul.mubr.f32.gmra.mrb[0].mxu0 %v1578
        %v2857 = vpop.f32.mrb[0].mxu0
        %v2858 = vadd.f32 %v399, %v2857
        %v2859 = vpop.f32.mrb[0].mxu0
        %2860 = vmatprep.mubr.f32.mxu0 0.0
        %2861 = vmatmul.mubr.f32.gmra.mrb[0].mxu0 %v1581
        %v2862 = vpop.f32.mrb[0].mxu0
        %v2863 = vadd.f32 %v399, %v2862
        %v2864 = vpop.f32.mrb[0].mxu0
        %2865 = vmatprep.mubr.f32.mxu0 0.0
        %2866 = vmatmul.mubr.f32.gmra.mrb[0].mxu0 %v1584
        %v2867 = vpop.f32.mrb[0].mxu0
        %v2868 = vadd.f32 %v399, %v2867
        %v2869 = vpop.f32.mrb[0].mxu0
        %2870 = vmatprep.mubr.f32.mxu0 0.0
        %2871 = vmatmul.mubr.f32.gmra.mrb[0].mxu0 %v1587
        %v2872 = vpop.f32.mrb[0].mxu0
        %v2873 = vadd.f32 %v399, %v2872
        %v2874 = vpop.f32.mrb[0].mxu0
        %2875 = vmatprep.mubr.f32.mxu0 0.0
        %2876 = vmatmul.mubr.f32.gmra.mrb[0].mxu0 %v1590
        %v2877 = vpop.f32.mrb[0].mxu0
        %v2878 = vadd.f32 %v399, %v2877
        %v2879 = vpop.f32.mrb[0].mxu0
        %2880 = vmatprep.mubr.f32.mxu0 0.0
        %2881 = vmatmul.mubr.f32.gmra.mrb[0].mxu0 %v1593
        %v2882 = vpop.f32.mrb[0].mxu0
        %v2883 = vadd.f32 %v399, %v2882
        %v2884 = vpop.f32.mrb[0].mxu0
        %2885 = vmatprep.mubr.f32.mxu0 0.0
        %2886 = vmatmul.mubr.f32.gmra.mrb[0].mxu0 %v1596
        %v2887 = vpop.f32.mrb[0].mxu0
        %v2888 = vadd.f32 %v399, %v2887
        %v2889 = vpop.f32.mrb[0].mxu0
        %2890 = vmatprep.mubr.f32.mxu0 0.0
        %2891 = vmatmul.mubr.f32.gmra.mrb[0].mxu0 %v1599
        %v2892 = vpop.f32.mrb[0].mxu0
        %v2893 = vadd.f32 %v399, %v2892
        %v2894 = vpop.f32.mrb[0].mxu0
        %2895 = vmatprep.mubr.f32.mxu0 0.0
        %2896 = vmatmul.mubr.f32.gmra.mrb[0].mxu0 %v1602
        %v2897 = vpop.f32.mrb[0].mxu0
        %v2898 = vadd.f32 %v399, %v2897
        %v2899 = vpop.f32.mrb[0].mxu0
        %2900 = vmatprep.mubr.f32.mxu0 0.0
        %2901 = vmatmul.mubr.f32.gmra.mrb[0].mxu0 %v1605
        %v2902 = vpop.f32.mrb[0].mxu0
        %v2903 = vadd.f32 %v399, %v2902
        %v2904 = vpop.f32.mrb[0].mxu0
        %2905 = vmatprep.mubr.f32.mxu0 0.0
        %2906 = vmatmul.mubr.f32.gmra.mrb[0].mxu0 %v1608
        %v2907 = vpop.f32.mrb[0].mxu0
        %v2908 = vadd.f32 %v399, %v2907
        %v2909 = vpop.f32.mrb[0].mxu0
        %2910 = vmatprep.mubr.f32.mxu0 0.0
        %2911 = vmatmul.mubr.f32.gmra.mrb[0].mxu0 %v1611
        %v2912 = vpop.f32.mrb[0].mxu0
        %v2913 = vadd.f32 %v399, %v2912
        %v2914 = vpop.f32.mrb[0].mxu0
        %2915 = vmatprep.mubr.f32.mxu0 0.0
        %2916 = vmatmul.mubr.f32.gmra.mrb[0].mxu0 %v1614
        %v2917 = vpop.f32.mrb[0].mxu0
        %v2918 = vadd.f32 %v399, %v2917
        %v2919 = vpop.f32.mrb[0].mxu0
        %2920 = vmatprep.mubr.f32.mxu0 0.0
        %2921 = vmatmul.mubr.f32.gmra.mrb[0].mxu0 %v1617
        %v2922 = vpop.f32.mrb[0].mxu0
        %v2923 = vadd.f32 %v399, %v2922
        %v2924 = vpop.f32.mrb[0].mxu0
        %2925 = vmatprep.mubr.f32.mxu0 0.0
        %2926 = vmatmul.mubr.f32.gmra.mrb[0].mxu0 %v1620
        %v2927 = vpop.f32.mrb[0].mxu0
        %v2928 = vadd.f32 %v399, %v2927
        %v2929 = vpop.f32.mrb[0].mxu0
        %2930 = vmatprep.mubr.f32.mxu0 0.0
        %2931 = vmatmul.mubr.f32.gmra.mrb[0].mxu0 %v1623
        %v2932 = vpop.f32.mrb[0].mxu0
        %v2933 = vadd.f32 %v399, %v2932
        %v2934 = vpop.f32.mrb[0].mxu0
        %2935 = vmatprep.mubr.f32.mxu0 0.0
        %2936 = vmatmul.mubr.f32.gmra.mrb[0].mxu0 %v1626
        %v2937 = vpop.f32.mrb[0].mxu0
        %v2938 = vadd.f32 %v399, %v2937
        %v2939 = vpop.f32.mrb[0].mxu0
        %2940 = vmatprep.mubr.f32.mxu0 0.0
        %2941 = vmatmul.mubr.f32.gmra.mrb[0].mxu0 %v1629
        %v2942 = vpop.f32.mrb[0].mxu0
        %v2943 = vadd.f32 %v399, %v2942
        %v2944 = vpop.f32.mrb[0].mxu0
        %2945 = vmatprep.mubr.f32.mxu0 0.0
        %2946 = vmatmul.mubr.f32.gmra.mrb[0].mxu0 %v1632
        %v2947 = vpop.f32.mrb[0].mxu0
        %v2948 = vadd.f32 %v399, %v2947
        %v2949 = vpop.f32.mrb[0].mxu0
        %2950 = vmatprep.mubr.f32.mxu0 0.0
        %2951 = vmatmul.mubr.f32.gmra.mrb[0].mxu0 %v1635
        %v2952 = vpop.f32.mrb[0].mxu0
        %v2953 = vadd.f32 %v399, %v2952
        %v2954 = vpop.f32.mrb[0].mxu0
        %2955 = vmatprep.mubr.f32.mxu0 0.0
        %2956 = vmatmul.mubr.f32.gmra.mrb[0].mxu0 %v1638
        %v2957 = vpop.f32.mrb[0].mxu0
        %v2958 = vadd.f32 %v399, %v2957
        %v2959 = vpop.f32.mrb[0].mxu0
        %2960 = vmatprep.mubr.f32.mxu0 0.0
        %2961 = vmatmul.mubr.f32.gmra.mrb[0].mxu0 %v1641
        %v2962 = vpop.f32.mrb[0].mxu0
        %v2963 = vadd.f32 %v399, %v2962
        %v2964 = vpop.f32.mrb[0].mxu0
        %2965 = vmatprep.mubr.f32.mxu0 0.0
        %2966 = vmatmul.mubr.f32.gmra.mrb[0].mxu0 %v1644
        %v2967 = vpop.f32.mrb[0].mxu0
        %v2968 = vadd.f32 %v399, %v2967
        %v2969 = vpop.f32.mrb[0].mxu0
        %2970 = vmatprep.mubr.f32.mxu0 0.0
        %2971 = vmatmul.mubr.f32.gmra.mrb[0].mxu0 %v1647
        %v2972 = vpop.f32.mrb[0].mxu0
        %v2973 = vadd.f32 %v399, %v2972
        %v2974 = vpop.f32.mrb[0].mxu0
        %2975 = vmatprep.mubr.f32.mxu0 0.0
        %2976 = vmatmul.mubr.f32.gmra.mrb[0].mxu0 %v1650
        %v2977 = vpop.f32.mrb[0].mxu0
        %v2978 = vadd.f32 %v399, %v2977
        %v2979 = vpop.f32.mrb[0].mxu0
        %2980 = vmatprep.mubr.f32.mxu0 0.0
        %2981 = vmatmul.mubr.f32.gmra.mrb[0].mxu0 %v1653
        %v2982 = vpop.f32.mrb[0].mxu0
        %v2983 = vadd.f32 %v399, %v2982
        %v2984 = vpop.f32.mrb[0].mxu0
        %2985 = vmatprep.mubr.f32.mxu0 0.0
        %2986 = vmatmul.mubr.f32.gmra.mrb[0].mxu0 %v1656
        %v2987 = vpop.f32.mrb[0].mxu0
        %v2988 = vadd.f32 %v399, %v2987
        %v2989 = vpop.f32.mrb[0].mxu0
        %2990 = vmatprep.mubr.f32.mxu0 0.0
        %2991 = vmatmul.mubr.f32.gmra.mrb[0].mxu0 %v1659
        %v2992 = vpop.f32.mrb[0].mxu0
        %v2993 = vadd.f32 %v399, %v2992
        %v2994 = vpop.f32.mrb[0].mxu0
        %2995 = vmatprep.mubr.f32.mxu0 0.0
        %2996 = vmatmul.mubr.f32.gmra.mrb[0].mxu0 %v1662
        %v2997 = vpop.f32.mrb[0].mxu0
        %v2998 = vadd.f32 %v399, %v2997
        %v2999 = vpop.f32.mrb[0].mxu0
        %3000 = vmatprep.mubr.f32.mxu0 0.0
        %3001 = vmatmul.mubr.f32.gmra.mrb[0].mxu0 %v1665
        %v3002 = vpop.f32.mrb[0].mxu0
        %v3003 = vadd.f32 %v399, %v3002
        %v3004 = vpop.f32.mrb[0].mxu0
        %3005 = vmatprep.mubr.f32.mxu0 0.0
        %3006 = vmatmul.mubr.f32.gmra.mrb[0].mxu0 %v1668
        %v3007 = vpop.f32.mrb[0].mxu0
        %v3008 = vadd.f32 %v399, %v3007
        %v3009 = vpop.f32.mrb[0].mxu0
        %3010 = vmatprep.mubr.f32.mxu0 0.0
        %3011 = vmatmul.mubr.f32.gmra.mrb[0].mxu0 %v1671
        %v3012 = vpop.f32.mrb[0].mxu0
        %v3013 = vadd.f32 %v399, %v3012
        %v3014 = vpop.f32.mrb[0].mxu0
        %3015 = vmatprep.mubr.f32.mxu0 0.0
        %3016 = vmatmul.mubr.f32.gmra.mrb[0].mxu0 %v1674
        %v3017 = vpop.f32.mrb[0].mxu0
        %v3018 = vadd.f32 %v399, %v3017
        %v3019 = vpop.f32.mrb[0].mxu0
        %3020 = vmatprep.mubr.f32.mxu0 0.0
        %3021 = vmatmul.mubr.f32.gmra.mrb[0].mxu0 %v1677
        %v3022 = vpop.f32.mrb[0].mxu0
        %v3023 = vadd.f32 %v399, %v3022
        %v3024 = vpop.f32.mrb[0].mxu0
        %3025 = vmatprep.mubr.f32.mxu0 0.0
        %3026 = vmatmul.mubr.f32.gmra.mrb[0].mxu0 %v1680
        %v3027 = vpop.f32.mrb[0].mxu0
        %v3028 = vadd.f32 %v399, %v3027
        %v3029 = vpop.f32.mrb[0].mxu0
        %3030 = vdwg.mxu0
        %v3031 = vmax.f32 %v1753, 0.0
        %v3032 = vmax.f32 %v1758, 0.0
        %v3033 = vmax.f32 %v1763, 0.0
        %v3034 = vmax.f32 %v1768, 0.0
        %v3035 = vmax.f32 %v1773, 0.0
        %v3036 = vmax.f32 %v1778, 0.0
        %v3037 = vmax.f32 %v1783, 0.0
        %v3038 = vmax.f32 %v1788, 0.0
        %v3039 = vmax.f32 %v1793, 0.0
        %v3040 = vmax.f32 %v1798, 0.0
        %v3041 = vmax.f32 %v1803, 0.0
        %v3042 = vmax.f32 %v1808, 0.0
        %v3043 = vmax.f32 %v1813, 0.0
        %v3044 = vmax.f32 %v1818, 0.0
        %v3045 = vmax.f32 %v1823, 0.0
        %v3046 = vmax.f32 %v1828, 0.0
        %v3047 = vmax.f32 %v1833, 0.0
        %v3048 = vmax.f32 %v1838, 0.0
        %v3049 = vmax.f32 %v1843, 0.0
        %v3050 = vmax.f32 %v1848, 0.0
        %v3051 = vmax.f32 %v1853, 0.0
        %v3052 = vmax.f32 %v1858, 0.0
        %v3053 = vmax.f32 %v1863, 0.0
        %v3054 = vmax.f32 %v1868, 0.0
        %v3055 = vmax.f32 %v1873, 0.0
        %v3056 = vmax.f32 %v1878, 0.0
        %v3057 = vmax.f32 %v1883, 0.0
        %v3058 = vmax.f32 %v1888, 0.0
        %v3059 = vmax.f32 %v1893, 0.0
        %v3060 = vmax.f32 %v1898, 0.0
        %v3061 = vmax.f32 %v1903, 0.0
        %v3062 = vmax.f32 %v1908, 0.0
        %v3063 = vmax.f32 %v1913, 0.0
        %v3064 = vmax.f32 %v1918, 0.0
        %v3065 = vmax.f32 %v1923, 0.0
        %v3066 = vmax.f32 %v1928, 0.0
        %v3067 = vmax.f32 %v1933, 0.0
        %v3068 = vmax.f32 %v1938, 0.0
        %v3069 = vmax.f32 %v1943, 0.0
        %v3070 = vmax.f32 %v1948, 0.0
        %v3071 = vmax.f32 %v1953, 0.0
        %v3072 = vmax.f32 %v1958, 0.0
        %v3073 = vmax.f32 %v1963, 0.0
        %v3074 = vmax.f32 %v1968, 0.0
        %v3075 = vmax.f32 %v1973, 0.0
        %v3076 = vmax.f32 %v1978, 0.0
        %v3077 = vmax.f32 %v1983, 0.0
        %v3078 = vmax.f32 %v1988, 0.0
        %v3079 = vmax.f32 %v1993, 0.0
        %v3080 = vmax.f32 %v1998, 0.0
        %v3081 = vmax.f32 %v2003, 0.0
        %v3082 = vmax.f32 %v2008, 0.0
        %v3083 = vmax.f32 %v2013, 0.0
        %v3084 = vmax.f32 %v2018, 0.0
        %v3085 = vmax.f32 %v2023, 0.0
        %v3086 = vmax.f32 %v2028, 0.0
        %v3087 = vmax.f32 %v2033, 0.0
        %v3088 = vmax.f32 %v2038, 0.0
        %v3089 = vmax.f32 %v2043, 0.0
        %v3090 = vmax.f32 %v2048, 0.0
        %v3091 = vmax.f32 %v2053, 0.0
        %v3092 = vmax.f32 %v2058, 0.0
        %v3093 = vmax.f32 %v2063, 0.0
        %v3094 = vmax.f32 %v2068, 0.0
        %v3095 = vmax.f32 %v2073, 0.0
        %v3096 = vmax.f32 %v2078, 0.0
        %v3097 = vmax.f32 %v2083, 0.0
        %v3098 = vmax.f32 %v2088, 0.0
        %v3099 = vmax.f32 %v2093, 0.0
        %v3100 = vmax.f32 %v2098, 0.0
        %v3101 = vmax.f32 %v2103, 0.0
        %v3102 = vmax.f32 %v2108, 0.0
        %v3103 = vmax.f32 %v2113, 0.0
        %v3104 = vmax.f32 %v2118, 0.0
        %v3105 = vmax.f32 %v2123, 0.0
        %v3106 = vmax.f32 %v2128, 0.0
        %v3107 = vmax.f32 %v2133, 0.0
        %v3108 = vmax.f32 %v2138, 0.0
        %v3109 = vmax.f32 %v2143, 0.0
        %v3110 = vmax.f32 %v2148, 0.0
        %v3111 = vmax.f32 %v2153, 0.0
        %v3112 = vmax.f32 %v2158, 0.0
        %v3113 = vmax.f32 %v2163, 0.0
        %v3114 = vmax.f32 %v2168, 0.0
        %v3115 = vmax.f32 %v2173, 0.0
        %v3116 = vmax.f32 %v2178, 0.0
        %v3117 = vmax.f32 %v2183, 0.0
        %v3118 = vmax.f32 %v2188, 0.0
        %v3119 = vmax.f32 %v2193, 0.0
        %v3120 = vmax.f32 %v2198, 0.0
        %v3121 = vmax.f32 %v2203, 0.0
        %v3122 = vmax.f32 %v2208, 0.0
        %v3123 = vmax.f32 %v2213, 0.0
        %v3124 = vmax.f32 %v2218, 0.0
        %v3125 = vmax.f32 %v2223, 0.0
        %v3126 = vmax.f32 %v2228, 0.0
        %v3127 = vmax.f32 %v2233, 0.0
        %v3128 = vmax.f32 %v2238, 0.0
        %v3129 = vmax.f32 %v2243, 0.0
        %v3130 = vmax.f32 %v2248, 0.0
        %v3131 = vmax.f32 %v2253, 0.0
        %v3132 = vmax.f32 %v2258, 0.0
        %v3133 = vmax.f32 %v2263, 0.0
        %v3134 = vmax.f32 %v2268, 0.0
        %v3135 = vmax.f32 %v2273, 0.0
        %v3136 = vmax.f32 %v2278, 0.0
        %v3137 = vmax.f32 %v2283, 0.0
        %v3138 = vmax.f32 %v2288, 0.0
        %v3139 = vmax.f32 %v2293, 0.0
        %v3140 = vmax.f32 %v2298, 0.0
        %v3141 = vmax.f32 %v2303, 0.0
        %v3142 = vmax.f32 %v2308, 0.0
        %v3143 = vmax.f32 %v2313, 0.0
        %v3144 = vmax.f32 %v2318, 0.0
        %v3145 = vmax.f32 %v2323, 0.0
        %v3146 = vmax.f32 %v2328, 0.0
        %v3147 = vmax.f32 %v2333, 0.0
        %v3148 = vmax.f32 %v2338, 0.0
        %v3149 = vmax.f32 %v2343, 0.0
        %v3150 = vmax.f32 %v2348, 0.0
        %v3151 = vmax.f32 %v2353, 0.0
        %v3152 = vmax.f32 %v2358, 0.0
        %v3153 = vmax.f32 %v2363, 0.0
        %v3154 = vmax.f32 %v2368, 0.0
        %v3155 = vmax.f32 %v2373, 0.0
        %v3156 = vmax.f32 %v2378, 0.0
        %v3157 = vmax.f32 %v2383, 0.0
        %v3158 = vmax.f32 %v2388, 0.0
        %v3159 = vmax.f32 %v2393, 0.0
        %v3160 = vmax.f32 %v2398, 0.0
        %v3161 = vmax.f32 %v2403, 0.0
        %v3162 = vmax.f32 %v2408, 0.0
        %v3163 = vmax.f32 %v2413, 0.0
        %v3164 = vmax.f32 %v2418, 0.0
        %v3165 = vmax.f32 %v2423, 0.0
        %v3166 = vmax.f32 %v2428, 0.0
        %v3167 = vmax.f32 %v2433, 0.0
        %v3168 = vmax.f32 %v2438, 0.0
        %v3169 = vmax.f32 %v2443, 0.0
        %v3170 = vmax.f32 %v2448, 0.0
        %v3171 = vmax.f32 %v2453, 0.0
        %v3172 = vmax.f32 %v2458, 0.0
        %v3173 = vmax.f32 %v2463, 0.0
        %v3174 = vmax.f32 %v2468, 0.0
        %v3175 = vmax.f32 %v2473, 0.0
        %v3176 = vmax.f32 %v2478, 0.0
        %v3177 = vmax.f32 %v2483, 0.0
        %v3178 = vmax.f32 %v2488, 0.0
        %v3179 = vmax.f32 %v2493, 0.0
        %v3180 = vmax.f32 %v2498, 0.0
        %v3181 = vmax.f32 %v2503, 0.0
        %v3182 = vmax.f32 %v2508, 0.0
        %v3183 = vmax.f32 %v2513, 0.0
        %v3184 = vmax.f32 %v2518, 0.0
        %v3185 = vmax.f32 %v2523, 0.0
        %v3186 = vmax.f32 %v2528, 0.0
        %v3187 = vmax.f32 %v2533, 0.0
        %v3188 = vmax.f32 %v2538, 0.0
        %v3189 = vmax.f32 %v2543, 0.0
        %v3190 = vmax.f32 %v2548, 0.0
        %v3191 = vmax.f32 %v2553, 0.0
        %v3192 = vmax.f32 %v2558, 0.0
        %v3193 = vmax.f32 %v2563, 0.0
        %v3194 = vmax.f32 %v2568, 0.0
        %v3195 = vmax.f32 %v2573, 0.0
        %v3196 = vmax.f32 %v2578, 0.0
        %v3197 = vmax.f32 %v2583, 0.0
        %v3198 = vmax.f32 %v2588, 0.0
        %v3199 = vmax.f32 %v2593, 0.0
        %v3200 = vmax.f32 %v2598, 0.0
        %v3201 = vmax.f32 %v2603, 0.0
        %v3202 = vmax.f32 %v2608, 0.0
        %v3203 = vmax.f32 %v2613, 0.0
        %v3204 = vmax.f32 %v2618, 0.0
        %v3205 = vmax.f32 %v2623, 0.0
        %v3206 = vmax.f32 %v2628, 0.0
        %v3207 = vmax.f32 %v2633, 0.0
        %v3208 = vmax.f32 %v2638, 0.0
        %v3209 = vmax.f32 %v2643, 0.0
        %v3210 = vmax.f32 %v2648, 0.0
        %v3211 = vmax.f32 %v2653, 0.0
        %v3212 = vmax.f32 %v2658, 0.0
        %v3213 = vmax.f32 %v2663, 0.0
        %v3214 = vmax.f32 %v2668, 0.0
        %v3215 = vmax.f32 %v2673, 0.0
        %v3216 = vmax.f32 %v2678, 0.0
        %v3217 = vmax.f32 %v2683, 0.0
        %v3218 = vmax.f32 %v2688, 0.0
        %v3219 = vmax.f32 %v2693, 0.0
        %v3220 = vmax.f32 %v2698, 0.0
        %v3221 = vmax.f32 %v2703, 0.0
        %v3222 = vmax.f32 %v2708, 0.0
        %v3223 = vmax.f32 %v2713, 0.0
        %v3224 = vmax.f32 %v2718, 0.0
        %v3225 = vmax.f32 %v2723, 0.0
        %v3226 = vmax.f32 %v2728, 0.0
        %v3227 = vmax.f32 %v2733, 0.0
        %v3228 = vmax.f32 %v2738, 0.0
        %v3229 = vmax.f32 %v2743, 0.0
        %v3230 = vmax.f32 %v2748, 0.0
        %v3231 = vmax.f32 %v2753, 0.0
        %v3232 = vmax.f32 %v2758, 0.0
        %v3233 = vmax.f32 %v2763, 0.0
        %v3234 = vmax.f32 %v2768, 0.0
        %v3235 = vmax.f32 %v2773, 0.0
        %v3236 = vmax.f32 %v2778, 0.0
        %v3237 = vmax.f32 %v2783, 0.0
        %v3238 = vmax.f32 %v2788, 0.0
        %v3239 = vmax.f32 %v2793, 0.0
        %v3240 = vmax.f32 %v2798, 0.0
        %v3241 = vmax.f32 %v2803, 0.0
        %v3242 = vmax.f32 %v2808, 0.0
        %v3243 = vmax.f32 %v2813, 0.0
        %v3244 = vmax.f32 %v2818, 0.0
        %v3245 = vmax.f32 %v2823, 0.0
        %v3246 = vmax.f32 %v2828, 0.0
        %v3247 = vmax.f32 %v2833, 0.0
        %v3248 = vmax.f32 %v2838, 0.0
        %v3249 = vmax.f32 %v2843, 0.0
        %v3250 = vmax.f32 %v2848, 0.0
        %v3251 = vmax.f32 %v2853, 0.0
        %v3252 = vmax.f32 %v2858, 0.0
        %v3253 = vmax.f32 %v2863, 0.0
        %v3254 = vmax.f32 %v2868, 0.0
        %v3255 = vmax.f32 %v2873, 0.0
        %v3256 = vmax.f32 %v2878, 0.0
        %v3257 = vmax.f32 %v2883, 0.0
        %v3258 = vmax.f32 %v2888, 0.0
        %v3259 = vmax.f32 %v2893, 0.0
        %v3260 = vmax.f32 %v2898, 0.0
        %v3261 = vmax.f32 %v2903, 0.0
        %v3262 = vmax.f32 %v2908, 0.0
        %v3263 = vmax.f32 %v2913, 0.0
        %v3264 = vmax.f32 %v2918, 0.0
        %v3265 = vmax.f32 %v2923, 0.0
        %v3266 = vmax.f32 %v2928, 0.0
        %v3267 = vmax.f32 %v2933, 0.0
        %v3268 = vmax.f32 %v2938, 0.0
        %v3269 = vmax.f32 %v2943, 0.0
        %v3270 = vmax.f32 %v2948, 0.0
        %v3271 = vmax.f32 %v2953, 0.0
        %v3272 = vmax.f32 %v2958, 0.0
        %v3273 = vmax.f32 %v2963, 0.0
        %v3274 = vmax.f32 %v2968, 0.0
        %v3275 = vmax.f32 %v2973, 0.0
        %v3276 = vmax.f32 %v2978, 0.0
        %v3277 = vmax.f32 %v2983, 0.0
        %v3278 = vmax.f32 %v2988, 0.0
        %v3279 = vmax.f32 %v2993, 0.0
        %v3280 = vmax.f32 %v2998, 0.0
        %v3281 = vmax.f32 %v3003, 0.0
        %v3282 = vmax.f32 %v3008, 0.0
        %v3283 = vmax.f32 %v3013, 0.0
        %v3284 = vmax.f32 %v3018, 0.0
        %v3285 = vmax.f32 %v3023, 0.0
        %v3286 = vmax.f32 %v3028, 0.0
        %vm3287 = vcmask 261120
        %3288 = vst.msk [vmem:[#allocation2] sm:$0xff] %vm3287, %v3031
        %3289 = vst.msk [vmem:[#allocation2 + $0x8] sm:$0xff] %vm3287, %v3032
        %3290 = vst.msk [vmem:[#allocation2 + $0x10] sm:$0xff] %vm3287, %v3033
        %3291 = vst.msk [vmem:[#allocation2 + $0x18] sm:$0xff] %vm3287, %v3034
        %3292 = vst.msk [vmem:[#allocation2 + $0x20] sm:$0xff] %vm3287, %v3035
        %3293 = vst.msk [vmem:[#allocation2 + $0x28] sm:$0xff] %vm3287, %v3036
        %3294 = vst.msk [vmem:[#allocation2 + $0x30] sm:$0xff] %vm3287, %v3037
        %3295 = vst.msk [vmem:[#allocation2 + $0x38] sm:$0xff] %vm3287, %v3038
        %3296 = vst.msk [vmem:[#allocation2 + $0x40] sm:$0xff] %vm3287, %v3039
        %3297 = vst.msk [vmem:[#allocation2 + $0x48] sm:$0xff] %vm3287, %v3040
        %3298 = vst.msk [vmem:[#allocation2 + $0x50] sm:$0xff] %vm3287, %v3041
        %3299 = vst.msk [vmem:[#allocation2 + $0x58] sm:$0xff] %vm3287, %v3042
        %3300 = vst.msk [vmem:[#allocation2 + $0x60] sm:$0xff] %vm3287, %v3043
        %3301 = vst.msk [vmem:[#allocation2 + $0x68] sm:$0xff] %vm3287, %v3044
        %3302 = vst.msk [vmem:[#allocation2 + $0x70] sm:$0xff] %vm3287, %v3045
        %3303 = vst.msk [vmem:[#allocation2 + $0x78] sm:$0xff] %vm3287, %v3046
        %3304 = vst.msk [vmem:[#allocation2 + $0x80] sm:$0xff] %vm3287, %v3047
        %3305 = vst.msk [vmem:[#allocation2 + $0x88] sm:$0xff] %vm3287, %v3048
        %3306 = vst.msk [vmem:[#allocation2 + $0x90] sm:$0xff] %vm3287, %v3049
        %3307 = vst.msk [vmem:[#allocation2 + $0x98] sm:$0xff] %vm3287, %v3050
        %3308 = vst.msk [vmem:[#allocation2 + $0xa0] sm:$0xff] %vm3287, %v3051
        %3309 = vst.msk [vmem:[#allocation2 + $0xa8] sm:$0xff] %vm3287, %v3052
        %3310 = vst.msk [vmem:[#allocation2 + $0xb0] sm:$0xff] %vm3287, %v3053
        %3311 = vst.msk [vmem:[#allocation2 + $0xb8] sm:$0xff] %vm3287, %v3054
        %3312 = vst.msk [vmem:[#allocation2 + $0xc0] sm:$0xff] %vm3287, %v3055
        %3313 = vst.msk [vmem:[#allocation2 + $0xc8] sm:$0xff] %vm3287, %v3056
        %3314 = vst.msk [vmem:[#allocation2 + $0xd0] sm:$0xff] %vm3287, %v3057
        %3315 = vst.msk [vmem:[#allocation2 + $0xd8] sm:$0xff] %vm3287, %v3058
        %3316 = vst.msk [vmem:[#allocation2 + $0xe0] sm:$0xff] %vm3287, %v3059
        %3317 = vst.msk [vmem:[#allocation2 + $0xe8] sm:$0xff] %vm3287, %v3060
        %3318 = vst.msk [vmem:[#allocation2 + $0xf0] sm:$0xff] %vm3287, %v3061
        %3319 = vst.msk [vmem:[#allocation2 + $0xf8] sm:$0xff] %vm3287, %v3062
        %3320 = vst.msk [vmem:[#allocation2 + $0x100] sm:$0xff] %vm3287, %v3063
        %3321 = vst.msk [vmem:[#allocation2 + $0x108] sm:$0xff] %vm3287, %v3064
        %3322 = vst.msk [vmem:[#allocation2 + $0x110] sm:$0xff] %vm3287, %v3065
        %3323 = vst.msk [vmem:[#allocation2 + $0x118] sm:$0xff] %vm3287, %v3066
        %3324 = vst.msk [vmem:[#allocation2 + $0x120] sm:$0xff] %vm3287, %v3067
        %3325 = vst.msk [vmem:[#allocation2 + $0x128] sm:$0xff] %vm3287, %v3068
        %3326 = vst.msk [vmem:[#allocation2 + $0x130] sm:$0xff] %vm3287, %v3069
        %3327 = vst.msk [vmem:[#allocation2 + $0x138] sm:$0xff] %vm3287, %v3070
        %3328 = vst.msk [vmem:[#allocation2 + $0x140] sm:$0xff] %vm3287, %v3071
        %3329 = vst.msk [vmem:[#allocation2 + $0x148] sm:$0xff] %vm3287, %v3072
        %3330 = vst.msk [vmem:[#allocation2 + $0x150] sm:$0xff] %vm3287, %v3073
        %3331 = vst.msk [vmem:[#allocation2 + $0x158] sm:$0xff] %vm3287, %v3074
        %3332 = vst.msk [vmem:[#allocation2 + $0x160] sm:$0xff] %vm3287, %v3075
        %3333 = vst.msk [vmem:[#allocation2 + $0x168] sm:$0xff] %vm3287, %v3076
        %3334 = vst.msk [vmem:[#allocation2 + $0x170] sm:$0xff] %vm3287, %v3077
        %3335 = vst.msk [vmem:[#allocation2 + $0x178] sm:$0xff] %vm3287, %v3078
        %3336 = vst.msk [vmem:[#allocation2 + $0x180] sm:$0xff] %vm3287, %v3079
        %3337 = vst.msk [vmem:[#allocation2 + $0x188] sm:$0xff] %vm3287, %v3080
        %3338 = vst.msk [vmem:[#allocation2 + $0x190] sm:$0xff] %vm3287, %v3081
        %3339 = vst.msk [vmem:[#allocation2 + $0x198] sm:$0xff] %vm3287, %v3082
        %3340 = vst.msk [vmem:[#allocation2 + $0x1a0] sm:$0xff] %vm3287, %v3083
        %3341 = vst.msk [vmem:[#allocation2 + $0x1a8] sm:$0xff] %vm3287, %v3084
        %3342 = vst.msk [vmem:[#allocation2 + $0x1b0] sm:$0xff] %vm3287, %v3085
        %3343 = vst.msk [vmem:[#allocation2 + $0x1b8] sm:$0xff] %vm3287, %v3086
        %3344 = vst.msk [vmem:[#allocation2 + $0x1c0] sm:$0xff] %vm3287, %v3087
        %3345 = vst.msk [vmem:[#allocation2 + $0x1c8] sm:$0xff] %vm3287, %v3088
        %3346 = vst.msk [vmem:[#allocation2 + $0x1d0] sm:$0xff] %vm3287, %v3089
        %3347 = vst.msk [vmem:[#allocation2 + $0x1d8] sm:$0xff] %vm3287, %v3090
        %3348 = vst.msk [vmem:[#allocation2 + $0x1e0] sm:$0xff] %vm3287, %v3091
        %3349 = vst.msk [vmem:[#allocation2 + $0x1e8] sm:$0xff] %vm3287, %v3092
        %3350 = vst.msk [vmem:[#allocation2 + $0x1f0] sm:$0xff] %vm3287, %v3093
        %3351 = vst.msk [vmem:[#allocation2 + $0x1f8] sm:$0xff] %vm3287, %v3094
        %3352 = vst.msk [vmem:[#allocation2 + $0x200] sm:$0xff] %vm3287, %v3095
        %3353 = vst.msk [vmem:[#allocation2 + $0x208] sm:$0xff] %vm3287, %v3096
        %3354 = vst.msk [vmem:[#allocation2 + $0x210] sm:$0xff] %vm3287, %v3097
        %3355 = vst.msk [vmem:[#allocation2 + $0x218] sm:$0xff] %vm3287, %v3098
        %3356 = vst.msk [vmem:[#allocation2 + $0x220] sm:$0xff] %vm3287, %v3099
        %3357 = vst.msk [vmem:[#allocation2 + $0x228] sm:$0xff] %vm3287, %v3100
        %3358 = vst.msk [vmem:[#allocation2 + $0x230] sm:$0xff] %vm3287, %v3101
        %3359 = vst.msk [vmem:[#allocation2 + $0x238] sm:$0xff] %vm3287, %v3102
        %3360 = vst.msk [vmem:[#allocation2 + $0x240] sm:$0xff] %vm3287, %v3103
        %3361 = vst.msk [vmem:[#allocation2 + $0x248] sm:$0xff] %vm3287, %v3104
        %3362 = vst.msk [vmem:[#allocation2 + $0x250] sm:$0xff] %vm3287, %v3105
        %3363 = vst.msk [vmem:[#allocation2 + $0x258] sm:$0xff] %vm3287, %v3106
        %3364 = vst.msk [vmem:[#allocation2 + $0x260] sm:$0xff] %vm3287, %v3107
        %3365 = vst.msk [vmem:[#allocation2 + $0x268] sm:$0xff] %vm3287, %v3108
        %3366 = vst.msk [vmem:[#allocation2 + $0x270] sm:$0xff] %vm3287, %v3109
        %3367 = vst.msk [vmem:[#allocation2 + $0x278] sm:$0xff] %vm3287, %v3110
        %3368 = vst.msk [vmem:[#allocation2 + $0x280] sm:$0xff] %vm3287, %v3111
        %3369 = vst.msk [vmem:[#allocation2 + $0x288] sm:$0xff] %vm3287, %v3112
        %3370 = vst.msk [vmem:[#allocation2 + $0x290] sm:$0xff] %vm3287, %v3113
        %3371 = vst.msk [vmem:[#allocation2 + $0x298] sm:$0xff] %vm3287, %v3114
        %3372 = vst.msk [vmem:[#allocation2 + $0x2a0] sm:$0xff] %vm3287, %v3115
        %3373 = vst.msk [vmem:[#allocation2 + $0x2a8] sm:$0xff] %vm3287, %v3116
        %3374 = vst.msk [vmem:[#allocation2 + $0x2b0] sm:$0xff] %vm3287, %v3117
        %3375 = vst.msk [vmem:[#allocation2 + $0x2b8] sm:$0xff] %vm3287, %v3118
        %3376 = vst.msk [vmem:[#allocation2 + $0x2c0] sm:$0xff] %vm3287, %v3119
        %3377 = vst.msk [vmem:[#allocation2 + $0x2c8] sm:$0xff] %vm3287, %v3120
        %3378 = vst.msk [vmem:[#allocation2 + $0x2d0] sm:$0xff] %vm3287, %v3121
        %3379 = vst.msk [vmem:[#allocation2 + $0x2d8] sm:$0xff] %vm3287, %v3122
        %3380 = vst.msk [vmem:[#allocation2 + $0x2e0] sm:$0xff] %vm3287, %v3123
        %3381 = vst.msk [vmem:[#allocation2 + $0x2e8] sm:$0xff] %vm3287, %v3124
        %3382 = vst.msk [vmem:[#allocation2 + $0x2f0] sm:$0xff] %vm3287, %v3125
        %3383 = vst.msk [vmem:[#allocation2 + $0x2f8] sm:$0xff] %vm3287, %v3126
        %3384 = vst.msk [vmem:[#allocation2 + $0x300] sm:$0xff] %vm3287, %v3127
        %3385 = vst.msk [vmem:[#allocation2 + $0x308] sm:$0xff] %vm3287, %v3128
        %3386 = vst.msk [vmem:[#allocation2 + $0x310] sm:$0xff] %vm3287, %v3129
        %3387 = vst.msk [vmem:[#allocation2 + $0x318] sm:$0xff] %vm3287, %v3130
        %3388 = vst.msk [vmem:[#allocation2 + $0x320] sm:$0xff] %vm3287, %v3131
        %3389 = vst.msk [vmem:[#allocation2 + $0x328] sm:$0xff] %vm3287, %v3132
        %3390 = vst.msk [vmem:[#allocation2 + $0x330] sm:$0xff] %vm3287, %v3133
        %3391 = vst.msk [vmem:[#allocation2 + $0x338] sm:$0xff] %vm3287, %v3134
        %3392 = vst.msk [vmem:[#allocation2 + $0x340] sm:$0xff] %vm3287, %v3135
        %3393 = vst.msk [vmem:[#allocation2 + $0x348] sm:$0xff] %vm3287, %v3136
        %3394 = vst.msk [vmem:[#allocation2 + $0x350] sm:$0xff] %vm3287, %v3137
        %3395 = vst.msk [vmem:[#allocation2 + $0x358] sm:$0xff] %vm3287, %v3138
        %3396 = vst.msk [vmem:[#allocation2 + $0x360] sm:$0xff] %vm3287, %v3139
        %3397 = vst.msk [vmem:[#allocation2 + $0x368] sm:$0xff] %vm3287, %v3140
        %3398 = vst.msk [vmem:[#allocation2 + $0x370] sm:$0xff] %vm3287, %v3141
        %3399 = vst.msk [vmem:[#allocation2 + $0x378] sm:$0xff] %vm3287, %v3142
        %3400 = vst.msk [vmem:[#allocation2 + $0x380] sm:$0xff] %vm3287, %v3143
        %3401 = vst.msk [vmem:[#allocation2 + $0x388] sm:$0xff] %vm3287, %v3144
        %3402 = vst.msk [vmem:[#allocation2 + $0x390] sm:$0xff] %vm3287, %v3145
        %3403 = vst.msk [vmem:[#allocation2 + $0x398] sm:$0xff] %vm3287, %v3146
        %3404 = vst.msk [vmem:[#allocation2 + $0x3a0] sm:$0xff] %vm3287, %v3147
        %3405 = vst.msk [vmem:[#allocation2 + $0x3a8] sm:$0xff] %vm3287, %v3148
        %3406 = vst.msk [vmem:[#allocation2 + $0x3b0] sm:$0xff] %vm3287, %v3149
        %3407 = vst.msk [vmem:[#allocation2 + $0x3b8] sm:$0xff] %vm3287, %v3150
        %3408 = vst.msk [vmem:[#allocation2 + $0x3c0] sm:$0xff] %vm3287, %v3151
        %3409 = vst.msk [vmem:[#allocation2 + $0x3c8] sm:$0xff] %vm3287, %v3152
        %3410 = vst.msk [vmem:[#allocation2 + $0x3d0] sm:$0xff] %vm3287, %v3153
        %3411 = vst.msk [vmem:[#allocation2 + $0x3d8] sm:$0xff] %vm3287, %v3154
        %3412 = vst.msk [vmem:[#allocation2 + $0x3e0] sm:$0xff] %vm3287, %v3155
        %3413 = vst.msk [vmem:[#allocation2 + $0x3e8] sm:$0xff] %vm3287, %v3156
        %3414 = vst.msk [vmem:[#allocation2 + $0x3f0] sm:$0xff] %vm3287, %v3157
        %3415 = vst.msk [vmem:[#allocation2 + $0x3f8] sm:$0xff] %vm3287, %v3158
        %3416 = vst.msk [vmem:[#allocation2 + $0x400] sm:$0xff] %vm3287, %v3159
        %3417 = vst.msk [vmem:[#allocation2 + $0x408] sm:$0xff] %vm3287, %v3160
        %3418 = vst.msk [vmem:[#allocation2 + $0x410] sm:$0xff] %vm3287, %v3161
        %3419 = vst.msk [vmem:[#allocation2 + $0x418] sm:$0xff] %vm3287, %v3162
        %3420 = vst.msk [vmem:[#allocation2 + $0x420] sm:$0xff] %vm3287, %v3163
        %3421 = vst.msk [vmem:[#allocation2 + $0x428] sm:$0xff] %vm3287, %v3164
        %3422 = vst.msk [vmem:[#allocation2 + $0x430] sm:$0xff] %vm3287, %v3165
        %3423 = vst.msk [vmem:[#allocation2 + $0x438] sm:$0xff] %vm3287, %v3166
        %3424 = vst.msk [vmem:[#allocation2 + $0x440] sm:$0xff] %vm3287, %v3167
        %3425 = vst.msk [vmem:[#allocation2 + $0x448] sm:$0xff] %vm3287, %v3168
        %3426 = vst.msk [vmem:[#allocation2 + $0x450] sm:$0xff] %vm3287, %v3169
        %3427 = vst.msk [vmem:[#allocation2 + $0x458] sm:$0xff] %vm3287, %v3170
        %3428 = vst.msk [vmem:[#allocation2 + $0x460] sm:$0xff] %vm3287, %v3171
        %3429 = vst.msk [vmem:[#allocation2 + $0x468] sm:$0xff] %vm3287, %v3172
        %3430 = vst.msk [vmem:[#allocation2 + $0x470] sm:$0xff] %vm3287, %v3173
        %3431 = vst.msk [vmem:[#allocation2 + $0x478] sm:$0xff] %vm3287, %v3174
        %3432 = vst.msk [vmem:[#allocation2 + $0x480] sm:$0xff] %vm3287, %v3175
        %3433 = vst.msk [vmem:[#allocation2 + $0x488] sm:$0xff] %vm3287, %v3176
        %3434 = vst.msk [vmem:[#allocation2 + $0x490] sm:$0xff] %vm3287, %v3177
        %3435 = vst.msk [vmem:[#allocation2 + $0x498] sm:$0xff] %vm3287, %v3178
        %3436 = vst.msk [vmem:[#allocation2 + $0x4a0] sm:$0xff] %vm3287, %v3179
        %3437 = vst.msk [vmem:[#allocation2 + $0x4a8] sm:$0xff] %vm3287, %v3180
        %3438 = vst.msk [vmem:[#allocation2 + $0x4b0] sm:$0xff] %vm3287, %v3181
        %3439 = vst.msk [vmem:[#allocation2 + $0x4b8] sm:$0xff] %vm3287, %v3182
        %3440 = vst.msk [vmem:[#allocation2 + $0x4c0] sm:$0xff] %vm3287, %v3183
        %3441 = vst.msk [vmem:[#allocation2 + $0x4c8] sm:$0xff] %vm3287, %v3184
        %3442 = vst.msk [vmem:[#allocation2 + $0x4d0] sm:$0xff] %vm3287, %v3185
        %3443 = vst.msk [vmem:[#allocation2 + $0x4d8] sm:$0xff] %vm3287, %v3186
        %3444 = vst.msk [vmem:[#allocation2 + $0x4e0] sm:$0xff] %vm3287, %v3187
        %3445 = vst.msk [vmem:[#allocation2 + $0x4e8] sm:$0xff] %vm3287, %v3188
        %3446 = vst.msk [vmem:[#allocation2 + $0x4f0] sm:$0xff] %vm3287, %v3189
        %3447 = vst.msk [vmem:[#allocation2 + $0x4f8] sm:$0xff] %vm3287, %v3190
        %3448 = vst.msk [vmem:[#allocation2 + $0x500] sm:$0xff] %vm3287, %v3191
        %3449 = vst.msk [vmem:[#allocation2 + $0x508] sm:$0xff] %vm3287, %v3192
        %3450 = vst.msk [vmem:[#allocation2 + $0x510] sm:$0xff] %vm3287, %v3193
        %3451 = vst.msk [vmem:[#allocation2 + $0x518] sm:$0xff] %vm3287, %v3194
        %3452 = vst.msk [vmem:[#allocation2 + $0x520] sm:$0xff] %vm3287, %v3195
        %3453 = vst.msk [vmem:[#allocation2 + $0x528] sm:$0xff] %vm3287, %v3196
        %3454 = vst.msk [vmem:[#allocation2 + $0x530] sm:$0xff] %vm3287, %v3197
        %3455 = vst.msk [vmem:[#allocation2 + $0x538] sm:$0xff] %vm3287, %v3198
        %3456 = vst.msk [vmem:[#allocation2 + $0x540] sm:$0xff] %vm3287, %v3199
        %3457 = vst.msk [vmem:[#allocation2 + $0x548] sm:$0xff] %vm3287, %v3200
        %3458 = vst.msk [vmem:[#allocation2 + $0x550] sm:$0xff] %vm3287, %v3201
        %3459 = vst.msk [vmem:[#allocation2 + $0x558] sm:$0xff] %vm3287, %v3202
        %3460 = vst.msk [vmem:[#allocation2 + $0x560] sm:$0xff] %vm3287, %v3203
        %3461 = vst.msk [vmem:[#allocation2 + $0x568] sm:$0xff] %vm3287, %v3204
        %3462 = vst.msk [vmem:[#allocation2 + $0x570] sm:$0xff] %vm3287, %v3205
        %3463 = vst.msk [vmem:[#allocation2 + $0x578] sm:$0xff] %vm3287, %v3206
        %3464 = vst.msk [vmem:[#allocation2 + $0x580] sm:$0xff] %vm3287, %v3207
        %3465 = vst.msk [vmem:[#allocation2 + $0x588] sm:$0xff] %vm3287, %v3208
        %3466 = vst.msk [vmem:[#allocation2 + $0x590] sm:$0xff] %vm3287, %v3209
        %3467 = vst.msk [vmem:[#allocation2 + $0x598] sm:$0xff] %vm3287, %v3210
        %3468 = vst.msk [vmem:[#allocation2 + $0x5a0] sm:$0xff] %vm3287, %v3211
        %3469 = vst.msk [vmem:[#allocation2 + $0x5a8] sm:$0xff] %vm3287, %v3212
        %3470 = vst.msk [vmem:[#allocation2 + $0x5b0] sm:$0xff] %vm3287, %v3213
        %3471 = vst.msk [vmem:[#allocation2 + $0x5b8] sm:$0xff] %vm3287, %v3214
        %3472 = vst.msk [vmem:[#allocation2 + $0x5c0] sm:$0xff] %vm3287, %v3215
        %3473 = vst.msk [vmem:[#allocation2 + $0x5c8] sm:$0xff] %vm3287, %v3216
        %3474 = vst.msk [vmem:[#allocation2 + $0x5d0] sm:$0xff] %vm3287, %v3217
        %3475 = vst.msk [vmem:[#allocation2 + $0x5d8] sm:$0xff] %vm3287, %v3218
        %3476 = vst.msk [vmem:[#allocation2 + $0x5e0] sm:$0xff] %vm3287, %v3219
        %3477 = vst.msk [vmem:[#allocation2 + $0x5e8] sm:$0xff] %vm3287, %v3220
        %3478 = vst.msk [vmem:[#allocation2 + $0x5f0] sm:$0xff] %vm3287, %v3221
        %3479 = vst.msk [vmem:[#allocation2 + $0x5f8] sm:$0xff] %vm3287, %v3222
        %3480 = vst.msk [vmem:[#allocation2 + $0x600] sm:$0xff] %vm3287, %v3223
        %3481 = vst.msk [vmem:[#allocation2 + $0x608] sm:$0xff] %vm3287, %v3224
        %3482 = vst.msk [vmem:[#allocation2 + $0x610] sm:$0xff] %vm3287, %v3225
        %3483 = vst.msk [vmem:[#allocation2 + $0x618] sm:$0xff] %vm3287, %v3226
        %3484 = vst.msk [vmem:[#allocation2 + $0x620] sm:$0xff] %vm3287, %v3227
        %3485 = vst.msk [vmem:[#allocation2 + $0x628] sm:$0xff] %vm3287, %v3228
        %3486 = vst.msk [vmem:[#allocation2 + $0x630] sm:$0xff] %vm3287, %v3229
        %3487 = vst.msk [vmem:[#allocation2 + $0x638] sm:$0xff] %vm3287, %v3230
        %3488 = vst.msk [vmem:[#allocation2 + $0x640] sm:$0xff] %vm3287, %v3231
        %3489 = vst.msk [vmem:[#allocation2 + $0x648] sm:$0xff] %vm3287, %v3232
        %3490 = vst.msk [vmem:[#allocation2 + $0x650] sm:$0xff] %vm3287, %v3233
        %3491 = vst.msk [vmem:[#allocation2 + $0x658] sm:$0xff] %vm3287, %v3234
        %3492 = vst.msk [vmem:[#allocation2 + $0x660] sm:$0xff] %vm3287, %v3235
        %3493 = vst.msk [vmem:[#allocation2 + $0x668] sm:$0xff] %vm3287, %v3236
        %3494 = vst.msk [vmem:[#allocation2 + $0x670] sm:$0xff] %vm3287, %v3237
        %3495 = vst.msk [vmem:[#allocation2 + $0x678] sm:$0xff] %vm3287, %v3238
        %3496 = vst.msk [vmem:[#allocation2 + $0x680] sm:$0xff] %vm3287, %v3239
        %3497 = vst.msk [vmem:[#allocation2 + $0x688] sm:$0xff] %vm3287, %v3240
        %3498 = vst.msk [vmem:[#allocation2 + $0x690] sm:$0xff] %vm3287, %v3241
        %3499 = vst.msk [vmem:[#allocation2 + $0x698] sm:$0xff] %vm3287, %v3242
        %3500 = vst.msk [vmem:[#allocation2 + $0x6a0] sm:$0xff] %vm3287, %v3243
        %3501 = vst.msk [vmem:[#allocation2 + $0x6a8] sm:$0xff] %vm3287, %v3244
        %3502 = vst.msk [vmem:[#allocation2 + $0x6b0] sm:$0xff] %vm3287, %v3245
        %3503 = vst.msk [vmem:[#allocation2 + $0x6b8] sm:$0xff] %vm3287, %v3246
        %3504 = vst.msk [vmem:[#allocation2 + $0x6c0] sm:$0xff] %vm3287, %v3247
        %3505 = vst.msk [vmem:[#allocation2 + $0x6c8] sm:$0xff] %vm3287, %v3248
        %3506 = vst.msk [vmem:[#allocation2 + $0x6d0] sm:$0xff] %vm3287, %v3249
        %3507 = vst.msk [vmem:[#allocation2 + $0x6d8] sm:$0xff] %vm3287, %v3250
        %3508 = vst.msk [vmem:[#allocation2 + $0x6e0] sm:$0xff] %vm3287, %v3251
        %3509 = vst.msk [vmem:[#allocation2 + $0x6e8] sm:$0xff] %vm3287, %v3252
        %3510 = vst.msk [vmem:[#allocation2 + $0x6f0] sm:$0xff] %vm3287, %v3253
        %3511 = vst.msk [vmem:[#allocation2 + $0x6f8] sm:$0xff] %vm3287, %v3254
        %3512 = vst.msk [vmem:[#allocation2 + $0x700] sm:$0xff] %vm3287, %v3255
        %3513 = vst.msk [vmem:[#allocation2 + $0x708] sm:$0xff] %vm3287, %v3256
        %3514 = vst.msk [vmem:[#allocation2 + $0x710] sm:$0xff] %vm3287, %v3257
        %3515 = vst.msk [vmem:[#allocation2 + $0x718] sm:$0xff] %vm3287, %v3258
        %3516 = vst.msk [vmem:[#allocation2 + $0x720] sm:$0xff] %vm3287, %v3259
        %3517 = vst.msk [vmem:[#allocation2 + $0x728] sm:$0xff] %vm3287, %v3260
        %3518 = vst.msk [vmem:[#allocation2 + $0x730] sm:$0xff] %vm3287, %v3261
        %3519 = vst.msk [vmem:[#allocation2 + $0x738] sm:$0xff] %vm3287, %v3262
        %3520 = vst.msk [vmem:[#allocation2 + $0x740] sm:$0xff] %vm3287, %v3263
        %3521 = vst.msk [vmem:[#allocation2 + $0x748] sm:$0xff] %vm3287, %v3264
        %3522 = vst.msk [vmem:[#allocation2 + $0x750] sm:$0xff] %vm3287, %v3265
        %3523 = vst.msk [vmem:[#allocation2 + $0x758] sm:$0xff] %vm3287, %v3266
        %3524 = vst.msk [vmem:[#allocation2 + $0x760] sm:$0xff] %vm3287, %v3267
        %3525 = vst.msk [vmem:[#allocation2 + $0x768] sm:$0xff] %vm3287, %v3268
        %3526 = vst.msk [vmem:[#allocation2 + $0x770] sm:$0xff] %vm3287, %v3269
        %3527 = vst.msk [vmem:[#allocation2 + $0x778] sm:$0xff] %vm3287, %v3270
        %3528 = vst.msk [vmem:[#allocation2 + $0x780] sm:$0xff] %vm3287, %v3271
        %3529 = vst.msk [vmem:[#allocation2 + $0x788] sm:$0xff] %vm3287, %v3272
        %3530 = vst.msk [vmem:[#allocation2 + $0x790] sm:$0xff] %vm3287, %v3273
        %3531 = vst.msk [vmem:[#allocation2 + $0x798] sm:$0xff] %vm3287, %v3274
        %3532 = vst.msk [vmem:[#allocation2 + $0x7a0] sm:$0xff] %vm3287, %v3275
        %3533 = vst.msk [vmem:[#allocation2 + $0x7a8] sm:$0xff] %vm3287, %v3276
        %3534 = vst.msk [vmem:[#allocation2 + $0x7b0] sm:$0xff] %vm3287, %v3277
        %3535 = vst.msk [vmem:[#allocation2 + $0x7b8] sm:$0xff] %vm3287, %v3278
        %3536 = vst.msk [vmem:[#allocation2 + $0x7c0] sm:$0xff] %vm3287, %v3279
        %3537 = vst.msk [vmem:[#allocation2 + $0x7c8] sm:$0xff] %vm3287, %v3280
        %3538 = vst.msk [vmem:[#allocation2 + $0x7d0] sm:$0xff] %vm3287, %v3281
        %3539 = vst.msk [vmem:[#allocation2 + $0x7d8] sm:$0xff] %vm3287, %v3282
        %3540 = vst.msk [vmem:[#allocation2 + $0x7e0] sm:$0xff] %vm3287, %v3283
        %3541 = vst.msk [vmem:[#allocation2 + $0x7e8] sm:$0xff] %vm3287, %v3284
        %3542 = vst.msk [vmem:[#allocation2 + $0x7f0] sm:$0xff] %vm3287, %v3285
        %3543 = vst.msk [vmem:[#allocation2 + $0x7f8] sm:$0xff] %vm3287, %v3286
        %v3544 = vld [vmem:[#allocation2] ss:$2 sm:$0xff]
        %s3545 = scalar_lea.vmem [#allocation2], 32
        %v3546 = vld [vmem:[%s3545] ss:$2 sm:$0xff]
        %s3547 = scalar_lea.vmem [#allocation2], 64
        %v3548 = vld [vmem:[%s3547] ss:$2 sm:$0xff]
        %s3549 = scalar_lea.vmem [#allocation2], 96
        %v3550 = vld [vmem:[%s3549] ss:$2 sm:$0xff]
        %s3551 = scalar_lea.vmem [#allocation2], 128
        %v3552 = vld [vmem:[%s3551] ss:$2 sm:$0xff]
        %s3553 = scalar_lea.vmem [#allocation2], 160
        %v3554 = vld [vmem:[%s3553] ss:$2 sm:$0xff]
        %s3555 = scalar_lea.vmem [#allocation2], 192
        %v3556 = vld [vmem:[%s3555] ss:$2 sm:$0xff]
        %s3557 = scalar_lea.vmem [#allocation2], 224
        %v3558 = vld [vmem:[%s3557] ss:$2 sm:$0xff]
        %s3559 = scalar_lea.vmem [#allocation2], 256
        %v3560 = vld [vmem:[%s3559] ss:$2 sm:$0xff]
        %s3561 = scalar_lea.vmem [#allocation2], 288
        %v3562 = vld [vmem:[%s3561] ss:$2 sm:$0xff]
        %s3563 = scalar_lea.vmem [#allocation2], 320
        %v3564 = vld [vmem:[%s3563] ss:$2 sm:$0xff]
        %s3565 = scalar_lea.vmem [#allocation2], 352
        %v3566 = vld [vmem:[%s3565] ss:$2 sm:$0xff]
        %s3567 = scalar_lea.vmem [#allocation2], 384
        %v3568 = vld [vmem:[%s3567] ss:$2 sm:$0xff]
        %s3569 = scalar_lea.vmem [#allocation2], 416
        %v3570 = vld [vmem:[%s3569] ss:$2 sm:$0xff]
        %s3571 = scalar_lea.vmem [#allocation2], 448
        %v3572 = vld [vmem:[%s3571] ss:$2 sm:$0xff]
        %s3573 = scalar_lea.vmem [#allocation2], 480
        %v3574 = vld [vmem:[%s3573] ss:$2 sm:$0xff]
        %s3575 = scalar_lea.vmem [#allocation2], 512
        %v3576 = vld [vmem:[%s3575] ss:$2 sm:$0xff]
        %s3577 = scalar_lea.vmem [#allocation2], 544
        %v3578 = vld [vmem:[%s3577] ss:$2 sm:$0xff]
        %s3579 = scalar_lea.vmem [#allocation2], 576
        %v3580 = vld [vmem:[%s3579] ss:$2 sm:$0xff]
        %s3581 = scalar_lea.vmem [#allocation2], 608
        %v3582 = vld [vmem:[%s3581] ss:$2 sm:$0xff]
        %s3583 = scalar_lea.vmem [#allocation2], 640
        %v3584 = vld [vmem:[%s3583] ss:$2 sm:$0xff]
        %s3585 = scalar_lea.vmem [#allocation2], 672
        %v3586 = vld [vmem:[%s3585] ss:$2 sm:$0xff]
        %s3587 = scalar_lea.vmem [#allocation2], 704
        %v3588 = vld [vmem:[%s3587] ss:$2 sm:$0xff]
        %s3589 = scalar_lea.vmem [#allocation2], 736
        %v3590 = vld [vmem:[%s3589] ss:$2 sm:$0xff]
        %s3591 = scalar_lea.vmem [#allocation2], 768
        %v3592 = vld [vmem:[%s3591] ss:$2 sm:$0xff]
        %s3593 = scalar_lea.vmem [#allocation2], 800
        %v3594 = vld [vmem:[%s3593] ss:$2 sm:$0xff]
        %s3595 = scalar_lea.vmem [#allocation2], 832
        %v3596 = vld [vmem:[%s3595] ss:$2 sm:$0xff]
        %s3597 = scalar_lea.vmem [#allocation2], 864
        %v3598 = vld [vmem:[%s3597] ss:$2 sm:$0xff]
        %s3599 = scalar_lea.vmem [#allocation2], 896
        %v3600 = vld [vmem:[%s3599] ss:$2 sm:$0xff]
        %s3601 = scalar_lea.vmem [#allocation2], 928
        %v3602 = vld [vmem:[%s3601] ss:$2 sm:$0xff]
        %s3603 = scalar_lea.vmem [#allocation2], 960
        %v3604 = vld [vmem:[%s3603] ss:$2 sm:$0xff]
        %s3605 = scalar_lea.vmem [#allocation2], 992
        %v3606 = vld [vmem:[%s3605] ss:$2 sm:$0xff]
        %s3607 = scalar_lea.vmem [#allocation2], 1024
        %v3608 = vld [vmem:[%s3607] ss:$2 sm:$0xff]
        %s3609 = scalar_lea.vmem [#allocation2], 1056
        %v3610 = vld [vmem:[%s3609] ss:$2 sm:$0xff]
        %s3611 = scalar_lea.vmem [#allocation2], 1088
        %v3612 = vld [vmem:[%s3611] ss:$2 sm:$0xff]
        %s3613 = scalar_lea.vmem [#allocation2], 1120
        %v3614 = vld [vmem:[%s3613] ss:$2 sm:$0xff]
        %s3615 = scalar_lea.vmem [#allocation2], 1152
        %v3616 = vld [vmem:[%s3615] ss:$2 sm:$0xff]
        %s3617 = scalar_lea.vmem [#allocation2], 1184
        %v3618 = vld [vmem:[%s3617] ss:$2 sm:$0xff]
        %s3619 = scalar_lea.vmem [#allocation2], 1216
        %v3620 = vld [vmem:[%s3619] ss:$2 sm:$0xff]
        %s3621 = scalar_lea.vmem [#allocation2], 1248
        %v3622 = vld [vmem:[%s3621] ss:$2 sm:$0xff]
        %s3623 = scalar_lea.vmem [#allocation2], 1280
        %v3624 = vld [vmem:[%s3623] ss:$2 sm:$0xff]
        %s3625 = scalar_lea.vmem [#allocation2], 1312
        %v3626 = vld [vmem:[%s3625] ss:$2 sm:$0xff]
        %s3627 = scalar_lea.vmem [#allocation2], 1344
        %v3628 = vld [vmem:[%s3627] ss:$2 sm:$0xff]
        %s3629 = scalar_lea.vmem [#allocation2], 1376
        %v3630 = vld [vmem:[%s3629] ss:$2 sm:$0xff]
        %s3631 = scalar_lea.vmem [#allocation2], 1408
        %v3632 = vld [vmem:[%s3631] ss:$2 sm:$0xff]
        %s3633 = scalar_lea.vmem [#allocation2], 1440
        %v3634 = vld [vmem:[%s3633] ss:$2 sm:$0xff]
        %s3635 = scalar_lea.vmem [#allocation2], 1472
        %v3636 = vld [vmem:[%s3635] ss:$2 sm:$0xff]
        %s3637 = scalar_lea.vmem [#allocation2], 1504
        %v3638 = vld [vmem:[%s3637] ss:$2 sm:$0xff]
        %s3639 = scalar_lea.vmem [#allocation2], 1536
        %v3640 = vld [vmem:[%s3639] ss:$2 sm:$0xff]
        %s3641 = scalar_lea.vmem [#allocation2], 1568
        %v3642 = vld [vmem:[%s3641] ss:$2 sm:$0xff]
        %s3643 = scalar_lea.vmem [#allocation2], 1600
        %v3644 = vld [vmem:[%s3643] ss:$2 sm:$0xff]
        %s3645 = scalar_lea.vmem [#allocation2], 1632
        %v3646 = vld [vmem:[%s3645] ss:$2 sm:$0xff]
        %s3647 = scalar_lea.vmem [#allocation2], 1664
        %v3648 = vld [vmem:[%s3647] ss:$2 sm:$0xff]
        %s3649 = scalar_lea.vmem [#allocation2], 1696
        %v3650 = vld [vmem:[%s3649] ss:$2 sm:$0xff]
        %s3651 = scalar_lea.vmem [#allocation2], 1728
        %v3652 = vld [vmem:[%s3651] ss:$2 sm:$0xff]
        %s3653 = scalar_lea.vmem [#allocation2], 1760
        %v3654 = vld [vmem:[%s3653] ss:$2 sm:$0xff]
        %s3655 = scalar_lea.vmem [#allocation2], 1792
        %v3656 = vld [vmem:[%s3655] ss:$2 sm:$0xff]
        %s3657 = scalar_lea.vmem [#allocation2], 1824
        %v3658 = vld [vmem:[%s3657] ss:$2 sm:$0xff]
        %s3659 = scalar_lea.vmem [#allocation2], 1856
        %v3660 = vld [vmem:[%s3659] ss:$2 sm:$0xff]
        %s3661 = scalar_lea.vmem [#allocation2], 1888
        %v3662 = vld [vmem:[%s3661] ss:$2 sm:$0xff]
        %s3663 = scalar_lea.vmem [#allocation2], 1920
        %v3664 = vld [vmem:[%s3663] ss:$2 sm:$0xff]
        %s3665 = scalar_lea.vmem [#allocation2], 1952
        %v3666 = vld [vmem:[%s3665] ss:$2 sm:$0xff]
        %s3667 = scalar_lea.vmem [#allocation2], 1984
        %v3668 = vld [vmem:[%s3667] ss:$2 sm:$0xff]
        %s3669 = scalar_lea.vmem [#allocation2], 2016
        %v3670 = vld [vmem:[%s3669] ss:$2 sm:$0xff]
        %s3671 = scalar_lea.vmem [#allocation2], 1
        %v3672 = vld [vmem:[%s3671] ss:$2 sm:$0xff]
        %s3673 = scalar_lea.vmem [#allocation2], 33
        %v3674 = vld [vmem:[%s3673] ss:$2 sm:$0xff]
        %s3675 = scalar_lea.vmem [#allocation2], 65
        %v3676 = vld [vmem:[%s3675] ss:$2 sm:$0xff]
        %s3677 = scalar_lea.vmem [#allocation2], 97
        %v3678 = vld [vmem:[%s3677] ss:$2 sm:$0xff]
        %s3679 = scalar_lea.vmem [#allocation2], 129
        %v3680 = vld [vmem:[%s3679] ss:$2 sm:$0xff]
        %s3681 = scalar_lea.vmem [#allocation2], 161
        %v3682 = vld [vmem:[%s3681] ss:$2 sm:$0xff]
        %s3683 = scalar_lea.vmem [#allocation2], 193
        %v3684 = vld [vmem:[%s3683] ss:$2 sm:$0xff]
        %s3685 = scalar_lea.vmem [#allocation2], 225
        %v3686 = vld [vmem:[%s3685] ss:$2 sm:$0xff]
        %s3687 = scalar_lea.vmem [#allocation2], 257
        %v3688 = vld [vmem:[%s3687] ss:$2 sm:$0xff]
        %s3689 = scalar_lea.vmem [#allocation2], 289
        %v3690 = vld [vmem:[%s3689] ss:$2 sm:$0xff]
        %s3691 = scalar_lea.vmem [#allocation2], 321
        %v3692 = vld [vmem:[%s3691] ss:$2 sm:$0xff]
        %s3693 = scalar_lea.vmem [#allocation2], 353
        %v3694 = vld [vmem:[%s3693] ss:$2 sm:$0xff]
        %s3695 = scalar_lea.vmem [#allocation2], 385
        %v3696 = vld [vmem:[%s3695] ss:$2 sm:$0xff]
        %s3697 = scalar_lea.vmem [#allocation2], 417
        %v3698 = vld [vmem:[%s3697] ss:$2 sm:$0xff]
        %s3699 = scalar_lea.vmem [#allocation2], 449
        %v3700 = vld [vmem:[%s3699] ss:$2 sm:$0xff]
        %s3701 = scalar_lea.vmem [#allocation2], 481
        %v3702 = vld [vmem:[%s3701] ss:$2 sm:$0xff]
        %s3703 = scalar_lea.vmem [#allocation2], 513
        %v3704 = vld [vmem:[%s3703] ss:$2 sm:$0xff]
        %s3705 = scalar_lea.vmem [#allocation2], 545
        %v3706 = vld [vmem:[%s3705] ss:$2 sm:$0xff]
        %s3707 = scalar_lea.vmem [#allocation2], 577
        %v3708 = vld [vmem:[%s3707] ss:$2 sm:$0xff]
        %s3709 = scalar_lea.vmem [#allocation2], 609
        %v3710 = vld [vmem:[%s3709] ss:$2 sm:$0xff]
        %s3711 = scalar_lea.vmem [#allocation2], 641
        %v3712 = vld [vmem:[%s3711] ss:$2 sm:$0xff]
        %s3713 = scalar_lea.vmem [#allocation2], 673
        %v3714 = vld [vmem:[%s3713] ss:$2 sm:$0xff]
        %s3715 = scalar_lea.vmem [#allocation2], 705
        %v3716 = vld [vmem:[%s3715] ss:$2 sm:$0xff]
        %s3717 = scalar_lea.vmem [#allocation2], 737
        %v3718 = vld [vmem:[%s3717] ss:$2 sm:$0xff]
        %s3719 = scalar_lea.vmem [#allocation2], 769
        %v3720 = vld [vmem:[%s3719] ss:$2 sm:$0xff]
        %s3721 = scalar_lea.vmem [#allocation2], 801
        %v3722 = vld [vmem:[%s3721] ss:$2 sm:$0xff]
        %s3723 = scalar_lea.vmem [#allocation2], 833
        %v3724 = vld [vmem:[%s3723] ss:$2 sm:$0xff]
        %s3725 = scalar_lea.vmem [#allocation2], 865
        %v3726 = vld [vmem:[%s3725] ss:$2 sm:$0xff]
        %s3727 = scalar_lea.vmem [#allocation2], 897
        %v3728 = vld [vmem:[%s3727] ss:$2 sm:$0xff]
        %s3729 = scalar_lea.vmem [#allocation2], 929
        %v3730 = vld [vmem:[%s3729] ss:$2 sm:$0xff]
        %s3731 = scalar_lea.vmem [#allocation2], 961
        %v3732 = vld [vmem:[%s3731] ss:$2 sm:$0xff]
        %s3733 = scalar_lea.vmem [#allocation2], 993
        %v3734 = vld [vmem:[%s3733] ss:$2 sm:$0xff]
        %s3735 = scalar_lea.vmem [#allocation2], 1025
        %v3736 = vld [vmem:[%s3735] ss:$2 sm:$0xff]
        %s3737 = scalar_lea.vmem [#allocation2], 1057
        %v3738 = vld [vmem:[%s3737] ss:$2 sm:$0xff]
        %s3739 = scalar_lea.vmem [#allocation2], 1089
        %v3740 = vld [vmem:[%s3739] ss:$2 sm:$0xff]
        %s3741 = scalar_lea.vmem [#allocation2], 1121
        %v3742 = vld [vmem:[%s3741] ss:$2 sm:$0xff]
        %s3743 = scalar_lea.vmem [#allocation2], 1153
        %v3744 = vld [vmem:[%s3743] ss:$2 sm:$0xff]
        %s3745 = scalar_lea.vmem [#allocation2], 1185
        %v3746 = vld [vmem:[%s3745] ss:$2 sm:$0xff]
        %s3747 = scalar_lea.vmem [#allocation2], 1217
        %v3748 = vld [vmem:[%s3747] ss:$2 sm:$0xff]
        %s3749 = scalar_lea.vmem [#allocation2], 1249
        %v3750 = vld [vmem:[%s3749] ss:$2 sm:$0xff]
        %s3751 = scalar_lea.vmem [#allocation2], 1281
        %v3752 = vld [vmem:[%s3751] ss:$2 sm:$0xff]
        %s3753 = scalar_lea.vmem [#allocation2], 1313
        %v3754 = vld [vmem:[%s3753] ss:$2 sm:$0xff]
        %s3755 = scalar_lea.vmem [#allocation2], 1345
        %v3756 = vld [vmem:[%s3755] ss:$2 sm:$0xff]
        %s3757 = scalar_lea.vmem [#allocation2], 1377
        %v3758 = vld [vmem:[%s3757] ss:$2 sm:$0xff]
        %s3759 = scalar_lea.vmem [#allocation2], 1409
        %v3760 = vld [vmem:[%s3759] ss:$2 sm:$0xff]
        %s3761 = scalar_lea.vmem [#allocation2], 1441
        %v3762 = vld [vmem:[%s3761] ss:$2 sm:$0xff]
        %s3763 = scalar_lea.vmem [#allocation2], 1473
        %v3764 = vld [vmem:[%s3763] ss:$2 sm:$0xff]
        %s3765 = scalar_lea.vmem [#allocation2], 1505
        %v3766 = vld [vmem:[%s3765] ss:$2 sm:$0xff]
        %s3767 = scalar_lea.vmem [#allocation2], 1537
        %v3768 = vld [vmem:[%s3767] ss:$2 sm:$0xff]
        %s3769 = scalar_lea.vmem [#allocation2], 1569
        %v3770 = vld [vmem:[%s3769] ss:$2 sm:$0xff]
        %s3771 = scalar_lea.vmem [#allocation2], 1601
        %v3772 = vld [vmem:[%s3771] ss:$2 sm:$0xff]
        %s3773 = scalar_lea.vmem [#allocation2], 1633
        %v3774 = vld [vmem:[%s3773] ss:$2 sm:$0xff]
        %s3775 = scalar_lea.vmem [#allocation2], 1665
        %v3776 = vld [vmem:[%s3775] ss:$2 sm:$0xff]
        %s3777 = scalar_lea.vmem [#allocation2], 1697
        %v3778 = vld [vmem:[%s3777] ss:$2 sm:$0xff]
        %s3779 = scalar_lea.vmem [#allocation2], 1729
        %v3780 = vld [vmem:[%s3779] ss:$2 sm:$0xff]
        %s3781 = scalar_lea.vmem [#allocation2], 1761
        %v3782 = vld [vmem:[%s3781] ss:$2 sm:$0xff]
        %s3783 = scalar_lea.vmem [#allocation2], 1793
        %v3784 = vld [vmem:[%s3783] ss:$2 sm:$0xff]
        %s3785 = scalar_lea.vmem [#allocation2], 1825
        %v3786 = vld [vmem:[%s3785] ss:$2 sm:$0xff]
        %s3787 = scalar_lea.vmem [#allocation2], 1857
        %v3788 = vld [vmem:[%s3787] ss:$2 sm:$0xff]
        %s3789 = scalar_lea.vmem [#allocation2], 1889
        %v3790 = vld [vmem:[%s3789] ss:$2 sm:$0xff]
        %s3791 = scalar_lea.vmem [#allocation2], 1921
        %v3792 = vld [vmem:[%s3791] ss:$2 sm:$0xff]
        %s3793 = scalar_lea.vmem [#allocation2], 1953
        %v3794 = vld [vmem:[%s3793] ss:$2 sm:$0xff]
        %s3795 = scalar_lea.vmem [#allocation2], 1985
        %v3796 = vld [vmem:[%s3795] ss:$2 sm:$0xff]
        %s3797 = scalar_lea.vmem [#allocation2], 2017
        %v3798 = vld [vmem:[%s3797] ss:$2 sm:$0xff]
        %v3799 = vmax.f32 %v3544, %v3672
        %v3800 = vmax.f32 %v3546, %v3674
        %v3801 = vmax.f32 %v3548, %v3676
        %v3802 = vmax.f32 %v3550, %v3678
        %v3803 = vmax.f32 %v3552, %v3680
        %v3804 = vmax.f32 %v3554, %v3682
        %v3805 = vmax.f32 %v3556, %v3684
        %v3806 = vmax.f32 %v3558, %v3686
        %v3807 = vmax.f32 %v3560, %v3688
        %v3808 = vmax.f32 %v3562, %v3690
        %v3809 = vmax.f32 %v3564, %v3692
        %v3810 = vmax.f32 %v3566, %v3694
        %v3811 = vmax.f32 %v3568, %v3696
        %v3812 = vmax.f32 %v3570, %v3698
        %v3813 = vmax.f32 %v3572, %v3700
        %v3814 = vmax.f32 %v3574, %v3702
        %v3815 = vmax.f32 %v3576, %v3704
        %v3816 = vmax.f32 %v3578, %v3706
        %v3817 = vmax.f32 %v3580, %v3708
        %v3818 = vmax.f32 %v3582, %v3710
        %v3819 = vmax.f32 %v3584, %v3712
        %v3820 = vmax.f32 %v3586, %v3714
        %v3821 = vmax.f32 %v3588, %v3716
        %v3822 = vmax.f32 %v3590, %v3718
        %v3823 = vmax.f32 %v3592, %v3720
        %v3824 = vmax.f32 %v3594, %v3722
        %v3825 = vmax.f32 %v3596, %v3724
        %v3826 = vmax.f32 %v3598, %v3726
        %v3827 = vmax.f32 %v3600, %v3728
        %v3828 = vmax.f32 %v3602, %v3730
        %v3829 = vmax.f32 %v3604, %v3732
        %v3830 = vmax.f32 %v3606, %v3734
        %v3831 = vmax.f32 %v3608, %v3736
        %v3832 = vmax.f32 %v3610, %v3738
        %v3833 = vmax.f32 %v3612, %v3740
        %v3834 = vmax.f32 %v3614, %v3742
        %v3835 = vmax.f32 %v3616, %v3744
        %v3836 = vmax.f32 %v3618, %v3746
        %v3837 = vmax.f32 %v3620, %v3748
        %v3838 = vmax.f32 %v3622, %v3750
        %v3839 = vmax.f32 %v3624, %v3752
        %v3840 = vmax.f32 %v3626, %v3754
        %v3841 = vmax.f32 %v3628, %v3756
        %v3842 = vmax.f32 %v3630, %v3758
        %v3843 = vmax.f32 %v3632, %v3760
        %v3844 = vmax.f32 %v3634, %v3762
        %v3845 = vmax.f32 %v3636, %v3764
        %v3846 = vmax.f32 %v3638, %v3766
        %v3847 = vmax.f32 %v3640, %v3768
        %v3848 = vmax.f32 %v3642, %v3770
        %v3849 = vmax.f32 %v3644, %v3772
        %v3850 = vmax.f32 %v3646, %v3774
        %v3851 = vmax.f32 %v3648, %v3776
        %v3852 = vmax.f32 %v3650, %v3778
        %v3853 = vmax.f32 %v3652, %v3780
        %v3854 = vmax.f32 %v3654, %v3782
        %v3855 = vmax.f32 %v3656, %v3784
        %v3856 = vmax.f32 %v3658, %v3786
        %v3857 = vmax.f32 %v3660, %v3788
        %v3858 = vmax.f32 %v3662, %v3790
        %v3859 = vmax.f32 %v3664, %v3792
        %v3860 = vmax.f32 %v3666, %v3794
        %v3861 = vmax.f32 %v3668, %v3796
        %v3862 = vmax.f32 %v3670, %v3798
        %s3863 = scalar_lea.vmem [#allocation2], 16
        %v3864 = vld [vmem:[%s3863] ss:$2 sm:$0xff]
        %s3865 = scalar_lea.vmem %s3863, 32 [#allocation2]
        %v3866 = vld [vmem:[%s3865] ss:$2 sm:$0xff]
        %s3867 = scalar_lea.vmem %s3863, 64 [#allocation2]
        %v3868 = vld [vmem:[%s3867] ss:$2 sm:$0xff]
        %s3869 = scalar_lea.vmem %s3863, 96 [#allocation2]
        %v3870 = vld [vmem:[%s3869] ss:$2 sm:$0xff]
        %s3871 = scalar_lea.vmem %s3863, 128 [#allocation2]
        %v3872 = vld [vmem:[%s3871] ss:$2 sm:$0xff]
        %s3873 = scalar_lea.vmem %s3863, 160 [#allocation2]
        %v3874 = vld [vmem:[%s3873] ss:$2 sm:$0xff]
        %s3875 = scalar_lea.vmem %s3863, 192 [#allocation2]
        %v3876 = vld [vmem:[%s3875] ss:$2 sm:$0xff]
        %s3877 = scalar_lea.vmem %s3863, 224 [#allocation2]
        %v3878 = vld [vmem:[%s3877] ss:$2 sm:$0xff]
        %s3879 = scalar_lea.vmem %s3863, 256 [#allocation2]
        %v3880 = vld [vmem:[%s3879] ss:$2 sm:$0xff]
        %s3881 = scalar_lea.vmem %s3863, 288 [#allocation2]
        %v3882 = vld [vmem:[%s3881] ss:$2 sm:$0xff]
        %s3883 = scalar_lea.vmem %s3863, 320 [#allocation2]
        %v3884 = vld [vmem:[%s3883] ss:$2 sm:$0xff]
        %s3885 = scalar_lea.vmem %s3863, 352 [#allocation2]
        %v3886 = vld [vmem:[%s3885] ss:$2 sm:$0xff]
        %s3887 = scalar_lea.vmem %s3863, 384 [#allocation2]
        %v3888 = vld [vmem:[%s3887] ss:$2 sm:$0xff]
        %s3889 = scalar_lea.vmem %s3863, 416 [#allocation2]
        %v3890 = vld [vmem:[%s3889] ss:$2 sm:$0xff]
        %s3891 = scalar_lea.vmem %s3863, 448 [#allocation2]
        %v3892 = vld [vmem:[%s3891] ss:$2 sm:$0xff]
        %s3893 = scalar_lea.vmem %s3863, 480 [#allocation2]
        %v3894 = vld [vmem:[%s3893] ss:$2 sm:$0xff]
        %s3895 = scalar_lea.vmem %s3863, 512 [#allocation2]
        %v3896 = vld [vmem:[%s3895] ss:$2 sm:$0xff]
        %s3897 = scalar_lea.vmem %s3863, 544 [#allocation2]
        %v3898 = vld [vmem:[%s3897] ss:$2 sm:$0xff]
        %s3899 = scalar_lea.vmem %s3863, 576 [#allocation2]
        %v3900 = vld [vmem:[%s3899] ss:$2 sm:$0xff]
        %s3901 = scalar_lea.vmem %s3863, 608 [#allocation2]
        %v3902 = vld [vmem:[%s3901] ss:$2 sm:$0xff]
        %s3903 = scalar_lea.vmem %s3863, 640 [#allocation2]
        %v3904 = vld [vmem:[%s3903] ss:$2 sm:$0xff]
        %s3905 = scalar_lea.vmem %s3863, 672 [#allocation2]
        %v3906 = vld [vmem:[%s3905] ss:$2 sm:$0xff]
        %s3907 = scalar_lea.vmem %s3863, 704 [#allocation2]
        %v3908 = vld [vmem:[%s3907] ss:$2 sm:$0xff]
        %s3909 = scalar_lea.vmem %s3863, 736 [#allocation2]
        %v3910 = vld [vmem:[%s3909] ss:$2 sm:$0xff]
        %s3911 = scalar_lea.vmem %s3863, 768 [#allocation2]
        %v3912 = vld [vmem:[%s3911] ss:$2 sm:$0xff]
        %s3913 = scalar_lea.vmem %s3863, 800 [#allocation2]
        %v3914 = vld [vmem:[%s3913] ss:$2 sm:$0xff]
        %s3915 = scalar_lea.vmem %s3863, 832 [#allocation2]
        %v3916 = vld [vmem:[%s3915] ss:$2 sm:$0xff]
        %s3917 = scalar_lea.vmem %s3863, 864 [#allocation2]
        %v3918 = vld [vmem:[%s3917] ss:$2 sm:$0xff]
        %s3919 = scalar_lea.vmem %s3863, 896 [#allocation2]
        %v3920 = vld [vmem:[%s3919] ss:$2 sm:$0xff]
        %s3921 = scalar_lea.vmem %s3863, 928 [#allocation2]
        %v3922 = vld [vmem:[%s3921] ss:$2 sm:$0xff]
        %s3923 = scalar_lea.vmem %s3863, 960 [#allocation2]
        %v3924 = vld [vmem:[%s3923] ss:$2 sm:$0xff]
        %s3925 = scalar_lea.vmem %s3863, 992 [#allocation2]
        %v3926 = vld [vmem:[%s3925] ss:$2 sm:$0xff]
        %s3927 = scalar_lea.vmem %s3863, 1024 [#allocation2]
        %v3928 = vld [vmem:[%s3927] ss:$2 sm:$0xff]
        %s3929 = scalar_lea.vmem %s3863, 1056 [#allocation2]
        %v3930 = vld [vmem:[%s3929] ss:$2 sm:$0xff]
        %s3931 = scalar_lea.vmem %s3863, 1088 [#allocation2]
        %v3932 = vld [vmem:[%s3931] ss:$2 sm:$0xff]
        %s3933 = scalar_lea.vmem %s3863, 1120 [#allocation2]
        %v3934 = vld [vmem:[%s3933] ss:$2 sm:$0xff]
        %s3935 = scalar_lea.vmem %s3863, 1152 [#allocation2]
        %v3936 = vld [vmem:[%s3935] ss:$2 sm:$0xff]
        %s3937 = scalar_lea.vmem %s3863, 1184 [#allocation2]
        %v3938 = vld [vmem:[%s3937] ss:$2 sm:$0xff]
        %s3939 = scalar_lea.vmem %s3863, 1216 [#allocation2]
        %v3940 = vld [vmem:[%s3939] ss:$2 sm:$0xff]
        %s3941 = scalar_lea.vmem %s3863, 1248 [#allocation2]
        %v3942 = vld [vmem:[%s3941] ss:$2 sm:$0xff]
        %s3943 = scalar_lea.vmem %s3863, 1280 [#allocation2]
        %v3944 = vld [vmem:[%s3943] ss:$2 sm:$0xff]
        %s3945 = scalar_lea.vmem %s3863, 1312 [#allocation2]
        %v3946 = vld [vmem:[%s3945] ss:$2 sm:$0xff]
        %s3947 = scalar_lea.vmem %s3863, 1344 [#allocation2]
        %v3948 = vld [vmem:[%s3947] ss:$2 sm:$0xff]
        %s3949 = scalar_lea.vmem %s3863, 1376 [#allocation2]
        %v3950 = vld [vmem:[%s3949] ss:$2 sm:$0xff]
        %s3951 = scalar_lea.vmem %s3863, 1408 [#allocation2]
        %v3952 = vld [vmem:[%s3951] ss:$2 sm:$0xff]
        %s3953 = scalar_lea.vmem %s3863, 1440 [#allocation2]
        %v3954 = vld [vmem:[%s3953] ss:$2 sm:$0xff]
        %s3955 = scalar_lea.vmem %s3863, 1472 [#allocation2]
        %v3956 = vld [vmem:[%s3955] ss:$2 sm:$0xff]
        %s3957 = scalar_lea.vmem %s3863, 1504 [#allocation2]
        %v3958 = vld [vmem:[%s3957] ss:$2 sm:$0xff]
        %s3959 = scalar_lea.vmem %s3863, 1536 [#allocation2]
        %v3960 = vld [vmem:[%s3959] ss:$2 sm:$0xff]
        %s3961 = scalar_lea.vmem %s3863, 1568 [#allocation2]
        %v3962 = vld [vmem:[%s3961] ss:$2 sm:$0xff]
        %s3963 = scalar_lea.vmem %s3863, 1600 [#allocation2]
        %v3964 = vld [vmem:[%s3963] ss:$2 sm:$0xff]
        %s3965 = scalar_lea.vmem %s3863, 1632 [#allocation2]
        %v3966 = vld [vmem:[%s3965] ss:$2 sm:$0xff]
        %s3967 = scalar_lea.vmem %s3863, 1664 [#allocation2]
        %v3968 = vld [vmem:[%s3967] ss:$2 sm:$0xff]
        %s3969 = scalar_lea.vmem %s3863, 1696 [#allocation2]
        %v3970 = vld [vmem:[%s3969] ss:$2 sm:$0xff]
        %s3971 = scalar_lea.vmem %s3863, 1728 [#allocation2]
        %v3972 = vld [vmem:[%s3971] ss:$2 sm:$0xff]
        %s3973 = scalar_lea.vmem %s3863, 1760 [#allocation2]
        %v3974 = vld [vmem:[%s3973] ss:$2 sm:$0xff]
        %s3975 = scalar_lea.vmem %s3863, 1792 [#allocation2]
        %v3976 = vld [vmem:[%s3975] ss:$2 sm:$0xff]
        %s3977 = scalar_lea.vmem %s3863, 1824 [#allocation2]
        %v3978 = vld [vmem:[%s3977] ss:$2 sm:$0xff]
        %s3979 = scalar_lea.vmem %s3863, 1856 [#allocation2]
        %v3980 = vld [vmem:[%s3979] ss:$2 sm:$0xff]
        %s3981 = scalar_lea.vmem %s3863, 1888 [#allocation2]
        %v3982 = vld [vmem:[%s3981] ss:$2 sm:$0xff]
        %s3983 = scalar_lea.vmem %s3863, 1920 [#allocation2]
        %v3984 = vld [vmem:[%s3983] ss:$2 sm:$0xff]
        %s3985 = scalar_lea.vmem %s3863, 1952 [#allocation2]
        %v3986 = vld [vmem:[%s3985] ss:$2 sm:$0xff]
        %s3987 = scalar_lea.vmem %s3863, 1984 [#allocation2]
        %v3988 = vld [vmem:[%s3987] ss:$2 sm:$0xff]
        %s3989 = scalar_lea.vmem %s3863, 2016 [#allocation2]
        %v3990 = vld [vmem:[%s3989] ss:$2 sm:$0xff]
        %s3991 = scalar_lea.vmem %s3863, 1 [#allocation2]
        %v3992 = vld [vmem:[%s3991] ss:$2 sm:$0xff]
        %s3993 = scalar_lea.vmem %s3863, 33 [#allocation2]
        %v3994 = vld [vmem:[%s3993] ss:$2 sm:$0xff]
        %s3995 = scalar_lea.vmem %s3863, 65 [#allocation2]
        %v3996 = vld [vmem:[%s3995] ss:$2 sm:$0xff]
        %s3997 = scalar_lea.vmem %s3863, 97 [#allocation2]
        %v3998 = vld [vmem:[%s3997] ss:$2 sm:$0xff]
        %s3999 = scalar_lea.vmem %s3863, 129 [#allocation2]
        %v4000 = vld [vmem:[%s3999] ss:$2 sm:$0xff]
        %s4001 = scalar_lea.vmem %s3863, 161 [#allocation2]
        %v4002 = vld [vmem:[%s4001] ss:$2 sm:$0xff]
        %s4003 = scalar_lea.vmem %s3863, 193 [#allocation2]
        %v4004 = vld [vmem:[%s4003] ss:$2 sm:$0xff]
        %s4005 = scalar_lea.vmem %s3863, 225 [#allocation2]
        %v4006 = vld [vmem:[%s4005] ss:$2 sm:$0xff]
        %s4007 = scalar_lea.vmem %s3863, 257 [#allocation2]
        %v4008 = vld [vmem:[%s4007] ss:$2 sm:$0xff]
        %s4009 = scalar_lea.vmem %s3863, 289 [#allocation2]
        %v4010 = vld [vmem:[%s4009] ss:$2 sm:$0xff]
        %s4011 = scalar_lea.vmem %s3863, 321 [#allocation2]
        %v4012 = vld [vmem:[%s4011] ss:$2 sm:$0xff]
        %s4013 = scalar_lea.vmem %s3863, 353 [#allocation2]
        %v4014 = vld [vmem:[%s4013] ss:$2 sm:$0xff]
        %s4015 = scalar_lea.vmem %s3863, 385 [#allocation2]
        %v4016 = vld [vmem:[%s4015] ss:$2 sm:$0xff]
        %s4017 = scalar_lea.vmem %s3863, 417 [#allocation2]
        %v4018 = vld [vmem:[%s4017] ss:$2 sm:$0xff]
        %s4019 = scalar_lea.vmem %s3863, 449 [#allocation2]
        %v4020 = vld [vmem:[%s4019] ss:$2 sm:$0xff]
        %s4021 = scalar_lea.vmem %s3863, 481 [#allocation2]
        %v4022 = vld [vmem:[%s4021] ss:$2 sm:$0xff]
        %s4023 = scalar_lea.vmem %s3863, 513 [#allocation2]
        %v4024 = vld [vmem:[%s4023] ss:$2 sm:$0xff]
        %s4025 = scalar_lea.vmem %s3863, 545 [#allocation2]
        %v4026 = vld [vmem:[%s4025] ss:$2 sm:$0xff]
        %s4027 = scalar_lea.vmem %s3863, 577 [#allocation2]
        %v4028 = vld [vmem:[%s4027] ss:$2 sm:$0xff]
        %s4029 = scalar_lea.vmem %s3863, 609 [#allocation2]
        %v4030 = vld [vmem:[%s4029] ss:$2 sm:$0xff]
        %s4031 = scalar_lea.vmem %s3863, 641 [#allocation2]
        %v4032 = vld [vmem:[%s4031] ss:$2 sm:$0xff]
        %s4033 = scalar_lea.vmem %s3863, 673 [#allocation2]
        %v4034 = vld [vmem:[%s4033] ss:$2 sm:$0xff]
        %s4035 = scalar_lea.vmem %s3863, 705 [#allocation2]
        %v4036 = vld [vmem:[%s4035] ss:$2 sm:$0xff]
        %s4037 = scalar_lea.vmem %s3863, 737 [#allocation2]
        %v4038 = vld [vmem:[%s4037] ss:$2 sm:$0xff]
        %s4039 = scalar_lea.vmem %s3863, 769 [#allocation2]
        %v4040 = vld [vmem:[%s4039] ss:$2 sm:$0xff]
        %s4041 = scalar_lea.vmem %s3863, 801 [#allocation2]
        %v4042 = vld [vmem:[%s4041] ss:$2 sm:$0xff]
        %s4043 = scalar_lea.vmem %s3863, 833 [#allocation2]
        %v4044 = vld [vmem:[%s4043] ss:$2 sm:$0xff]
        %s4045 = scalar_lea.vmem %s3863, 865 [#allocation2]
        %v4046 = vld [vmem:[%s4045] ss:$2 sm:$0xff]
        %s4047 = scalar_lea.vmem %s3863, 897 [#allocation2]
        %v4048 = vld [vmem:[%s4047] ss:$2 sm:$0xff]
        %s4049 = scalar_lea.vmem %s3863, 929 [#allocation2]
        %v4050 = vld [vmem:[%s4049] ss:$2 sm:$0xff]
        %s4051 = scalar_lea.vmem %s3863, 961 [#allocation2]
        %v4052 = vld [vmem:[%s4051] ss:$2 sm:$0xff]
        %s4053 = scalar_lea.vmem %s3863, 993 [#allocation2]
        %v4054 = vld [vmem:[%s4053] ss:$2 sm:$0xff]
        %s4055 = scalar_lea.vmem %s3863, 1025 [#allocation2]
        %v4056 = vld [vmem:[%s4055] ss:$2 sm:$0xff]
        %s4057 = scalar_lea.vmem %s3863, 1057 [#allocation2]
        %v4058 = vld [vmem:[%s4057] ss:$2 sm:$0xff]
        %s4059 = scalar_lea.vmem %s3863, 1089 [#allocation2]
        %v4060 = vld [vmem:[%s4059] ss:$2 sm:$0xff]
        %s4061 = scalar_lea.vmem %s3863, 1121 [#allocation2]
        %v4062 = vld [vmem:[%s4061] ss:$2 sm:$0xff]
        %s4063 = scalar_lea.vmem %s3863, 1153 [#allocation2]
        %v4064 = vld [vmem:[%s4063] ss:$2 sm:$0xff]
        %s4065 = scalar_lea.vmem %s3863, 1185 [#allocation2]
        %v4066 = vld [vmem:[%s4065] ss:$2 sm:$0xff]
        %s4067 = scalar_lea.vmem %s3863, 1217 [#allocation2]
        %v4068 = vld [vmem:[%s4067] ss:$2 sm:$0xff]
        %s4069 = scalar_lea.vmem %s3863, 1249 [#allocation2]
        %v4070 = vld [vmem:[%s4069] ss:$2 sm:$0xff]
        %s4071 = scalar_lea.vmem %s3863, 1281 [#allocation2]
        %v4072 = vld [vmem:[%s4071] ss:$2 sm:$0xff]
        %s4073 = scalar_lea.vmem %s3863, 1313 [#allocation2]
        %v4074 = vld [vmem:[%s4073] ss:$2 sm:$0xff]
        %s4075 = scalar_lea.vmem %s3863, 1345 [#allocation2]
        %v4076 = vld [vmem:[%s4075] ss:$2 sm:$0xff]
        %s4077 = scalar_lea.vmem %s3863, 1377 [#allocation2]
        %v4078 = vld [vmem:[%s4077] ss:$2 sm:$0xff]
        %s4079 = scalar_lea.vmem %s3863, 1409 [#allocation2]
        %v4080 = vld [vmem:[%s4079] ss:$2 sm:$0xff]
        %s4081 = scalar_lea.vmem %s3863, 1441 [#allocation2]
        %v4082 = vld [vmem:[%s4081] ss:$2 sm:$0xff]
        %s4083 = scalar_lea.vmem %s3863, 1473 [#allocation2]
        %v4084 = vld [vmem:[%s4083] ss:$2 sm:$0xff]
        %s4085 = scalar_lea.vmem %s3863, 1505 [#allocation2]
        %v4086 = vld [vmem:[%s4085] ss:$2 sm:$0xff]
        %s4087 = scalar_lea.vmem %s3863, 1537 [#allocation2]
        %v4088 = vld [vmem:[%s4087] ss:$2 sm:$0xff]
        %s4089 = scalar_lea.vmem %s3863, 1569 [#allocation2]
        %v4090 = vld [vmem:[%s4089] ss:$2 sm:$0xff]
        %s4091 = scalar_lea.vmem %s3863, 1601 [#allocation2]
        %v4092 = vld [vmem:[%s4091] ss:$2 sm:$0xff]
        %s4093 = scalar_lea.vmem %s3863, 1633 [#allocation2]
        %v4094 = vld [vmem:[%s4093] ss:$2 sm:$0xff]
        %s4095 = scalar_lea.vmem %s3863, 1665 [#allocation2]
        %v4096 = vld [vmem:[%s4095] ss:$2 sm:$0xff]
        %s4097 = scalar_lea.vmem %s3863, 1697 [#allocation2]
        %v4098 = vld [vmem:[%s4097] ss:$2 sm:$0xff]
        %s4099 = scalar_lea.vmem %s3863, 1729 [#allocation2]
        %v4100 = vld [vmem:[%s4099] ss:$2 sm:$0xff]
        %s4101 = scalar_lea.vmem %s3863, 1761 [#allocation2]
        %v4102 = vld [vmem:[%s4101] ss:$2 sm:$0xff]
        %s4103 = scalar_lea.vmem %s3863, 1793 [#allocation2]
        %v4104 = vld [vmem:[%s4103] ss:$2 sm:$0xff]
        %s4105 = scalar_lea.vmem %s3863, 1825 [#allocation2]
        %v4106 = vld [vmem:[%s4105] ss:$2 sm:$0xff]
        %s4107 = scalar_lea.vmem %s3863, 1857 [#allocation2]
        %v4108 = vld [vmem:[%s4107] ss:$2 sm:$0xff]
        %s4109 = scalar_lea.vmem %s3863, 1889 [#allocation2]
        %v4110 = vld [vmem:[%s4109] ss:$2 sm:$0xff]
        %s4111 = scalar_lea.vmem %s3863, 1921 [#allocation2]
        %v4112 = vld [vmem:[%s4111] ss:$2 sm:$0xff]
        %s4113 = scalar_lea.vmem %s3863, 1953 [#allocation2]
        %v4114 = vld [vmem:[%s4113] ss:$2 sm:$0xff]
        %s4115 = scalar_lea.vmem %s3863, 1985 [#allocation2]
        %v4116 = vld [vmem:[%s4115] ss:$2 sm:$0xff]
        %s4117 = scalar_lea.vmem %s3863, 2017 [#allocation2]
        %v4118 = vld [vmem:[%s4117] ss:$2 sm:$0xff]
        %v4119 = vmax.f32 %v3864, %v3992
        %v4120 = vmax.f32 %v3866, %v3994
        %v4121 = vmax.f32 %v3868, %v3996
        %v4122 = vmax.f32 %v3870, %v3998
        %v4123 = vmax.f32 %v3872, %v4000
        %v4124 = vmax.f32 %v3874, %v4002
        %v4125 = vmax.f32 %v3876, %v4004
        %v4126 = vmax.f32 %v3878, %v4006
        %v4127 = vmax.f32 %v3880, %v4008
        %v4128 = vmax.f32 %v3882, %v4010
        %v4129 = vmax.f32 %v3884, %v4012
        %v4130 = vmax.f32 %v3886, %v4014
        %v4131 = vmax.f32 %v3888, %v4016
        %v4132 = vmax.f32 %v3890, %v4018
        %v4133 = vmax.f32 %v3892, %v4020
        %v4134 = vmax.f32 %v3894, %v4022
        %v4135 = vmax.f32 %v3896, %v4024
        %v4136 = vmax.f32 %v3898, %v4026
        %v4137 = vmax.f32 %v3900, %v4028
        %v4138 = vmax.f32 %v3902, %v4030
        %v4139 = vmax.f32 %v3904, %v4032
        %v4140 = vmax.f32 %v3906, %v4034
        %v4141 = vmax.f32 %v3908, %v4036
        %v4142 = vmax.f32 %v3910, %v4038
        %v4143 = vmax.f32 %v3912, %v4040
        %v4144 = vmax.f32 %v3914, %v4042
        %v4145 = vmax.f32 %v3916, %v4044
        %v4146 = vmax.f32 %v3918, %v4046
        %v4147 = vmax.f32 %v3920, %v4048
        %v4148 = vmax.f32 %v3922, %v4050
        %v4149 = vmax.f32 %v3924, %v4052
        %v4150 = vmax.f32 %v3926, %v4054
        %v4151 = vmax.f32 %v3928, %v4056
        %v4152 = vmax.f32 %v3930, %v4058
        %v4153 = vmax.f32 %v3932, %v4060
        %v4154 = vmax.f32 %v3934, %v4062
        %v4155 = vmax.f32 %v3936, %v4064
        %v4156 = vmax.f32 %v3938, %v4066
        %v4157 = vmax.f32 %v3940, %v4068
        %v4158 = vmax.f32 %v3942, %v4070
        %v4159 = vmax.f32 %v3944, %v4072
        %v4160 = vmax.f32 %v3946, %v4074
        %v4161 = vmax.f32 %v3948, %v4076
        %v4162 = vmax.f32 %v3950, %v4078
        %v4163 = vmax.f32 %v3952, %v4080
        %v4164 = vmax.f32 %v3954, %v4082
        %v4165 = vmax.f32 %v3956, %v4084
        %v4166 = vmax.f32 %v3958, %v4086
        %v4167 = vmax.f32 %v3960, %v4088
        %v4168 = vmax.f32 %v3962, %v4090
        %v4169 = vmax.f32 %v3964, %v4092
        %v4170 = vmax.f32 %v3966, %v4094
        %v4171 = vmax.f32 %v3968, %v4096
        %v4172 = vmax.f32 %v3970, %v4098
        %v4173 = vmax.f32 %v3972, %v4100
        %v4174 = vmax.f32 %v3974, %v4102
        %v4175 = vmax.f32 %v3976, %v4104
        %v4176 = vmax.f32 %v3978, %v4106
        %v4177 = vmax.f32 %v3980, %v4108
        %v4178 = vmax.f32 %v3982, %v4110
        %v4179 = vmax.f32 %v3984, %v4112
        %v4180 = vmax.f32 %v3986, %v4114
        %v4181 = vmax.f32 %v3988, %v4116
        %v4182 = vmax.f32 %v3990, %v4118
        %v4183 = vmax.f32 %v3799, %v4119
        %v4184 = vmax.f32 %v3800, %v4120
        %v4185 = vmax.f32 %v3801, %v4121
        %v4186 = vmax.f32 %v3802, %v4122
        %v4187 = vmax.f32 %v3803, %v4123
        %v4188 = vmax.f32 %v3804, %v4124
        %v4189 = vmax.f32 %v3805, %v4125
        %v4190 = vmax.f32 %v3806, %v4126
        %v4191 = vmax.f32 %v3807, %v4127
        %v4192 = vmax.f32 %v3808, %v4128
        %v4193 = vmax.f32 %v3809, %v4129
        %v4194 = vmax.f32 %v3810, %v4130
        %v4195 = vmax.f32 %v3811, %v4131
        %v4196 = vmax.f32 %v3812, %v4132
        %v4197 = vmax.f32 %v3813, %v4133
        %v4198 = vmax.f32 %v3814, %v4134
        %v4199 = vmax.f32 %v3815, %v4135
        %v4200 = vmax.f32 %v3816, %v4136
        %v4201 = vmax.f32 %v3817, %v4137
        %v4202 = vmax.f32 %v3818, %v4138
        %v4203 = vmax.f32 %v3819, %v4139
        %v4204 = vmax.f32 %v3820, %v4140
        %v4205 = vmax.f32 %v3821, %v4141
        %v4206 = vmax.f32 %v3822, %v4142
        %v4207 = vmax.f32 %v3823, %v4143
        %v4208 = vmax.f32 %v3824, %v4144
        %v4209 = vmax.f32 %v3825, %v4145
        %v4210 = vmax.f32 %v3826, %v4146
        %v4211 = vmax.f32 %v3827, %v4147
        %v4212 = vmax.f32 %v3828, %v4148
        %v4213 = vmax.f32 %v3829, %v4149
        %v4214 = vmax.f32 %v3830, %v4150
        %v4215 = vmax.f32 %v3831, %v4151
        %v4216 = vmax.f32 %v3832, %v4152
        %v4217 = vmax.f32 %v3833, %v4153
        %v4218 = vmax.f32 %v3834, %v4154
        %v4219 = vmax.f32 %v3835, %v4155
        %v4220 = vmax.f32 %v3836, %v4156
        %v4221 = vmax.f32 %v3837, %v4157
        %v4222 = vmax.f32 %v3838, %v4158
        %v4223 = vmax.f32 %v3839, %v4159
        %v4224 = vmax.f32 %v3840, %v4160
        %v4225 = vmax.f32 %v3841, %v4161
        %v4226 = vmax.f32 %v3842, %v4162
        %v4227 = vmax.f32 %v3843, %v4163
        %v4228 = vmax.f32 %v3844, %v4164
        %v4229 = vmax.f32 %v3845, %v4165
        %v4230 = vmax.f32 %v3846, %v4166
        %v4231 = vmax.f32 %v3847, %v4167
        %v4232 = vmax.f32 %v3848, %v4168
        %v4233 = vmax.f32 %v3849, %v4169
        %v4234 = vmax.f32 %v3850, %v4170
        %v4235 = vmax.f32 %v3851, %v4171
        %v4236 = vmax.f32 %v3852, %v4172
        %v4237 = vmax.f32 %v3853, %v4173
        %v4238 = vmax.f32 %v3854, %v4174
        %v4239 = vmax.f32 %v3855, %v4175
        %v4240 = vmax.f32 %v3856, %v4176
        %v4241 = vmax.f32 %v3857, %v4177
        %v4242 = vmax.f32 %v3858, %v4178
        %v4243 = vmax.f32 %v3859, %v4179
        %v4244 = vmax.f32 %v3860, %v4180
        %v4245 = vmax.f32 %v3861, %v4181
        %v4246 = vmax.f32 %v3862, %v4182
        %4247 = vst.msk [vmem:[#allocation3] sm:$0xff] %vm3287, 0.0
        %vm4248 = vcmask 254976
        %4249 = vst.msk [vmem:[#allocation3 + $0x8] sm:$0x3] %vm4248, 0.0
        %4250 = vst.msk [vmem:[#allocation3 + $0xa0] sm:$0xff] %vm3287, 0.0
        %4251 = vst.msk [vmem:[#allocation3 + $0xa8] sm:$0x3] %vm4248, 0.0
        %4252 = vst.msk [vmem:[#allocation3 + $0x140] sm:$0xff] %vm3287, 0.0
        %4253 = vst.msk [vmem:[#allocation3 + $0x148] sm:$0x3] %vm4248, 0.0
        %4254 = vst.msk [vmem:[#allocation3 + $0x1e0] sm:$0xff] %vm3287, 0.0
        %4255 = vst.msk [vmem:[#allocation3 + $0x1e8] sm:$0x3] %vm4248, 0.0
        %4256 = vst.msk [vmem:[#allocation3 + $0x280] sm:$0xff] %vm3287, 0.0
        %4257 = vst.msk [vmem:[#allocation3 + $0x288] sm:$0x3] %vm4248, 0.0
        %4258 = vst.msk [vmem:[#allocation3 + $0x320] sm:$0xff] %vm3287, 0.0
        %4259 = vst.msk [vmem:[#allocation3 + $0x328] sm:$0x3] %vm4248, 0.0
        %4260 = vst.msk [vmem:[#allocation3 + $0x3c0] sm:$0xff] %vm3287, 0.0
        %4261 = vst.msk [vmem:[#allocation3 + $0x3c8] sm:$0x3] %vm4248, 0.0
        %4262 = vst.msk [vmem:[#allocation3 + $0x460] sm:$0xff] %vm3287, 0.0
        %4263 = vst.msk [vmem:[#allocation3 + $0x468] sm:$0x3] %vm4248, 0.0
        %s4264 = scalar_lea.vmem [#allocation3], 144
        %4265 = vst.msk [vmem:[%s4264] sm:$0xff] %vm3287, 0.0
        %4266 = vst.msk [vmem:[%s4264 + $0x8] sm:$0x3] %vm4248, 0.0
        %4267 = vst.msk [vmem:[%s4264 + $0xa0] sm:$0xff] %vm3287, 0.0
        %4268 = vst.msk [vmem:[%s4264 + $0xa8] sm:$0x3] %vm4248, 0.0
        %4269 = vst.msk [vmem:[%s4264 + $0x140] sm:$0xff] %vm3287, 0.0
        %4270 = vst.msk [vmem:[%s4264 + $0x148] sm:$0x3] %vm4248, 0.0
        %4271 = vst.msk [vmem:[%s4264 + $0x1e0] sm:$0xff] %vm3287, 0.0
        %4272 = vst.msk [vmem:[%s4264 + $0x1e8] sm:$0x3] %vm4248, 0.0
        %4273 = vst.msk [vmem:[%s4264 + $0x280] sm:$0xff] %vm3287, 0.0
        %4274 = vst.msk [vmem:[%s4264 + $0x288] sm:$0x3] %vm4248, 0.0
        %4275 = vst.msk [vmem:[%s4264 + $0x320] sm:$0xff] %vm3287, 0.0
        %4276 = vst.msk [vmem:[%s4264 + $0x328] sm:$0x3] %vm4248, 0.0
        %4277 = vst.msk [vmem:[%s4264 + $0x3c0] sm:$0xff] %vm3287, 0.0
        %4278 = vst.msk [vmem:[%s4264 + $0x3c8] sm:$0x3] %vm4248, 0.0
        %4279 = vst.msk [vmem:[%s4264 + $0x460] sm:$0xff] %vm3287, 0.0
        %4280 = vst.msk [vmem:[%s4264 + $0x468] sm:$0x3] %vm4248, 0.0
        %s4281 = scalar_lea.vmem [#allocation3], 16
        %vm4282 = vcmask 253952
        %4283 = vst.msk [vmem:[%s4281] sm:$0x1] %vm4282, 0.0
        %4284 = vst.msk [vmem:[%s4281 + $0x10] sm:$0x1] %vm4282, 0.0
        %4285 = vst.msk [vmem:[%s4281 + $0x20] sm:$0x1] %vm4282, 0.0
        %4286 = vst.msk [vmem:[%s4281 + $0x30] sm:$0x1] %vm4282, 0.0
        %4287 = vst.msk [vmem:[%s4281 + $0x40] sm:$0x1] %vm4282, 0.0
        %4288 = vst.msk [vmem:[%s4281 + $0x50] sm:$0x1] %vm4282, 0.0
        %4289 = vst.msk [vmem:[%s4281 + $0x60] sm:$0x1] %vm4282, 0.0
        %4290 = vst.msk [vmem:[%s4281 + $0x70] sm:$0x1] %vm4282, 0.0
        %4291 = vst.msk [vmem:[%s4281 + $0xa0] sm:$0x1] %vm4282, 0.0
        %4292 = vst.msk [vmem:[%s4281 + $0xb0] sm:$0x1] %vm4282, 0.0
        %4293 = vst.msk [vmem:[%s4281 + $0xc0] sm:$0x1] %vm4282, 0.0
        %4294 = vst.msk [vmem:[%s4281 + $0xd0] sm:$0x1] %vm4282, 0.0
        %4295 = vst.msk [vmem:[%s4281 + $0xe0] sm:$0x1] %vm4282, 0.0
        %4296 = vst.msk [vmem:[%s4281 + $0xf0] sm:$0x1] %vm4282, 0.0
        %4297 = vst.msk [vmem:[%s4281 + $0x100] sm:$0x1] %vm4282, 0.0
        %4298 = vst.msk [vmem:[%s4281 + $0x110] sm:$0x1] %vm4282, 0.0
        %4299 = vst.msk [vmem:[%s4281 + $0x140] sm:$0x1] %vm4282, 0.0
        %4300 = vst.msk [vmem:[%s4281 + $0x150] sm:$0x1] %vm4282, 0.0
        %4301 = vst.msk [vmem:[%s4281 + $0x160] sm:$0x1] %vm4282, 0.0
        %4302 = vst.msk [vmem:[%s4281 + $0x170] sm:$0x1] %vm4282, 0.0
        %4303 = vst.msk [vmem:[%s4281 + $0x180] sm:$0x1] %vm4282, 0.0
        %4304 = vst.msk [vmem:[%s4281 + $0x190] sm:$0x1] %vm4282, 0.0
        %4305 = vst.msk [vmem:[%s4281 + $0x1a0] sm:$0x1] %vm4282, 0.0
        %4306 = vst.msk [vmem:[%s4281 + $0x1b0] sm:$0x1] %vm4282, 0.0
        %4307 = vst.msk [vmem:[%s4281 + $0x1e0] sm:$0x1] %vm4282, 0.0
        %4308 = vst.msk [vmem:[%s4281 + $0x1f0] sm:$0x1] %vm4282, 0.0
        %4309 = vst.msk [vmem:[%s4281 + $0x200] sm:$0x1] %vm4282, 0.0
        %4310 = vst.msk [vmem:[%s4281 + $0x210] sm:$0x1] %vm4282, 0.0
        %4311 = vst.msk [vmem:[%s4281 + $0x220] sm:$0x1] %vm4282, 0.0
        %4312 = vst.msk [vmem:[%s4281 + $0x230] sm:$0x1] %vm4282, 0.0
        %4313 = vst.msk [vmem:[%s4281 + $0x240] sm:$0x1] %vm4282, 0.0
        %4314 = vst.msk [vmem:[%s4281 + $0x250] sm:$0x1] %vm4282, 0.0
        %4315 = vst.msk [vmem:[%s4281 + $0x280] sm:$0x1] %vm4282, 0.0
        %4316 = vst.msk [vmem:[%s4281 + $0x290] sm:$0x1] %vm4282, 0.0
        %4317 = vst.msk [vmem:[%s4281 + $0x2a0] sm:$0x1] %vm4282, 0.0
        %4318 = vst.msk [vmem:[%s4281 + $0x2b0] sm:$0x1] %vm4282, 0.0
        %4319 = vst.msk [vmem:[%s4281 + $0x2c0] sm:$0x1] %vm4282, 0.0
        %4320 = vst.msk [vmem:[%s4281 + $0x2d0] sm:$0x1] %vm4282, 0.0
        %4321 = vst.msk [vmem:[%s4281 + $0x2e0] sm:$0x1] %vm4282, 0.0
        %4322 = vst.msk [vmem:[%s4281 + $0x2f0] sm:$0x1] %vm4282, 0.0
        %4323 = vst.msk [vmem:[%s4281 + $0x320] sm:$0x1] %vm4282, 0.0
        %4324 = vst.msk [vmem:[%s4281 + $0x330] sm:$0x1] %vm4282, 0.0
        %4325 = vst.msk [vmem:[%s4281 + $0x340] sm:$0x1] %vm4282, 0.0
        %4326 = vst.msk [vmem:[%s4281 + $0x350] sm:$0x1] %vm4282, 0.0
        %4327 = vst.msk [vmem:[%s4281 + $0x360] sm:$0x1] %vm4282, 0.0
        %4328 = vst.msk [vmem:[%s4281 + $0x370] sm:$0x1] %vm4282, 0.0
        %4329 = vst.msk [vmem:[%s4281 + $0x380] sm:$0x1] %vm4282, 0.0
        %4330 = vst.msk [vmem:[%s4281 + $0x390] sm:$0x1] %vm4282, 0.0
        %4331 = vst.msk [vmem:[%s4281 + $0x3c0] sm:$0x1] %vm4282, 0.0
        %4332 = vst.msk [vmem:[%s4281 + $0x3d0] sm:$0x1] %vm4282, 0.0
        %4333 = vst.msk [vmem:[%s4281 + $0x3e0] sm:$0x1] %vm4282, 0.0
        %4334 = vst.msk [vmem:[%s4281 + $0x3f0] sm:$0x1] %vm4282, 0.0
        %4335 = vst.msk [vmem:[%s4281 + $0x400] sm:$0x1] %vm4282, 0.0
        %4336 = vst.msk [vmem:[%s4281 + $0x410] sm:$0x1] %vm4282, 0.0
        %4337 = vst.msk [vmem:[%s4281 + $0x420] sm:$0x1] %vm4282, 0.0
        %4338 = vst.msk [vmem:[%s4281 + $0x430] sm:$0x1] %vm4282, 0.0
        %4339 = vst.msk [vmem:[%s4281 + $0x460] sm:$0x1] %vm4282, 0.0
        %4340 = vst.msk [vmem:[%s4281 + $0x470] sm:$0x1] %vm4282, 0.0
        %4341 = vst.msk [vmem:[%s4281 + $0x480] sm:$0x1] %vm4282, 0.0
        %4342 = vst.msk [vmem:[%s4281 + $0x490] sm:$0x1] %vm4282, 0.0
        %4343 = vst.msk [vmem:[%s4281 + $0x4a0] sm:$0x1] %vm4282, 0.0
        %4344 = vst.msk [vmem:[%s4281 + $0x4b0] sm:$0x1] %vm4282, 0.0
        %4345 = vst.msk [vmem:[%s4281 + $0x4c0] sm:$0x1] %vm4282, 0.0
        %4346 = vst.msk [vmem:[%s4281 + $0x4d0] sm:$0x1] %vm4282, 0.0
        %4347 = vst.msk [vmem:[%s4281 + $0x9] sm:$0x1] %vm4282, 0.0
        %4348 = vst.msk [vmem:[%s4281 + $0x19] sm:$0x1] %vm4282, 0.0
        %4349 = vst.msk [vmem:[%s4281 + $0x29] sm:$0x1] %vm4282, 0.0
        %4350 = vst.msk [vmem:[%s4281 + $0x39] sm:$0x1] %vm4282, 0.0
        %4351 = vst.msk [vmem:[%s4281 + $0x49] sm:$0x1] %vm4282, 0.0
        %4352 = vst.msk [vmem:[%s4281 + $0x59] sm:$0x1] %vm4282, 0.0
        %4353 = vst.msk [vmem:[%s4281 + $0x69] sm:$0x1] %vm4282, 0.0
        %4354 = vst.msk [vmem:[%s4281 + $0x79] sm:$0x1] %vm4282, 0.0
        %4355 = vst.msk [vmem:[%s4281 + $0xa9] sm:$0x1] %vm4282, 0.0
        %4356 = vst.msk [vmem:[%s4281 + $0xb9] sm:$0x1] %vm4282, 0.0
        %4357 = vst.msk [vmem:[%s4281 + $0xc9] sm:$0x1] %vm4282, 0.0
        %4358 = vst.msk [vmem:[%s4281 + $0xd9] sm:$0x1] %vm4282, 0.0
        %4359 = vst.msk [vmem:[%s4281 + $0xe9] sm:$0x1] %vm4282, 0.0
        %4360 = vst.msk [vmem:[%s4281 + $0xf9] sm:$0x1] %vm4282, 0.0
        %4361 = vst.msk [vmem:[%s4281 + $0x109] sm:$0x1] %vm4282, 0.0
        %4362 = vst.msk [vmem:[%s4281 + $0x119] sm:$0x1] %vm4282, 0.0
        %4363 = vst.msk [vmem:[%s4281 + $0x149] sm:$0x1] %vm4282, 0.0
        %4364 = vst.msk [vmem:[%s4281 + $0x159] sm:$0x1] %vm4282, 0.0
        %4365 = vst.msk [vmem:[%s4281 + $0x169] sm:$0x1] %vm4282, 0.0
        %4366 = vst.msk [vmem:[%s4281 + $0x179] sm:$0x1] %vm4282, 0.0
        %4367 = vst.msk [vmem:[%s4281 + $0x189] sm:$0x1] %vm4282, 0.0
        %4368 = vst.msk [vmem:[%s4281 + $0x199] sm:$0x1] %vm4282, 0.0
        %4369 = vst.msk [vmem:[%s4281 + $0x1a9] sm:$0x1] %vm4282, 0.0
        %4370 = vst.msk [vmem:[%s4281 + $0x1b9] sm:$0x1] %vm4282, 0.0
        %4371 = vst.msk [vmem:[%s4281 + $0x1e9] sm:$0x1] %vm4282, 0.0
        %4372 = vst.msk [vmem:[%s4281 + $0x1f9] sm:$0x1] %vm4282, 0.0
        %4373 = vst.msk [vmem:[%s4281 + $0x209] sm:$0x1] %vm4282, 0.0
        %4374 = vst.msk [vmem:[%s4281 + $0x219] sm:$0x1] %vm4282, 0.0
        %4375 = vst.msk [vmem:[%s4281 + $0x229] sm:$0x1] %vm4282, 0.0
        %4376 = vst.msk [vmem:[%s4281 + $0x239] sm:$0x1] %vm4282, 0.0
        %4377 = vst.msk [vmem:[%s4281 + $0x249] sm:$0x1] %vm4282, 0.0
        %4378 = vst.msk [vmem:[%s4281 + $0x259] sm:$0x1] %vm4282, 0.0
        %4379 = vst.msk [vmem:[%s4281 + $0x289] sm:$0x1] %vm4282, 0.0
        %4380 = vst.msk [vmem:[%s4281 + $0x299] sm:$0x1] %vm4282, 0.0
        %4381 = vst.msk [vmem:[%s4281 + $0x2a9] sm:$0x1] %vm4282, 0.0
        %4382 = vst.msk [vmem:[%s4281 + $0x2b9] sm:$0x1] %vm4282, 0.0
        %4383 = vst.msk [vmem:[%s4281 + $0x2c9] sm:$0x1] %vm4282, 0.0
        %4384 = vst.msk [vmem:[%s4281 + $0x2d9] sm:$0x1] %vm4282, 0.0
        %4385 = vst.msk [vmem:[%s4281 + $0x2e9] sm:$0x1] %vm4282, 0.0
        %4386 = vst.msk [vmem:[%s4281 + $0x2f9] sm:$0x1] %vm4282, 0.0
        %4387 = vst.msk [vmem:[%s4281 + $0x329] sm:$0x1] %vm4282, 0.0
        %4388 = vst.msk [vmem:[%s4281 + $0x339] sm:$0x1] %vm4282, 0.0
        %4389 = vst.msk [vmem:[%s4281 + $0x349] sm:$0x1] %vm4282, 0.0
        %4390 = vst.msk [vmem:[%s4281 + $0x359] sm:$0x1] %vm4282, 0.0
        %4391 = vst.msk [vmem:[%s4281 + $0x369] sm:$0x1] %vm4282, 0.0
        %4392 = vst.msk [vmem:[%s4281 + $0x379] sm:$0x1] %vm4282, 0.0
        %4393 = vst.msk [vmem:[%s4281 + $0x389] sm:$0x1] %vm4282, 0.0
        %4394 = vst.msk [vmem:[%s4281 + $0x399] sm:$0x1] %vm4282, 0.0
        %4395 = vst.msk [vmem:[%s4281 + $0x3c9] sm:$0x1] %vm4282, 0.0
        %4396 = vst.msk [vmem:[%s4281 + $0x3d9] sm:$0x1] %vm4282, 0.0
        %4397 = vst.msk [vmem:[%s4281 + $0x3e9] sm:$0x1] %vm4282, 0.0
        %4398 = vst.msk [vmem:[%s4281 + $0x3f9] sm:$0x1] %vm4282, 0.0
        %4399 = vst.msk [vmem:[%s4281 + $0x409] sm:$0x1] %vm4282, 0.0
        %4400 = vst.msk [vmem:[%s4281 + $0x419] sm:$0x1] %vm4282, 0.0
        %4401 = vst.msk [vmem:[%s4281 + $0x429] sm:$0x1] %vm4282, 0.0
        %4402 = vst.msk [vmem:[%s4281 + $0x439] sm:$0x1] %vm4282, 0.0
        %4403 = vst.msk [vmem:[%s4281 + $0x469] sm:$0x1] %vm4282, 0.0
        %4404 = vst.msk [vmem:[%s4281 + $0x479] sm:$0x1] %vm4282, 0.0
        %4405 = vst.msk [vmem:[%s4281 + $0x489] sm:$0x1] %vm4282, 0.0
        %4406 = vst.msk [vmem:[%s4281 + $0x499] sm:$0x1] %vm4282, 0.0
        %4407 = vst.msk [vmem:[%s4281 + $0x4a9] sm:$0x1] %vm4282, 0.0
        %4408 = vst.msk [vmem:[%s4281 + $0x4b9] sm:$0x1] %vm4282, 0.0
        %4409 = vst.msk [vmem:[%s4281 + $0x4c9] sm:$0x1] %vm4282, 0.0
        %4410 = vst.msk [vmem:[%s4281 + $0x4d9] sm:$0x1] %vm4282, 0.0
        %4411 = vst.msk [vmem:[%s4281 + $0x1] sm:$0xff] %vm3287, %v4183
        %4412 = vst.msk [vmem:[%s4281 + $0x11] sm:$0xff] %vm3287, %v4184
        %4413 = vst.msk [vmem:[%s4281 + $0x21] sm:$0xff] %vm3287, %v4185
        %4414 = vst.msk [vmem:[%s4281 + $0x31] sm:$0xff] %vm3287, %v4186
        %4415 = vst.msk [vmem:[%s4281 + $0x41] sm:$0xff] %vm3287, %v4187
        %4416 = vst.msk [vmem:[%s4281 + $0x51] sm:$0xff] %vm3287, %v4188
        %4417 = vst.msk [vmem:[%s4281 + $0x61] sm:$0xff] %vm3287, %v4189
        %4418 = vst.msk [vmem:[%s4281 + $0x71] sm:$0xff] %vm3287, %v4190
        %4419 = vst.msk [vmem:[%s4281 + $0xa1] sm:$0xff] %vm3287, %v4191
        %4420 = vst.msk [vmem:[%s4281 + $0xb1] sm:$0xff] %vm3287, %v4192
        %4421 = vst.msk [vmem:[%s4281 + $0xc1] sm:$0xff] %vm3287, %v4193
        %4422 = vst.msk [vmem:[%s4281 + $0xd1] sm:$0xff] %vm3287, %v4194
        %4423 = vst.msk [vmem:[%s4281 + $0xe1] sm:$0xff] %vm3287, %v4195
        %4424 = vst.msk [vmem:[%s4281 + $0xf1] sm:$0xff] %vm3287, %v4196
        %4425 = vst.msk [vmem:[%s4281 + $0x101] sm:$0xff] %vm3287, %v4197
        %4426 = vst.msk [vmem:[%s4281 + $0x111] sm:$0xff] %vm3287, %v4198
        %4427 = vst.msk [vmem:[%s4281 + $0x141] sm:$0xff] %vm3287, %v4199
        %4428 = vst.msk [vmem:[%s4281 + $0x151] sm:$0xff] %vm3287, %v4200
        %4429 = vst.msk [vmem:[%s4281 + $0x161] sm:$0xff] %vm3287, %v4201
        %4430 = vst.msk [vmem:[%s4281 + $0x171] sm:$0xff] %vm3287, %v4202
        %4431 = vst.msk [vmem:[%s4281 + $0x181] sm:$0xff] %vm3287, %v4203
        %4432 = vst.msk [vmem:[%s4281 + $0x191] sm:$0xff] %vm3287, %v4204
        %4433 = vst.msk [vmem:[%s4281 + $0x1a1] sm:$0xff] %vm3287, %v4205
        %4434 = vst.msk [vmem:[%s4281 + $0x1b1] sm:$0xff] %vm3287, %v4206
        %4435 = vst.msk [vmem:[%s4281 + $0x1e1] sm:$0xff] %vm3287, %v4207
        %4436 = vst.msk [vmem:[%s4281 + $0x1f1] sm:$0xff] %vm3287, %v4208
        %4437 = vst.msk [vmem:[%s4281 + $0x201] sm:$0xff] %vm3287, %v4209
        %4438 = vst.msk [vmem:[%s4281 + $0x211] sm:$0xff] %vm3287, %v4210
        %4439 = vst.msk [vmem:[%s4281 + $0x221] sm:$0xff] %vm3287, %v4211
        %4440 = vst.msk [vmem:[%s4281 + $0x231] sm:$0xff] %vm3287, %v4212
        %4441 = vst.msk [vmem:[%s4281 + $0x241] sm:$0xff] %vm3287, %v4213
        %4442 = vst.msk [vmem:[%s4281 + $0x251] sm:$0xff] %vm3287, %v4214
        %4443 = vst.msk [vmem:[%s4281 + $0x281] sm:$0xff] %vm3287, %v4215
        %4444 = vst.msk [vmem:[%s4281 + $0x291] sm:$0xff] %vm3287, %v4216
        %4445 = vst.msk [vmem:[%s4281 + $0x2a1] sm:$0xff] %vm3287, %v4217
        %4446 = vst.msk [vmem:[%s4281 + $0x2b1] sm:$0xff] %vm3287, %v4218
        %4447 = vst.msk [vmem:[%s4281 + $0x2c1] sm:$0xff] %vm3287, %v4219
        %4448 = vst.msk [vmem:[%s4281 + $0x2d1] sm:$0xff] %vm3287, %v4220
        %4449 = vst.msk [vmem:[%s4281 + $0x2e1] sm:$0xff] %vm3287, %v4221
        %4450 = vst.msk [vmem:[%s4281 + $0x2f1] sm:$0xff] %vm3287, %v4222
        %4451 = vst.msk [vmem:[%s4281 + $0x321] sm:$0xff] %vm3287, %v4223
        %4452 = vst.msk [vmem:[%s4281 + $0x331] sm:$0xff] %vm3287, %v4224
        %4453 = vst.msk [vmem:[%s4281 + $0x341] sm:$0xff] %vm3287, %v4225
        %4454 = vst.msk [vmem:[%s4281 + $0x351] sm:$0xff] %vm3287, %v4226
        %4455 = vst.msk [vmem:[%s4281 + $0x361] sm:$0xff] %vm3287, %v4227
        %4456 = vst.msk [vmem:[%s4281 + $0x371] sm:$0xff] %vm3287, %v4228
        %4457 = vst.msk [vmem:[%s4281 + $0x381] sm:$0xff] %vm3287, %v4229
        %4458 = vst.msk [vmem:[%s4281 + $0x391] sm:$0xff] %vm3287, %v4230
        %4459 = vst.msk [vmem:[%s4281 + $0x3c1] sm:$0xff] %vm3287, %v4231
        %4460 = vst.msk [vmem:[%s4281 + $0x3d1] sm:$0xff] %vm3287, %v4232
        %4461 = vst.msk [vmem:[%s4281 + $0x3e1] sm:$0xff] %vm3287, %v4233
        %4462 = vst.msk [vmem:[%s4281 + $0x3f1] sm:$0xff] %vm3287, %v4234
        %4463 = vst.msk [vmem:[%s4281 + $0x401] sm:$0xff] %vm3287, %v4235
        %4464 = vst.msk [vmem:[%s4281 + $0x411] sm:$0xff] %vm3287, %v4236
        %4465 = vst.msk [vmem:[%s4281 + $0x421] sm:$0xff] %vm3287, %v4237
        %4466 = vst.msk [vmem:[%s4281 + $0x431] sm:$0xff] %vm3287, %v4238
        %4467 = vst.msk [vmem:[%s4281 + $0x461] sm:$0xff] %vm3287, %v4239
        %4468 = vst.msk [vmem:[%s4281 + $0x471] sm:$0xff] %vm3287, %v4240
        %4469 = vst.msk [vmem:[%s4281 + $0x481] sm:$0xff] %vm3287, %v4241
        %4470 = vst.msk [vmem:[%s4281 + $0x491] sm:$0xff] %vm3287, %v4242
        %4471 = vst.msk [vmem:[%s4281 + $0x4a1] sm:$0xff] %vm3287, %v4243
        %4472 = vst.msk [vmem:[%s4281 + $0x4b1] sm:$0xff] %vm3287, %v4244
        %4473 = vst.msk [vmem:[%s4281 + $0x4c1] sm:$0xff] %vm3287, %v4245
        %4474 = vst.msk [vmem:[%s4281 + $0x4d1] sm:$0xff] %vm3287, %v4246
        %v4475 = vld [vmem:[#allocation3] sm:$0xff]
        %v4476 = vld [vmem:[#allocation3 + $0x10] sm:$0xff]
        %v4477 = vld [vmem:[#allocation3 + $0x20] sm:$0xff]
        %v4478 = vld [vmem:[#allocation3 + $0x30] sm:$0xff]
        %v4479 = vld [vmem:[#allocation3 + $0x40] sm:$0xff]
        %v4480 = vld [vmem:[#allocation3 + $0x50] sm:$0xff]
        %v4481 = vld [vmem:[#allocation3 + $0x60] sm:$0xff]
        %v4482 = vld [vmem:[#allocation3 + $0x70] sm:$0xff]
        %v4483 = vld [vmem:[#allocation3 + $0xa0] sm:$0xff]
        %v4484 = vld [vmem:[#allocation3 + $0xb0] sm:$0xff]
        %v4485 = vld [vmem:[#allocation3 + $0xc0] sm:$0xff]
        %v4486 = vld [vmem:[#allocation3 + $0xd0] sm:$0xff]
        %v4487 = vld [vmem:[#allocation3 + $0xe0] sm:$0xff]
        %v4488 = vld [vmem:[#allocation3 + $0xf0] sm:$0xff]
        %v4489 = vld [vmem:[#allocation3 + $0x100] sm:$0xff]
        %v4490 = vld [vmem:[#allocation3 + $0x110] sm:$0xff]
        %v4491 = vld [vmem:[#allocation3 + $0x140] sm:$0xff]
        %v4492 = vld [vmem:[#allocation3 + $0x150] sm:$0xff]
        %v4493 = vld [vmem:[#allocation3 + $0x160] sm:$0xff]
        %v4494 = vld [vmem:[#allocation3 + $0x170] sm:$0xff]
        %v4495 = vld [vmem:[#allocation3 + $0x180] sm:$0xff]
        %v4496 = vld [vmem:[#allocation3 + $0x190] sm:$0xff]
        %v4497 = vld [vmem:[#allocation3 + $0x1a0] sm:$0xff]
        %v4498 = vld [vmem:[#allocation3 + $0x1b0] sm:$0xff]
        %v4499 = vld [vmem:[#allocation3 + $0x1e0] sm:$0xff]
        %v4500 = vld [vmem:[#allocation3 + $0x1f0] sm:$0xff]
        %v4501 = vld [vmem:[#allocation3 + $0x200] sm:$0xff]
        %v4502 = vld [vmem:[#allocation3 + $0x210] sm:$0xff]
        %v4503 = vld [vmem:[#allocation3 + $0x220] sm:$0xff]
        %v4504 = vld [vmem:[#allocation3 + $0x230] sm:$0xff]
        %v4505 = vld [vmem:[#allocation3 + $0x240] sm:$0xff]
        %v4506 = vld [vmem:[#allocation3 + $0x250] sm:$0xff]
        %v4507 = vld [vmem:[#allocation3 + $0x280] sm:$0xff]
        %v4508 = vld [vmem:[#allocation3 + $0x290] sm:$0xff]
        %v4509 = vld [vmem:[#allocation3 + $0x2a0] sm:$0xff]
        %v4510 = vld [vmem:[#allocation3 + $0x2b0] sm:$0xff]
        %v4511 = vld [vmem:[#allocation3 + $0x2c0] sm:$0xff]
        %v4512 = vld [vmem:[#allocation3 + $0x2d0] sm:$0xff]
        %v4513 = vld [vmem:[#allocation3 + $0x2e0] sm:$0xff]
        %v4514 = vld [vmem:[#allocation3 + $0x2f0] sm:$0xff]
        %v4515 = vld [vmem:[#allocation3 + $0x320] sm:$0xff]
        %v4516 = vld [vmem:[#allocation3 + $0x330] sm:$0xff]
        %v4517 = vld [vmem:[#allocation3 + $0x340] sm:$0xff]
        %v4518 = vld [vmem:[#allocation3 + $0x350] sm:$0xff]
        %v4519 = vld [vmem:[#allocation3 + $0x360] sm:$0xff]
        %v4520 = vld [vmem:[#allocation3 + $0x370] sm:$0xff]
        %v4521 = vld [vmem:[#allocation3 + $0x380] sm:$0xff]
        %v4522 = vld [vmem:[#allocation3 + $0x390] sm:$0xff]
        %v4523 = vld [vmem:[#allocation3 + $0x3c0] sm:$0xff]
        %v4524 = vld [vmem:[#allocation3 + $0x3d0] sm:$0xff]
        %v4525 = vld [vmem:[#allocation3 + $0x3e0] sm:$0xff]
        %v4526 = vld [vmem:[#allocation3 + $0x3f0] sm:$0xff]
        %v4527 = vld [vmem:[#allocation3 + $0x400] sm:$0xff]
        %v4528 = vld [vmem:[#allocation3 + $0x410] sm:$0xff]
        %v4529 = vld [vmem:[#allocation3 + $0x420] sm:$0xff]
        %v4530 = vld [vmem:[#allocation3 + $0x430] sm:$0xff]
        %v4531 = vld [vmem:[#allocation3 + $0x460] sm:$0xff]
        %v4532 = vld [vmem:[#allocation3 + $0x470] sm:$0xff]
        %v4533 = vld [vmem:[#allocation3 + $0x480] sm:$0xff]
        %v4534 = vld [vmem:[#allocation3 + $0x490] sm:$0xff]
        %v4535 = vld [vmem:[#allocation3 + $0x4a0] sm:$0xff]
        %v4536 = vld [vmem:[#allocation3 + $0x4b0] sm:$0xff]
        %v4537 = vld [vmem:[#allocation3 + $0x4c0] sm:$0xff]
        %v4538 = vld [vmem:[#allocation3 + $0x4d0] sm:$0xff]
        %4539 = vst.msk [vmem:[#allocation4] sm:$0xff] %vm3287, %v4475
        %4540 = vst.msk [vmem:[#allocation4 + $0x18] sm:$0xff] %vm3287, %v4476
        %4541 = vst.msk [vmem:[#allocation4 + $0x30] sm:$0xff] %vm3287, %v4477
        %4542 = vst.msk [vmem:[#allocation4 + $0x48] sm:$0xff] %vm3287, %v4478
        %4543 = vst.msk [vmem:[#allocation4 + $0x60] sm:$0xff] %vm3287, %v4479
        %4544 = vst.msk [vmem:[#allocation4 + $0x78] sm:$0xff] %vm3287, %v4480
        %4545 = vst.msk [vmem:[#allocation4 + $0x90] sm:$0xff] %vm3287, %v4481
        %4546 = vst.msk [vmem:[#allocation4 + $0xa8] sm:$0xff] %vm3287, %v4482
        %4547 = vst.msk [vmem:[#allocation4 + $0xc0] sm:$0xff] %vm3287, %v4483
        %4548 = vst.msk [vmem:[#allocation4 + $0xd8] sm:$0xff] %vm3287, %v4484
        %4549 = vst.msk [vmem:[#allocation4 + $0xf0] sm:$0xff] %vm3287, %v4485
        %4550 = vst.msk [vmem:[#allocation4 + $0x108] sm:$0xff] %vm3287, %v4486
        %4551 = vst.msk [vmem:[#allocation4 + $0x120] sm:$0xff] %vm3287, %v4487
        %4552 = vst.msk [vmem:[#allocation4 + $0x138] sm:$0xff] %vm3287, %v4488
        %4553 = vst.msk [vmem:[#allocation4 + $0x150] sm:$0xff] %vm3287, %v4489
        %4554 = vst.msk [vmem:[#allocation4 + $0x168] sm:$0xff] %vm3287, %v4490
        %4555 = vst.msk [vmem:[#allocation4 + $0x180] sm:$0xff] %vm3287, %v4491
        %4556 = vst.msk [vmem:[#allocation4 + $0x198] sm:$0xff] %vm3287, %v4492
        %4557 = vst.msk [vmem:[#allocation4 + $0x1b0] sm:$0xff] %vm3287, %v4493
        %4558 = vst.msk [vmem:[#allocation4 + $0x1c8] sm:$0xff] %vm3287, %v4494
        %4559 = vst.msk [vmem:[#allocation4 + $0x1e0] sm:$0xff] %vm3287, %v4495
        %4560 = vst.msk [vmem:[#allocation4 + $0x1f8] sm:$0xff] %vm3287, %v4496
        %4561 = vst.msk [vmem:[#allocation4 + $0x210] sm:$0xff] %vm3287, %v4497
        %4562 = vst.msk [vmem:[#allocation4 + $0x228] sm:$0xff] %vm3287, %v4498
        %4563 = vst.msk [vmem:[#allocation4 + $0x240] sm:$0xff] %vm3287, %v4499
        %4564 = vst.msk [vmem:[#allocation4 + $0x258] sm:$0xff] %vm3287, %v4500
        %4565 = vst.msk [vmem:[#allocation4 + $0x270] sm:$0xff] %vm3287, %v4501
        %4566 = vst.msk [vmem:[#allocation4 + $0x288] sm:$0xff] %vm3287, %v4502
        %4567 = vst.msk [vmem:[#allocation4 + $0x2a0] sm:$0xff] %vm3287, %v4503
        %4568 = vst.msk [vmem:[#allocation4 + $0x2b8] sm:$0xff] %vm3287, %v4504
        %4569 = vst.msk [vmem:[#allocation4 + $0x2d0] sm:$0xff] %vm3287, %v4505
        %4570 = vst.msk [vmem:[#allocation4 + $0x2e8] sm:$0xff] %vm3287, %v4506
        %4571 = vst.msk [vmem:[#allocation4 + $0x300] sm:$0xff] %vm3287, %v4507
        %4572 = vst.msk [vmem:[#allocation4 + $0x318] sm:$0xff] %vm3287, %v4508
        %4573 = vst.msk [vmem:[#allocation4 + $0x330] sm:$0xff] %vm3287, %v4509
        %4574 = vst.msk [vmem:[#allocation4 + $0x348] sm:$0xff] %vm3287, %v4510
        %4575 = vst.msk [vmem:[#allocation4 + $0x360] sm:$0xff] %vm3287, %v4511
        %4576 = vst.msk [vmem:[#allocation4 + $0x378] sm:$0xff] %vm3287, %v4512
        %4577 = vst.msk [vmem:[#allocation4 + $0x390] sm:$0xff] %vm3287, %v4513
        %4578 = vst.msk [vmem:[#allocation4 + $0x3a8] sm:$0xff] %vm3287, %v4514
        %4579 = vst.msk [vmem:[#allocation4 + $0x3c0] sm:$0xff] %vm3287, %v4515
        %4580 = vst.msk [vmem:[#allocation4 + $0x3d8] sm:$0xff] %vm3287, %v4516
        %4581 = vst.msk [vmem:[#allocation4 + $0x3f0] sm:$0xff] %vm3287, %v4517
        %4582 = vst.msk [vmem:[#allocation4 + $0x408] sm:$0xff] %vm3287, %v4518
        %4583 = vst.msk [vmem:[#allocation4 + $0x420] sm:$0xff] %vm3287, %v4519
        %4584 = vst.msk [vmem:[#allocation4 + $0x438] sm:$0xff] %vm3287, %v4520
        %4585 = vst.msk [vmem:[#allocation4 + $0x450] sm:$0xff] %vm3287, %v4521
        %4586 = vst.msk [vmem:[#allocation4 + $0x468] sm:$0xff] %vm3287, %v4522
        %4587 = vst.msk [vmem:[#allocation4 + $0x480] sm:$0xff] %vm3287, %v4523
        %4588 = vst.msk [vmem:[#allocation4 + $0x498] sm:$0xff] %vm3287, %v4524
        %4589 = vst.msk [vmem:[#allocation4 + $0x4b0] sm:$0xff] %vm3287, %v4525
        %4590 = vst.msk [vmem:[#allocation4 + $0x4c8] sm:$0xff] %vm3287, %v4526
        %4591 = vst.msk [vmem:[#allocation4 + $0x4e0] sm:$0xff] %vm3287, %v4527
        %4592 = vst.msk [vmem:[#allocation4 + $0x4f8] sm:$0xff] %vm3287, %v4528
        %4593 = vst.msk [vmem:[#allocation4 + $0x510] sm:$0xff] %vm3287, %v4529
        %4594 = vst.msk [vmem:[#allocation4 + $0x528] sm:$0xff] %vm3287, %v4530
        %4595 = vst.msk [vmem:[#allocation4 + $0x540] sm:$0xff] %vm3287, %v4531
        %4596 = vst.msk [vmem:[#allocation4 + $0x558] sm:$0xff] %vm3287, %v4532
        %4597 = vst.msk [vmem:[#allocation4 + $0x570] sm:$0xff] %vm3287, %v4533
        %4598 = vst.msk [vmem:[#allocation4 + $0x588] sm:$0xff] %vm3287, %v4534
        %4599 = vst.msk [vmem:[#allocation4 + $0x5a0] sm:$0xff] %vm3287, %v4535
        %4600 = vst.msk [vmem:[#allocation4 + $0x5b8] sm:$0xff] %vm3287, %v4536
        %4601 = vst.msk [vmem:[#allocation4 + $0x5d0] sm:$0xff] %vm3287, %v4537
        %4602 = vst.msk [vmem:[#allocation4 + $0x5e8] sm:$0xff] %vm3287, %v4538
        %v4603 = vld [vmem:[#allocation3 + $0x1] sm:$0xff]
        %v4604 = vld [vmem:[#allocation3 + $0x11] sm:$0xff]
        %v4605 = vld [vmem:[#allocation3 + $0x21] sm:$0xff]
        %v4606 = vld [vmem:[#allocation3 + $0x31] sm:$0xff]
        %v4607 = vld [vmem:[#allocation3 + $0x41] sm:$0xff]
        %v4608 = vld [vmem:[#allocation3 + $0x51] sm:$0xff]
        %v4609 = vld [vmem:[#allocation3 + $0x61] sm:$0xff]
        %v4610 = vld [vmem:[#allocation3 + $0x71] sm:$0xff]
        %v4611 = vld [vmem:[#allocation3 + $0xa1] sm:$0xff]
        %v4612 = vld [vmem:[#allocation3 + $0xb1] sm:$0xff]
        %v4613 = vld [vmem:[#allocation3 + $0xc1] sm:$0xff]
        %v4614 = vld [vmem:[#allocation3 + $0xd1] sm:$0xff]
        %v4615 = vld [vmem:[#allocation3 + $0xe1] sm:$0xff]
        %v4616 = vld [vmem:[#allocation3 + $0xf1] sm:$0xff]
        %v4617 = vld [vmem:[#allocation3 + $0x101] sm:$0xff]
        %v4618 = vld [vmem:[#allocation3 + $0x111] sm:$0xff]
        %v4619 = vld [vmem:[#allocation3 + $0x141] sm:$0xff]
        %v4620 = vld [vmem:[#allocation3 + $0x151] sm:$0xff]
        %v4621 = vld [vmem:[#allocation3 + $0x161] sm:$0xff]
        %v4622 = vld [vmem:[#allocation3 + $0x171] sm:$0xff]
        %v4623 = vld [vmem:[#allocation3 + $0x181] sm:$0xff]
        %v4624 = vld [vmem:[#allocation3 + $0x191] sm:$0xff]
        %v4625 = vld [vmem:[#allocation3 + $0x1a1] sm:$0xff]
        %v4626 = vld [vmem:[#allocation3 + $0x1b1] sm:$0xff]
        %v4627 = vld [vmem:[#allocation3 + $0x1e1] sm:$0xff]
        %v4628 = vld [vmem:[#allocation3 + $0x1f1] sm:$0xff]
        %v4629 = vld [vmem:[#allocation3 + $0x201] sm:$0xff]
        %v4630 = vld [vmem:[#allocation3 + $0x211] sm:$0xff]
        %v4631 = vld [vmem:[#allocation3 + $0x221] sm:$0xff]
        %v4632 = vld [vmem:[#allocation3 + $0x231] sm:$0xff]
        %v4633 = vld [vmem:[#allocation3 + $0x241] sm:$0xff]
        %v4634 = vld [vmem:[#allocation3 + $0x251] sm:$0xff]
        %v4635 = vld [vmem:[#allocation3 + $0x281] sm:$0xff]
        %v4636 = vld [vmem:[#allocation3 + $0x291] sm:$0xff]
        %v4637 = vld [vmem:[#allocation3 + $0x2a1] sm:$0xff]
        %v4638 = vld [vmem:[#allocation3 + $0x2b1] sm:$0xff]
        %v4639 = vld [vmem:[#allocation3 + $0x2c1] sm:$0xff]
        %v4640 = vld [vmem:[#allocation3 + $0x2d1] sm:$0xff]
        %v4641 = vld [vmem:[#allocation3 + $0x2e1] sm:$0xff]
        %v4642 = vld [vmem:[#allocation3 + $0x2f1] sm:$0xff]
        %v4643 = vld [vmem:[#allocation3 + $0x321] sm:$0xff]
        %v4644 = vld [vmem:[#allocation3 + $0x331] sm:$0xff]
        %v4645 = vld [vmem:[#allocation3 + $0x341] sm:$0xff]
        %v4646 = vld [vmem:[#allocation3 + $0x351] sm:$0xff]
        %v4647 = vld [vmem:[#allocation3 + $0x361] sm:$0xff]
        %v4648 = vld [vmem:[#allocation3 + $0x371] sm:$0xff]
        %v4649 = vld [vmem:[#allocation3 + $0x381] sm:$0xff]
        %v4650 = vld [vmem:[#allocation3 + $0x391] sm:$0xff]
        %v4651 = vld [vmem:[#allocation3 + $0x3c1] sm:$0xff]
        %v4652 = vld [vmem:[#allocation3 + $0x3d1] sm:$0xff]
        %v4653 = vld [vmem:[#allocation3 + $0x3e1] sm:$0xff]
        %v4654 = vld [vmem:[#allocation3 + $0x3f1] sm:$0xff]
        %v4655 = vld [vmem:[#allocation3 + $0x401] sm:$0xff]
        %v4656 = vld [vmem:[#allocation3 + $0x411] sm:$0xff]
        %v4657 = vld [vmem:[#allocation3 + $0x421] sm:$0xff]
        %v4658 = vld [vmem:[#allocation3 + $0x431] sm:$0xff]
        %v4659 = vld [vmem:[#allocation3 + $0x461] sm:$0xff]
        %v4660 = vld [vmem:[#allocation3 + $0x471] sm:$0xff]
        %v4661 = vld [vmem:[#allocation3 + $0x481] sm:$0xff]
        %v4662 = vld [vmem:[#allocation3 + $0x491] sm:$0xff]
        %v4663 = vld [vmem:[#allocation3 + $0x4a1] sm:$0xff]
        %v4664 = vld [vmem:[#allocation3 + $0x4b1] sm:$0xff]
        %v4665 = vld [vmem:[#allocation3 + $0x4c1] sm:$0xff]
        %v4666 = vld [vmem:[#allocation3 + $0x4d1] sm:$0xff]
        %4731 = vrot.lane.b32.xlu0 %v4603, 32
        %v4732 = vpop.permute.xlu0 %4731
        %4733 = vrot.lane.b32.xlu0 %v4604, 32
        %v4734 = vpop.permute.xlu0 %4733
        %4735 = vrot.lane.b32.xlu0 %v4605, 32
        %v4736 = vpop.permute.xlu0 %4735
        %4737 = vrot.lane.b32.xlu0 %v4606, 32
        %v4738 = vpop.permute.xlu0 %4737
        %4739 = vrot.lane.b32.xlu0 %v4607, 32
        %v4740 = vpop.permute.xlu0 %4739
        %4741 = vrot.lane.b32.xlu0 %v4608, 32
        %v4742 = vpop.permute.xlu0 %4741
        %4743 = vrot.lane.b32.xlu0 %v4609, 32
        %v4744 = vpop.permute.xlu0 %4743
        %4745 = vrot.lane.b32.xlu0 %v4610, 32
        %v4746 = vpop.permute.xlu0 %4745
        %4747 = vrot.lane.b32.xlu0 %v4611, 32
        %v4748 = vpop.permute.xlu0 %4747
        %4749 = vrot.lane.b32.xlu0 %v4612, 32
        %v4750 = vpop.permute.xlu0 %4749
        %4751 = vrot.lane.b32.xlu0 %v4613, 32
        %v4752 = vpop.permute.xlu0 %4751
        %4753 = vrot.lane.b32.xlu0 %v4614, 32
        %v4754 = vpop.permute.xlu0 %4753
        %4755 = vrot.lane.b32.xlu0 %v4615, 32
        %v4756 = vpop.permute.xlu0 %4755
        %4757 = vrot.lane.b32.xlu0 %v4616, 32
        %v4758 = vpop.permute.xlu0 %4757
        %4759 = vrot.lane.b32.xlu0 %v4617, 32
        %v4760 = vpop.permute.xlu0 %4759
        %4761 = vrot.lane.b32.xlu0 %v4618, 32
        %v4762 = vpop.permute.xlu0 %4761
        %4763 = vrot.lane.b32.xlu0 %v4619, 32
        %v4764 = vpop.permute.xlu0 %4763
        %4765 = vrot.lane.b32.xlu0 %v4620, 32
        %v4766 = vpop.permute.xlu0 %4765
        %4767 = vrot.lane.b32.xlu0 %v4621, 32
        %v4768 = vpop.permute.xlu0 %4767
        %4769 = vrot.lane.b32.xlu0 %v4622, 32
        %v4770 = vpop.permute.xlu0 %4769
        %4771 = vrot.lane.b32.xlu0 %v4623, 32
        %v4772 = vpop.permute.xlu0 %4771
        %4773 = vrot.lane.b32.xlu0 %v4624, 32
        %v4774 = vpop.permute.xlu0 %4773
        %4775 = vrot.lane.b32.xlu0 %v4625, 32
        %v4776 = vpop.permute.xlu0 %4775
        %4777 = vrot.lane.b32.xlu0 %v4626, 32
        %v4778 = vpop.permute.xlu0 %4777
        %4779 = vrot.lane.b32.xlu0 %v4627, 32
        %v4780 = vpop.permute.xlu0 %4779
        %4781 = vrot.lane.b32.xlu0 %v4628, 32
        %v4782 = vpop.permute.xlu0 %4781
        %4783 = vrot.lane.b32.xlu0 %v4629, 32
        %v4784 = vpop.permute.xlu0 %4783
        %4785 = vrot.lane.b32.xlu0 %v4630, 32
        %v4786 = vpop.permute.xlu0 %4785
        %4787 = vrot.lane.b32.xlu0 %v4631, 32
        %v4788 = vpop.permute.xlu0 %4787
        %4789 = vrot.lane.b32.xlu0 %v4632, 32
        %v4790 = vpop.permute.xlu0 %4789
        %4791 = vrot.lane.b32.xlu0 %v4633, 32
        %v4792 = vpop.permute.xlu0 %4791
        %4793 = vrot.lane.b32.xlu0 %v4634, 32
        %v4794 = vpop.permute.xlu0 %4793
        %4795 = vrot.lane.b32.xlu0 %v4635, 32
        %v4796 = vpop.permute.xlu0 %4795
        %4797 = vrot.lane.b32.xlu0 %v4636, 32
        %v4798 = vpop.permute.xlu0 %4797
        %4799 = vrot.lane.b32.xlu0 %v4637, 32
        %v4800 = vpop.permute.xlu0 %4799
        %4801 = vrot.lane.b32.xlu0 %v4638, 32
        %v4802 = vpop.permute.xlu0 %4801
        %4803 = vrot.lane.b32.xlu0 %v4639, 32
        %v4804 = vpop.permute.xlu0 %4803
        %4805 = vrot.lane.b32.xlu0 %v4640, 32
        %v4806 = vpop.permute.xlu0 %4805
        %4807 = vrot.lane.b32.xlu0 %v4641, 32
        %v4808 = vpop.permute.xlu0 %4807
        %4809 = vrot.lane.b32.xlu0 %v4642, 32
        %v4810 = vpop.permute.xlu0 %4809
        %4811 = vrot.lane.b32.xlu0 %v4643, 32
        %v4812 = vpop.permute.xlu0 %4811
        %4813 = vrot.lane.b32.xlu0 %v4644, 32
        %v4814 = vpop.permute.xlu0 %4813
        %4815 = vrot.lane.b32.xlu0 %v4645, 32
        %v4816 = vpop.permute.xlu0 %4815
        %4817 = vrot.lane.b32.xlu0 %v4646, 32
        %v4818 = vpop.permute.xlu0 %4817
        %4819 = vrot.lane.b32.xlu0 %v4647, 32
        %v4820 = vpop.permute.xlu0 %4819
        %4821 = vrot.lane.b32.xlu0 %v4648, 32
        %v4822 = vpop.permute.xlu0 %4821
        %4823 = vrot.lane.b32.xlu0 %v4649, 32
        %v4824 = vpop.permute.xlu0 %4823
        %4825 = vrot.lane.b32.xlu0 %v4650, 32
        %v4826 = vpop.permute.xlu0 %4825
        %4827 = vrot.lane.b32.xlu0 %v4651, 32
        %v4828 = vpop.permute.xlu0 %4827
        %4829 = vrot.lane.b32.xlu0 %v4652, 32
        %v4830 = vpop.permute.xlu0 %4829
        %4831 = vrot.lane.b32.xlu0 %v4653, 32
        %v4832 = vpop.permute.xlu0 %4831
        %4833 = vrot.lane.b32.xlu0 %v4654, 32
        %v4834 = vpop.permute.xlu0 %4833
        %4835 = vrot.lane.b32.xlu0 %v4655, 32
        %v4836 = vpop.permute.xlu0 %4835
        %4837 = vrot.lane.b32.xlu0 %v4656, 32
        %v4838 = vpop.permute.xlu0 %4837
        %4839 = vrot.lane.b32.xlu0 %v4657, 32
        %v4840 = vpop.permute.xlu0 %4839
        %4841 = vrot.lane.b32.xlu0 %v4658, 32
        %v4842 = vpop.permute.xlu0 %4841
        %4843 = vrot.lane.b32.xlu0 %v4659, 32
        %v4844 = vpop.permute.xlu0 %4843
        %4845 = vrot.lane.b32.xlu0 %v4660, 32
        %v4846 = vpop.permute.xlu0 %4845
        %4847 = vrot.lane.b32.xlu0 %v4661, 32
        %v4848 = vpop.permute.xlu0 %4847
        %4849 = vrot.lane.b32.xlu0 %v4662, 32
        %v4850 = vpop.permute.xlu0 %4849
        %4851 = vrot.lane.b32.xlu0 %v4663, 32
        %v4852 = vpop.permute.xlu0 %4851
        %4853 = vrot.lane.b32.xlu0 %v4664, 32
        %v4854 = vpop.permute.xlu0 %4853
        %4855 = vrot.lane.b32.xlu0 %v4665, 32
        %v4856 = vpop.permute.xlu0 %4855
        %4857 = vrot.lane.b32.xlu0 %v4666, 32
        %v4858 = vpop.permute.xlu0 %4857
        %vm4923 = vcmask 523520
        %4924 = vst.msk [vmem:[#allocation4] sm:$0xff] %vm4923, %v4732
        %4925 = vst.msk [vmem:[#allocation4 + $0x18] sm:$0xff] %vm4923, %v4734
        %4926 = vst.msk [vmem:[#allocation4 + $0x30] sm:$0xff] %vm4923, %v4736
        %4927 = vst.msk [vmem:[#allocation4 + $0x48] sm:$0xff] %vm4923, %v4738
        %4928 = vst.msk [vmem:[#allocation4 + $0x60] sm:$0xff] %vm4923, %v4740
        %4929 = vst.msk [vmem:[#allocation4 + $0x78] sm:$0xff] %vm4923, %v4742
        %4930 = vst.msk [vmem:[#allocation4 + $0x90] sm:$0xff] %vm4923, %v4744
        %4931 = vst.msk [vmem:[#allocation4 + $0xa8] sm:$0xff] %vm4923, %v4746
        %4932 = vst.msk [vmem:[#allocation4 + $0xc0] sm:$0xff] %vm4923, %v4748
        %4933 = vst.msk [vmem:[#allocation4 + $0xd8] sm:$0xff] %vm4923, %v4750
        %4934 = vst.msk [vmem:[#allocation4 + $0xf0] sm:$0xff] %vm4923, %v4752
        %4935 = vst.msk [vmem:[#allocation4 + $0x108] sm:$0xff] %vm4923, %v4754
        %4936 = vst.msk [vmem:[#allocation4 + $0x120] sm:$0xff] %vm4923, %v4756
        %4937 = vst.msk [vmem:[#allocation4 + $0x138] sm:$0xff] %vm4923, %v4758
        %4938 = vst.msk [vmem:[#allocation4 + $0x150] sm:$0xff] %vm4923, %v4760
        %4939 = vst.msk [vmem:[#allocation4 + $0x168] sm:$0xff] %vm4923, %v4762
        %4940 = vst.msk [vmem:[#allocation4 + $0x180] sm:$0xff] %vm4923, %v4764
        %4941 = vst.msk [vmem:[#allocation4 + $0x198] sm:$0xff] %vm4923, %v4766
        %4942 = vst.msk [vmem:[#allocation4 + $0x1b0] sm:$0xff] %vm4923, %v4768
        %4943 = vst.msk [vmem:[#allocation4 + $0x1c8] sm:$0xff] %vm4923, %v4770
        %4944 = vst.msk [vmem:[#allocation4 + $0x1e0] sm:$0xff] %vm4923, %v4772
        %4945 = vst.msk [vmem:[#allocation4 + $0x1f8] sm:$0xff] %vm4923, %v4774
        %4946 = vst.msk [vmem:[#allocation4 + $0x210] sm:$0xff] %vm4923, %v4776
        %4947 = vst.msk [vmem:[#allocation4 + $0x228] sm:$0xff] %vm4923, %v4778
        %4948 = vst.msk [vmem:[#allocation4 + $0x240] sm:$0xff] %vm4923, %v4780
        %4949 = vst.msk [vmem:[#allocation4 + $0x258] sm:$0xff] %vm4923, %v4782
        %4950 = vst.msk [vmem:[#allocation4 + $0x270] sm:$0xff] %vm4923, %v4784
        %4951 = vst.msk [vmem:[#allocation4 + $0x288] sm:$0xff] %vm4923, %v4786
        %4952 = vst.msk [vmem:[#allocation4 + $0x2a0] sm:$0xff] %vm4923, %v4788
        %4953 = vst.msk [vmem:[#allocation4 + $0x2b8] sm:$0xff] %vm4923, %v4790
        %4954 = vst.msk [vmem:[#allocation4 + $0x2d0] sm:$0xff] %vm4923, %v4792
        %4955 = vst.msk [vmem:[#allocation4 + $0x2e8] sm:$0xff] %vm4923, %v4794
        %4956 = vst.msk [vmem:[#allocation4 + $0x300] sm:$0xff] %vm4923, %v4796
        %4957 = vst.msk [vmem:[#allocation4 + $0x318] sm:$0xff] %vm4923, %v4798
        %4958 = vst.msk [vmem:[#allocation4 + $0x330] sm:$0xff] %vm4923, %v4800
        %4959 = vst.msk [vmem:[#allocation4 + $0x348] sm:$0xff] %vm4923, %v4802
        %4960 = vst.msk [vmem:[#allocation4 + $0x360] sm:$0xff] %vm4923, %v4804
        %4961 = vst.msk [vmem:[#allocation4 + $0x378] sm:$0xff] %vm4923, %v4806
        %4962 = vst.msk [vmem:[#allocation4 + $0x390] sm:$0xff] %vm4923, %v4808
        %4963 = vst.msk [vmem:[#allocation4 + $0x3a8] sm:$0xff] %vm4923, %v4810
        %4964 = vst.msk [vmem:[#allocation4 + $0x3c0] sm:$0xff] %vm4923, %v4812
        %4965 = vst.msk [vmem:[#allocation4 + $0x3d8] sm:$0xff] %vm4923, %v4814
        %4966 = vst.msk [vmem:[#allocation4 + $0x3f0] sm:$0xff] %vm4923, %v4816
        %4967 = vst.msk [vmem:[#allocation4 + $0x408] sm:$0xff] %vm4923, %v4818
        %4968 = vst.msk [vmem:[#allocation4 + $0x420] sm:$0xff] %vm4923, %v4820
        %4969 = vst.msk [vmem:[#allocation4 + $0x438] sm:$0xff] %vm4923, %v4822
        %4970 = vst.msk [vmem:[#allocation4 + $0x450] sm:$0xff] %vm4923, %v4824
        %4971 = vst.msk [vmem:[#allocation4 + $0x468] sm:$0xff] %vm4923, %v4826
        %4972 = vst.msk [vmem:[#allocation4 + $0x480] sm:$0xff] %vm4923, %v4828
        %4973 = vst.msk [vmem:[#allocation4 + $0x498] sm:$0xff] %vm4923, %v4830
        %4974 = vst.msk [vmem:[#allocation4 + $0x4b0] sm:$0xff] %vm4923, %v4832
        %4975 = vst.msk [vmem:[#allocation4 + $0x4c8] sm:$0xff] %vm4923, %v4834
        %4976 = vst.msk [vmem:[#allocation4 + $0x4e0] sm:$0xff] %vm4923, %v4836
        %4977 = vst.msk [vmem:[#allocation4 + $0x4f8] sm:$0xff] %vm4923, %v4838
        %4978 = vst.msk [vmem:[#allocation4 + $0x510] sm:$0xff] %vm4923, %v4840
        %4979 = vst.msk [vmem:[#allocation4 + $0x528] sm:$0xff] %vm4923, %v4842
        %4980 = vst.msk [vmem:[#allocation4 + $0x540] sm:$0xff] %vm4923, %v4844
        %4981 = vst.msk [vmem:[#allocation4 + $0x558] sm:$0xff] %vm4923, %v4846
        %4982 = vst.msk [vmem:[#allocation4 + $0x570] sm:$0xff] %vm4923, %v4848
        %4983 = vst.msk [vmem:[#allocation4 + $0x588] sm:$0xff] %vm4923, %v4850
        %4984 = vst.msk [vmem:[#allocation4 + $0x5a0] sm:$0xff] %vm4923, %v4852
        %4985 = vst.msk [vmem:[#allocation4 + $0x5b8] sm:$0xff] %vm4923, %v4854
        %4986 = vst.msk [vmem:[#allocation4 + $0x5d0] sm:$0xff] %vm4923, %v4856
        %4987 = vst.msk [vmem:[#allocation4 + $0x5e8] sm:$0xff] %vm4923, %v4858
        %v4988 = vld [vmem:[#allocation3 + $0x2] sm:$0xff]
        %v4989 = vld [vmem:[#allocation3 + $0x12] sm:$0xff]
        %v4990 = vld [vmem:[#allocation3 + $0x22] sm:$0xff]
        %v4991 = vld [vmem:[#allocation3 + $0x32] sm:$0xff]
        %v4992 = vld [vmem:[#allocation3 + $0x42] sm:$0xff]
        %v4993 = vld [vmem:[#allocation3 + $0x52] sm:$0xff]
        %v4994 = vld [vmem:[#allocation3 + $0x62] sm:$0xff]
        %v4995 = vld [vmem:[#allocation3 + $0x72] sm:$0xff]
        %v4996 = vld [vmem:[#allocation3 + $0xa2] sm:$0xff]
        %v4997 = vld [vmem:[#allocation3 + $0xb2] sm:$0xff]
        %v4998 = vld [vmem:[#allocation3 + $0xc2] sm:$0xff]
        %v4999 = vld [vmem:[#allocation3 + $0xd2] sm:$0xff]
        %v5000 = vld [vmem:[#allocation3 + $0xe2] sm:$0xff]
        %v5001 = vld [vmem:[#allocation3 + $0xf2] sm:$0xff]
        %v5002 = vld [vmem:[#allocation3 + $0x102] sm:$0xff]
        %v5003 = vld [vmem:[#allocation3 + $0x112] sm:$0xff]
        %v5004 = vld [vmem:[#allocation3 + $0x142] sm:$0xff]
        %v5005 = vld [vmem:[#allocation3 + $0x152] sm:$0xff]
        %v5006 = vld [vmem:[#allocation3 + $0x162] sm:$0xff]
        %v5007 = vld [vmem:[#allocation3 + $0x172] sm:$0xff]
        %v5008 = vld [vmem:[#allocation3 + $0x182] sm:$0xff]
        %v5009 = vld [vmem:[#allocation3 + $0x192] sm:$0xff]
        %v5010 = vld [vmem:[#allocation3 + $0x1a2] sm:$0xff]
        %v5011 = vld [vmem:[#allocation3 + $0x1b2] sm:$0xff]
        %v5012 = vld [vmem:[#allocation3 + $0x1e2] sm:$0xff]
        %v5013 = vld [vmem:[#allocation3 + $0x1f2] sm:$0xff]
        %v5014 = vld [vmem:[#allocation3 + $0x202] sm:$0xff]
        %v5015 = vld [vmem:[#allocation3 + $0x212] sm:$0xff]
        %v5016 = vld [vmem:[#allocation3 + $0x222] sm:$0xff]
        %v5017 = vld [vmem:[#allocation3 + $0x232] sm:$0xff]
        %v5018 = vld [vmem:[#allocation3 + $0x242] sm:$0xff]
        %v5019 = vld [vmem:[#allocation3 + $0x252] sm:$0xff]
        %v5020 = vld [vmem:[#allocation3 + $0x282] sm:$0xff]
        %v5021 = vld [vmem:[#allocation3 + $0x292] sm:$0xff]
        %v5022 = vld [vmem:[#allocation3 + $0x2a2] sm:$0xff]
        %v5023 = vld [vmem:[#allocation3 + $0x2b2] sm:$0xff]
        %v5024 = vld [vmem:[#allocation3 + $0x2c2] sm:$0xff]
        %v5025 = vld [vmem:[#allocation3 + $0x2d2] sm:$0xff]
        %v5026 = vld [vmem:[#allocation3 + $0x2e2] sm:$0xff]
        %v5027 = vld [vmem:[#allocation3 + $0x2f2] sm:$0xff]
        %v5028 = vld [vmem:[#allocation3 + $0x322] sm:$0xff]
        %v5029 = vld [vmem:[#allocation3 + $0x332] sm:$0xff]
        %v5030 = vld [vmem:[#allocation3 + $0x342] sm:$0xff]
        %v5031 = vld [vmem:[#allocation3 + $0x352] sm:$0xff]
        %v5032 = vld [vmem:[#allocation3 + $0x362] sm:$0xff]
        %v5033 = vld [vmem:[#allocation3 + $0x372] sm:$0xff]
        %v5034 = vld [vmem:[#allocation3 + $0x382] sm:$0xff]
        %v5035 = vld [vmem:[#allocation3 + $0x392] sm:$0xff]
        %v5036 = vld [vmem:[#allocation3 + $0x3c2] sm:$0xff]
        %v5037 = vld [vmem:[#allocation3 + $0x3d2] sm:$0xff]
        %v5038 = vld [vmem:[#allocation3 + $0x3e2] sm:$0xff]
        %v5039 = vld [vmem:[#allocation3 + $0x3f2] sm:$0xff]
        %v5040 = vld [vmem:[#allocation3 + $0x402] sm:$0xff]
        %v5041 = vld [vmem:[#allocation3 + $0x412] sm:$0xff]
        %v5042 = vld [vmem:[#allocation3 + $0x422] sm:$0xff]
        %v5043 = vld [vmem:[#allocation3 + $0x432] sm:$0xff]
        %v5044 = vld [vmem:[#allocation3 + $0x462] sm:$0xff]
        %v5045 = vld [vmem:[#allocation3 + $0x472] sm:$0xff]
        %v5046 = vld [vmem:[#allocation3 + $0x482] sm:$0xff]
        %v5047 = vld [vmem:[#allocation3 + $0x492] sm:$0xff]
        %v5048 = vld [vmem:[#allocation3 + $0x4a2] sm:$0xff]
        %v5049 = vld [vmem:[#allocation3 + $0x4b2] sm:$0xff]
        %v5050 = vld [vmem:[#allocation3 + $0x4c2] sm:$0xff]
        %v5051 = vld [vmem:[#allocation3 + $0x4d2] sm:$0xff]
        %5116 = vrot.lane.b32.xlu0 %v4988, 64
        %v5117 = vpop.permute.xlu0 %5116
        %5118 = vrot.lane.b32.xlu0 %v4989, 64
        %v5119 = vpop.permute.xlu0 %5118
        %5120 = vrot.lane.b32.xlu0 %v4990, 64
        %v5121 = vpop.permute.xlu0 %5120
        %5122 = vrot.lane.b32.xlu0 %v4991, 64
        %v5123 = vpop.permute.xlu0 %5122
        %5124 = vrot.lane.b32.xlu0 %v4992, 64
        %v5125 = vpop.permute.xlu0 %5124
        %5126 = vrot.lane.b32.xlu0 %v4993, 64
        %v5127 = vpop.permute.xlu0 %5126
        %5128 = vrot.lane.b32.xlu0 %v4994, 64
        %v5129 = vpop.permute.xlu0 %5128
        %5130 = vrot.lane.b32.xlu0 %v4995, 64
        %v5131 = vpop.permute.xlu0 %5130
        %5132 = vrot.lane.b32.xlu0 %v4996, 64
        %v5133 = vpop.permute.xlu0 %5132
        %5134 = vrot.lane.b32.xlu0 %v4997, 64
        %v5135 = vpop.permute.xlu0 %5134
        %5136 = vrot.lane.b32.xlu0 %v4998, 64
        %v5137 = vpop.permute.xlu0 %5136
        %5138 = vrot.lane.b32.xlu0 %v4999, 64
        %v5139 = vpop.permute.xlu0 %5138
        %5140 = vrot.lane.b32.xlu0 %v5000, 64
        %v5141 = vpop.permute.xlu0 %5140
        %5142 = vrot.lane.b32.xlu0 %v5001, 64
        %v5143 = vpop.permute.xlu0 %5142
        %5144 = vrot.lane.b32.xlu0 %v5002, 64
        %v5145 = vpop.permute.xlu0 %5144
        %5146 = vrot.lane.b32.xlu0 %v5003, 64
        %v5147 = vpop.permute.xlu0 %5146
        %5148 = vrot.lane.b32.xlu0 %v5004, 64
        %v5149 = vpop.permute.xlu0 %5148
        %5150 = vrot.lane.b32.xlu0 %v5005, 64
        %v5151 = vpop.permute.xlu0 %5150
        %5152 = vrot.lane.b32.xlu0 %v5006, 64
        %v5153 = vpop.permute.xlu0 %5152
        %5154 = vrot.lane.b32.xlu0 %v5007, 64
        %v5155 = vpop.permute.xlu0 %5154
        %5156 = vrot.lane.b32.xlu0 %v5008, 64
        %v5157 = vpop.permute.xlu0 %5156
        %5158 = vrot.lane.b32.xlu0 %v5009, 64
        %v5159 = vpop.permute.xlu0 %5158
        %5160 = vrot.lane.b32.xlu0 %v5010, 64
        %v5161 = vpop.permute.xlu0 %5160
        %5162 = vrot.lane.b32.xlu0 %v5011, 64
        %v5163 = vpop.permute.xlu0 %5162
        %5164 = vrot.lane.b32.xlu0 %v5012, 64
        %v5165 = vpop.permute.xlu0 %5164
        %5166 = vrot.lane.b32.xlu0 %v5013, 64
        %v5167 = vpop.permute.xlu0 %5166
        %5168 = vrot.lane.b32.xlu0 %v5014, 64
        %v5169 = vpop.permute.xlu0 %5168
        %5170 = vrot.lane.b32.xlu0 %v5015, 64
        %v5171 = vpop.permute.xlu0 %5170
        %5172 = vrot.lane.b32.xlu0 %v5016, 64
        %v5173 = vpop.permute.xlu0 %5172
        %5174 = vrot.lane.b32.xlu0 %v5017, 64
        %v5175 = vpop.permute.xlu0 %5174
        %5176 = vrot.lane.b32.xlu0 %v5018, 64
        %v5177 = vpop.permute.xlu0 %5176
        %5178 = vrot.lane.b32.xlu0 %v5019, 64
        %v5179 = vpop.permute.xlu0 %5178
        %5180 = vrot.lane.b32.xlu0 %v5020, 64
        %v5181 = vpop.permute.xlu0 %5180
        %5182 = vrot.lane.b32.xlu0 %v5021, 64
        %v5183 = vpop.permute.xlu0 %5182
        %5184 = vrot.lane.b32.xlu0 %v5022, 64
        %v5185 = vpop.permute.xlu0 %5184
        %5186 = vrot.lane.b32.xlu0 %v5023, 64
        %v5187 = vpop.permute.xlu0 %5186
        %5188 = vrot.lane.b32.xlu0 %v5024, 64
        %v5189 = vpop.permute.xlu0 %5188
        %5190 = vrot.lane.b32.xlu0 %v5025, 64
        %v5191 = vpop.permute.xlu0 %5190
        %5192 = vrot.lane.b32.xlu0 %v5026, 64
        %v5193 = vpop.permute.xlu0 %5192
        %5194 = vrot.lane.b32.xlu0 %v5027, 64
        %v5195 = vpop.permute.xlu0 %5194
        %5196 = vrot.lane.b32.xlu0 %v5028, 64
        %v5197 = vpop.permute.xlu0 %5196
        %5198 = vrot.lane.b32.xlu0 %v5029, 64
        %v5199 = vpop.permute.xlu0 %5198
        %5200 = vrot.lane.b32.xlu0 %v5030, 64
        %v5201 = vpop.permute.xlu0 %5200
        %5202 = vrot.lane.b32.xlu0 %v5031, 64
        %v5203 = vpop.permute.xlu0 %5202
        %5204 = vrot.lane.b32.xlu0 %v5032, 64
        %v5205 = vpop.permute.xlu0 %5204
        %5206 = vrot.lane.b32.xlu0 %v5033, 64
        %v5207 = vpop.permute.xlu0 %5206
        %5208 = vrot.lane.b32.xlu0 %v5034, 64
        %v5209 = vpop.permute.xlu0 %5208
        %5210 = vrot.lane.b32.xlu0 %v5035, 64
        %v5211 = vpop.permute.xlu0 %5210
        %5212 = vrot.lane.b32.xlu0 %v5036, 64
        %v5213 = vpop.permute.xlu0 %5212
        %5214 = vrot.lane.b32.xlu0 %v5037, 64
        %v5215 = vpop.permute.xlu0 %5214
        %5216 = vrot.lane.b32.xlu0 %v5038, 64
        %v5217 = vpop.permute.xlu0 %5216
        %5218 = vrot.lane.b32.xlu0 %v5039, 64
        %v5219 = vpop.permute.xlu0 %5218
        %5220 = vrot.lane.b32.xlu0 %v5040, 64
        %v5221 = vpop.permute.xlu0 %5220
        %5222 = vrot.lane.b32.xlu0 %v5041, 64
        %v5223 = vpop.permute.xlu0 %5222
        %5224 = vrot.lane.b32.xlu0 %v5042, 64
        %v5225 = vpop.permute.xlu0 %5224
        %5226 = vrot.lane.b32.xlu0 %v5043, 64
        %v5227 = vpop.permute.xlu0 %5226
        %5228 = vrot.lane.b32.xlu0 %v5044, 64
        %v5229 = vpop.permute.xlu0 %5228
        %5230 = vrot.lane.b32.xlu0 %v5045, 64
        %v5231 = vpop.permute.xlu0 %5230
        %5232 = vrot.lane.b32.xlu0 %v5046, 64
        %v5233 = vpop.permute.xlu0 %5232
        %5234 = vrot.lane.b32.xlu0 %v5047, 64
        %v5235 = vpop.permute.xlu0 %5234
        %5236 = vrot.lane.b32.xlu0 %v5048, 64
        %v5237 = vpop.permute.xlu0 %5236
        %5238 = vrot.lane.b32.xlu0 %v5049, 64
        %v5239 = vpop.permute.xlu0 %5238
        %5240 = vrot.lane.b32.xlu0 %v5050, 64
        %v5241 = vpop.permute.xlu0 %5240
        %5242 = vrot.lane.b32.xlu0 %v5051, 64
        %v5243 = vpop.permute.xlu0 %5242
        %vm5308 = vcmask 785920
        %5309 = vst.msk [vmem:[#allocation4] sm:$0xff] %vm5308, %v5117
        %5310 = vst.msk [vmem:[#allocation4 + $0x18] sm:$0xff] %vm5308, %v5119
        %5311 = vst.msk [vmem:[#allocation4 + $0x30] sm:$0xff] %vm5308, %v5121
        %5312 = vst.msk [vmem:[#allocation4 + $0x48] sm:$0xff] %vm5308, %v5123
        %5313 = vst.msk [vmem:[#allocation4 + $0x60] sm:$0xff] %vm5308, %v5125
        %5314 = vst.msk [vmem:[#allocation4 + $0x78] sm:$0xff] %vm5308, %v5127
        %5315 = vst.msk [vmem:[#allocation4 + $0x90] sm:$0xff] %vm5308, %v5129
        %5316 = vst.msk [vmem:[#allocation4 + $0xa8] sm:$0xff] %vm5308, %v5131
        %5317 = vst.msk [vmem:[#allocation4 + $0xc0] sm:$0xff] %vm5308, %v5133
        %5318 = vst.msk [vmem:[#allocation4 + $0xd8] sm:$0xff] %vm5308, %v5135
        %5319 = vst.msk [vmem:[#allocation4 + $0xf0] sm:$0xff] %vm5308, %v5137
        %5320 = vst.msk [vmem:[#allocation4 + $0x108] sm:$0xff] %vm5308, %v5139
        %5321 = vst.msk [vmem:[#allocation4 + $0x120] sm:$0xff] %vm5308, %v5141
        %5322 = vst.msk [vmem:[#allocation4 + $0x138] sm:$0xff] %vm5308, %v5143
        %5323 = vst.msk [vmem:[#allocation4 + $0x150] sm:$0xff] %vm5308, %v5145
        %5324 = vst.msk [vmem:[#allocation4 + $0x168] sm:$0xff] %vm5308, %v5147
        %5325 = vst.msk [vmem:[#allocation4 + $0x180] sm:$0xff] %vm5308, %v5149
        %5326 = vst.msk [vmem:[#allocation4 + $0x198] sm:$0xff] %vm5308, %v5151
        %5327 = vst.msk [vmem:[#allocation4 + $0x1b0] sm:$0xff] %vm5308, %v5153
        %5328 = vst.msk [vmem:[#allocation4 + $0x1c8] sm:$0xff] %vm5308, %v5155
        %5329 = vst.msk [vmem:[#allocation4 + $0x1e0] sm:$0xff] %vm5308, %v5157
        %5330 = vst.msk [vmem:[#allocation4 + $0x1f8] sm:$0xff] %vm5308, %v5159
        %5331 = vst.msk [vmem:[#allocation4 + $0x210] sm:$0xff] %vm5308, %v5161
        %5332 = vst.msk [vmem:[#allocation4 + $0x228] sm:$0xff] %vm5308, %v5163
        %5333 = vst.msk [vmem:[#allocation4 + $0x240] sm:$0xff] %vm5308, %v5165
        %5334 = vst.msk [vmem:[#allocation4 + $0x258] sm:$0xff] %vm5308, %v5167
        %5335 = vst.msk [vmem:[#allocation4 + $0x270] sm:$0xff] %vm5308, %v5169
        %5336 = vst.msk [vmem:[#allocation4 + $0x288] sm:$0xff] %vm5308, %v5171
        %5337 = vst.msk [vmem:[#allocation4 + $0x2a0] sm:$0xff] %vm5308, %v5173
        %5338 = vst.msk [vmem:[#allocation4 + $0x2b8] sm:$0xff] %vm5308, %v5175
        %5339 = vst.msk [vmem:[#allocation4 + $0x2d0] sm:$0xff] %vm5308, %v5177
        %5340 = vst.msk [vmem:[#allocation4 + $0x2e8] sm:$0xff] %vm5308, %v5179
        %5341 = vst.msk [vmem:[#allocation4 + $0x300] sm:$0xff] %vm5308, %v5181
        %5342 = vst.msk [vmem:[#allocation4 + $0x318] sm:$0xff] %vm5308, %v5183
        %5343 = vst.msk [vmem:[#allocation4 + $0x330] sm:$0xff] %vm5308, %v5185
        %5344 = vst.msk [vmem:[#allocation4 + $0x348] sm:$0xff] %vm5308, %v5187
        %5345 = vst.msk [vmem:[#allocation4 + $0x360] sm:$0xff] %vm5308, %v5189
        %5346 = vst.msk [vmem:[#allocation4 + $0x378] sm:$0xff] %vm5308, %v5191
        %5347 = vst.msk [vmem:[#allocation4 + $0x390] sm:$0xff] %vm5308, %v5193
        %5348 = vst.msk [vmem:[#allocation4 + $0x3a8] sm:$0xff] %vm5308, %v5195
        %5349 = vst.msk [vmem:[#allocation4 + $0x3c0] sm:$0xff] %vm5308, %v5197
        %5350 = vst.msk [vmem:[#allocation4 + $0x3d8] sm:$0xff] %vm5308, %v5199
        %5351 = vst.msk [vmem:[#allocation4 + $0x3f0] sm:$0xff] %vm5308, %v5201
        %5352 = vst.msk [vmem:[#allocation4 + $0x408] sm:$0xff] %vm5308, %v5203
        %5353 = vst.msk [vmem:[#allocation4 + $0x420] sm:$0xff] %vm5308, %v5205
        %5354 = vst.msk [vmem:[#allocation4 + $0x438] sm:$0xff] %vm5308, %v5207
        %5355 = vst.msk [vmem:[#allocation4 + $0x450] sm:$0xff] %vm5308, %v5209
        %5356 = vst.msk [vmem:[#allocation4 + $0x468] sm:$0xff] %vm5308, %v5211
        %5357 = vst.msk [vmem:[#allocation4 + $0x480] sm:$0xff] %vm5308, %v5213
        %5358 = vst.msk [vmem:[#allocation4 + $0x498] sm:$0xff] %vm5308, %v5215
        %5359 = vst.msk [vmem:[#allocation4 + $0x4b0] sm:$0xff] %vm5308, %v5217
        %5360 = vst.msk [vmem:[#allocation4 + $0x4c8] sm:$0xff] %vm5308, %v5219
        %5361 = vst.msk [vmem:[#allocation4 + $0x4e0] sm:$0xff] %vm5308, %v5221
        %5362 = vst.msk [vmem:[#allocation4 + $0x4f8] sm:$0xff] %vm5308, %v5223
        %5363 = vst.msk [vmem:[#allocation4 + $0x510] sm:$0xff] %vm5308, %v5225
        %5364 = vst.msk [vmem:[#allocation4 + $0x528] sm:$0xff] %vm5308, %v5227
        %5365 = vst.msk [vmem:[#allocation4 + $0x540] sm:$0xff] %vm5308, %v5229
        %5366 = vst.msk [vmem:[#allocation4 + $0x558] sm:$0xff] %vm5308, %v5231
        %5367 = vst.msk [vmem:[#allocation4 + $0x570] sm:$0xff] %vm5308, %v5233
        %5368 = vst.msk [vmem:[#allocation4 + $0x588] sm:$0xff] %vm5308, %v5235
        %5369 = vst.msk [vmem:[#allocation4 + $0x5a0] sm:$0xff] %vm5308, %v5237
        %5370 = vst.msk [vmem:[#allocation4 + $0x5b8] sm:$0xff] %vm5308, %v5239
        %5371 = vst.msk [vmem:[#allocation4 + $0x5d0] sm:$0xff] %vm5308, %v5241
        %5372 = vst.msk [vmem:[#allocation4 + $0x5e8] sm:$0xff] %vm5308, %v5243
        %v5373 = vld [vmem:[%s4281] sm:$0xff]
        %v5374 = vld [vmem:[%s4281 + $0x10] sm:$0xff]
        %v5375 = vld [vmem:[%s4281 + $0x20] sm:$0xff]
        %v5376 = vld [vmem:[%s4281 + $0x30] sm:$0xff]
        %v5377 = vld [vmem:[%s4281 + $0x40] sm:$0xff]
        %v5378 = vld [vmem:[%s4281 + $0x50] sm:$0xff]
        %v5379 = vld [vmem:[%s4281 + $0x60] sm:$0xff]
        %v5380 = vld [vmem:[%s4281 + $0x70] sm:$0xff]
        %v5381 = vld [vmem:[%s4281 + $0xa0] sm:$0xff]
        %v5382 = vld [vmem:[%s4281 + $0xb0] sm:$0xff]
        %v5383 = vld [vmem:[%s4281 + $0xc0] sm:$0xff]
        %v5384 = vld [vmem:[%s4281 + $0xd0] sm:$0xff]
        %v5385 = vld [vmem:[%s4281 + $0xe0] sm:$0xff]
        %v5386 = vld [vmem:[%s4281 + $0xf0] sm:$0xff]
        %v5387 = vld [vmem:[%s4281 + $0x100] sm:$0xff]
        %v5388 = vld [vmem:[%s4281 + $0x110] sm:$0xff]
        %v5389 = vld [vmem:[%s4281 + $0x140] sm:$0xff]
        %v5390 = vld [vmem:[%s4281 + $0x150] sm:$0xff]
        %v5391 = vld [vmem:[%s4281 + $0x160] sm:$0xff]
        %v5392 = vld [vmem:[%s4281 + $0x170] sm:$0xff]
        %v5393 = vld [vmem:[%s4281 + $0x180] sm:$0xff]
        %v5394 = vld [vmem:[%s4281 + $0x190] sm:$0xff]
        %v5395 = vld [vmem:[%s4281 + $0x1a0] sm:$0xff]
        %v5396 = vld [vmem:[%s4281 + $0x1b0] sm:$0xff]
        %v5397 = vld [vmem:[%s4281 + $0x1e0] sm:$0xff]
        %v5398 = vld [vmem:[%s4281 + $0x1f0] sm:$0xff]
        %v5399 = vld [vmem:[%s4281 + $0x200] sm:$0xff]
        %v5400 = vld [vmem:[%s4281 + $0x210] sm:$0xff]
        %v5401 = vld [vmem:[%s4281 + $0x220] sm:$0xff]
        %v5402 = vld [vmem:[%s4281 + $0x230] sm:$0xff]
        %v5403 = vld [vmem:[%s4281 + $0x240] sm:$0xff]
        %v5404 = vld [vmem:[%s4281 + $0x250] sm:$0xff]
        %v5405 = vld [vmem:[%s4281 + $0x280] sm:$0xff]
        %v5406 = vld [vmem:[%s4281 + $0x290] sm:$0xff]
        %v5407 = vld [vmem:[%s4281 + $0x2a0] sm:$0xff]
        %v5408 = vld [vmem:[%s4281 + $0x2b0] sm:$0xff]
        %v5409 = vld [vmem:[%s4281 + $0x2c0] sm:$0xff]
        %v5410 = vld [vmem:[%s4281 + $0x2d0] sm:$0xff]
        %v5411 = vld [vmem:[%s4281 + $0x2e0] sm:$0xff]
        %v5412 = vld [vmem:[%s4281 + $0x2f0] sm:$0xff]
        %v5413 = vld [vmem:[%s4281 + $0x320] sm:$0xff]
        %v5414 = vld [vmem:[%s4281 + $0x330] sm:$0xff]
        %v5415 = vld [vmem:[%s4281 + $0x340] sm:$0xff]
        %v5416 = vld [vmem:[%s4281 + $0x350] sm:$0xff]
        %v5417 = vld [vmem:[%s4281 + $0x360] sm:$0xff]
        %v5418 = vld [vmem:[%s4281 + $0x370] sm:$0xff]
        %v5419 = vld [vmem:[%s4281 + $0x380] sm:$0xff]
        %v5420 = vld [vmem:[%s4281 + $0x390] sm:$0xff]
        %v5421 = vld [vmem:[%s4281 + $0x3c0] sm:$0xff]
        %v5422 = vld [vmem:[%s4281 + $0x3d0] sm:$0xff]
        %v5423 = vld [vmem:[%s4281 + $0x3e0] sm:$0xff]
        %v5424 = vld [vmem:[%s4281 + $0x3f0] sm:$0xff]
        %v5425 = vld [vmem:[%s4281 + $0x400] sm:$0xff]
        %v5426 = vld [vmem:[%s4281 + $0x410] sm:$0xff]
        %v5427 = vld [vmem:[%s4281 + $0x420] sm:$0xff]
        %v5428 = vld [vmem:[%s4281 + $0x430] sm:$0xff]
        %v5429 = vld [vmem:[%s4281 + $0x460] sm:$0xff]
        %v5430 = vld [vmem:[%s4281 + $0x470] sm:$0xff]
        %v5431 = vld [vmem:[%s4281 + $0x480] sm:$0xff]
        %v5432 = vld [vmem:[%s4281 + $0x490] sm:$0xff]
        %v5433 = vld [vmem:[%s4281 + $0x4a0] sm:$0xff]
        %v5434 = vld [vmem:[%s4281 + $0x4b0] sm:$0xff]
        %v5435 = vld [vmem:[%s4281 + $0x4c0] sm:$0xff]
        %v5436 = vld [vmem:[%s4281 + $0x4d0] sm:$0xff]
        %5501 = vrot.lane.b32.xlu0 %v5373, 96
        %v5502 = vpop.permute.xlu0 %5501
        %5503 = vrot.lane.b32.xlu0 %v5374, 96
        %v5504 = vpop.permute.xlu0 %5503
        %5505 = vrot.lane.b32.xlu0 %v5375, 96
        %v5506 = vpop.permute.xlu0 %5505
        %5507 = vrot.lane.b32.xlu0 %v5376, 96
        %v5508 = vpop.permute.xlu0 %5507
        %5509 = vrot.lane.b32.xlu0 %v5377, 96
        %v5510 = vpop.permute.xlu0 %5509
        %5511 = vrot.lane.b32.xlu0 %v5378, 96
        %v5512 = vpop.permute.xlu0 %5511
        %5513 = vrot.lane.b32.xlu0 %v5379, 96
        %v5514 = vpop.permute.xlu0 %5513
        %5515 = vrot.lane.b32.xlu0 %v5380, 96
        %v5516 = vpop.permute.xlu0 %5515
        %5517 = vrot.lane.b32.xlu0 %v5381, 96
        %v5518 = vpop.permute.xlu0 %5517
        %5519 = vrot.lane.b32.xlu0 %v5382, 96
        %v5520 = vpop.permute.xlu0 %5519
        %5521 = vrot.lane.b32.xlu0 %v5383, 96
        %v5522 = vpop.permute.xlu0 %5521
        %5523 = vrot.lane.b32.xlu0 %v5384, 96
        %v5524 = vpop.permute.xlu0 %5523
        %5525 = vrot.lane.b32.xlu0 %v5385, 96
        %v5526 = vpop.permute.xlu0 %5525
        %5527 = vrot.lane.b32.xlu0 %v5386, 96
        %v5528 = vpop.permute.xlu0 %5527
        %5529 = vrot.lane.b32.xlu0 %v5387, 96
        %v5530 = vpop.permute.xlu0 %5529
        %5531 = vrot.lane.b32.xlu0 %v5388, 96
        %v5532 = vpop.permute.xlu0 %5531
        %5533 = vrot.lane.b32.xlu0 %v5389, 96
        %v5534 = vpop.permute.xlu0 %5533
        %5535 = vrot.lane.b32.xlu0 %v5390, 96
        %v5536 = vpop.permute.xlu0 %5535
        %5537 = vrot.lane.b32.xlu0 %v5391, 96
        %v5538 = vpop.permute.xlu0 %5537
        %5539 = vrot.lane.b32.xlu0 %v5392, 96
        %v5540 = vpop.permute.xlu0 %5539
        %5541 = vrot.lane.b32.xlu0 %v5393, 96
        %v5542 = vpop.permute.xlu0 %5541
        %5543 = vrot.lane.b32.xlu0 %v5394, 96
        %v5544 = vpop.permute.xlu0 %5543
        %5545 = vrot.lane.b32.xlu0 %v5395, 96
        %v5546 = vpop.permute.xlu0 %5545
        %5547 = vrot.lane.b32.xlu0 %v5396, 96
        %v5548 = vpop.permute.xlu0 %5547
        %5549 = vrot.lane.b32.xlu0 %v5397, 96
        %v5550 = vpop.permute.xlu0 %5549
        %5551 = vrot.lane.b32.xlu0 %v5398, 96
        %v5552 = vpop.permute.xlu0 %5551
        %5553 = vrot.lane.b32.xlu0 %v5399, 96
        %v5554 = vpop.permute.xlu0 %5553
        %5555 = vrot.lane.b32.xlu0 %v5400, 96
        %v5556 = vpop.permute.xlu0 %5555
        %5557 = vrot.lane.b32.xlu0 %v5401, 96
        %v5558 = vpop.permute.xlu0 %5557
        %5559 = vrot.lane.b32.xlu0 %v5402, 96
        %v5560 = vpop.permute.xlu0 %5559
        %5561 = vrot.lane.b32.xlu0 %v5403, 96
        %v5562 = vpop.permute.xlu0 %5561
        %5563 = vrot.lane.b32.xlu0 %v5404, 96
        %v5564 = vpop.permute.xlu0 %5563
        %5565 = vrot.lane.b32.xlu0 %v5405, 96
        %v5566 = vpop.permute.xlu0 %5565
        %5567 = vrot.lane.b32.xlu0 %v5406, 96
        %v5568 = vpop.permute.xlu0 %5567
        %5569 = vrot.lane.b32.xlu0 %v5407, 96
        %v5570 = vpop.permute.xlu0 %5569
        %5571 = vrot.lane.b32.xlu0 %v5408, 96
        %v5572 = vpop.permute.xlu0 %5571
        %5573 = vrot.lane.b32.xlu0 %v5409, 96
        %v5574 = vpop.permute.xlu0 %5573
        %5575 = vrot.lane.b32.xlu0 %v5410, 96
        %v5576 = vpop.permute.xlu0 %5575
        %5577 = vrot.lane.b32.xlu0 %v5411, 96
        %v5578 = vpop.permute.xlu0 %5577
        %5579 = vrot.lane.b32.xlu0 %v5412, 96
        %v5580 = vpop.permute.xlu0 %5579
        %5581 = vrot.lane.b32.xlu0 %v5413, 96
        %v5582 = vpop.permute.xlu0 %5581
        %5583 = vrot.lane.b32.xlu0 %v5414, 96
        %v5584 = vpop.permute.xlu0 %5583
        %5585 = vrot.lane.b32.xlu0 %v5415, 96
        %v5586 = vpop.permute.xlu0 %5585
        %5587 = vrot.lane.b32.xlu0 %v5416, 96
        %v5588 = vpop.permute.xlu0 %5587
        %5589 = vrot.lane.b32.xlu0 %v5417, 96
        %v5590 = vpop.permute.xlu0 %5589
        %5591 = vrot.lane.b32.xlu0 %v5418, 96
        %v5592 = vpop.permute.xlu0 %5591
        %5593 = vrot.lane.b32.xlu0 %v5419, 96
        %v5594 = vpop.permute.xlu0 %5593
        %5595 = vrot.lane.b32.xlu0 %v5420, 96
        %v5596 = vpop.permute.xlu0 %5595
        %5597 = vrot.lane.b32.xlu0 %v5421, 96
        %v5598 = vpop.permute.xlu0 %5597
        %5599 = vrot.lane.b32.xlu0 %v5422, 96
        %v5600 = vpop.permute.xlu0 %5599
        %5601 = vrot.lane.b32.xlu0 %v5423, 96
        %v5602 = vpop.permute.xlu0 %5601
        %5603 = vrot.lane.b32.xlu0 %v5424, 96
        %v5604 = vpop.permute.xlu0 %5603
        %5605 = vrot.lane.b32.xlu0 %v5425, 96
        %v5606 = vpop.permute.xlu0 %5605
        %5607 = vrot.lane.b32.xlu0 %v5426, 96
        %v5608 = vpop.permute.xlu0 %5607
        %5609 = vrot.lane.b32.xlu0 %v5427, 96
        %v5610 = vpop.permute.xlu0 %5609
        %5611 = vrot.lane.b32.xlu0 %v5428, 96
        %v5612 = vpop.permute.xlu0 %5611
        %5613 = vrot.lane.b32.xlu0 %v5429, 96
        %v5614 = vpop.permute.xlu0 %5613
        %5615 = vrot.lane.b32.xlu0 %v5430, 96
        %v5616 = vpop.permute.xlu0 %5615
        %5617 = vrot.lane.b32.xlu0 %v5431, 96
        %v5618 = vpop.permute.xlu0 %5617
        %5619 = vrot.lane.b32.xlu0 %v5432, 96
        %v5620 = vpop.permute.xlu0 %5619
        %5621 = vrot.lane.b32.xlu0 %v5433, 96
        %v5622 = vpop.permute.xlu0 %5621
        %5623 = vrot.lane.b32.xlu0 %v5434, 96
        %v5624 = vpop.permute.xlu0 %5623
        %5625 = vrot.lane.b32.xlu0 %v5435, 96
        %v5626 = vpop.permute.xlu0 %5625
        %5627 = vrot.lane.b32.xlu0 %v5436, 96
        %v5628 = vpop.permute.xlu0 %5627
        %vm5693 = vcmask 1048320
        %5694 = vst.msk [vmem:[#allocation4] sm:$0xff] %vm5693, %v5502
        %5695 = vst.msk [vmem:[#allocation4 + $0x18] sm:$0xff] %vm5693, %v5504
        %5696 = vst.msk [vmem:[#allocation4 + $0x30] sm:$0xff] %vm5693, %v5506
        %5697 = vst.msk [vmem:[#allocation4 + $0x48] sm:$0xff] %vm5693, %v5508
        %5698 = vst.msk [vmem:[#allocation4 + $0x60] sm:$0xff] %vm5693, %v5510
        %5699 = vst.msk [vmem:[#allocation4 + $0x78] sm:$0xff] %vm5693, %v5512
        %5700 = vst.msk [vmem:[#allocation4 + $0x90] sm:$0xff] %vm5693, %v5514
        %5701 = vst.msk [vmem:[#allocation4 + $0xa8] sm:$0xff] %vm5693, %v5516
        %5702 = vst.msk [vmem:[#allocation4 + $0xc0] sm:$0xff] %vm5693, %v5518
        %5703 = vst.msk [vmem:[#allocation4 + $0xd8] sm:$0xff] %vm5693, %v5520
        %5704 = vst.msk [vmem:[#allocation4 + $0xf0] sm:$0xff] %vm5693, %v5522
        %5705 = vst.msk [vmem:[#allocation4 + $0x108] sm:$0xff] %vm5693, %v5524
        %5706 = vst.msk [vmem:[#allocation4 + $0x120] sm:$0xff] %vm5693, %v5526
        %5707 = vst.msk [vmem:[#allocation4 + $0x138] sm:$0xff] %vm5693, %v5528
        %5708 = vst.msk [vmem:[#allocation4 + $0x150] sm:$0xff] %vm5693, %v5530
        %5709 = vst.msk [vmem:[#allocation4 + $0x168] sm:$0xff] %vm5693, %v5532
        %5710 = vst.msk [vmem:[#allocation4 + $0x180] sm:$0xff] %vm5693, %v5534
        %5711 = vst.msk [vmem:[#allocation4 + $0x198] sm:$0xff] %vm5693, %v5536
        %5712 = vst.msk [vmem:[#allocation4 + $0x1b0] sm:$0xff] %vm5693, %v5538
        %5713 = vst.msk [vmem:[#allocation4 + $0x1c8] sm:$0xff] %vm5693, %v5540
        %5714 = vst.msk [vmem:[#allocation4 + $0x1e0] sm:$0xff] %vm5693, %v5542
        %5715 = vst.msk [vmem:[#allocation4 + $0x1f8] sm:$0xff] %vm5693, %v5544
        %5716 = vst.msk [vmem:[#allocation4 + $0x210] sm:$0xff] %vm5693, %v5546
        %5717 = vst.msk [vmem:[#allocation4 + $0x228] sm:$0xff] %vm5693, %v5548
        %5718 = vst.msk [vmem:[#allocation4 + $0x240] sm:$0xff] %vm5693, %v5550
        %5719 = vst.msk [vmem:[#allocation4 + $0x258] sm:$0xff] %vm5693, %v5552
        %5720 = vst.msk [vmem:[#allocation4 + $0x270] sm:$0xff] %vm5693, %v5554
        %5721 = vst.msk [vmem:[#allocation4 + $0x288] sm:$0xff] %vm5693, %v5556
        %5722 = vst.msk [vmem:[#allocation4 + $0x2a0] sm:$0xff] %vm5693, %v5558
        %5723 = vst.msk [vmem:[#allocation4 + $0x2b8] sm:$0xff] %vm5693, %v5560
        %5724 = vst.msk [vmem:[#allocation4 + $0x2d0] sm:$0xff] %vm5693, %v5562
        %5725 = vst.msk [vmem:[#allocation4 + $0x2e8] sm:$0xff] %vm5693, %v5564
        %5726 = vst.msk [vmem:[#allocation4 + $0x300] sm:$0xff] %vm5693, %v5566
        %5727 = vst.msk [vmem:[#allocation4 + $0x318] sm:$0xff] %vm5693, %v5568
        %5728 = vst.msk [vmem:[#allocation4 + $0x330] sm:$0xff] %vm5693, %v5570
        %5729 = vst.msk [vmem:[#allocation4 + $0x348] sm:$0xff] %vm5693, %v5572
        %5730 = vst.msk [vmem:[#allocation4 + $0x360] sm:$0xff] %vm5693, %v5574
        %5731 = vst.msk [vmem:[#allocation4 + $0x378] sm:$0xff] %vm5693, %v5576
        %5732 = vst.msk [vmem:[#allocation4 + $0x390] sm:$0xff] %vm5693, %v5578
        %5733 = vst.msk [vmem:[#allocation4 + $0x3a8] sm:$0xff] %vm5693, %v5580
        %5734 = vst.msk [vmem:[#allocation4 + $0x3c0] sm:$0xff] %vm5693, %v5582
        %5735 = vst.msk [vmem:[#allocation4 + $0x3d8] sm:$0xff] %vm5693, %v5584
        %5736 = vst.msk [vmem:[#allocation4 + $0x3f0] sm:$0xff] %vm5693, %v5586
        %5737 = vst.msk [vmem:[#allocation4 + $0x408] sm:$0xff] %vm5693, %v5588
        %5738 = vst.msk [vmem:[#allocation4 + $0x420] sm:$0xff] %vm5693, %v5590
        %5739 = vst.msk [vmem:[#allocation4 + $0x438] sm:$0xff] %vm5693, %v5592
        %5740 = vst.msk [vmem:[#allocation4 + $0x450] sm:$0xff] %vm5693, %v5594
        %5741 = vst.msk [vmem:[#allocation4 + $0x468] sm:$0xff] %vm5693, %v5596
        %5742 = vst.msk [vmem:[#allocation4 + $0x480] sm:$0xff] %vm5693, %v5598
        %5743 = vst.msk [vmem:[#allocation4 + $0x498] sm:$0xff] %vm5693, %v5600
        %5744 = vst.msk [vmem:[#allocation4 + $0x4b0] sm:$0xff] %vm5693, %v5602
        %5745 = vst.msk [vmem:[#allocation4 + $0x4c8] sm:$0xff] %vm5693, %v5604
        %5746 = vst.msk [vmem:[#allocation4 + $0x4e0] sm:$0xff] %vm5693, %v5606
        %5747 = vst.msk [vmem:[#allocation4 + $0x4f8] sm:$0xff] %vm5693, %v5608
        %5748 = vst.msk [vmem:[#allocation4 + $0x510] sm:$0xff] %vm5693, %v5610
        %5749 = vst.msk [vmem:[#allocation4 + $0x528] sm:$0xff] %vm5693, %v5612
        %5750 = vst.msk [vmem:[#allocation4 + $0x540] sm:$0xff] %vm5693, %v5614
        %5751 = vst.msk [vmem:[#allocation4 + $0x558] sm:$0xff] %vm5693, %v5616
        %5752 = vst.msk [vmem:[#allocation4 + $0x570] sm:$0xff] %vm5693, %v5618
        %5753 = vst.msk [vmem:[#allocation4 + $0x588] sm:$0xff] %vm5693, %v5620
        %5754 = vst.msk [vmem:[#allocation4 + $0x5a0] sm:$0xff] %vm5693, %v5622
        %5755 = vst.msk [vmem:[#allocation4 + $0x5b8] sm:$0xff] %vm5693, %v5624
        %5756 = vst.msk [vmem:[#allocation4 + $0x5d0] sm:$0xff] %vm5693, %v5626
        %5757 = vst.msk [vmem:[#allocation4 + $0x5e8] sm:$0xff] %vm5693, %v5628
        %v5758 = vld [vmem:[%s4281 + $0x1] sm:$0xff]
        %v5759 = vld [vmem:[%s4281 + $0x11] sm:$0xff]
        %v5760 = vld [vmem:[%s4281 + $0x21] sm:$0xff]
        %v5761 = vld [vmem:[%s4281 + $0x31] sm:$0xff]
        %v5762 = vld [vmem:[%s4281 + $0x41] sm:$0xff]
        %v5763 = vld [vmem:[%s4281 + $0x51] sm:$0xff]
        %v5764 = vld [vmem:[%s4281 + $0x61] sm:$0xff]
        %v5765 = vld [vmem:[%s4281 + $0x71] sm:$0xff]
        %v5766 = vld [vmem:[%s4281 + $0xa1] sm:$0xff]
        %v5767 = vld [vmem:[%s4281 + $0xb1] sm:$0xff]
        %v5768 = vld [vmem:[%s4281 + $0xc1] sm:$0xff]
        %v5769 = vld [vmem:[%s4281 + $0xd1] sm:$0xff]
        %v5770 = vld [vmem:[%s4281 + $0xe1] sm:$0xff]
        %v5771 = vld [vmem:[%s4281 + $0xf1] sm:$0xff]
        %v5772 = vld [vmem:[%s4281 + $0x101] sm:$0xff]
        %v5773 = vld [vmem:[%s4281 + $0x111] sm:$0xff]
        %v5774 = vld [vmem:[%s4281 + $0x141] sm:$0xff]
        %v5775 = vld [vmem:[%s4281 + $0x151] sm:$0xff]
        %v5776 = vld [vmem:[%s4281 + $0x161] sm:$0xff]
        %v5777 = vld [vmem:[%s4281 + $0x171] sm:$0xff]
        %v5778 = vld [vmem:[%s4281 + $0x181] sm:$0xff]
        %v5779 = vld [vmem:[%s4281 + $0x191] sm:$0xff]
        %v5780 = vld [vmem:[%s4281 + $0x1a1] sm:$0xff]
        %v5781 = vld [vmem:[%s4281 + $0x1b1] sm:$0xff]
        %v5782 = vld [vmem:[%s4281 + $0x1e1] sm:$0xff]
        %v5783 = vld [vmem:[%s4281 + $0x1f1] sm:$0xff]
        %v5784 = vld [vmem:[%s4281 + $0x201] sm:$0xff]
        %v5785 = vld [vmem:[%s4281 + $0x211] sm:$0xff]
        %v5786 = vld [vmem:[%s4281 + $0x221] sm:$0xff]
        %v5787 = vld [vmem:[%s4281 + $0x231] sm:$0xff]
        %v5788 = vld [vmem:[%s4281 + $0x241] sm:$0xff]
        %v5789 = vld [vmem:[%s4281 + $0x251] sm:$0xff]
        %v5790 = vld [vmem:[%s4281 + $0x281] sm:$0xff]
        %v5791 = vld [vmem:[%s4281 + $0x291] sm:$0xff]
        %v5792 = vld [vmem:[%s4281 + $0x2a1] sm:$0xff]
        %v5793 = vld [vmem:[%s4281 + $0x2b1] sm:$0xff]
        %v5794 = vld [vmem:[%s4281 + $0x2c1] sm:$0xff]
        %v5795 = vld [vmem:[%s4281 + $0x2d1] sm:$0xff]
        %v5796 = vld [vmem:[%s4281 + $0x2e1] sm:$0xff]
        %v5797 = vld [vmem:[%s4281 + $0x2f1] sm:$0xff]
        %v5798 = vld [vmem:[%s4281 + $0x321] sm:$0xff]
        %v5799 = vld [vmem:[%s4281 + $0x331] sm:$0xff]
        %v5800 = vld [vmem:[%s4281 + $0x341] sm:$0xff]
        %v5801 = vld [vmem:[%s4281 + $0x351] sm:$0xff]
        %v5802 = vld [vmem:[%s4281 + $0x361] sm:$0xff]
        %v5803 = vld [vmem:[%s4281 + $0x371] sm:$0xff]
        %v5804 = vld [vmem:[%s4281 + $0x381] sm:$0xff]
        %v5805 = vld [vmem:[%s4281 + $0x391] sm:$0xff]
        %v5806 = vld [vmem:[%s4281 + $0x3c1] sm:$0xff]
        %v5807 = vld [vmem:[%s4281 + $0x3d1] sm:$0xff]
        %v5808 = vld [vmem:[%s4281 + $0x3e1] sm:$0xff]
        %v5809 = vld [vmem:[%s4281 + $0x3f1] sm:$0xff]
        %v5810 = vld [vmem:[%s4281 + $0x401] sm:$0xff]
        %v5811 = vld [vmem:[%s4281 + $0x411] sm:$0xff]
        %v5812 = vld [vmem:[%s4281 + $0x421] sm:$0xff]
        %v5813 = vld [vmem:[%s4281 + $0x431] sm:$0xff]
        %v5814 = vld [vmem:[%s4281 + $0x461] sm:$0xff]
        %v5815 = vld [vmem:[%s4281 + $0x471] sm:$0xff]
        %v5816 = vld [vmem:[%s4281 + $0x481] sm:$0xff]
        %v5817 = vld [vmem:[%s4281 + $0x491] sm:$0xff]
        %v5818 = vld [vmem:[%s4281 + $0x4a1] sm:$0xff]
        %v5819 = vld [vmem:[%s4281 + $0x4b1] sm:$0xff]
        %v5820 = vld [vmem:[%s4281 + $0x4c1] sm:$0xff]
        %v5821 = vld [vmem:[%s4281 + $0x4d1] sm:$0xff]
        %5822 = vst.msk [vmem:[#allocation4 + $0x8] sm:$0xff] %vm3287, %v5758
        %5823 = vst.msk [vmem:[#allocation4 + $0x20] sm:$0xff] %vm3287, %v5759
        %5824 = vst.msk [vmem:[#allocation4 + $0x38] sm:$0xff] %vm3287, %v5760
        %5825 = vst.msk [vmem:[#allocation4 + $0x50] sm:$0xff] %vm3287, %v5761
        %5826 = vst.msk [vmem:[#allocation4 + $0x68] sm:$0xff] %vm3287, %v5762
        %5827 = vst.msk [vmem:[#allocation4 + $0x80] sm:$0xff] %vm3287, %v5763
        %5828 = vst.msk [vmem:[#allocation4 + $0x98] sm:$0xff] %vm3287, %v5764
        %5829 = vst.msk [vmem:[#allocation4 + $0xb0] sm:$0xff] %vm3287, %v5765
        %5830 = vst.msk [vmem:[#allocation4 + $0xc8] sm:$0xff] %vm3287, %v5766
        %5831 = vst.msk [vmem:[#allocation4 + $0xe0] sm:$0xff] %vm3287, %v5767
        %5832 = vst.msk [vmem:[#allocation4 + $0xf8] sm:$0xff] %vm3287, %v5768
        %5833 = vst.msk [vmem:[#allocation4 + $0x110] sm:$0xff] %vm3287, %v5769
        %5834 = vst.msk [vmem:[#allocation4 + $0x128] sm:$0xff] %vm3287, %v5770
        %5835 = vst.msk [vmem:[#allocation4 + $0x140] sm:$0xff] %vm3287, %v5771
        %5836 = vst.msk [vmem:[#allocation4 + $0x158] sm:$0xff] %vm3287, %v5772
        %5837 = vst.msk [vmem:[#allocation4 + $0x170] sm:$0xff] %vm3287, %v5773
        %5838 = vst.msk [vmem:[#allocation4 + $0x188] sm:$0xff] %vm3287, %v5774
        %5839 = vst.msk [vmem:[#allocation4 + $0x1a0] sm:$0xff] %vm3287, %v5775
        %5840 = vst.msk [vmem:[#allocation4 + $0x1b8] sm:$0xff] %vm3287, %v5776
        %5841 = vst.msk [vmem:[#allocation4 + $0x1d0] sm:$0xff] %vm3287, %v5777
        %5842 = vst.msk [vmem:[#allocation4 + $0x1e8] sm:$0xff] %vm3287, %v5778
        %5843 = vst.msk [vmem:[#allocation4 + $0x200] sm:$0xff] %vm3287, %v5779
        %5844 = vst.msk [vmem:[#allocation4 + $0x218] sm:$0xff] %vm3287, %v5780
        %5845 = vst.msk [vmem:[#allocation4 + $0x230] sm:$0xff] %vm3287, %v5781
        %5846 = vst.msk [vmem:[#allocation4 + $0x248] sm:$0xff] %vm3287, %v5782
        %5847 = vst.msk [vmem:[#allocation4 + $0x260] sm:$0xff] %vm3287, %v5783
        %5848 = vst.msk [vmem:[#allocation4 + $0x278] sm:$0xff] %vm3287, %v5784
        %5849 = vst.msk [vmem:[#allocation4 + $0x290] sm:$0xff] %vm3287, %v5785
        %5850 = vst.msk [vmem:[#allocation4 + $0x2a8] sm:$0xff] %vm3287, %v5786
        %5851 = vst.msk [vmem:[#allocation4 + $0x2c0] sm:$0xff] %vm3287, %v5787
        %5852 = vst.msk [vmem:[#allocation4 + $0x2d8] sm:$0xff] %vm3287, %v5788
        %5853 = vst.msk [vmem:[#allocation4 + $0x2f0] sm:$0xff] %vm3287, %v5789
        %5854 = vst.msk [vmem:[#allocation4 + $0x308] sm:$0xff] %vm3287, %v5790
        %5855 = vst.msk [vmem:[#allocation4 + $0x320] sm:$0xff] %vm3287, %v5791
        %5856 = vst.msk [vmem:[#allocation4 + $0x338] sm:$0xff] %vm3287, %v5792
        %5857 = vst.msk [vmem:[#allocation4 + $0x350] sm:$0xff] %vm3287, %v5793
        %5858 = vst.msk [vmem:[#allocation4 + $0x368] sm:$0xff] %vm3287, %v5794
        %5859 = vst.msk [vmem:[#allocation4 + $0x380] sm:$0xff] %vm3287, %v5795
        %5860 = vst.msk [vmem:[#allocation4 + $0x398] sm:$0xff] %vm3287, %v5796
        %5861 = vst.msk [vmem:[#allocation4 + $0x3b0] sm:$0xff] %vm3287, %v5797
        %5862 = vst.msk [vmem:[#allocation4 + $0x3c8] sm:$0xff] %vm3287, %v5798
        %5863 = vst.msk [vmem:[#allocation4 + $0x3e0] sm:$0xff] %vm3287, %v5799
        %5864 = vst.msk [vmem:[#allocation4 + $0x3f8] sm:$0xff] %vm3287, %v5800
        %5865 = vst.msk [vmem:[#allocation4 + $0x410] sm:$0xff] %vm3287, %v5801
        %5866 = vst.msk [vmem:[#allocation4 + $0x428] sm:$0xff] %vm3287, %v5802
        %5867 = vst.msk [vmem:[#allocation4 + $0x440] sm:$0xff] %vm3287, %v5803
        %5868 = vst.msk [vmem:[#allocation4 + $0x458] sm:$0xff] %vm3287, %v5804
        %5869 = vst.msk [vmem:[#allocation4 + $0x470] sm:$0xff] %vm3287, %v5805
        %5870 = vst.msk [vmem:[#allocation4 + $0x488] sm:$0xff] %vm3287, %v5806
        %5871 = vst.msk [vmem:[#allocation4 + $0x4a0] sm:$0xff] %vm3287, %v5807
        %5872 = vst.msk [vmem:[#allocation4 + $0x4b8] sm:$0xff] %vm3287, %v5808
        %5873 = vst.msk [vmem:[#allocation4 + $0x4d0] sm:$0xff] %vm3287, %v5809
        %5874 = vst.msk [vmem:[#allocation4 + $0x4e8] sm:$0xff] %vm3287, %v5810
        %5875 = vst.msk [vmem:[#allocation4 + $0x500] sm:$0xff] %vm3287, %v5811
        %5876 = vst.msk [vmem:[#allocation4 + $0x518] sm:$0xff] %vm3287, %v5812
        %5877 = vst.msk [vmem:[#allocation4 + $0x530] sm:$0xff] %vm3287, %v5813
        %5878 = vst.msk [vmem:[#allocation4 + $0x548] sm:$0xff] %vm3287, %v5814
        %5879 = vst.msk [vmem:[#allocation4 + $0x560] sm:$0xff] %vm3287, %v5815
        %5880 = vst.msk [vmem:[#allocation4 + $0x578] sm:$0xff] %vm3287, %v5816
        %5881 = vst.msk [vmem:[#allocation4 + $0x590] sm:$0xff] %vm3287, %v5817
        %5882 = vst.msk [vmem:[#allocation4 + $0x5a8] sm:$0xff] %vm3287, %v5818
        %5883 = vst.msk [vmem:[#allocation4 + $0x5c0] sm:$0xff] %vm3287, %v5819
        %5884 = vst.msk [vmem:[#allocation4 + $0x5d8] sm:$0xff] %vm3287, %v5820
        %5885 = vst.msk [vmem:[#allocation4 + $0x5f0] sm:$0xff] %vm3287, %v5821
        %v5886 = vld [vmem:[%s4281 + $0x2] sm:$0xff]
        %v5887 = vld [vmem:[%s4281 + $0x12] sm:$0xff]
        %v5888 = vld [vmem:[%s4281 + $0x22] sm:$0xff]
        %v5889 = vld [vmem:[%s4281 + $0x32] sm:$0xff]
        %v5890 = vld [vmem:[%s4281 + $0x42] sm:$0xff]
        %v5891 = vld [vmem:[%s4281 + $0x52] sm:$0xff]
        %v5892 = vld [vmem:[%s4281 + $0x62] sm:$0xff]
        %v5893 = vld [vmem:[%s4281 + $0x72] sm:$0xff]
        %v5894 = vld [vmem:[%s4281 + $0xa2] sm:$0xff]
        %v5895 = vld [vmem:[%s4281 + $0xb2] sm:$0xff]
        %v5896 = vld [vmem:[%s4281 + $0xc2] sm:$0xff]
        %v5897 = vld [vmem:[%s4281 + $0xd2] sm:$0xff]
        %v5898 = vld [vmem:[%s4281 + $0xe2] sm:$0xff]
        %v5899 = vld [vmem:[%s4281 + $0xf2] sm:$0xff]
        %v5900 = vld [vmem:[%s4281 + $0x102] sm:$0xff]
        %v5901 = vld [vmem:[%s4281 + $0x112] sm:$0xff]
        %v5902 = vld [vmem:[%s4281 + $0x142] sm:$0xff]
        %v5903 = vld [vmem:[%s4281 + $0x152] sm:$0xff]
        %v5904 = vld [vmem:[%s4281 + $0x162] sm:$0xff]
        %v5905 = vld [vmem:[%s4281 + $0x172] sm:$0xff]
        %v5906 = vld [vmem:[%s4281 + $0x182] sm:$0xff]
        %v5907 = vld [vmem:[%s4281 + $0x192] sm:$0xff]
        %v5908 = vld [vmem:[%s4281 + $0x1a2] sm:$0xff]
        %v5909 = vld [vmem:[%s4281 + $0x1b2] sm:$0xff]
        %v5910 = vld [vmem:[%s4281 + $0x1e2] sm:$0xff]
        %v5911 = vld [vmem:[%s4281 + $0x1f2] sm:$0xff]
        %v5912 = vld [vmem:[%s4281 + $0x202] sm:$0xff]
        %v5913 = vld [vmem:[%s4281 + $0x212] sm:$0xff]
        %v5914 = vld [vmem:[%s4281 + $0x222] sm:$0xff]
        %v5915 = vld [vmem:[%s4281 + $0x232] sm:$0xff]
        %v5916 = vld [vmem:[%s4281 + $0x242] sm:$0xff]
        %v5917 = vld [vmem:[%s4281 + $0x252] sm:$0xff]
        %v5918 = vld [vmem:[%s4281 + $0x282] sm:$0xff]
        %v5919 = vld [vmem:[%s4281 + $0x292] sm:$0xff]
        %v5920 = vld [vmem:[%s4281 + $0x2a2] sm:$0xff]
        %v5921 = vld [vmem:[%s4281 + $0x2b2] sm:$0xff]
        %v5922 = vld [vmem:[%s4281 + $0x2c2] sm:$0xff]
        %v5923 = vld [vmem:[%s4281 + $0x2d2] sm:$0xff]
        %v5924 = vld [vmem:[%s4281 + $0x2e2] sm:$0xff]
        %v5925 = vld [vmem:[%s4281 + $0x2f2] sm:$0xff]
        %v5926 = vld [vmem:[%s4281 + $0x322] sm:$0xff]
        %v5927 = vld [vmem:[%s4281 + $0x332] sm:$0xff]
        %v5928 = vld [vmem:[%s4281 + $0x342] sm:$0xff]
        %v5929 = vld [vmem:[%s4281 + $0x352] sm:$0xff]
        %v5930 = vld [vmem:[%s4281 + $0x362] sm:$0xff]
        %v5931 = vld [vmem:[%s4281 + $0x372] sm:$0xff]
        %v5932 = vld [vmem:[%s4281 + $0x382] sm:$0xff]
        %v5933 = vld [vmem:[%s4281 + $0x392] sm:$0xff]
        %v5934 = vld [vmem:[%s4281 + $0x3c2] sm:$0xff]
        %v5935 = vld [vmem:[%s4281 + $0x3d2] sm:$0xff]
        %v5936 = vld [vmem:[%s4281 + $0x3e2] sm:$0xff]
        %v5937 = vld [vmem:[%s4281 + $0x3f2] sm:$0xff]
        %v5938 = vld [vmem:[%s4281 + $0x402] sm:$0xff]
        %v5939 = vld [vmem:[%s4281 + $0x412] sm:$0xff]
        %v5940 = vld [vmem:[%s4281 + $0x422] sm:$0xff]
        %v5941 = vld [vmem:[%s4281 + $0x432] sm:$0xff]
        %v5942 = vld [vmem:[%s4281 + $0x462] sm:$0xff]
        %v5943 = vld [vmem:[%s4281 + $0x472] sm:$0xff]
        %v5944 = vld [vmem:[%s4281 + $0x482] sm:$0xff]
        %v5945 = vld [vmem:[%s4281 + $0x492] sm:$0xff]
        %v5946 = vld [vmem:[%s4281 + $0x4a2] sm:$0xff]
        %v5947 = vld [vmem:[%s4281 + $0x4b2] sm:$0xff]
        %v5948 = vld [vmem:[%s4281 + $0x4c2] sm:$0xff]
        %v5949 = vld [vmem:[%s4281 + $0x4d2] sm:$0xff]
        %6014 = vrot.lane.b32.xlu0 %v5886, 32
        %v6015 = vpop.permute.xlu0 %6014
        %6016 = vrot.lane.b32.xlu0 %v5887, 32
        %v6017 = vpop.permute.xlu0 %6016
        %6018 = vrot.lane.b32.xlu0 %v5888, 32
        %v6019 = vpop.permute.xlu0 %6018
        %6020 = vrot.lane.b32.xlu0 %v5889, 32
        %v6021 = vpop.permute.xlu0 %6020
        %6022 = vrot.lane.b32.xlu0 %v5890, 32
        %v6023 = vpop.permute.xlu0 %6022
        %6024 = vrot.lane.b32.xlu0 %v5891, 32
        %v6025 = vpop.permute.xlu0 %6024
        %6026 = vrot.lane.b32.xlu0 %v5892, 32
        %v6027 = vpop.permute.xlu0 %6026
        %6028 = vrot.lane.b32.xlu0 %v5893, 32
        %v6029 = vpop.permute.xlu0 %6028
        %6030 = vrot.lane.b32.xlu0 %v5894, 32
        %v6031 = vpop.permute.xlu0 %6030
        %6032 = vrot.lane.b32.xlu0 %v5895, 32
        %v6033 = vpop.permute.xlu0 %6032
        %6034 = vrot.lane.b32.xlu0 %v5896, 32
        %v6035 = vpop.permute.xlu0 %6034
        %6036 = vrot.lane.b32.xlu0 %v5897, 32
        %v6037 = vpop.permute.xlu0 %6036
        %6038 = vrot.lane.b32.xlu0 %v5898, 32
        %v6039 = vpop.permute.xlu0 %6038
        %6040 = vrot.lane.b32.xlu0 %v5899, 32
        %v6041 = vpop.permute.xlu0 %6040
        %6042 = vrot.lane.b32.xlu0 %v5900, 32
        %v6043 = vpop.permute.xlu0 %6042
        %6044 = vrot.lane.b32.xlu0 %v5901, 32
        %v6045 = vpop.permute.xlu0 %6044
        %6046 = vrot.lane.b32.xlu0 %v5902, 32
        %v6047 = vpop.permute.xlu0 %6046
        %6048 = vrot.lane.b32.xlu0 %v5903, 32
        %v6049 = vpop.permute.xlu0 %6048
        %6050 = vrot.lane.b32.xlu0 %v5904, 32
        %v6051 = vpop.permute.xlu0 %6050
        %6052 = vrot.lane.b32.xlu0 %v5905, 32
        %v6053 = vpop.permute.xlu0 %6052
        %6054 = vrot.lane.b32.xlu0 %v5906, 32
        %v6055 = vpop.permute.xlu0 %6054
        %6056 = vrot.lane.b32.xlu0 %v5907, 32
        %v6057 = vpop.permute.xlu0 %6056
        %6058 = vrot.lane.b32.xlu0 %v5908, 32
        %v6059 = vpop.permute.xlu0 %6058
        %6060 = vrot.lane.b32.xlu0 %v5909, 32
        %v6061 = vpop.permute.xlu0 %6060
        %6062 = vrot.lane.b32.xlu0 %v5910, 32
        %v6063 = vpop.permute.xlu0 %6062
        %6064 = vrot.lane.b32.xlu0 %v5911, 32
        %v6065 = vpop.permute.xlu0 %6064
        %6066 = vrot.lane.b32.xlu0 %v5912, 32
        %v6067 = vpop.permute.xlu0 %6066
        %6068 = vrot.lane.b32.xlu0 %v5913, 32
        %v6069 = vpop.permute.xlu0 %6068
        %6070 = vrot.lane.b32.xlu0 %v5914, 32
        %v6071 = vpop.permute.xlu0 %6070
        %6072 = vrot.lane.b32.xlu0 %v5915, 32
        %v6073 = vpop.permute.xlu0 %6072
        %6074 = vrot.lane.b32.xlu0 %v5916, 32
        %v6075 = vpop.permute.xlu0 %6074
        %6076 = vrot.lane.b32.xlu0 %v5917, 32
        %v6077 = vpop.permute.xlu0 %6076
        %6078 = vrot.lane.b32.xlu0 %v5918, 32
        %v6079 = vpop.permute.xlu0 %6078
        %6080 = vrot.lane.b32.xlu0 %v5919, 32
        %v6081 = vpop.permute.xlu0 %6080
        %6082 = vrot.lane.b32.xlu0 %v5920, 32
        %v6083 = vpop.permute.xlu0 %6082
        %6084 = vrot.lane.b32.xlu0 %v5921, 32
        %v6085 = vpop.permute.xlu0 %6084
        %6086 = vrot.lane.b32.xlu0 %v5922, 32
        %v6087 = vpop.permute.xlu0 %6086
        %6088 = vrot.lane.b32.xlu0 %v5923, 32
        %v6089 = vpop.permute.xlu0 %6088
        %6090 = vrot.lane.b32.xlu0 %v5924, 32
        %v6091 = vpop.permute.xlu0 %6090
        %6092 = vrot.lane.b32.xlu0 %v5925, 32
        %v6093 = vpop.permute.xlu0 %6092
        %6094 = vrot.lane.b32.xlu0 %v5926, 32
        %v6095 = vpop.permute.xlu0 %6094
        %6096 = vrot.lane.b32.xlu0 %v5927, 32
        %v6097 = vpop.permute.xlu0 %6096
        %6098 = vrot.lane.b32.xlu0 %v5928, 32
        %v6099 = vpop.permute.xlu0 %6098
        %6100 = vrot.lane.b32.xlu0 %v5929, 32
        %v6101 = vpop.permute.xlu0 %6100
        %6102 = vrot.lane.b32.xlu0 %v5930, 32
        %v6103 = vpop.permute.xlu0 %6102
        %6104 = vrot.lane.b32.xlu0 %v5931, 32
        %v6105 = vpop.permute.xlu0 %6104
        %6106 = vrot.lane.b32.xlu0 %v5932, 32
        %v6107 = vpop.permute.xlu0 %6106
        %6108 = vrot.lane.b32.xlu0 %v5933, 32
        %v6109 = vpop.permute.xlu0 %6108
        %6110 = vrot.lane.b32.xlu0 %v5934, 32
        %v6111 = vpop.permute.xlu0 %6110
        %6112 = vrot.lane.b32.xlu0 %v5935, 32
        %v6113 = vpop.permute.xlu0 %6112
        %6114 = vrot.lane.b32.xlu0 %v5936, 32
        %v6115 = vpop.permute.xlu0 %6114
        %6116 = vrot.lane.b32.xlu0 %v5937, 32
        %v6117 = vpop.permute.xlu0 %6116
        %6118 = vrot.lane.b32.xlu0 %v5938, 32
        %v6119 = vpop.permute.xlu0 %6118
        %6120 = vrot.lane.b32.xlu0 %v5939, 32
        %v6121 = vpop.permute.xlu0 %6120
        %6122 = vrot.lane.b32.xlu0 %v5940, 32
        %v6123 = vpop.permute.xlu0 %6122
        %6124 = vrot.lane.b32.xlu0 %v5941, 32
        %v6125 = vpop.permute.xlu0 %6124
        %6126 = vrot.lane.b32.xlu0 %v5942, 32
        %v6127 = vpop.permute.xlu0 %6126
        %6128 = vrot.lane.b32.xlu0 %v5943, 32
        %v6129 = vpop.permute.xlu0 %6128
        %6130 = vrot.lane.b32.xlu0 %v5944, 32
        %v6131 = vpop.permute.xlu0 %6130
        %6132 = vrot.lane.b32.xlu0 %v5945, 32
        %v6133 = vpop.permute.xlu0 %6132
        %6134 = vrot.lane.b32.xlu0 %v5946, 32
        %v6135 = vpop.permute.xlu0 %6134
        %6136 = vrot.lane.b32.xlu0 %v5947, 32
        %v6137 = vpop.permute.xlu0 %6136
        %6138 = vrot.lane.b32.xlu0 %v5948, 32
        %v6139 = vpop.permute.xlu0 %6138
        %6140 = vrot.lane.b32.xlu0 %v5949, 32
        %v6141 = vpop.permute.xlu0 %6140
        %6206 = vst.msk [vmem:[#allocation4 + $0x8] sm:$0xff] %vm4923, %v6015
        %6207 = vst.msk [vmem:[#allocation4 + $0x20] sm:$0xff] %vm4923, %v6017
        %6208 = vst.msk [vmem:[#allocation4 + $0x38] sm:$0xff] %vm4923, %v6019
        %6209 = vst.msk [vmem:[#allocation4 + $0x50] sm:$0xff] %vm4923, %v6021
        %6210 = vst.msk [vmem:[#allocation4 + $0x68] sm:$0xff] %vm4923, %v6023
        %6211 = vst.msk [vmem:[#allocation4 + $0x80] sm:$0xff] %vm4923, %v6025
        %6212 = vst.msk [vmem:[#allocation4 + $0x98] sm:$0xff] %vm4923, %v6027
        %6213 = vst.msk [vmem:[#allocation4 + $0xb0] sm:$0xff] %vm4923, %v6029
        %6214 = vst.msk [vmem:[#allocation4 + $0xc8] sm:$0xff] %vm4923, %v6031
        %6215 = vst.msk [vmem:[#allocation4 + $0xe0] sm:$0xff] %vm4923, %v6033
        %6216 = vst.msk [vmem:[#allocation4 + $0xf8] sm:$0xff] %vm4923, %v6035
        %6217 = vst.msk [vmem:[#allocation4 + $0x110] sm:$0xff] %vm4923, %v6037
        %6218 = vst.msk [vmem:[#allocation4 + $0x128] sm:$0xff] %vm4923, %v6039
        %6219 = vst.msk [vmem:[#allocation4 + $0x140] sm:$0xff] %vm4923, %v6041
        %6220 = vst.msk [vmem:[#allocation4 + $0x158] sm:$0xff] %vm4923, %v6043
        %6221 = vst.msk [vmem:[#allocation4 + $0x170] sm:$0xff] %vm4923, %v6045
        %6222 = vst.msk [vmem:[#allocation4 + $0x188] sm:$0xff] %vm4923, %v6047
        %6223 = vst.msk [vmem:[#allocation4 + $0x1a0] sm:$0xff] %vm4923, %v6049
        %6224 = vst.msk [vmem:[#allocation4 + $0x1b8] sm:$0xff] %vm4923, %v6051
        %6225 = vst.msk [vmem:[#allocation4 + $0x1d0] sm:$0xff] %vm4923, %v6053
        %6226 = vst.msk [vmem:[#allocation4 + $0x1e8] sm:$0xff] %vm4923, %v6055
        %6227 = vst.msk [vmem:[#allocation4 + $0x200] sm:$0xff] %vm4923, %v6057
        %6228 = vst.msk [vmem:[#allocation4 + $0x218] sm:$0xff] %vm4923, %v6059
        %6229 = vst.msk [vmem:[#allocation4 + $0x230] sm:$0xff] %vm4923, %v6061
        %6230 = vst.msk [vmem:[#allocation4 + $0x248] sm:$0xff] %vm4923, %v6063
        %6231 = vst.msk [vmem:[#allocation4 + $0x260] sm:$0xff] %vm4923, %v6065
        %6232 = vst.msk [vmem:[#allocation4 + $0x278] sm:$0xff] %vm4923, %v6067
        %6233 = vst.msk [vmem:[#allocation4 + $0x290] sm:$0xff] %vm4923, %v6069
        %6234 = vst.msk [vmem:[#allocation4 + $0x2a8] sm:$0xff] %vm4923, %v6071
        %6235 = vst.msk [vmem:[#allocation4 + $0x2c0] sm:$0xff] %vm4923, %v6073
        %6236 = vst.msk [vmem:[#allocation4 + $0x2d8] sm:$0xff] %vm4923, %v6075
        %6237 = vst.msk [vmem:[#allocation4 + $0x2f0] sm:$0xff] %vm4923, %v6077
        %6238 = vst.msk [vmem:[#allocation4 + $0x308] sm:$0xff] %vm4923, %v6079
        %6239 = vst.msk [vmem:[#allocation4 + $0x320] sm:$0xff] %vm4923, %v6081
        %6240 = vst.msk [vmem:[#allocation4 + $0x338] sm:$0xff] %vm4923, %v6083
        %6241 = vst.msk [vmem:[#allocation4 + $0x350] sm:$0xff] %vm4923, %v6085
        %6242 = vst.msk [vmem:[#allocation4 + $0x368] sm:$0xff] %vm4923, %v6087
        %6243 = vst.msk [vmem:[#allocation4 + $0x380] sm:$0xff] %vm4923, %v6089
        %6244 = vst.msk [vmem:[#allocation4 + $0x398] sm:$0xff] %vm4923, %v6091
        %6245 = vst.msk [vmem:[#allocation4 + $0x3b0] sm:$0xff] %vm4923, %v6093
        %6246 = vst.msk [vmem:[#allocation4 + $0x3c8] sm:$0xff] %vm4923, %v6095
        %6247 = vst.msk [vmem:[#allocation4 + $0x3e0] sm:$0xff] %vm4923, %v6097
        %6248 = vst.msk [vmem:[#allocation4 + $0x3f8] sm:$0xff] %vm4923, %v6099
        %6249 = vst.msk [vmem:[#allocation4 + $0x410] sm:$0xff] %vm4923, %v6101
        %6250 = vst.msk [vmem:[#allocation4 + $0x428] sm:$0xff] %vm4923, %v6103
        %6251 = vst.msk [vmem:[#allocation4 + $0x440] sm:$0xff] %vm4923, %v6105
        %6252 = vst.msk [vmem:[#allocation4 + $0x458] sm:$0xff] %vm4923, %v6107
        %6253 = vst.msk [vmem:[#allocation4 + $0x470] sm:$0xff] %vm4923, %v6109
        %6254 = vst.msk [vmem:[#allocation4 + $0x488] sm:$0xff] %vm4923, %v6111
        %6255 = vst.msk [vmem:[#allocation4 + $0x4a0] sm:$0xff] %vm4923, %v6113
        %6256 = vst.msk [vmem:[#allocation4 + $0x4b8] sm:$0xff] %vm4923, %v6115
        %6257 = vst.msk [vmem:[#allocation4 + $0x4d0] sm:$0xff] %vm4923, %v6117
        %6258 = vst.msk [vmem:[#allocation4 + $0x4e8] sm:$0xff] %vm4923, %v6119
        %6259 = vst.msk [vmem:[#allocation4 + $0x500] sm:$0xff] %vm4923, %v6121
        %6260 = vst.msk [vmem:[#allocation4 + $0x518] sm:$0xff] %vm4923, %v6123
        %6261 = vst.msk [vmem:[#allocation4 + $0x530] sm:$0xff] %vm4923, %v6125
        %6262 = vst.msk [vmem:[#allocation4 + $0x548] sm:$0xff] %vm4923, %v6127
        %6263 = vst.msk [vmem:[#allocation4 + $0x560] sm:$0xff] %vm4923, %v6129
        %6264 = vst.msk [vmem:[#allocation4 + $0x578] sm:$0xff] %vm4923, %v6131
        %6265 = vst.msk [vmem:[#allocation4 + $0x590] sm:$0xff] %vm4923, %v6133
        %6266 = vst.msk [vmem:[#allocation4 + $0x5a8] sm:$0xff] %vm4923, %v6135
        %6267 = vst.msk [vmem:[#allocation4 + $0x5c0] sm:$0xff] %vm4923, %v6137
        %6268 = vst.msk [vmem:[#allocation4 + $0x5d8] sm:$0xff] %vm4923, %v6139
        %6269 = vst.msk [vmem:[#allocation4 + $0x5f0] sm:$0xff] %vm4923, %v6141
        %s6270 = scalar_lea.vmem [#allocation3], 32
        %v6271 = vld [vmem:[%s6270] sm:$0xff]
        %v6272 = vld [vmem:[%s6270 + $0x10] sm:$0xff]
        %v6273 = vld [vmem:[%s6270 + $0x20] sm:$0xff]
        %v6274 = vld [vmem:[%s6270 + $0x30] sm:$0xff]
        %v6275 = vld [vmem:[%s6270 + $0x40] sm:$0xff]
        %v6276 = vld [vmem:[%s6270 + $0x50] sm:$0xff]
        %v6277 = vld [vmem:[%s6270 + $0x60] sm:$0xff]
        %v6278 = vld [vmem:[%s6270 + $0x70] sm:$0xff]
        %v6279 = vld [vmem:[%s6270 + $0xa0] sm:$0xff]
        %v6280 = vld [vmem:[%s6270 + $0xb0] sm:$0xff]
        %v6281 = vld [vmem:[%s6270 + $0xc0] sm:$0xff]
        %v6282 = vld [vmem:[%s6270 + $0xd0] sm:$0xff]
        %v6283 = vld [vmem:[%s6270 + $0xe0] sm:$0xff]
        %v6284 = vld [vmem:[%s6270 + $0xf0] sm:$0xff]
        %v6285 = vld [vmem:[%s6270 + $0x100] sm:$0xff]
        %v6286 = vld [vmem:[%s6270 + $0x110] sm:$0xff]
        %v6287 = vld [vmem:[%s6270 + $0x140] sm:$0xff]
        %v6288 = vld [vmem:[%s6270 + $0x150] sm:$0xff]
        %v6289 = vld [vmem:[%s6270 + $0x160] sm:$0xff]
        %v6290 = vld [vmem:[%s6270 + $0x170] sm:$0xff]
        %v6291 = vld [vmem:[%s6270 + $0x180] sm:$0xff]
        %v6292 = vld [vmem:[%s6270 + $0x190] sm:$0xff]
        %v6293 = vld [vmem:[%s6270 + $0x1a0] sm:$0xff]
        %v6294 = vld [vmem:[%s6270 + $0x1b0] sm:$0xff]
        %v6295 = vld [vmem:[%s6270 + $0x1e0] sm:$0xff]
        %v6296 = vld [vmem:[%s6270 + $0x1f0] sm:$0xff]
        %v6297 = vld [vmem:[%s6270 + $0x200] sm:$0xff]
        %v6298 = vld [vmem:[%s6270 + $0x210] sm:$0xff]
        %v6299 = vld [vmem:[%s6270 + $0x220] sm:$0xff]
        %v6300 = vld [vmem:[%s6270 + $0x230] sm:$0xff]
        %v6301 = vld [vmem:[%s6270 + $0x240] sm:$0xff]
        %v6302 = vld [vmem:[%s6270 + $0x250] sm:$0xff]
        %v6303 = vld [vmem:[%s6270 + $0x280] sm:$0xff]
        %v6304 = vld [vmem:[%s6270 + $0x290] sm:$0xff]
        %v6305 = vld [vmem:[%s6270 + $0x2a0] sm:$0xff]
        %v6306 = vld [vmem:[%s6270 + $0x2b0] sm:$0xff]
        %v6307 = vld [vmem:[%s6270 + $0x2c0] sm:$0xff]
        %v6308 = vld [vmem:[%s6270 + $0x2d0] sm:$0xff]
        %v6309 = vld [vmem:[%s6270 + $0x2e0] sm:$0xff]
        %v6310 = vld [vmem:[%s6270 + $0x2f0] sm:$0xff]
        %v6311 = vld [vmem:[%s6270 + $0x320] sm:$0xff]
        %v6312 = vld [vmem:[%s6270 + $0x330] sm:$0xff]
        %v6313 = vld [vmem:[%s6270 + $0x340] sm:$0xff]
        %v6314 = vld [vmem:[%s6270 + $0x350] sm:$0xff]
        %v6315 = vld [vmem:[%s6270 + $0x360] sm:$0xff]
        %v6316 = vld [vmem:[%s6270 + $0x370] sm:$0xff]
        %v6317 = vld [vmem:[%s6270 + $0x380] sm:$0xff]
        %v6318 = vld [vmem:[%s6270 + $0x390] sm:$0xff]
        %v6319 = vld [vmem:[%s6270 + $0x3c0] sm:$0xff]
        %v6320 = vld [vmem:[%s6270 + $0x3d0] sm:$0xff]
        %v6321 = vld [vmem:[%s6270 + $0x3e0] sm:$0xff]
        %v6322 = vld [vmem:[%s6270 + $0x3f0] sm:$0xff]
        %v6323 = vld [vmem:[%s6270 + $0x400] sm:$0xff]
        %v6324 = vld [vmem:[%s6270 + $0x410] sm:$0xff]
        %v6325 = vld [vmem:[%s6270 + $0x420] sm:$0xff]
        %v6326 = vld [vmem:[%s6270 + $0x430] sm:$0xff]
        %v6327 = vld [vmem:[%s6270 + $0x460] sm:$0xff]
        %v6328 = vld [vmem:[%s6270 + $0x470] sm:$0xff]
        %v6329 = vld [vmem:[%s6270 + $0x480] sm:$0xff]
        %v6330 = vld [vmem:[%s6270 + $0x490] sm:$0xff]
        %v6331 = vld [vmem:[%s6270 + $0x4a0] sm:$0xff]
        %v6332 = vld [vmem:[%s6270 + $0x4b0] sm:$0xff]
        %v6333 = vld [vmem:[%s6270 + $0x4c0] sm:$0xff]
        %v6334 = vld [vmem:[%s6270 + $0x4d0] sm:$0xff]
        %6399 = vrot.lane.b32.xlu0 %v6271, 64
        %v6400 = vpop.permute.xlu0 %6399
        %6401 = vrot.lane.b32.xlu0 %v6272, 64
        %v6402 = vpop.permute.xlu0 %6401
        %6403 = vrot.lane.b32.xlu0 %v6273, 64
        %v6404 = vpop.permute.xlu0 %6403
        %6405 = vrot.lane.b32.xlu0 %v6274, 64
        %v6406 = vpop.permute.xlu0 %6405
        %6407 = vrot.lane.b32.xlu0 %v6275, 64
        %v6408 = vpop.permute.xlu0 %6407
        %6409 = vrot.lane.b32.xlu0 %v6276, 64
        %v6410 = vpop.permute.xlu0 %6409
        %6411 = vrot.lane.b32.xlu0 %v6277, 64
        %v6412 = vpop.permute.xlu0 %6411
        %6413 = vrot.lane.b32.xlu0 %v6278, 64
        %v6414 = vpop.permute.xlu0 %6413
        %6415 = vrot.lane.b32.xlu0 %v6279, 64
        %v6416 = vpop.permute.xlu0 %6415
        %6417 = vrot.lane.b32.xlu0 %v6280, 64
        %v6418 = vpop.permute.xlu0 %6417
        %6419 = vrot.lane.b32.xlu0 %v6281, 64
        %v6420 = vpop.permute.xlu0 %6419
        %6421 = vrot.lane.b32.xlu0 %v6282, 64
        %v6422 = vpop.permute.xlu0 %6421
        %6423 = vrot.lane.b32.xlu0 %v6283, 64
        %v6424 = vpop.permute.xlu0 %6423
        %6425 = vrot.lane.b32.xlu0 %v6284, 64
        %v6426 = vpop.permute.xlu0 %6425
        %6427 = vrot.lane.b32.xlu0 %v6285, 64
        %v6428 = vpop.permute.xlu0 %6427
        %6429 = vrot.lane.b32.xlu0 %v6286, 64
        %v6430 = vpop.permute.xlu0 %6429
        %6431 = vrot.lane.b32.xlu0 %v6287, 64
        %v6432 = vpop.permute.xlu0 %6431
        %6433 = vrot.lane.b32.xlu0 %v6288, 64
        %v6434 = vpop.permute.xlu0 %6433
        %6435 = vrot.lane.b32.xlu0 %v6289, 64
        %v6436 = vpop.permute.xlu0 %6435
        %6437 = vrot.lane.b32.xlu0 %v6290, 64
        %v6438 = vpop.permute.xlu0 %6437
        %6439 = vrot.lane.b32.xlu0 %v6291, 64
        %v6440 = vpop.permute.xlu0 %6439
        %6441 = vrot.lane.b32.xlu0 %v6292, 64
        %v6442 = vpop.permute.xlu0 %6441
        %6443 = vrot.lane.b32.xlu0 %v6293, 64
        %v6444 = vpop.permute.xlu0 %6443
        %6445 = vrot.lane.b32.xlu0 %v6294, 64
        %v6446 = vpop.permute.xlu0 %6445
        %6447 = vrot.lane.b32.xlu0 %v6295, 64
        %v6448 = vpop.permute.xlu0 %6447
        %6449 = vrot.lane.b32.xlu0 %v6296, 64
        %v6450 = vpop.permute.xlu0 %6449
        %6451 = vrot.lane.b32.xlu0 %v6297, 64
        %v6452 = vpop.permute.xlu0 %6451
        %6453 = vrot.lane.b32.xlu0 %v6298, 64
        %v6454 = vpop.permute.xlu0 %6453
        %6455 = vrot.lane.b32.xlu0 %v6299, 64
        %v6456 = vpop.permute.xlu0 %6455
        %6457 = vrot.lane.b32.xlu0 %v6300, 64
        %v6458 = vpop.permute.xlu0 %6457
        %6459 = vrot.lane.b32.xlu0 %v6301, 64
        %v6460 = vpop.permute.xlu0 %6459
        %6461 = vrot.lane.b32.xlu0 %v6302, 64
        %v6462 = vpop.permute.xlu0 %6461
        %6463 = vrot.lane.b32.xlu0 %v6303, 64
        %v6464 = vpop.permute.xlu0 %6463
        %6465 = vrot.lane.b32.xlu0 %v6304, 64
        %v6466 = vpop.permute.xlu0 %6465
        %6467 = vrot.lane.b32.xlu0 %v6305, 64
        %v6468 = vpop.permute.xlu0 %6467
        %6469 = vrot.lane.b32.xlu0 %v6306, 64
        %v6470 = vpop.permute.xlu0 %6469
        %6471 = vrot.lane.b32.xlu0 %v6307, 64
        %v6472 = vpop.permute.xlu0 %6471
        %6473 = vrot.lane.b32.xlu0 %v6308, 64
        %v6474 = vpop.permute.xlu0 %6473
        %6475 = vrot.lane.b32.xlu0 %v6309, 64
        %v6476 = vpop.permute.xlu0 %6475
        %6477 = vrot.lane.b32.xlu0 %v6310, 64
        %v6478 = vpop.permute.xlu0 %6477
        %6479 = vrot.lane.b32.xlu0 %v6311, 64
        %v6480 = vpop.permute.xlu0 %6479
        %6481 = vrot.lane.b32.xlu0 %v6312, 64
        %v6482 = vpop.permute.xlu0 %6481
        %6483 = vrot.lane.b32.xlu0 %v6313, 64
        %v6484 = vpop.permute.xlu0 %6483
        %6485 = vrot.lane.b32.xlu0 %v6314, 64
        %v6486 = vpop.permute.xlu0 %6485
        %6487 = vrot.lane.b32.xlu0 %v6315, 64
        %v6488 = vpop.permute.xlu0 %6487
        %6489 = vrot.lane.b32.xlu0 %v6316, 64
        %v6490 = vpop.permute.xlu0 %6489
        %6491 = vrot.lane.b32.xlu0 %v6317, 64
        %v6492 = vpop.permute.xlu0 %6491
        %6493 = vrot.lane.b32.xlu0 %v6318, 64
        %v6494 = vpop.permute.xlu0 %6493
        %6495 = vrot.lane.b32.xlu0 %v6319, 64
        %v6496 = vpop.permute.xlu0 %6495
        %6497 = vrot.lane.b32.xlu0 %v6320, 64
        %v6498 = vpop.permute.xlu0 %6497
        %6499 = vrot.lane.b32.xlu0 %v6321, 64
        %v6500 = vpop.permute.xlu0 %6499
        %6501 = vrot.lane.b32.xlu0 %v6322, 64
        %v6502 = vpop.permute.xlu0 %6501
        %6503 = vrot.lane.b32.xlu0 %v6323, 64
        %v6504 = vpop.permute.xlu0 %6503
        %6505 = vrot.lane.b32.xlu0 %v6324, 64
        %v6506 = vpop.permute.xlu0 %6505
        %6507 = vrot.lane.b32.xlu0 %v6325, 64
        %v6508 = vpop.permute.xlu0 %6507
        %6509 = vrot.lane.b32.xlu0 %v6326, 64
        %v6510 = vpop.permute.xlu0 %6509
        %6511 = vrot.lane.b32.xlu0 %v6327, 64
        %v6512 = vpop.permute.xlu0 %6511
        %6513 = vrot.lane.b32.xlu0 %v6328, 64
        %v6514 = vpop.permute.xlu0 %6513
        %6515 = vrot.lane.b32.xlu0 %v6329, 64
        %v6516 = vpop.permute.xlu0 %6515
        %6517 = vrot.lane.b32.xlu0 %v6330, 64
        %v6518 = vpop.permute.xlu0 %6517
        %6519 = vrot.lane.b32.xlu0 %v6331, 64
        %v6520 = vpop.permute.xlu0 %6519
        %6521 = vrot.lane.b32.xlu0 %v6332, 64
        %v6522 = vpop.permute.xlu0 %6521
        %6523 = vrot.lane.b32.xlu0 %v6333, 64
        %v6524 = vpop.permute.xlu0 %6523
        %6525 = vrot.lane.b32.xlu0 %v6334, 64
        %v6526 = vpop.permute.xlu0 %6525
        %6591 = vst.msk [vmem:[#allocation4 + $0x8] sm:$0xff] %vm5308, %v6400
        %6592 = vst.msk [vmem:[#allocation4 + $0x20] sm:$0xff] %vm5308, %v6402
        %6593 = vst.msk [vmem:[#allocation4 + $0x38] sm:$0xff] %vm5308, %v6404
        %6594 = vst.msk [vmem:[#allocation4 + $0x50] sm:$0xff] %vm5308, %v6406
        %6595 = vst.msk [vmem:[#allocation4 + $0x68] sm:$0xff] %vm5308, %v6408
        %6596 = vst.msk [vmem:[#allocation4 + $0x80] sm:$0xff] %vm5308, %v6410
        %6597 = vst.msk [vmem:[#allocation4 + $0x98] sm:$0xff] %vm5308, %v6412
        %6598 = vst.msk [vmem:[#allocation4 + $0xb0] sm:$0xff] %vm5308, %v6414
        %6599 = vst.msk [vmem:[#allocation4 + $0xc8] sm:$0xff] %vm5308, %v6416
        %6600 = vst.msk [vmem:[#allocation4 + $0xe0] sm:$0xff] %vm5308, %v6418
        %6601 = vst.msk [vmem:[#allocation4 + $0xf8] sm:$0xff] %vm5308, %v6420
        %6602 = vst.msk [vmem:[#allocation4 + $0x110] sm:$0xff] %vm5308, %v6422
        %6603 = vst.msk [vmem:[#allocation4 + $0x128] sm:$0xff] %vm5308, %v6424
        %6604 = vst.msk [vmem:[#allocation4 + $0x140] sm:$0xff] %vm5308, %v6426
        %6605 = vst.msk [vmem:[#allocation4 + $0x158] sm:$0xff] %vm5308, %v6428
        %6606 = vst.msk [vmem:[#allocation4 + $0x170] sm:$0xff] %vm5308, %v6430
        %6607 = vst.msk [vmem:[#allocation4 + $0x188] sm:$0xff] %vm5308, %v6432
        %6608 = vst.msk [vmem:[#allocation4 + $0x1a0] sm:$0xff] %vm5308, %v6434
        %6609 = vst.msk [vmem:[#allocation4 + $0x1b8] sm:$0xff] %vm5308, %v6436
        %6610 = vst.msk [vmem:[#allocation4 + $0x1d0] sm:$0xff] %vm5308, %v6438
        %6611 = vst.msk [vmem:[#allocation4 + $0x1e8] sm:$0xff] %vm5308, %v6440
        %6612 = vst.msk [vmem:[#allocation4 + $0x200] sm:$0xff] %vm5308, %v6442
        %6613 = vst.msk [vmem:[#allocation4 + $0x218] sm:$0xff] %vm5308, %v6444
        %6614 = vst.msk [vmem:[#allocation4 + $0x230] sm:$0xff] %vm5308, %v6446
        %6615 = vst.msk [vmem:[#allocation4 + $0x248] sm:$0xff] %vm5308, %v6448
        %6616 = vst.msk [vmem:[#allocation4 + $0x260] sm:$0xff] %vm5308, %v6450
        %6617 = vst.msk [vmem:[#allocation4 + $0x278] sm:$0xff] %vm5308, %v6452
        %6618 = vst.msk [vmem:[#allocation4 + $0x290] sm:$0xff] %vm5308, %v6454
        %6619 = vst.msk [vmem:[#allocation4 + $0x2a8] sm:$0xff] %vm5308, %v6456
        %6620 = vst.msk [vmem:[#allocation4 + $0x2c0] sm:$0xff] %vm5308, %v6458
        %6621 = vst.msk [vmem:[#allocation4 + $0x2d8] sm:$0xff] %vm5308, %v6460
        %6622 = vst.msk [vmem:[#allocation4 + $0x2f0] sm:$0xff] %vm5308, %v6462
        %6623 = vst.msk [vmem:[#allocation4 + $0x308] sm:$0xff] %vm5308, %v6464
        %6624 = vst.msk [vmem:[#allocation4 + $0x320] sm:$0xff] %vm5308, %v6466
        %6625 = vst.msk [vmem:[#allocation4 + $0x338] sm:$0xff] %vm5308, %v6468
        %6626 = vst.msk [vmem:[#allocation4 + $0x350] sm:$0xff] %vm5308, %v6470
        %6627 = vst.msk [vmem:[#allocation4 + $0x368] sm:$0xff] %vm5308, %v6472
        %6628 = vst.msk [vmem:[#allocation4 + $0x380] sm:$0xff] %vm5308, %v6474
        %6629 = vst.msk [vmem:[#allocation4 + $0x398] sm:$0xff] %vm5308, %v6476
        %6630 = vst.msk [vmem:[#allocation4 + $0x3b0] sm:$0xff] %vm5308, %v6478
        %6631 = vst.msk [vmem:[#allocation4 + $0x3c8] sm:$0xff] %vm5308, %v6480
        %6632 = vst.msk [vmem:[#allocation4 + $0x3e0] sm:$0xff] %vm5308, %v6482
        %6633 = vst.msk [vmem:[#allocation4 + $0x3f8] sm:$0xff] %vm5308, %v6484
        %6634 = vst.msk [vmem:[#allocation4 + $0x410] sm:$0xff] %vm5308, %v6486
        %6635 = vst.msk [vmem:[#allocation4 + $0x428] sm:$0xff] %vm5308, %v6488
        %6636 = vst.msk [vmem:[#allocation4 + $0x440] sm:$0xff] %vm5308, %v6490
        %6637 = vst.msk [vmem:[#allocation4 + $0x458] sm:$0xff] %vm5308, %v6492
        %6638 = vst.msk [vmem:[#allocation4 + $0x470] sm:$0xff] %vm5308, %v6494
        %6639 = vst.msk [vmem:[#allocation4 + $0x488] sm:$0xff] %vm5308, %v6496
        %6640 = vst.msk [vmem:[#allocation4 + $0x4a0] sm:$0xff] %vm5308, %v6498
        %6641 = vst.msk [vmem:[#allocation4 + $0x4b8] sm:$0xff] %vm5308, %v6500
        %6642 = vst.msk [vmem:[#allocation4 + $0x4d0] sm:$0xff] %vm5308, %v6502
        %6643 = vst.msk [vmem:[#allocation4 + $0x4e8] sm:$0xff] %vm5308, %v6504
        %6644 = vst.msk [vmem:[#allocation4 + $0x500] sm:$0xff] %vm5308, %v6506
        %6645 = vst.msk [vmem:[#allocation4 + $0x518] sm:$0xff] %vm5308, %v6508
        %6646 = vst.msk [vmem:[#allocation4 + $0x530] sm:$0xff] %vm5308, %v6510
        %6647 = vst.msk [vmem:[#allocation4 + $0x548] sm:$0xff] %vm5308, %v6512
        %6648 = vst.msk [vmem:[#allocation4 + $0x560] sm:$0xff] %vm5308, %v6514
        %6649 = vst.msk [vmem:[#allocation4 + $0x578] sm:$0xff] %vm5308, %v6516
        %6650 = vst.msk [vmem:[#allocation4 + $0x590] sm:$0xff] %vm5308, %v6518
        %6651 = vst.msk [vmem:[#allocation4 + $0x5a8] sm:$0xff] %vm5308, %v6520
        %6652 = vst.msk [vmem:[#allocation4 + $0x5c0] sm:$0xff] %vm5308, %v6522
        %6653 = vst.msk [vmem:[#allocation4 + $0x5d8] sm:$0xff] %vm5308, %v6524
        %6654 = vst.msk [vmem:[#allocation4 + $0x5f0] sm:$0xff] %vm5308, %v6526
        %v6655 = vld [vmem:[%s6270 + $0x1] sm:$0xff]
        %v6656 = vld [vmem:[%s6270 + $0x11] sm:$0xff]
        %v6657 = vld [vmem:[%s6270 + $0x21] sm:$0xff]
        %v6658 = vld [vmem:[%s6270 + $0x31] sm:$0xff]
        %v6659 = vld [vmem:[%s6270 + $0x41] sm:$0xff]
        %v6660 = vld [vmem:[%s6270 + $0x51] sm:$0xff]
        %v6661 = vld [vmem:[%s6270 + $0x61] sm:$0xff]
        %v6662 = vld [vmem:[%s6270 + $0x71] sm:$0xff]
        %v6663 = vld [vmem:[%s6270 + $0xa1] sm:$0xff]
        %v6664 = vld [vmem:[%s6270 + $0xb1] sm:$0xff]
        %v6665 = vld [vmem:[%s6270 + $0xc1] sm:$0xff]
        %v6666 = vld [vmem:[%s6270 + $0xd1] sm:$0xff]
        %v6667 = vld [vmem:[%s6270 + $0xe1] sm:$0xff]
        %v6668 = vld [vmem:[%s6270 + $0xf1] sm:$0xff]
        %v6669 = vld [vmem:[%s6270 + $0x101] sm:$0xff]
        %v6670 = vld [vmem:[%s6270 + $0x111] sm:$0xff]
        %v6671 = vld [vmem:[%s6270 + $0x141] sm:$0xff]
        %v6672 = vld [vmem:[%s6270 + $0x151] sm:$0xff]
        %v6673 = vld [vmem:[%s6270 + $0x161] sm:$0xff]
        %v6674 = vld [vmem:[%s6270 + $0x171] sm:$0xff]
        %v6675 = vld [vmem:[%s6270 + $0x181] sm:$0xff]
        %v6676 = vld [vmem:[%s6270 + $0x191] sm:$0xff]
        %v6677 = vld [vmem:[%s6270 + $0x1a1] sm:$0xff]
        %v6678 = vld [vmem:[%s6270 + $0x1b1] sm:$0xff]
        %v6679 = vld [vmem:[%s6270 + $0x1e1] sm:$0xff]
        %v6680 = vld [vmem:[%s6270 + $0x1f1] sm:$0xff]
        %v6681 = vld [vmem:[%s6270 + $0x201] sm:$0xff]
        %v6682 = vld [vmem:[%s6270 + $0x211] sm:$0xff]
        %v6683 = vld [vmem:[%s6270 + $0x221] sm:$0xff]
        %v6684 = vld [vmem:[%s6270 + $0x231] sm:$0xff]
        %v6685 = vld [vmem:[%s6270 + $0x241] sm:$0xff]
        %v6686 = vld [vmem:[%s6270 + $0x251] sm:$0xff]
        %v6687 = vld [vmem:[%s6270 + $0x281] sm:$0xff]
        %v6688 = vld [vmem:[%s6270 + $0x291] sm:$0xff]
        %v6689 = vld [vmem:[%s6270 + $0x2a1] sm:$0xff]
        %v6690 = vld [vmem:[%s6270 + $0x2b1] sm:$0xff]
        %v6691 = vld [vmem:[%s6270 + $0x2c1] sm:$0xff]
        %v6692 = vld [vmem:[%s6270 + $0x2d1] sm:$0xff]
        %v6693 = vld [vmem:[%s6270 + $0x2e1] sm:$0xff]
        %v6694 = vld [vmem:[%s6270 + $0x2f1] sm:$0xff]
        %v6695 = vld [vmem:[%s6270 + $0x321] sm:$0xff]
        %v6696 = vld [vmem:[%s6270 + $0x331] sm:$0xff]
        %v6697 = vld [vmem:[%s6270 + $0x341] sm:$0xff]
        %v6698 = vld [vmem:[%s6270 + $0x351] sm:$0xff]
        %v6699 = vld [vmem:[%s6270 + $0x361] sm:$0xff]
        %v6700 = vld [vmem:[%s6270 + $0x371] sm:$0xff]
        %v6701 = vld [vmem:[%s6270 + $0x381] sm:$0xff]
        %v6702 = vld [vmem:[%s6270 + $0x391] sm:$0xff]
        %v6703 = vld [vmem:[%s6270 + $0x3c1] sm:$0xff]
        %v6704 = vld [vmem:[%s6270 + $0x3d1] sm:$0xff]
        %v6705 = vld [vmem:[%s6270 + $0x3e1] sm:$0xff]
        %v6706 = vld [vmem:[%s6270 + $0x3f1] sm:$0xff]
        %v6707 = vld [vmem:[%s6270 + $0x401] sm:$0xff]
        %v6708 = vld [vmem:[%s6270 + $0x411] sm:$0xff]
        %v6709 = vld [vmem:[%s6270 + $0x421] sm:$0xff]
        %v6710 = vld [vmem:[%s6270 + $0x431] sm:$0xff]
        %v6711 = vld [vmem:[%s6270 + $0x461] sm:$0xff]
        %v6712 = vld [vmem:[%s6270 + $0x471] sm:$0xff]
        %v6713 = vld [vmem:[%s6270 + $0x481] sm:$0xff]
        %v6714 = vld [vmem:[%s6270 + $0x491] sm:$0xff]
        %v6715 = vld [vmem:[%s6270 + $0x4a1] sm:$0xff]
        %v6716 = vld [vmem:[%s6270 + $0x4b1] sm:$0xff]
        %v6717 = vld [vmem:[%s6270 + $0x4c1] sm:$0xff]
        %v6718 = vld [vmem:[%s6270 + $0x4d1] sm:$0xff]
        %6783 = vrot.lane.b32.xlu0 %v6655, 96
        %v6784 = vpop.permute.xlu0 %6783
        %6785 = vrot.lane.b32.xlu0 %v6656, 96
        %v6786 = vpop.permute.xlu0 %6785
        %6787 = vrot.lane.b32.xlu0 %v6657, 96
        %v6788 = vpop.permute.xlu0 %6787
        %6789 = vrot.lane.b32.xlu0 %v6658, 96
        %v6790 = vpop.permute.xlu0 %6789
        %6791 = vrot.lane.b32.xlu0 %v6659, 96
        %v6792 = vpop.permute.xlu0 %6791
        %6793 = vrot.lane.b32.xlu0 %v6660, 96
        %v6794 = vpop.permute.xlu0 %6793
        %6795 = vrot.lane.b32.xlu0 %v6661, 96
        %v6796 = vpop.permute.xlu0 %6795
        %6797 = vrot.lane.b32.xlu0 %v6662, 96
        %v6798 = vpop.permute.xlu0 %6797
        %6799 = vrot.lane.b32.xlu0 %v6663, 96
        %v6800 = vpop.permute.xlu0 %6799
        %6801 = vrot.lane.b32.xlu0 %v6664, 96
        %v6802 = vpop.permute.xlu0 %6801
        %6803 = vrot.lane.b32.xlu0 %v6665, 96
        %v6804 = vpop.permute.xlu0 %6803
        %6805 = vrot.lane.b32.xlu0 %v6666, 96
        %v6806 = vpop.permute.xlu0 %6805
        %6807 = vrot.lane.b32.xlu0 %v6667, 96
        %v6808 = vpop.permute.xlu0 %6807
        %6809 = vrot.lane.b32.xlu0 %v6668, 96
        %v6810 = vpop.permute.xlu0 %6809
        %6811 = vrot.lane.b32.xlu0 %v6669, 96
        %v6812 = vpop.permute.xlu0 %6811
        %6813 = vrot.lane.b32.xlu0 %v6670, 96
        %v6814 = vpop.permute.xlu0 %6813
        %6815 = vrot.lane.b32.xlu0 %v6671, 96
        %v6816 = vpop.permute.xlu0 %6815
        %6817 = vrot.lane.b32.xlu0 %v6672, 96
        %v6818 = vpop.permute.xlu0 %6817
        %6819 = vrot.lane.b32.xlu0 %v6673, 96
        %v6820 = vpop.permute.xlu0 %6819
        %6821 = vrot.lane.b32.xlu0 %v6674, 96
        %v6822 = vpop.permute.xlu0 %6821
        %6823 = vrot.lane.b32.xlu0 %v6675, 96
        %v6824 = vpop.permute.xlu0 %6823
        %6825 = vrot.lane.b32.xlu0 %v6676, 96
        %v6826 = vpop.permute.xlu0 %6825
        %6827 = vrot.lane.b32.xlu0 %v6677, 96
        %v6828 = vpop.permute.xlu0 %6827
        %6829 = vrot.lane.b32.xlu0 %v6678, 96
        %v6830 = vpop.permute.xlu0 %6829
        %6831 = vrot.lane.b32.xlu0 %v6679, 96
        %v6832 = vpop.permute.xlu0 %6831
        %6833 = vrot.lane.b32.xlu0 %v6680, 96
        %v6834 = vpop.permute.xlu0 %6833
        %6835 = vrot.lane.b32.xlu0 %v6681, 96
        %v6836 = vpop.permute.xlu0 %6835
        %6837 = vrot.lane.b32.xlu0 %v6682, 96
        %v6838 = vpop.permute.xlu0 %6837
        %6839 = vrot.lane.b32.xlu0 %v6683, 96
        %v6840 = vpop.permute.xlu0 %6839
        %6841 = vrot.lane.b32.xlu0 %v6684, 96
        %v6842 = vpop.permute.xlu0 %6841
        %6843 = vrot.lane.b32.xlu0 %v6685, 96
        %v6844 = vpop.permute.xlu0 %6843
        %6845 = vrot.lane.b32.xlu0 %v6686, 96
        %v6846 = vpop.permute.xlu0 %6845
        %6847 = vrot.lane.b32.xlu0 %v6687, 96
        %v6848 = vpop.permute.xlu0 %6847
        %6849 = vrot.lane.b32.xlu0 %v6688, 96
        %v6850 = vpop.permute.xlu0 %6849
        %6851 = vrot.lane.b32.xlu0 %v6689, 96
        %v6852 = vpop.permute.xlu0 %6851
        %6853 = vrot.lane.b32.xlu0 %v6690, 96
        %v6854 = vpop.permute.xlu0 %6853
        %6855 = vrot.lane.b32.xlu0 %v6691, 96
        %v6856 = vpop.permute.xlu0 %6855
        %6857 = vrot.lane.b32.xlu0 %v6692, 96
        %v6858 = vpop.permute.xlu0 %6857
        %6859 = vrot.lane.b32.xlu0 %v6693, 96
        %v6860 = vpop.permute.xlu0 %6859
        %6861 = vrot.lane.b32.xlu0 %v6694, 96
        %v6862 = vpop.permute.xlu0 %6861
        %6863 = vrot.lane.b32.xlu0 %v6695, 96
        %v6864 = vpop.permute.xlu0 %6863
        %6865 = vrot.lane.b32.xlu0 %v6696, 96
        %v6866 = vpop.permute.xlu0 %6865
        %6867 = vrot.lane.b32.xlu0 %v6697, 96
        %v6868 = vpop.permute.xlu0 %6867
        %6869 = vrot.lane.b32.xlu0 %v6698, 96
        %v6870 = vpop.permute.xlu0 %6869
        %6871 = vrot.lane.b32.xlu0 %v6699, 96
        %v6872 = vpop.permute.xlu0 %6871
        %6873 = vrot.lane.b32.xlu0 %v6700, 96
        %v6874 = vpop.permute.xlu0 %6873
        %6875 = vrot.lane.b32.xlu0 %v6701, 96
        %v6876 = vpop.permute.xlu0 %6875
        %6877 = vrot.lane.b32.xlu0 %v6702, 96
        %v6878 = vpop.permute.xlu0 %6877
        %6879 = vrot.lane.b32.xlu0 %v6703, 96
        %v6880 = vpop.permute.xlu0 %6879
        %6881 = vrot.lane.b32.xlu0 %v6704, 96
        %v6882 = vpop.permute.xlu0 %6881
        %6883 = vrot.lane.b32.xlu0 %v6705, 96
        %v6884 = vpop.permute.xlu0 %6883
        %6885 = vrot.lane.b32.xlu0 %v6706, 96
        %v6886 = vpop.permute.xlu0 %6885
        %6887 = vrot.lane.b32.xlu0 %v6707, 96
        %v6888 = vpop.permute.xlu0 %6887
        %6889 = vrot.lane.b32.xlu0 %v6708, 96
        %v6890 = vpop.permute.xlu0 %6889
        %6891 = vrot.lane.b32.xlu0 %v6709, 96
        %v6892 = vpop.permute.xlu0 %6891
        %6893 = vrot.lane.b32.xlu0 %v6710, 96
        %v6894 = vpop.permute.xlu0 %6893
        %6895 = vrot.lane.b32.xlu0 %v6711, 96
        %v6896 = vpop.permute.xlu0 %6895
        %6897 = vrot.lane.b32.xlu0 %v6712, 96
        %v6898 = vpop.permute.xlu0 %6897
        %6899 = vrot.lane.b32.xlu0 %v6713, 96
        %v6900 = vpop.permute.xlu0 %6899
        %6901 = vrot.lane.b32.xlu0 %v6714, 96
        %v6902 = vpop.permute.xlu0 %6901
        %6903 = vrot.lane.b32.xlu0 %v6715, 96
        %v6904 = vpop.permute.xlu0 %6903
        %6905 = vrot.lane.b32.xlu0 %v6716, 96
        %v6906 = vpop.permute.xlu0 %6905
        %6907 = vrot.lane.b32.xlu0 %v6717, 96
        %v6908 = vpop.permute.xlu0 %6907
        %6909 = vrot.lane.b32.xlu0 %v6718, 96
        %v6910 = vpop.permute.xlu0 %6909
        %6975 = vst.msk [vmem:[#allocation4 + $0x8] sm:$0xff] %vm5693, %v6784
        %6976 = vst.msk [vmem:[#allocation4 + $0x20] sm:$0xff] %vm5693, %v6786
        %6977 = vst.msk [vmem:[#allocation4 + $0x38] sm:$0xff] %vm5693, %v6788
        %6978 = vst.msk [vmem:[#allocation4 + $0x50] sm:$0xff] %vm5693, %v6790
        %6979 = vst.msk [vmem:[#allocation4 + $0x68] sm:$0xff] %vm5693, %v6792
        %6980 = vst.msk [vmem:[#allocation4 + $0x80] sm:$0xff] %vm5693, %v6794
        %6981 = vst.msk [vmem:[#allocation4 + $0x98] sm:$0xff] %vm5693, %v6796
        %6982 = vst.msk [vmem:[#allocation4 + $0xb0] sm:$0xff] %vm5693, %v6798
        %6983 = vst.msk [vmem:[#allocation4 + $0xc8] sm:$0xff] %vm5693, %v6800
        %6984 = vst.msk [vmem:[#allocation4 + $0xe0] sm:$0xff] %vm5693, %v6802
        %6985 = vst.msk [vmem:[#allocation4 + $0xf8] sm:$0xff] %vm5693, %v6804
        %6986 = vst.msk [vmem:[#allocation4 + $0x110] sm:$0xff] %vm5693, %v6806
        %6987 = vst.msk [vmem:[#allocation4 + $0x128] sm:$0xff] %vm5693, %v6808
        %6988 = vst.msk [vmem:[#allocation4 + $0x140] sm:$0xff] %vm5693, %v6810
        %6989 = vst.msk [vmem:[#allocation4 + $0x158] sm:$0xff] %vm5693, %v6812
        %6990 = vst.msk [vmem:[#allocation4 + $0x170] sm:$0xff] %vm5693, %v6814
        %6991 = vst.msk [vmem:[#allocation4 + $0x188] sm:$0xff] %vm5693, %v6816
        %6992 = vst.msk [vmem:[#allocation4 + $0x1a0] sm:$0xff] %vm5693, %v6818
        %6993 = vst.msk [vmem:[#allocation4 + $0x1b8] sm:$0xff] %vm5693, %v6820
        %6994 = vst.msk [vmem:[#allocation4 + $0x1d0] sm:$0xff] %vm5693, %v6822
        %6995 = vst.msk [vmem:[#allocation4 + $0x1e8] sm:$0xff] %vm5693, %v6824
        %6996 = vst.msk [vmem:[#allocation4 + $0x200] sm:$0xff] %vm5693, %v6826
        %6997 = vst.msk [vmem:[#allocation4 + $0x218] sm:$0xff] %vm5693, %v6828
        %6998 = vst.msk [vmem:[#allocation4 + $0x230] sm:$0xff] %vm5693, %v6830
        %6999 = vst.msk [vmem:[#allocation4 + $0x248] sm:$0xff] %vm5693, %v6832
        %7000 = vst.msk [vmem:[#allocation4 + $0x260] sm:$0xff] %vm5693, %v6834
        %7001 = vst.msk [vmem:[#allocation4 + $0x278] sm:$0xff] %vm5693, %v6836
        %7002 = vst.msk [vmem:[#allocation4 + $0x290] sm:$0xff] %vm5693, %v6838
        %7003 = vst.msk [vmem:[#allocation4 + $0x2a8] sm:$0xff] %vm5693, %v6840
        %7004 = vst.msk [vmem:[#allocation4 + $0x2c0] sm:$0xff] %vm5693, %v6842
        %7005 = vst.msk [vmem:[#allocation4 + $0x2d8] sm:$0xff] %vm5693, %v6844
        %7006 = vst.msk [vmem:[#allocation4 + $0x2f0] sm:$0xff] %vm5693, %v6846
        %7007 = vst.msk [vmem:[#allocation4 + $0x308] sm:$0xff] %vm5693, %v6848
        %7008 = vst.msk [vmem:[#allocation4 + $0x320] sm:$0xff] %vm5693, %v6850
        %7009 = vst.msk [vmem:[#allocation4 + $0x338] sm:$0xff] %vm5693, %v6852
        %7010 = vst.msk [vmem:[#allocation4 + $0x350] sm:$0xff] %vm5693, %v6854
        %7011 = vst.msk [vmem:[#allocation4 + $0x368] sm:$0xff] %vm5693, %v6856
        %7012 = vst.msk [vmem:[#allocation4 + $0x380] sm:$0xff] %vm5693, %v6858
        %7013 = vst.msk [vmem:[#allocation4 + $0x398] sm:$0xff] %vm5693, %v6860
        %7014 = vst.msk [vmem:[#allocation4 + $0x3b0] sm:$0xff] %vm5693, %v6862
        %7015 = vst.msk [vmem:[#allocation4 + $0x3c8] sm:$0xff] %vm5693, %v6864
        %7016 = vst.msk [vmem:[#allocation4 + $0x3e0] sm:$0xff] %vm5693, %v6866
        %7017 = vst.msk [vmem:[#allocation4 + $0x3f8] sm:$0xff] %vm5693, %v6868
        %7018 = vst.msk [vmem:[#allocation4 + $0x410] sm:$0xff] %vm5693, %v6870
        %7019 = vst.msk [vmem:[#allocation4 + $0x428] sm:$0xff] %vm5693, %v6872
        %7020 = vst.msk [vmem:[#allocation4 + $0x440] sm:$0xff] %vm5693, %v6874
        %7021 = vst.msk [vmem:[#allocation4 + $0x458] sm:$0xff] %vm5693, %v6876
        %7022 = vst.msk [vmem:[#allocation4 + $0x470] sm:$0xff] %vm5693, %v6878
        %7023 = vst.msk [vmem:[#allocation4 + $0x488] sm:$0xff] %vm5693, %v6880
        %7024 = vst.msk [vmem:[#allocation4 + $0x4a0] sm:$0xff] %vm5693, %v6882
        %7025 = vst.msk [vmem:[#allocation4 + $0x4b8] sm:$0xff] %vm5693, %v6884
        %7026 = vst.msk [vmem:[#allocation4 + $0x4d0] sm:$0xff] %vm5693, %v6886
        %7027 = vst.msk [vmem:[#allocation4 + $0x4e8] sm:$0xff] %vm5693, %v6888
        %7028 = vst.msk [vmem:[#allocation4 + $0x500] sm:$0xff] %vm5693, %v6890
        %7029 = vst.msk [vmem:[#allocation4 + $0x518] sm:$0xff] %vm5693, %v6892
        %7030 = vst.msk [vmem:[#allocation4 + $0x530] sm:$0xff] %vm5693, %v6894
        %7031 = vst.msk [vmem:[#allocation4 + $0x548] sm:$0xff] %vm5693, %v6896
        %7032 = vst.msk [vmem:[#allocation4 + $0x560] sm:$0xff] %vm5693, %v6898
        %7033 = vst.msk [vmem:[#allocation4 + $0x578] sm:$0xff] %vm5693, %v6900
        %7034 = vst.msk [vmem:[#allocation4 + $0x590] sm:$0xff] %vm5693, %v6902
        %7035 = vst.msk [vmem:[#allocation4 + $0x5a8] sm:$0xff] %vm5693, %v6904
        %7036 = vst.msk [vmem:[#allocation4 + $0x5c0] sm:$0xff] %vm5693, %v6906
        %7037 = vst.msk [vmem:[#allocation4 + $0x5d8] sm:$0xff] %vm5693, %v6908
        %7038 = vst.msk [vmem:[#allocation4 + $0x5f0] sm:$0xff] %vm5693, %v6910
        %v7039 = vld [vmem:[%s6270 + $0x2] sm:$0xff]
        %v7040 = vld [vmem:[%s6270 + $0x12] sm:$0xff]
        %v7041 = vld [vmem:[%s6270 + $0x22] sm:$0xff]
        %v7042 = vld [vmem:[%s6270 + $0x32] sm:$0xff]
        %v7043 = vld [vmem:[%s6270 + $0x42] sm:$0xff]
        %v7044 = vld [vmem:[%s6270 + $0x52] sm:$0xff]
        %v7045 = vld [vmem:[%s6270 + $0x62] sm:$0xff]
        %v7046 = vld [vmem:[%s6270 + $0x72] sm:$0xff]
        %v7047 = vld [vmem:[%s6270 + $0xa2] sm:$0xff]
        %v7048 = vld [vmem:[%s6270 + $0xb2] sm:$0xff]
        %v7049 = vld [vmem:[%s6270 + $0xc2] sm:$0xff]
        %v7050 = vld [vmem:[%s6270 + $0xd2] sm:$0xff]
        %v7051 = vld [vmem:[%s6270 + $0xe2] sm:$0xff]
        %v7052 = vld [vmem:[%s6270 + $0xf2] sm:$0xff]
        %v7053 = vld [vmem:[%s6270 + $0x102] sm:$0xff]
        %v7054 = vld [vmem:[%s6270 + $0x112] sm:$0xff]
        %v7055 = vld [vmem:[%s6270 + $0x142] sm:$0xff]
        %v7056 = vld [vmem:[%s6270 + $0x152] sm:$0xff]
        %v7057 = vld [vmem:[%s6270 + $0x162] sm:$0xff]
        %v7058 = vld [vmem:[%s6270 + $0x172] sm:$0xff]
        %v7059 = vld [vmem:[%s6270 + $0x182] sm:$0xff]
        %v7060 = vld [vmem:[%s6270 + $0x192] sm:$0xff]
        %v7061 = vld [vmem:[%s6270 + $0x1a2] sm:$0xff]
        %v7062 = vld [vmem:[%s6270 + $0x1b2] sm:$0xff]
        %v7063 = vld [vmem:[%s6270 + $0x1e2] sm:$0xff]
        %v7064 = vld [vmem:[%s6270 + $0x1f2] sm:$0xff]
        %v7065 = vld [vmem:[%s6270 + $0x202] sm:$0xff]
        %v7066 = vld [vmem:[%s6270 + $0x212] sm:$0xff]
        %v7067 = vld [vmem:[%s6270 + $0x222] sm:$0xff]
        %v7068 = vld [vmem:[%s6270 + $0x232] sm:$0xff]
        %v7069 = vld [vmem:[%s6270 + $0x242] sm:$0xff]
        %v7070 = vld [vmem:[%s6270 + $0x252] sm:$0xff]
        %v7071 = vld [vmem:[%s6270 + $0x282] sm:$0xff]
        %v7072 = vld [vmem:[%s6270 + $0x292] sm:$0xff]
        %v7073 = vld [vmem:[%s6270 + $0x2a2] sm:$0xff]
        %v7074 = vld [vmem:[%s6270 + $0x2b2] sm:$0xff]
        %v7075 = vld [vmem:[%s6270 + $0x2c2] sm:$0xff]
        %v7076 = vld [vmem:[%s6270 + $0x2d2] sm:$0xff]
        %v7077 = vld [vmem:[%s6270 + $0x2e2] sm:$0xff]
        %v7078 = vld [vmem:[%s6270 + $0x2f2] sm:$0xff]
        %v7079 = vld [vmem:[%s6270 + $0x322] sm:$0xff]
        %v7080 = vld [vmem:[%s6270 + $0x332] sm:$0xff]
        %v7081 = vld [vmem:[%s6270 + $0x342] sm:$0xff]
        %v7082 = vld [vmem:[%s6270 + $0x352] sm:$0xff]
        %v7083 = vld [vmem:[%s6270 + $0x362] sm:$0xff]
        %v7084 = vld [vmem:[%s6270 + $0x372] sm:$0xff]
        %v7085 = vld [vmem:[%s6270 + $0x382] sm:$0xff]
        %v7086 = vld [vmem:[%s6270 + $0x392] sm:$0xff]
        %v7087 = vld [vmem:[%s6270 + $0x3c2] sm:$0xff]
        %v7088 = vld [vmem:[%s6270 + $0x3d2] sm:$0xff]
        %v7089 = vld [vmem:[%s6270 + $0x3e2] sm:$0xff]
        %v7090 = vld [vmem:[%s6270 + $0x3f2] sm:$0xff]
        %v7091 = vld [vmem:[%s6270 + $0x402] sm:$0xff]
        %v7092 = vld [vmem:[%s6270 + $0x412] sm:$0xff]
        %v7093 = vld [vmem:[%s6270 + $0x422] sm:$0xff]
        %v7094 = vld [vmem:[%s6270 + $0x432] sm:$0xff]
        %v7095 = vld [vmem:[%s6270 + $0x462] sm:$0xff]
        %v7096 = vld [vmem:[%s6270 + $0x472] sm:$0xff]
        %v7097 = vld [vmem:[%s6270 + $0x482] sm:$0xff]
        %v7098 = vld [vmem:[%s6270 + $0x492] sm:$0xff]
        %v7099 = vld [vmem:[%s6270 + $0x4a2] sm:$0xff]
        %v7100 = vld [vmem:[%s6270 + $0x4b2] sm:$0xff]
        %v7101 = vld [vmem:[%s6270 + $0x4c2] sm:$0xff]
        %v7102 = vld [vmem:[%s6270 + $0x4d2] sm:$0xff]
        %7103 = vst.msk [vmem:[#allocation4 + $0x10] sm:$0xff] %vm3287, %v7039
        %7104 = vst.msk [vmem:[#allocation4 + $0x28] sm:$0xff] %vm3287, %v7040
        %7105 = vst.msk [vmem:[#allocation4 + $0x40] sm:$0xff] %vm3287, %v7041
        %7106 = vst.msk [vmem:[#allocation4 + $0x58] sm:$0xff] %vm3287, %v7042
        %7107 = vst.msk [vmem:[#allocation4 + $0x70] sm:$0xff] %vm3287, %v7043
        %7108 = vst.msk [vmem:[#allocation4 + $0x88] sm:$0xff] %vm3287, %v7044
        %7109 = vst.msk [vmem:[#allocation4 + $0xa0] sm:$0xff] %vm3287, %v7045
        %7110 = vst.msk [vmem:[#allocation4 + $0xb8] sm:$0xff] %vm3287, %v7046
        %7111 = vst.msk [vmem:[#allocation4 + $0xd0] sm:$0xff] %vm3287, %v7047
        %7112 = vst.msk [vmem:[#allocation4 + $0xe8] sm:$0xff] %vm3287, %v7048
        %7113 = vst.msk [vmem:[#allocation4 + $0x100] sm:$0xff] %vm3287, %v7049
        %7114 = vst.msk [vmem:[#allocation4 + $0x118] sm:$0xff] %vm3287, %v7050
        %7115 = vst.msk [vmem:[#allocation4 + $0x130] sm:$0xff] %vm3287, %v7051
        %7116 = vst.msk [vmem:[#allocation4 + $0x148] sm:$0xff] %vm3287, %v7052
        %7117 = vst.msk [vmem:[#allocation4 + $0x160] sm:$0xff] %vm3287, %v7053
        %7118 = vst.msk [vmem:[#allocation4 + $0x178] sm:$0xff] %vm3287, %v7054
        %7119 = vst.msk [vmem:[#allocation4 + $0x190] sm:$0xff] %vm3287, %v7055
        %7120 = vst.msk [vmem:[#allocation4 + $0x1a8] sm:$0xff] %vm3287, %v7056
        %7121 = vst.msk [vmem:[#allocation4 + $0x1c0] sm:$0xff] %vm3287, %v7057
        %7122 = vst.msk [vmem:[#allocation4 + $0x1d8] sm:$0xff] %vm3287, %v7058
        %7123 = vst.msk [vmem:[#allocation4 + $0x1f0] sm:$0xff] %vm3287, %v7059
        %7124 = vst.msk [vmem:[#allocation4 + $0x208] sm:$0xff] %vm3287, %v7060
        %7125 = vst.msk [vmem:[#allocation4 + $0x220] sm:$0xff] %vm3287, %v7061
        %7126 = vst.msk [vmem:[#allocation4 + $0x238] sm:$0xff] %vm3287, %v7062
        %7127 = vst.msk [vmem:[#allocation4 + $0x250] sm:$0xff] %vm3287, %v7063
        %7128 = vst.msk [vmem:[#allocation4 + $0x268] sm:$0xff] %vm3287, %v7064
        %7129 = vst.msk [vmem:[#allocation4 + $0x280] sm:$0xff] %vm3287, %v7065
        %7130 = vst.msk [vmem:[#allocation4 + $0x298] sm:$0xff] %vm3287, %v7066
        %7131 = vst.msk [vmem:[#allocation4 + $0x2b0] sm:$0xff] %vm3287, %v7067
        %7132 = vst.msk [vmem:[#allocation4 + $0x2c8] sm:$0xff] %vm3287, %v7068
        %7133 = vst.msk [vmem:[#allocation4 + $0x2e0] sm:$0xff] %vm3287, %v7069
        %7134 = vst.msk [vmem:[#allocation4 + $0x2f8] sm:$0xff] %vm3287, %v7070
        %7135 = vst.msk [vmem:[#allocation4 + $0x310] sm:$0xff] %vm3287, %v7071
        %7136 = vst.msk [vmem:[#allocation4 + $0x328] sm:$0xff] %vm3287, %v7072
        %7137 = vst.msk [vmem:[#allocation4 + $0x340] sm:$0xff] %vm3287, %v7073
        %7138 = vst.msk [vmem:[#allocation4 + $0x358] sm:$0xff] %vm3287, %v7074
        %7139 = vst.msk [vmem:[#allocation4 + $0x370] sm:$0xff] %vm3287, %v7075
        %7140 = vst.msk [vmem:[#allocation4 + $0x388] sm:$0xff] %vm3287, %v7076
        %7141 = vst.msk [vmem:[#allocation4 + $0x3a0] sm:$0xff] %vm3287, %v7077
        %7142 = vst.msk [vmem:[#allocation4 + $0x3b8] sm:$0xff] %vm3287, %v7078
        %7143 = vst.msk [vmem:[#allocation4 + $0x3d0] sm:$0xff] %vm3287, %v7079
        %7144 = vst.msk [vmem:[#allocation4 + $0x3e8] sm:$0xff] %vm3287, %v7080
        %7145 = vst.msk [vmem:[#allocation4 + $0x400] sm:$0xff] %vm3287, %v7081
        %7146 = vst.msk [vmem:[#allocation4 + $0x418] sm:$0xff] %vm3287, %v7082
        %7147 = vst.msk [vmem:[#allocation4 + $0x430] sm:$0xff] %vm3287, %v7083
        %7148 = vst.msk [vmem:[#allocation4 + $0x448] sm:$0xff] %vm3287, %v7084
        %7149 = vst.msk [vmem:[#allocation4 + $0x460] sm:$0xff] %vm3287, %v7085
        %7150 = vst.msk [vmem:[#allocation4 + $0x478] sm:$0xff] %vm3287, %v7086
        %7151 = vst.msk [vmem:[#allocation4 + $0x490] sm:$0xff] %vm3287, %v7087
        %7152 = vst.msk [vmem:[#allocation4 + $0x4a8] sm:$0xff] %vm3287, %v7088
        %7153 = vst.msk [vmem:[#allocation4 + $0x4c0] sm:$0xff] %vm3287, %v7089
        %7154 = vst.msk [vmem:[#allocation4 + $0x4d8] sm:$0xff] %vm3287, %v7090
        %7155 = vst.msk [vmem:[#allocation4 + $0x4f0] sm:$0xff] %vm3287, %v7091
        %7156 = vst.msk [vmem:[#allocation4 + $0x508] sm:$0xff] %vm3287, %v7092
        %7157 = vst.msk [vmem:[#allocation4 + $0x520] sm:$0xff] %vm3287, %v7093
        %7158 = vst.msk [vmem:[#allocation4 + $0x538] sm:$0xff] %vm3287, %v7094
        %7159 = vst.msk [vmem:[#allocation4 + $0x550] sm:$0xff] %vm3287, %v7095
        %7160 = vst.msk [vmem:[#allocation4 + $0x568] sm:$0xff] %vm3287, %v7096
        %7161 = vst.msk [vmem:[#allocation4 + $0x580] sm:$0xff] %vm3287, %v7097
        %7162 = vst.msk [vmem:[#allocation4 + $0x598] sm:$0xff] %vm3287, %v7098
        %7163 = vst.msk [vmem:[#allocation4 + $0x5b0] sm:$0xff] %vm3287, %v7099
        %7164 = vst.msk [vmem:[#allocation4 + $0x5c8] sm:$0xff] %vm3287, %v7100
        %7165 = vst.msk [vmem:[#allocation4 + $0x5e0] sm:$0xff] %vm3287, %v7101
        %7166 = vst.msk [vmem:[#allocation4 + $0x5f8] sm:$0xff] %vm3287, %v7102
        %v7167 = vld [vmem:[#allocation4] sm:$0xff]
        %v7168 = vld [vmem:[#allocation4 + $0x8] sm:$0xff]
        %v7169 = vld [vmem:[#allocation4 + $0x10] sm:$0xff]
        %v7170 = vld [vmem:[#allocation4 + $0x18] sm:$0xff]
        %v7171 = vld [vmem:[#allocation4 + $0x20] sm:$0xff]
        %v7172 = vld [vmem:[#allocation4 + $0x28] sm:$0xff]
        %v7173 = vld [vmem:[#allocation4 + $0x30] sm:$0xff]
        %v7174 = vld [vmem:[#allocation4 + $0x38] sm:$0xff]
        %v7175 = vld [vmem:[#allocation4 + $0x40] sm:$0xff]
        %v7176 = vld [vmem:[#allocation4 + $0x48] sm:$0xff]
        %v7177 = vld [vmem:[#allocation4 + $0x50] sm:$0xff]
        %v7178 = vld [vmem:[#allocation4 + $0x58] sm:$0xff]
        %v7179 = vld [vmem:[#allocation4 + $0x60] sm:$0xff]
        %v7180 = vld [vmem:[#allocation4 + $0x68] sm:$0xff]
        %v7181 = vld [vmem:[#allocation4 + $0x70] sm:$0xff]
        %v7182 = vld [vmem:[#allocation4 + $0x78] sm:$0xff]
        %v7183 = vld [vmem:[#allocation4 + $0x80] sm:$0xff]
        %v7184 = vld [vmem:[#allocation4 + $0x88] sm:$0xff]
        %v7185 = vld [vmem:[#allocation4 + $0x90] sm:$0xff]
        %v7186 = vld [vmem:[#allocation4 + $0x98] sm:$0xff]
        %v7187 = vld [vmem:[#allocation4 + $0xa0] sm:$0xff]
        %v7188 = vld [vmem:[#allocation4 + $0xa8] sm:$0xff]
        %v7189 = vld [vmem:[#allocation4 + $0xb0] sm:$0xff]
        %v7190 = vld [vmem:[#allocation4 + $0xb8] sm:$0xff]
        %v7191 = vld [vmem:[#allocation4 + $0xc0] sm:$0xff]
        %v7192 = vld [vmem:[#allocation4 + $0xc8] sm:$0xff]
        %v7193 = vld [vmem:[#allocation4 + $0xd0] sm:$0xff]
        %v7194 = vld [vmem:[#allocation4 + $0xd8] sm:$0xff]
        %v7195 = vld [vmem:[#allocation4 + $0xe0] sm:$0xff]
        %v7196 = vld [vmem:[#allocation4 + $0xe8] sm:$0xff]
        %v7197 = vld [vmem:[#allocation4 + $0xf0] sm:$0xff]
        %v7198 = vld [vmem:[#allocation4 + $0xf8] sm:$0xff]
        %v7199 = vld [vmem:[#allocation4 + $0x100] sm:$0xff]
        %v7200 = vld [vmem:[#allocation4 + $0x108] sm:$0xff]
        %v7201 = vld [vmem:[#allocation4 + $0x110] sm:$0xff]
        %v7202 = vld [vmem:[#allocation4 + $0x118] sm:$0xff]
        %v7203 = vld [vmem:[#allocation4 + $0x120] sm:$0xff]
        %v7204 = vld [vmem:[#allocation4 + $0x128] sm:$0xff]
        %v7205 = vld [vmem:[#allocation4 + $0x130] sm:$0xff]
        %v7206 = vld [vmem:[#allocation4 + $0x138] sm:$0xff]
        %v7207 = vld [vmem:[#allocation4 + $0x140] sm:$0xff]
        %v7208 = vld [vmem:[#allocation4 + $0x148] sm:$0xff]
        %v7209 = vld [vmem:[#allocation4 + $0x150] sm:$0xff]
        %v7210 = vld [vmem:[#allocation4 + $0x158] sm:$0xff]
        %v7211 = vld [vmem:[#allocation4 + $0x160] sm:$0xff]
        %v7212 = vld [vmem:[#allocation4 + $0x168] sm:$0xff]
        %v7213 = vld [vmem:[#allocation4 + $0x170] sm:$0xff]
        %v7214 = vld [vmem:[#allocation4 + $0x178] sm:$0xff]
        %v7215 = vld [vmem:[#allocation4 + $0x180] sm:$0xff]
        %v7216 = vld [vmem:[#allocation4 + $0x188] sm:$0xff]
        %v7217 = vld [vmem:[#allocation4 + $0x190] sm:$0xff]
        %v7218 = vld [vmem:[#allocation4 + $0x198] sm:$0xff]
        %v7219 = vld [vmem:[#allocation4 + $0x1a0] sm:$0xff]
        %v7220 = vld [vmem:[#allocation4 + $0x1a8] sm:$0xff]
        %v7221 = vld [vmem:[#allocation4 + $0x1b0] sm:$0xff]
        %v7222 = vld [vmem:[#allocation4 + $0x1b8] sm:$0xff]
        %v7223 = vld [vmem:[#allocation4 + $0x1c0] sm:$0xff]
        %v7224 = vld [vmem:[#allocation4 + $0x1c8] sm:$0xff]
        %v7225 = vld [vmem:[#allocation4 + $0x1d0] sm:$0xff]
        %v7226 = vld [vmem:[#allocation4 + $0x1d8] sm:$0xff]
        %v7227 = vld [vmem:[#allocation4 + $0x1e0] sm:$0xff]
        %v7228 = vld [vmem:[#allocation4 + $0x1e8] sm:$0xff]
        %v7229 = vld [vmem:[#allocation4 + $0x1f0] sm:$0xff]
        %v7230 = vld [vmem:[#allocation4 + $0x1f8] sm:$0xff]
        %v7231 = vld [vmem:[#allocation4 + $0x200] sm:$0xff]
        %v7232 = vld [vmem:[#allocation4 + $0x208] sm:$0xff]
        %v7233 = vld [vmem:[#allocation4 + $0x210] sm:$0xff]
        %v7234 = vld [vmem:[#allocation4 + $0x218] sm:$0xff]
        %v7235 = vld [vmem:[#allocation4 + $0x220] sm:$0xff]
        %v7236 = vld [vmem:[#allocation4 + $0x228] sm:$0xff]
        %v7237 = vld [vmem:[#allocation4 + $0x230] sm:$0xff]
        %v7238 = vld [vmem:[#allocation4 + $0x238] sm:$0xff]
        %v7239 = vld [vmem:[#allocation4 + $0x240] sm:$0xff]
        %v7240 = vld [vmem:[#allocation4 + $0x248] sm:$0xff]
        %v7241 = vld [vmem:[#allocation4 + $0x250] sm:$0xff]
        %v7242 = vld [vmem:[#allocation4 + $0x258] sm:$0xff]
        %v7243 = vld [vmem:[#allocation4 + $0x260] sm:$0xff]
        %v7244 = vld [vmem:[#allocation4 + $0x268] sm:$0xff]
        %v7245 = vld [vmem:[#allocation4 + $0x270] sm:$0xff]
        %v7246 = vld [vmem:[#allocation4 + $0x278] sm:$0xff]
        %v7247 = vld [vmem:[#allocation4 + $0x280] sm:$0xff]
        %v7248 = vld [vmem:[#allocation4 + $0x288] sm:$0xff]
        %v7249 = vld [vmem:[#allocation4 + $0x290] sm:$0xff]
        %v7250 = vld [vmem:[#allocation4 + $0x298] sm:$0xff]
        %v7251 = vld [vmem:[#allocation4 + $0x2a0] sm:$0xff]
        %v7252 = vld [vmem:[#allocation4 + $0x2a8] sm:$0xff]
        %v7253 = vld [vmem:[#allocation4 + $0x2b0] sm:$0xff]
        %v7254 = vld [vmem:[#allocation4 + $0x2b8] sm:$0xff]
        %v7255 = vld [vmem:[#allocation4 + $0x2c0] sm:$0xff]
        %v7256 = vld [vmem:[#allocation4 + $0x2c8] sm:$0xff]
        %v7257 = vld [vmem:[#allocation4 + $0x2d0] sm:$0xff]
        %v7258 = vld [vmem:[#allocation4 + $0x2d8] sm:$0xff]
        %v7259 = vld [vmem:[#allocation4 + $0x2e0] sm:$0xff]
        %v7260 = vld [vmem:[#allocation4 + $0x2e8] sm:$0xff]
        %v7261 = vld [vmem:[#allocation4 + $0x2f0] sm:$0xff]
        %v7262 = vld [vmem:[#allocation4 + $0x2f8] sm:$0xff]
        %v7263 = vld [vmem:[#allocation4 + $0x300] sm:$0xff]
        %v7264 = vld [vmem:[#allocation4 + $0x308] sm:$0xff]
        %v7265 = vld [vmem:[#allocation4 + $0x310] sm:$0xff]
        %v7266 = vld [vmem:[#allocation4 + $0x318] sm:$0xff]
        %v7267 = vld [vmem:[#allocation4 + $0x320] sm:$0xff]
        %v7268 = vld [vmem:[#allocation4 + $0x328] sm:$0xff]
        %v7269 = vld [vmem:[#allocation4 + $0x330] sm:$0xff]
        %v7270 = vld [vmem:[#allocation4 + $0x338] sm:$0xff]
        %v7271 = vld [vmem:[#allocation4 + $0x340] sm:$0xff]
        %v7272 = vld [vmem:[#allocation4 + $0x348] sm:$0xff]
        %v7273 = vld [vmem:[#allocation4 + $0x350] sm:$0xff]
        %v7274 = vld [vmem:[#allocation4 + $0x358] sm:$0xff]
        %v7275 = vld [vmem:[#allocation4 + $0x360] sm:$0xff]
        %v7276 = vld [vmem:[#allocation4 + $0x368] sm:$0xff]
        %v7277 = vld [vmem:[#allocation4 + $0x370] sm:$0xff]
        %v7278 = vld [vmem:[#allocation4 + $0x378] sm:$0xff]
        %v7279 = vld [vmem:[#allocation4 + $0x380] sm:$0xff]
        %v7280 = vld [vmem:[#allocation4 + $0x388] sm:$0xff]
        %v7281 = vld [vmem:[#allocation4 + $0x390] sm:$0xff]
        %v7282 = vld [vmem:[#allocation4 + $0x398] sm:$0xff]
        %v7283 = vld [vmem:[#allocation4 + $0x3a0] sm:$0xff]
        %v7284 = vld [vmem:[#allocation4 + $0x3a8] sm:$0xff]
        %v7285 = vld [vmem:[#allocation4 + $0x3b0] sm:$0xff]
        %v7286 = vld [vmem:[#allocation4 + $0x3b8] sm:$0xff]
        %v7287 = vld [vmem:[#allocation4 + $0x3c0] sm:$0xff]
        %v7288 = vld [vmem:[#allocation4 + $0x3c8] sm:$0xff]
        %v7289 = vld [vmem:[#allocation4 + $0x3d0] sm:$0xff]
        %v7290 = vld [vmem:[#allocation4 + $0x3d8] sm:$0xff]
        %v7291 = vld [vmem:[#allocation4 + $0x3e0] sm:$0xff]
        %v7292 = vld [vmem:[#allocation4 + $0x3e8] sm:$0xff]
        %v7293 = vld [vmem:[#allocation4 + $0x3f0] sm:$0xff]
        %v7294 = vld [vmem:[#allocation4 + $0x3f8] sm:$0xff]
        %v7295 = vld [vmem:[#allocation4 + $0x400] sm:$0xff]
        %v7296 = vld [vmem:[#allocation4 + $0x408] sm:$0xff]
        %v7297 = vld [vmem:[#allocation4 + $0x410] sm:$0xff]
        %v7298 = vld [vmem:[#allocation4 + $0x418] sm:$0xff]
        %v7299 = vld [vmem:[#allocation4 + $0x420] sm:$0xff]
        %v7300 = vld [vmem:[#allocation4 + $0x428] sm:$0xff]
        %v7301 = vld [vmem:[#allocation4 + $0x430] sm:$0xff]
        %v7302 = vld [vmem:[#allocation4 + $0x438] sm:$0xff]
        %v7303 = vld [vmem:[#allocation4 + $0x440] sm:$0xff]
        %v7304 = vld [vmem:[#allocation4 + $0x448] sm:$0xff]
        %v7305 = vld [vmem:[#allocation4 + $0x450] sm:$0xff]
        %v7306 = vld [vmem:[#allocation4 + $0x458] sm:$0xff]
        %v7307 = vld [vmem:[#allocation4 + $0x460] sm:$0xff]
        %v7308 = vld [vmem:[#allocation4 + $0x468] sm:$0xff]
        %v7309 = vld [vmem:[#allocation4 + $0x470] sm:$0xff]
        %v7310 = vld [vmem:[#allocation4 + $0x478] sm:$0xff]
        %v7311 = vld [vmem:[#allocation4 + $0x480] sm:$0xff]
        %v7312 = vld [vmem:[#allocation4 + $0x488] sm:$0xff]
        %v7313 = vld [vmem:[#allocation4 + $0x490] sm:$0xff]
        %v7314 = vld [vmem:[#allocation4 + $0x498] sm:$0xff]
        %v7315 = vld [vmem:[#allocation4 + $0x4a0] sm:$0xff]
        %v7316 = vld [vmem:[#allocation4 + $0x4a8] sm:$0xff]
        %v7317 = vld [vmem:[#allocation4 + $0x4b0] sm:$0xff]
        %v7318 = vld [vmem:[#allocation4 + $0x4b8] sm:$0xff]
        %v7319 = vld [vmem:[#allocation4 + $0x4c0] sm:$0xff]
        %v7320 = vld [vmem:[#allocation4 + $0x4c8] sm:$0xff]
        %v7321 = vld [vmem:[#allocation4 + $0x4d0] sm:$0xff]
        %v7322 = vld [vmem:[#allocation4 + $0x4d8] sm:$0xff]
        %v7323 = vld [vmem:[#allocation4 + $0x4e0] sm:$0xff]
        %v7324 = vld [vmem:[#allocation4 + $0x4e8] sm:$0xff]
        %v7325 = vld [vmem:[#allocation4 + $0x4f0] sm:$0xff]
        %v7326 = vld [vmem:[#allocation4 + $0x4f8] sm:$0xff]
        %v7327 = vld [vmem:[#allocation4 + $0x500] sm:$0xff]
        %v7328 = vld [vmem:[#allocation4 + $0x508] sm:$0xff]
        %v7329 = vld [vmem:[#allocation4 + $0x510] sm:$0xff]
        %v7330 = vld [vmem:[#allocation4 + $0x518] sm:$0xff]
        %v7331 = vld [vmem:[#allocation4 + $0x520] sm:$0xff]
        %v7332 = vld [vmem:[#allocation4 + $0x528] sm:$0xff]
        %v7333 = vld [vmem:[#allocation4 + $0x530] sm:$0xff]
        %v7334 = vld [vmem:[#allocation4 + $0x538] sm:$0xff]
        %v7335 = vld [vmem:[#allocation4 + $0x540] sm:$0xff]
        %v7336 = vld [vmem:[#allocation4 + $0x548] sm:$0xff]
        %v7337 = vld [vmem:[#allocation4 + $0x550] sm:$0xff]
        %v7338 = vld [vmem:[#allocation4 + $0x558] sm:$0xff]
        %v7339 = vld [vmem:[#allocation4 + $0x560] sm:$0xff]
        %v7340 = vld [vmem:[#allocation4 + $0x568] sm:$0xff]
        %v7341 = vld [vmem:[#allocation4 + $0x570] sm:$0xff]
        %v7342 = vld [vmem:[#allocation4 + $0x578] sm:$0xff]
        %v7343 = vld [vmem:[#allocation4 + $0x580] sm:$0xff]
        %v7344 = vld [vmem:[#allocation4 + $0x588] sm:$0xff]
        %v7345 = vld [vmem:[#allocation4 + $0x590] sm:$0xff]
        %v7346 = vld [vmem:[#allocation4 + $0x598] sm:$0xff]
        %v7347 = vld [vmem:[#allocation4 + $0x5a0] sm:$0xff]
        %v7348 = vld [vmem:[#allocation4 + $0x5a8] sm:$0xff]
        %v7349 = vld [vmem:[#allocation4 + $0x5b0] sm:$0xff]
        %v7350 = vld [vmem:[#allocation4 + $0x5b8] sm:$0xff]
        %v7351 = vld [vmem:[#allocation4 + $0x5c0] sm:$0xff]
        %v7352 = vld [vmem:[#allocation4 + $0x5c8] sm:$0xff]
        %v7353 = vld [vmem:[#allocation4 + $0x5d0] sm:$0xff]
        %v7354 = vld [vmem:[#allocation4 + $0x5d8] sm:$0xff]
        %v7355 = vld [vmem:[#allocation4 + $0x5e0] sm:$0xff]
        %v7356 = vld [vmem:[#allocation4 + $0x5e8] sm:$0xff]
        %v7357 = vld [vmem:[#allocation4 + $0x5f0] sm:$0xff]
        %v7358 = vld [vmem:[#allocation4 + $0x5f8] sm:$0xff]
        %v7359 = vld [vmem:[%s3] sm:$0xff]
        %v7360 = vld [vmem:[%s3 + $0x8] sm:$0xff]
        %v7361 = vld [vmem:[%s3 + $0x10] sm:$0xff]
        %v7362 = vld [vmem:[%s3 + $0x18] sm:$0xff]
        %v7363 = vld [vmem:[%s3 + $0x20] sm:$0xff]
        %v7364 = vld [vmem:[%s3 + $0x28] sm:$0xff]
        %v7365 = vld [vmem:[%s3 + $0x30] sm:$0xff]
        %v7366 = vld [vmem:[%s3 + $0x38] sm:$0xff]
        %v7367 = vld [vmem:[%s3 + $0x40] sm:$0xff]
        %v7368 = vld [vmem:[%s3 + $0x48] sm:$0xff]
        %v7369 = vld [vmem:[%s3 + $0x50] sm:$0xff]
        %v7370 = vld [vmem:[%s3 + $0x58] sm:$0xff]
        %v7371 = vld [vmem:[%s3 + $0x60] sm:$0xff]
        %v7372 = vld [vmem:[%s3 + $0x68] sm:$0xff]
        %v7373 = vld [vmem:[%s3 + $0x70] sm:$0xff]
        %v7374 = vld [vmem:[%s3 + $0x78] sm:$0xff]
        %v7375 = vld [vmem:[%s3 + $0x80] sm:$0xff]
        %v7376 = vld [vmem:[%s3 + $0x88] sm:$0xff]
        %v7377 = vld [vmem:[%s3 + $0x90] sm:$0xff]
        %v7378 = vld [vmem:[%s3 + $0x98] sm:$0xff]
        %v7379 = vld [vmem:[%s3 + $0xa0] sm:$0xff]
        %v7380 = vld [vmem:[%s3 + $0xa8] sm:$0xff]
        %v7381 = vld [vmem:[%s3 + $0xb0] sm:$0xff]
        %v7382 = vld [vmem:[%s3 + $0xb8] sm:$0xff]
        %v7383 = vld [vmem:[%s3 + $0xc0] sm:$0xff]
        %v7384 = vld [vmem:[%s3 + $0xc8] sm:$0xff]
        %v7385 = vld [vmem:[%s3 + $0xd0] sm:$0xff]
        %v7386 = vld [vmem:[%s3 + $0xd8] sm:$0xff]
        %v7387 = vld [vmem:[%s3 + $0xe0] sm:$0xff]
        %v7388 = vld [vmem:[%s3 + $0xe8] sm:$0xff]
        %v7389 = vld [vmem:[%s3 + $0xf0] sm:$0xff]
        %v7390 = vld [vmem:[%s3 + $0xf8] sm:$0xff]
        %v7391 = vld [vmem:[%s3 + $0x100] sm:$0xff]
        %v7392 = vld [vmem:[%s3 + $0x108] sm:$0xff]
        %v7393 = vld [vmem:[%s3 + $0x110] sm:$0xff]
        %v7394 = vld [vmem:[%s3 + $0x118] sm:$0xff]
        %v7395 = vld [vmem:[%s4] sm:$0x1]
        %v7397 = vlaneseq
        %v7398 = vshrl.u32 %v7397, 7
        %v7399 = vsub.s32 0, %v7398
        %v7400 = vrot.slane %v7395, %v7399
        %v7403 = vsel %vm3287, %v7169, 0
        %v7406 = vsel %vm3287, %v7172, 0
        %v7409 = vsel %vm3287, %v7175, 0
        %v7412 = vsel %vm3287, %v7178, 0
        %v7415 = vsel %vm3287, %v7181, 0
        %v7418 = vsel %vm3287, %v7184, 0
        %v7421 = vsel %vm3287, %v7187, 0
        %v7424 = vsel %vm3287, %v7190, 0
        %v7427 = vsel %vm3287, %v7193, 0
        %v7430 = vsel %vm3287, %v7196, 0
        %v7433 = vsel %vm3287, %v7199, 0
        %v7436 = vsel %vm3287, %v7202, 0
        %v7439 = vsel %vm3287, %v7205, 0
        %v7442 = vsel %vm3287, %v7208, 0
        %v7445 = vsel %vm3287, %v7211, 0
        %v7448 = vsel %vm3287, %v7214, 0
        %v7451 = vsel %vm3287, %v7217, 0
        %v7454 = vsel %vm3287, %v7220, 0
        %v7457 = vsel %vm3287, %v7223, 0
        %v7460 = vsel %vm3287, %v7226, 0
        %v7463 = vsel %vm3287, %v7229, 0
        %v7466 = vsel %vm3287, %v7232, 0
        %v7469 = vsel %vm3287, %v7235, 0
        %v7472 = vsel %vm3287, %v7238, 0
        %v7475 = vsel %vm3287, %v7241, 0
        %v7478 = vsel %vm3287, %v7244, 0
        %v7481 = vsel %vm3287, %v7247, 0
        %v7484 = vsel %vm3287, %v7250, 0
        %v7487 = vsel %vm3287, %v7253, 0
        %v7490 = vsel %vm3287, %v7256, 0
        %v7493 = vsel %vm3287, %v7259, 0
        %v7496 = vsel %vm3287, %v7262, 0
        %v7499 = vsel %vm3287, %v7265, 0
        %v7502 = vsel %vm3287, %v7268, 0
        %v7505 = vsel %vm3287, %v7271, 0
        %v7508 = vsel %vm3287, %v7274, 0
        %v7511 = vsel %vm3287, %v7277, 0
        %v7514 = vsel %vm3287, %v7280, 0
        %v7517 = vsel %vm3287, %v7283, 0
        %v7520 = vsel %vm3287, %v7286, 0
        %v7523 = vsel %vm3287, %v7289, 0
        %v7526 = vsel %vm3287, %v7292, 0
        %v7529 = vsel %vm3287, %v7295, 0
        %v7532 = vsel %vm3287, %v7298, 0
        %v7535 = vsel %vm3287, %v7301, 0
        %v7538 = vsel %vm3287, %v7304, 0
        %v7541 = vsel %vm3287, %v7307, 0
        %v7544 = vsel %vm3287, %v7310, 0
        %v7547 = vsel %vm3287, %v7313, 0
        %v7550 = vsel %vm3287, %v7316, 0
        %v7553 = vsel %vm3287, %v7319, 0
        %v7556 = vsel %vm3287, %v7322, 0
        %v7559 = vsel %vm3287, %v7325, 0
        %v7562 = vsel %vm3287, %v7328, 0
        %v7565 = vsel %vm3287, %v7331, 0
        %v7568 = vsel %vm3287, %v7334, 0
        %v7571 = vsel %vm3287, %v7337, 0
        %v7574 = vsel %vm3287, %v7340, 0
        %v7577 = vsel %vm3287, %v7343, 0
        %v7580 = vsel %vm3287, %v7346, 0
        %v7583 = vsel %vm3287, %v7349, 0
        %v7586 = vsel %vm3287, %v7352, 0
        %v7589 = vsel %vm3287, %v7355, 0
        %v7592 = vsel %vm3287, %v7358, 0
        %7594 = vmatprep.subr.mxu0 0.0
        %7595 = vmatpush1.msra.mxu0 %v7359
        %7596 = vmatprep.subr.mxu0 0.0
        %7597 = vmatpush1.msra.mxu0 %v7360
        %7598 = vmatprep.subr.mxu0 0.0
        %7599 = vmatpush1.msra.mxu0 %v7361
        %7600 = vmatprep.subr.mxu0 0.0
        %7601 = vmatpush1.msra.mxu0 %v7362
        %7602 = vmatprep.subr.mxu0 0.0
        %7603 = vmatpush1.msra.mxu0 %v7363
        %7604 = vmatprep.subr.mxu0 0.0
        %7605 = vmatpush1.msra.mxu0 %v7364
        %7606 = vmatprep.subr.mxu0 0.0
        %7607 = vmatpush1.msra.mxu0 %v7365
        %7608 = vmatprep.subr.mxu0 0.0
        %7609 = vmatpush1.msra.mxu0 %v7366
        %7610 = vmatprep.subr.mxu0 0.0
        %7611 = vmatpush1.msra.mxu0 %v7367
        %7612 = vmatprep.subr.mxu0 0.0
        %7613 = vmatpush1.msra.mxu0 %v7368
        %7614 = vmatprep.subr.mxu0 0.0
        %7615 = vmatpush1.msra.mxu0 %v7369
        %7616 = vmatprep.subr.mxu0 0.0
        %7617 = vmatpush1.msra.mxu0 %v7370
        %7618 = vmatprep.subr.mxu0 0.0
        %7619 = vmatpush1.msra.mxu0 %v7371
        %7620 = vmatprep.subr.mxu0 0.0
        %7621 = vmatpush1.msra.mxu0 %v7372
        %7622 = vmatprep.subr.mxu0 0.0
        %7623 = vmatpush1.msra.mxu0 %v7373
        %7624 = vmatprep.subr.mxu0 0.0
        %7625 = vmatpush1.msra.mxu0 %v7374
        %7626 = vmatprep.subr.mxu0 0.0
        %7627 = vmatpush1.msra.mxu0 %v7375
        %7628 = vmatprep.subr.mxu0 0.0
        %7629 = vmatpush1.msra.mxu0 %v7376
        %7630 = vmatprep.subr.mxu0 0.0
        %7631 = vmatpush1.msra.mxu0 %v7377
        %7632 = vmatprep.subr.mxu0 0.0
        %7633 = vmatpush1.msra.mxu0 %v7378
        %7634 = vmatprep.subr.mxu0 0.0
        %7635 = vmatpush1.msra.mxu0 %v7379
        %7636 = vmatprep.subr.mxu0 0.0
        %7637 = vmatpush1.msra.mxu0 %v7380
        %7638 = vmatprep.subr.mxu0 0.0
        %7639 = vmatpush1.msra.mxu0 %v7381
        %7640 = vmatprep.subr.mxu0 0.0
        %7641 = vmatpush1.msra.mxu0 %v7382
        %7642 = vmatprep.subr.mxu0 0.0
        %7643 = vmatpush1.msra.mxu0 %v7383
        %7644 = vmatprep.subr.mxu0 0.0
        %7645 = vmatpush1.msra.mxu0 %v7384
        %7646 = vmatprep.subr.mxu0 0.0
        %7647 = vmatpush1.msra.mxu0 %v7385
        %7648 = vmatprep.subr.mxu0 0.0
        %7649 = vmatpush1.msra.mxu0 %v7386
        %7650 = vmatprep.subr.mxu0 0.0
        %7651 = vmatpush1.msra.mxu0 %v7387
        %7652 = vmatprep.subr.mxu0 0.0
        %7653 = vmatpush1.msra.mxu0 %v7388
        %7654 = vmatprep.subr.mxu0 0.0
        %7655 = vmatpush1.msra.mxu0 %v7389
        %7656 = vmatprep.subr.mxu0 0.0
        %7657 = vmatpush1.msra.mxu0 %v7390
        %7658 = vmatprep.mubr.f32.mxu0 %v7168
        %7659 = vmatmul.mubr.f32.gmra.mrb[0].mxu0 %v7167
        %v7660 = vpop.f32.mrb[0].mxu0
        %v7661 = vadd.f32 %v7400, %v7660
        %v7662 = vpop.f32.mrb[0].mxu0
        %7663 = vmatprep.mubr.f32.mxu0 %v7171
        %7664 = vmatmul.mubr.f32.gmra.mrb[0].mxu0 %v7170
        %v7665 = vpop.f32.mrb[0].mxu0
        %v7666 = vadd.f32 %v7400, %v7665
        %v7667 = vpop.f32.mrb[0].mxu0
        %7668 = vmatprep.mubr.f32.mxu0 %v7174
        %7669 = vmatmul.mubr.f32.gmra.mrb[0].mxu0 %v7173
        %v7670 = vpop.f32.mrb[0].mxu0
        %v7671 = vadd.f32 %v7400, %v7670
        %v7672 = vpop.f32.mrb[0].mxu0
        %7673 = vmatprep.mubr.f32.mxu0 %v7177
        %7674 = vmatmul.mubr.f32.gmra.mrb[0].mxu0 %v7176
        %v7675 = vpop.f32.mrb[0].mxu0
        %v7676 = vadd.f32 %v7400, %v7675
        %v7677 = vpop.f32.mrb[0].mxu0
        %7678 = vmatprep.mubr.f32.mxu0 %v7180
        %7679 = vmatmul.mubr.f32.gmra.mrb[0].mxu0 %v7179
        %v7680 = vpop.f32.mrb[0].mxu0
        %v7681 = vadd.f32 %v7400, %v7680
        %v7682 = vpop.f32.mrb[0].mxu0
        %7683 = vmatprep.mubr.f32.mxu0 %v7183
        %7684 = vmatmul.mubr.f32.gmra.mrb[0].mxu0 %v7182
        %v7685 = vpop.f32.mrb[0].mxu0
        %v7686 = vadd.f32 %v7400, %v7685
        %v7687 = vpop.f32.mrb[0].mxu0
        %7688 = vmatprep.mubr.f32.mxu0 %v7186
        %7689 = vmatmul.mubr.f32.gmra.mrb[0].mxu0 %v7185
        %v7690 = vpop.f32.mrb[0].mxu0
        %v7691 = vadd.f32 %v7400, %v7690
        %v7692 = vpop.f32.mrb[0].mxu0
        %7693 = vmatprep.mubr.f32.mxu0 %v7189
        %7694 = vmatmul.mubr.f32.gmra.mrb[0].mxu0 %v7188
        %v7695 = vpop.f32.mrb[0].mxu0
        %v7696 = vadd.f32 %v7400, %v7695
        %v7697 = vpop.f32.mrb[0].mxu0
        %7698 = vmatprep.mubr.f32.mxu0 %v7192
        %7699 = vmatmul.mubr.f32.gmra.mrb[0].mxu0 %v7191
        %v7700 = vpop.f32.mrb[0].mxu0
        %v7701 = vadd.f32 %v7400, %v7700
        %v7702 = vpop.f32.mrb[0].mxu0
        %7703 = vmatprep.mubr.f32.mxu0 %v7195
        %7704 = vmatmul.mubr.f32.gmra.mrb[0].mxu0 %v7194
        %v7705 = vpop.f32.mrb[0].mxu0
        %v7706 = vadd.f32 %v7400, %v7705
        %v7707 = vpop.f32.mrb[0].mxu0
        %7708 = vmatprep.mubr.f32.mxu0 %v7198
        %7709 = vmatmul.mubr.f32.gmra.mrb[0].mxu0 %v7197
        %v7710 = vpop.f32.mrb[0].mxu0
        %v7711 = vadd.f32 %v7400, %v7710
        %v7712 = vpop.f32.mrb[0].mxu0
        %7713 = vmatprep.mubr.f32.mxu0 %v7201
        %7714 = vmatmul.mubr.f32.gmra.mrb[0].mxu0 %v7200
        %v7715 = vpop.f32.mrb[0].mxu0
        %v7716 = vadd.f32 %v7400, %v7715
        %v7717 = vpop.f32.mrb[0].mxu0
        %7718 = vmatprep.mubr.f32.mxu0 %v7204
        %7719 = vmatmul.mubr.f32.gmra.mrb[0].mxu0 %v7203
        %v7720 = vpop.f32.mrb[0].mxu0
        %v7721 = vadd.f32 %v7400, %v7720
        %v7722 = vpop.f32.mrb[0].mxu0
        %7723 = vmatprep.mubr.f32.mxu0 %v7207
        %7724 = vmatmul.mubr.f32.gmra.mrb[0].mxu0 %v7206
        %v7725 = vpop.f32.mrb[0].mxu0
        %v7726 = vadd.f32 %v7400, %v7725
        %v7727 = vpop.f32.mrb[0].mxu0
        %7728 = vmatprep.mubr.f32.mxu0 %v7210
        %7729 = vmatmul.mubr.f32.gmra.mrb[0].mxu0 %v7209
        %v7730 = vpop.f32.mrb[0].mxu0
        %v7731 = vadd.f32 %v7400, %v7730
        %v7732 = vpop.f32.mrb[0].mxu0
        %7733 = vmatprep.mubr.f32.mxu0 %v7213
        %7734 = vmatmul.mubr.f32.gmra.mrb[0].mxu0 %v7212
        %v7735 = vpop.f32.mrb[0].mxu0
        %v7736 = vadd.f32 %v7400, %v7735
        %v7737 = vpop.f32.mrb[0].mxu0
        %7738 = vmatprep.mubr.f32.mxu0 %v7216
        %7739 = vmatmul.mubr.f32.gmra.mrb[0].mxu0 %v7215
        %v7740 = vpop.f32.mrb[0].mxu0
        %v7741 = vadd.f32 %v7400, %v7740
        %v7742 = vpop.f32.mrb[0].mxu0
        %7743 = vmatprep.mubr.f32.mxu0 %v7219
        %7744 = vmatmul.mubr.f32.gmra.mrb[0].mxu0 %v7218
        %v7745 = vpop.f32.mrb[0].mxu0
        %v7746 = vadd.f32 %v7400, %v7745
        %v7747 = vpop.f32.mrb[0].mxu0
        %7748 = vmatprep.mubr.f32.mxu0 %v7222
        %7749 = vmatmul.mubr.f32.gmra.mrb[0].mxu0 %v7221
        %v7750 = vpop.f32.mrb[0].mxu0
        %v7751 = vadd.f32 %v7400, %v7750
        %v7752 = vpop.f32.mrb[0].mxu0
        %7753 = vmatprep.mubr.f32.mxu0 %v7225
        %7754 = vmatmul.mubr.f32.gmra.mrb[0].mxu0 %v7224
        %v7755 = vpop.f32.mrb[0].mxu0
        %v7756 = vadd.f32 %v7400, %v7755
        %v7757 = vpop.f32.mrb[0].mxu0
        %7758 = vmatprep.mubr.f32.mxu0 %v7228
        %7759 = vmatmul.mubr.f32.gmra.mrb[0].mxu0 %v7227
        %v7760 = vpop.f32.mrb[0].mxu0
        %v7761 = vadd.f32 %v7400, %v7760
        %v7762 = vpop.f32.mrb[0].mxu0
        %7763 = vmatprep.mubr.f32.mxu0 %v7231
        %7764 = vmatmul.mubr.f32.gmra.mrb[0].mxu0 %v7230
        %v7765 = vpop.f32.mrb[0].mxu0
        %v7766 = vadd.f32 %v7400, %v7765
        %v7767 = vpop.f32.mrb[0].mxu0
        %7768 = vmatprep.mubr.f32.mxu0 %v7234
        %7769 = vmatmul.mubr.f32.gmra.mrb[0].mxu0 %v7233
        %v7770 = vpop.f32.mrb[0].mxu0
        %v7771 = vadd.f32 %v7400, %v7770
        %v7772 = vpop.f32.mrb[0].mxu0
        %7773 = vmatprep.mubr.f32.mxu0 %v7237
        %7774 = vmatmul.mubr.f32.gmra.mrb[0].mxu0 %v7236
        %v7775 = vpop.f32.mrb[0].mxu0
        %v7776 = vadd.f32 %v7400, %v7775
        %v7777 = vpop.f32.mrb[0].mxu0
        %7778 = vmatprep.mubr.f32.mxu0 %v7240
        %7779 = vmatmul.mubr.f32.gmra.mrb[0].mxu0 %v7239
        %v7780 = vpop.f32.mrb[0].mxu0
        %v7781 = vadd.f32 %v7400, %v7780
        %v7782 = vpop.f32.mrb[0].mxu0
        %7783 = vmatprep.mubr.f32.mxu0 %v7243
        %7784 = vmatmul.mubr.f32.gmra.mrb[0].mxu0 %v7242
        %v7785 = vpop.f32.mrb[0].mxu0
        %v7786 = vadd.f32 %v7400, %v7785
        %v7787 = vpop.f32.mrb[0].mxu0
        %7788 = vmatprep.mubr.f32.mxu0 %v7246
        %7789 = vmatmul.mubr.f32.gmra.mrb[0].mxu0 %v7245
        %v7790 = vpop.f32.mrb[0].mxu0
        %v7791 = vadd.f32 %v7400, %v7790
        %v7792 = vpop.f32.mrb[0].mxu0
        %7793 = vmatprep.mubr.f32.mxu0 %v7249
        %7794 = vmatmul.mubr.f32.gmra.mrb[0].mxu0 %v7248
        %v7795 = vpop.f32.mrb[0].mxu0
        %v7796 = vadd.f32 %v7400, %v7795
        %v7797 = vpop.f32.mrb[0].mxu0
        %7798 = vmatprep.mubr.f32.mxu0 %v7252
        %7799 = vmatmul.mubr.f32.gmra.mrb[0].mxu0 %v7251
        %v7800 = vpop.f32.mrb[0].mxu0
        %v7801 = vadd.f32 %v7400, %v7800
        %v7802 = vpop.f32.mrb[0].mxu0
        %7803 = vmatprep.mubr.f32.mxu0 %v7255
        %7804 = vmatmul.mubr.f32.gmra.mrb[0].mxu0 %v7254
        %v7805 = vpop.f32.mrb[0].mxu0
        %v7806 = vadd.f32 %v7400, %v7805
        %v7807 = vpop.f32.mrb[0].mxu0
        %7808 = vmatprep.mubr.f32.mxu0 %v7258
        %7809 = vmatmul.mubr.f32.gmra.mrb[0].mxu0 %v7257
        %v7810 = vpop.f32.mrb[0].mxu0
        %v7811 = vadd.f32 %v7400, %v7810
        %v7812 = vpop.f32.mrb[0].mxu0
        %7813 = vmatprep.mubr.f32.mxu0 %v7261
        %7814 = vmatmul.mubr.f32.gmra.mrb[0].mxu0 %v7260
        %v7815 = vpop.f32.mrb[0].mxu0
        %v7816 = vadd.f32 %v7400, %v7815
        %v7817 = vpop.f32.mrb[0].mxu0
        %7818 = vmatprep.mubr.f32.mxu0 %v7264
        %7819 = vmatmul.mubr.f32.gmra.mrb[0].mxu0 %v7263
        %v7820 = vpop.f32.mrb[0].mxu0
        %v7821 = vadd.f32 %v7400, %v7820
        %v7822 = vpop.f32.mrb[0].mxu0
        %7823 = vmatprep.mubr.f32.mxu0 %v7267
        %7824 = vmatmul.mubr.f32.gmra.mrb[0].mxu0 %v7266
        %v7825 = vpop.f32.mrb[0].mxu0
        %v7826 = vadd.f32 %v7400, %v7825
        %v7827 = vpop.f32.mrb[0].mxu0
        %7828 = vmatprep.mubr.f32.mxu0 %v7270
        %7829 = vmatmul.mubr.f32.gmra.mrb[0].mxu0 %v7269
        %v7830 = vpop.f32.mrb[0].mxu0
        %v7831 = vadd.f32 %v7400, %v7830
        %v7832 = vpop.f32.mrb[0].mxu0
        %7833 = vmatprep.mubr.f32.mxu0 %v7273
        %7834 = vmatmul.mubr.f32.gmra.mrb[0].mxu0 %v7272
        %v7835 = vpop.f32.mrb[0].mxu0
        %v7836 = vadd.f32 %v7400, %v7835
        %v7837 = vpop.f32.mrb[0].mxu0
        %7838 = vmatprep.mubr.f32.mxu0 %v7276
        %7839 = vmatmul.mubr.f32.gmra.mrb[0].mxu0 %v7275
        %v7840 = vpop.f32.mrb[0].mxu0
        %v7841 = vadd.f32 %v7400, %v7840
        %v7842 = vpop.f32.mrb[0].mxu0
        %7843 = vmatprep.mubr.f32.mxu0 %v7279
        %7844 = vmatmul.mubr.f32.gmra.mrb[0].mxu0 %v7278
        %v7845 = vpop.f32.mrb[0].mxu0
        %v7846 = vadd.f32 %v7400, %v7845
        %v7847 = vpop.f32.mrb[0].mxu0
        %7848 = vmatprep.mubr.f32.mxu0 %v7282
        %7849 = vmatmul.mubr.f32.gmra.mrb[0].mxu0 %v7281
        %v7850 = vpop.f32.mrb[0].mxu0
        %v7851 = vadd.f32 %v7400, %v7850
        %v7852 = vpop.f32.mrb[0].mxu0
        %7853 = vmatprep.mubr.f32.mxu0 %v7285
        %7854 = vmatmul.mubr.f32.gmra.mrb[0].mxu0 %v7284
        %v7855 = vpop.f32.mrb[0].mxu0
        %v7856 = vadd.f32 %v7400, %v7855
        %v7857 = vpop.f32.mrb[0].mxu0
        %7858 = vmatprep.mubr.f32.mxu0 %v7288
        %7859 = vmatmul.mubr.f32.gmra.mrb[0].mxu0 %v7287
        %v7860 = vpop.f32.mrb[0].mxu0
        %v7861 = vadd.f32 %v7400, %v7860
        %v7862 = vpop.f32.mrb[0].mxu0
        %7863 = vmatprep.mubr.f32.mxu0 %v7291
        %7864 = vmatmul.mubr.f32.gmra.mrb[0].mxu0 %v7290
        %v7865 = vpop.f32.mrb[0].mxu0
        %v7866 = vadd.f32 %v7400, %v7865
        %v7867 = vpop.f32.mrb[0].mxu0
        %7868 = vmatprep.mubr.f32.mxu0 %v7294
        %7869 = vmatmul.mubr.f32.gmra.mrb[0].mxu0 %v7293
        %v7870 = vpop.f32.mrb[0].mxu0
        %v7871 = vadd.f32 %v7400, %v7870
        %v7872 = vpop.f32.mrb[0].mxu0
        %7873 = vmatprep.mubr.f32.mxu0 %v7297
        %7874 = vmatmul.mubr.f32.gmra.mrb[0].mxu0 %v7296
        %v7875 = vpop.f32.mrb[0].mxu0
        %v7876 = vadd.f32 %v7400, %v7875
        %v7877 = vpop.f32.mrb[0].mxu0
        %7878 = vmatprep.mubr.f32.mxu0 %v7300
        %7879 = vmatmul.mubr.f32.gmra.mrb[0].mxu0 %v7299
        %v7880 = vpop.f32.mrb[0].mxu0
        %v7881 = vadd.f32 %v7400, %v7880
        %v7882 = vpop.f32.mrb[0].mxu0
        %7883 = vmatprep.mubr.f32.mxu0 %v7303
        %7884 = vmatmul.mubr.f32.gmra.mrb[0].mxu0 %v7302
        %v7885 = vpop.f32.mrb[0].mxu0
        %v7886 = vadd.f32 %v7400, %v7885
        %v7887 = vpop.f32.mrb[0].mxu0
        %7888 = vmatprep.mubr.f32.mxu0 %v7306
        %7889 = vmatmul.mubr.f32.gmra.mrb[0].mxu0 %v7305
        %v7890 = vpop.f32.mrb[0].mxu0
        %v7891 = vadd.f32 %v7400, %v7890
        %v7892 = vpop.f32.mrb[0].mxu0
        %7893 = vmatprep.mubr.f32.mxu0 %v7309
        %7894 = vmatmul.mubr.f32.gmra.mrb[0].mxu0 %v7308
        %v7895 = vpop.f32.mrb[0].mxu0
        %v7896 = vadd.f32 %v7400, %v7895
        %v7897 = vpop.f32.mrb[0].mxu0
        %7898 = vmatprep.mubr.f32.mxu0 %v7312
        %7899 = vmatmul.mubr.f32.gmra.mrb[0].mxu0 %v7311
        %v7900 = vpop.f32.mrb[0].mxu0
        %v7901 = vadd.f32 %v7400, %v7900
        %v7902 = vpop.f32.mrb[0].mxu0
        %7903 = vmatprep.mubr.f32.mxu0 %v7315
        %7904 = vmatmul.mubr.f32.gmra.mrb[0].mxu0 %v7314
        %v7905 = vpop.f32.mrb[0].mxu0
        %v7906 = vadd.f32 %v7400, %v7905
        %v7907 = vpop.f32.mrb[0].mxu0
        %7908 = vmatprep.mubr.f32.mxu0 %v7318
        %7909 = vmatmul.mubr.f32.gmra.mrb[0].mxu0 %v7317
        %v7910 = vpop.f32.mrb[0].mxu0
        %v7911 = vadd.f32 %v7400, %v7910
        %v7912 = vpop.f32.mrb[0].mxu0
        %7913 = vmatprep.mubr.f32.mxu0 %v7321
        %7914 = vmatmul.mubr.f32.gmra.mrb[0].mxu0 %v7320
        %v7915 = vpop.f32.mrb[0].mxu0
        %v7916 = vadd.f32 %v7400, %v7915
        %v7917 = vpop.f32.mrb[0].mxu0
        %7918 = vmatprep.mubr.f32.mxu0 %v7324
        %7919 = vmatmul.mubr.f32.gmra.mrb[0].mxu0 %v7323
        %v7920 = vpop.f32.mrb[0].mxu0
        %v7921 = vadd.f32 %v7400, %v7920
        %v7922 = vpop.f32.mrb[0].mxu0
        %7923 = vmatprep.mubr.f32.mxu0 %v7327
        %7924 = vmatmul.mubr.f32.gmra.mrb[0].mxu0 %v7326
        %v7925 = vpop.f32.mrb[0].mxu0
        %v7926 = vadd.f32 %v7400, %v7925
        %v7927 = vpop.f32.mrb[0].mxu0
        %7928 = vmatprep.mubr.f32.mxu0 %v7330
        %7929 = vmatmul.mubr.f32.gmra.mrb[0].mxu0 %v7329
        %v7930 = vpop.f32.mrb[0].mxu0
        %v7931 = vadd.f32 %v7400, %v7930
        %v7932 = vpop.f32.mrb[0].mxu0
        %7933 = vmatprep.mubr.f32.mxu0 %v7333
        %7934 = vmatmul.mubr.f32.gmra.mrb[0].mxu0 %v7332
        %v7935 = vpop.f32.mrb[0].mxu0
        %v7936 = vadd.f32 %v7400, %v7935
        %v7937 = vpop.f32.mrb[0].mxu0
        %7938 = vmatprep.mubr.f32.mxu0 %v7336
        %7939 = vmatmul.mubr.f32.gmra.mrb[0].mxu0 %v7335
        %v7940 = vpop.f32.mrb[0].mxu0
        %v7941 = vadd.f32 %v7400, %v7940
        %v7942 = vpop.f32.mrb[0].mxu0
        %7943 = vmatprep.mubr.f32.mxu0 %v7339
        %7944 = vmatmul.mubr.f32.gmra.mrb[0].mxu0 %v7338
        %v7945 = vpop.f32.mrb[0].mxu0
        %v7946 = vadd.f32 %v7400, %v7945
        %v7947 = vpop.f32.mrb[0].mxu0
        %7948 = vmatprep.mubr.f32.mxu0 %v7342
        %7949 = vmatmul.mubr.f32.gmra.mrb[0].mxu0 %v7341
        %v7950 = vpop.f32.mrb[0].mxu0
        %v7951 = vadd.f32 %v7400, %v7950
        %v7952 = vpop.f32.mrb[0].mxu0
        %7953 = vmatprep.mubr.f32.mxu0 %v7345
        %7954 = vmatmul.mubr.f32.gmra.mrb[0].mxu0 %v7344
        %v7955 = vpop.f32.mrb[0].mxu0
        %v7956 = vadd.f32 %v7400, %v7955
        %v7957 = vpop.f32.mrb[0].mxu0
        %7958 = vmatprep.mubr.f32.mxu0 %v7348
        %7959 = vmatmul.mubr.f32.gmra.mrb[0].mxu0 %v7347
        %v7960 = vpop.f32.mrb[0].mxu0
        %v7961 = vadd.f32 %v7400, %v7960
        %v7962 = vpop.f32.mrb[0].mxu0
        %7963 = vmatprep.mubr.f32.mxu0 %v7351
        %7964 = vmatmul.mubr.f32.gmra.mrb[0].mxu0 %v7350
        %v7965 = vpop.f32.mrb[0].mxu0
        %v7966 = vadd.f32 %v7400, %v7965
        %v7967 = vpop.f32.mrb[0].mxu0
        %7968 = vmatprep.mubr.f32.mxu0 %v7354
        %7969 = vmatmul.mubr.f32.gmra.mrb[0].mxu0 %v7353
        %v7970 = vpop.f32.mrb[0].mxu0
        %v7971 = vadd.f32 %v7400, %v7970
        %v7972 = vpop.f32.mrb[0].mxu0
        %7973 = vmatprep.mubr.f32.mxu0 %v7357
        %7974 = vmatmul.mubr.f32.gmra.mrb[0].mxu0 %v7356
        %v7975 = vpop.f32.mrb[0].mxu0
        %v7976 = vadd.f32 %v7400, %v7975
        %v7977 = vpop.f32.mrb[0].mxu0
        %7978 = vdwg.mxu0
        %7979 = vmatprep.subr.mxu0 0.0
        %7980 = vmatpush1.msra.mxu0 %v7391
        %7981 = vmatprep.subr.mxu0 0.0
        %7982 = vmatpush1.msra.mxu0 %v7392
        %7983 = vmatprep.subr.mxu0 0.0
        %7984 = vmatpush1.msra.mxu0 %v7393
        %7985 = vmatprep.subr.mxu0 0.0
        %7986 = vmatpush1.msra.mxu0 %v7394
        %7987 = vmatprep.subr.mxu0 0.0
        %7988 = vmatpush1.msra.mxu0 0.0
        %7989 = vmatprep.subr.mxu0 0.0
        %7990 = vmatpush1.msra.mxu0 0.0
        %7991 = vmatprep.subr.mxu0 0.0
        %7992 = vmatpush1.msra.mxu0 0.0
        %7993 = vmatprep.subr.mxu0 0.0
        %7994 = vmatpush1.msra.mxu0 0.0
        %7995 = vmatprep.subr.mxu0 0.0
        %7996 = vmatpush1.msra.mxu0 0.0
        %7997 = vmatprep.subr.mxu0 0.0
        %7998 = vmatpush1.msra.mxu0 0.0
        %7999 = vmatprep.subr.mxu0 0.0
        %8000 = vmatpush1.msra.mxu0 0.0
        %8001 = vmatprep.subr.mxu0 0.0
        %8002 = vmatpush1.msra.mxu0 0.0
        %8003 = vmatprep.subr.mxu0 0.0
        %8004 = vmatpush1.msra.mxu0 0.0
        %8005 = vmatprep.subr.mxu0 0.0
        %8006 = vmatpush1.msra.mxu0 0.0
        %8007 = vmatprep.subr.mxu0 0.0
        %8008 = vmatpush1.msra.mxu0 0.0
        %8009 = vmatprep.subr.mxu0 0.0
        %8010 = vmatpush1.msra.mxu0 0.0
        %8011 = vmatprep.subr.mxu0 0.0
        %8012 = vmatpush1.msra.mxu0 0.0
        %8013 = vmatprep.subr.mxu0 0.0
        %8014 = vmatpush1.msra.mxu0 0.0
        %8015 = vmatprep.subr.mxu0 0.0
        %8016 = vmatpush1.msra.mxu0 0.0
        %8017 = vmatprep.subr.mxu0 0.0
        %8018 = vmatpush1.msra.mxu0 0.0
        %8019 = vmatprep.subr.mxu0 0.0
        %8020 = vmatpush1.msra.mxu0 0.0
        %8021 = vmatprep.subr.mxu0 0.0
        %8022 = vmatpush1.msra.mxu0 0.0
        %8023 = vmatprep.subr.mxu0 0.0
        %8024 = vmatpush1.msra.mxu0 0.0
        %8025 = vmatprep.subr.mxu0 0.0
        %8026 = vmatpush1.msra.mxu0 0.0
        %8027 = vmatprep.subr.mxu0 0.0
        %8028 = vmatpush1.msra.mxu0 0.0
        %8029 = vmatprep.subr.mxu0 0.0
        %8030 = vmatpush1.msra.mxu0 0.0
        %8031 = vmatprep.subr.mxu0 0.0
        %8032 = vmatpush1.msra.mxu0 0.0
        %8033 = vmatprep.subr.mxu0 0.0
        %8034 = vmatpush1.msra.mxu0 0.0
        %8035 = vmatprep.subr.mxu0 0.0
        %8036 = vmatpush1.msra.mxu0 0.0
        %8037 = vmatprep.subr.mxu0 0.0
        %8038 = vmatpush1.msra.mxu0 0.0
        %8039 = vmatprep.subr.mxu0 0.0
        %8040 = vmatpush1.msra.mxu0 0.0
        %8041 = vmatprep.subr.mxu0 0.0
        %8042 = vmatpush1.msra.mxu0 0.0
        %8043 = vmatprep.mubr.f32.mxu0 0.0
        %8044 = vmatmul.mubr.f32.gmra.mrb[0].mxu0 %v7403
        %v8045 = vpop.f32.mrb[0].mxu0
        %v8046 = vadd.f32 %v7661, %v8045
        %v8047 = vpop.f32.mrb[0].mxu0
        %8048 = vmatprep.mubr.f32.mxu0 0.0
        %8049 = vmatmul.mubr.f32.gmra.mrb[0].mxu0 %v7406
        %v8050 = vpop.f32.mrb[0].mxu0
        %v8051 = vadd.f32 %v7666, %v8050
        %v8052 = vpop.f32.mrb[0].mxu0
        %8053 = vmatprep.mubr.f32.mxu0 0.0
        %8054 = vmatmul.mubr.f32.gmra.mrb[0].mxu0 %v7409
        %v8055 = vpop.f32.mrb[0].mxu0
        %v8056 = vadd.f32 %v7671, %v8055
        %v8057 = vpop.f32.mrb[0].mxu0
        %8058 = vmatprep.mubr.f32.mxu0 0.0
        %8059 = vmatmul.mubr.f32.gmra.mrb[0].mxu0 %v7412
        %v8060 = vpop.f32.mrb[0].mxu0
        %v8061 = vadd.f32 %v7676, %v8060
        %v8062 = vpop.f32.mrb[0].mxu0
        %8063 = vmatprep.mubr.f32.mxu0 0.0
        %8064 = vmatmul.mubr.f32.gmra.mrb[0].mxu0 %v7415
        %v8065 = vpop.f32.mrb[0].mxu0
        %v8066 = vadd.f32 %v7681, %v8065
        %v8067 = vpop.f32.mrb[0].mxu0
        %8068 = vmatprep.mubr.f32.mxu0 0.0
        %8069 = vmatmul.mubr.f32.gmra.mrb[0].mxu0 %v7418
        %v8070 = vpop.f32.mrb[0].mxu0
        %v8071 = vadd.f32 %v7686, %v8070
        %v8072 = vpop.f32.mrb[0].mxu0
        %8073 = vmatprep.mubr.f32.mxu0 0.0
        %8074 = vmatmul.mubr.f32.gmra.mrb[0].mxu0 %v7421
        %v8075 = vpop.f32.mrb[0].mxu0
        %v8076 = vadd.f32 %v7691, %v8075
        %v8077 = vpop.f32.mrb[0].mxu0
        %8078 = vmatprep.mubr.f32.mxu0 0.0
        %8079 = vmatmul.mubr.f32.gmra.mrb[0].mxu0 %v7424
        %v8080 = vpop.f32.mrb[0].mxu0
        %v8081 = vadd.f32 %v7696, %v8080
        %v8082 = vpop.f32.mrb[0].mxu0
        %8083 = vmatprep.mubr.f32.mxu0 0.0
        %8084 = vmatmul.mubr.f32.gmra.mrb[0].mxu0 %v7427
        %v8085 = vpop.f32.mrb[0].mxu0
        %v8086 = vadd.f32 %v7701, %v8085
        %v8087 = vpop.f32.mrb[0].mxu0
        %8088 = vmatprep.mubr.f32.mxu0 0.0
        %8089 = vmatmul.mubr.f32.gmra.mrb[0].mxu0 %v7430
        %v8090 = vpop.f32.mrb[0].mxu0
        %v8091 = vadd.f32 %v7706, %v8090
        %v8092 = vpop.f32.mrb[0].mxu0
        %8093 = vmatprep.mubr.f32.mxu0 0.0
        %8094 = vmatmul.mubr.f32.gmra.mrb[0].mxu0 %v7433
        %v8095 = vpop.f32.mrb[0].mxu0
        %v8096 = vadd.f32 %v7711, %v8095
        %v8097 = vpop.f32.mrb[0].mxu0
        %8098 = vmatprep.mubr.f32.mxu0 0.0
        %8099 = vmatmul.mubr.f32.gmra.mrb[0].mxu0 %v7436
        %v8100 = vpop.f32.mrb[0].mxu0
        %v8101 = vadd.f32 %v7716, %v8100
        %v8102 = vpop.f32.mrb[0].mxu0
        %8103 = vmatprep.mubr.f32.mxu0 0.0
        %8104 = vmatmul.mubr.f32.gmra.mrb[0].mxu0 %v7439
        %v8105 = vpop.f32.mrb[0].mxu0
        %v8106 = vadd.f32 %v7721, %v8105
        %v8107 = vpop.f32.mrb[0].mxu0
        %8108 = vmatprep.mubr.f32.mxu0 0.0
        %8109 = vmatmul.mubr.f32.gmra.mrb[0].mxu0 %v7442
        %v8110 = vpop.f32.mrb[0].mxu0
        %v8111 = vadd.f32 %v7726, %v8110
        %v8112 = vpop.f32.mrb[0].mxu0
        %8113 = vmatprep.mubr.f32.mxu0 0.0
        %8114 = vmatmul.mubr.f32.gmra.mrb[0].mxu0 %v7445
        %v8115 = vpop.f32.mrb[0].mxu0
        %v8116 = vadd.f32 %v7731, %v8115
        %v8117 = vpop.f32.mrb[0].mxu0
        %8118 = vmatprep.mubr.f32.mxu0 0.0
        %8119 = vmatmul.mubr.f32.gmra.mrb[0].mxu0 %v7448
        %v8120 = vpop.f32.mrb[0].mxu0
        %v8121 = vadd.f32 %v7736, %v8120
        %v8122 = vpop.f32.mrb[0].mxu0
        %8123 = vmatprep.mubr.f32.mxu0 0.0
        %8124 = vmatmul.mubr.f32.gmra.mrb[0].mxu0 %v7451
        %v8125 = vpop.f32.mrb[0].mxu0
        %v8126 = vadd.f32 %v7741, %v8125
        %v8127 = vpop.f32.mrb[0].mxu0
        %8128 = vmatprep.mubr.f32.mxu0 0.0
        %8129 = vmatmul.mubr.f32.gmra.mrb[0].mxu0 %v7454
        %v8130 = vpop.f32.mrb[0].mxu0
        %v8131 = vadd.f32 %v7746, %v8130
        %v8132 = vpop.f32.mrb[0].mxu0
        %8133 = vmatprep.mubr.f32.mxu0 0.0
        %8134 = vmatmul.mubr.f32.gmra.mrb[0].mxu0 %v7457
        %v8135 = vpop.f32.mrb[0].mxu0
        %v8136 = vadd.f32 %v7751, %v8135
        %v8137 = vpop.f32.mrb[0].mxu0
        %8138 = vmatprep.mubr.f32.mxu0 0.0
        %8139 = vmatmul.mubr.f32.gmra.mrb[0].mxu0 %v7460
        %v8140 = vpop.f32.mrb[0].mxu0
        %v8141 = vadd.f32 %v7756, %v8140
        %v8142 = vpop.f32.mrb[0].mxu0
        %8143 = vmatprep.mubr.f32.mxu0 0.0
        %8144 = vmatmul.mubr.f32.gmra.mrb[0].mxu0 %v7463
        %v8145 = vpop.f32.mrb[0].mxu0
        %v8146 = vadd.f32 %v7761, %v8145
        %v8147 = vpop.f32.mrb[0].mxu0
        %8148 = vmatprep.mubr.f32.mxu0 0.0
        %8149 = vmatmul.mubr.f32.gmra.mrb[0].mxu0 %v7466
        %v8150 = vpop.f32.mrb[0].mxu0
        %v8151 = vadd.f32 %v7766, %v8150
        %v8152 = vpop.f32.mrb[0].mxu0
        %8153 = vmatprep.mubr.f32.mxu0 0.0
        %8154 = vmatmul.mubr.f32.gmra.mrb[0].mxu0 %v7469
        %v8155 = vpop.f32.mrb[0].mxu0
        %v8156 = vadd.f32 %v7771, %v8155
        %v8157 = vpop.f32.mrb[0].mxu0
        %8158 = vmatprep.mubr.f32.mxu0 0.0
        %8159 = vmatmul.mubr.f32.gmra.mrb[0].mxu0 %v7472
        %v8160 = vpop.f32.mrb[0].mxu0
        %v8161 = vadd.f32 %v7776, %v8160
        %v8162 = vpop.f32.mrb[0].mxu0
        %8163 = vmatprep.mubr.f32.mxu0 0.0
        %8164 = vmatmul.mubr.f32.gmra.mrb[0].mxu0 %v7475
        %v8165 = vpop.f32.mrb[0].mxu0
        %v8166 = vadd.f32 %v7781, %v8165
        %v8167 = vpop.f32.mrb[0].mxu0
        %8168 = vmatprep.mubr.f32.mxu0 0.0
        %8169 = vmatmul.mubr.f32.gmra.mrb[0].mxu0 %v7478
        %v8170 = vpop.f32.mrb[0].mxu0
        %v8171 = vadd.f32 %v7786, %v8170
        %v8172 = vpop.f32.mrb[0].mxu0
        %8173 = vmatprep.mubr.f32.mxu0 0.0
        %8174 = vmatmul.mubr.f32.gmra.mrb[0].mxu0 %v7481
        %v8175 = vpop.f32.mrb[0].mxu0
        %v8176 = vadd.f32 %v7791, %v8175
        %v8177 = vpop.f32.mrb[0].mxu0
        %8178 = vmatprep.mubr.f32.mxu0 0.0
        %8179 = vmatmul.mubr.f32.gmra.mrb[0].mxu0 %v7484
        %v8180 = vpop.f32.mrb[0].mxu0
        %v8181 = vadd.f32 %v7796, %v8180
        %v8182 = vpop.f32.mrb[0].mxu0
        %8183 = vmatprep.mubr.f32.mxu0 0.0
        %8184 = vmatmul.mubr.f32.gmra.mrb[0].mxu0 %v7487
        %v8185 = vpop.f32.mrb[0].mxu0
        %v8186 = vadd.f32 %v7801, %v8185
        %v8187 = vpop.f32.mrb[0].mxu0
        %8188 = vmatprep.mubr.f32.mxu0 0.0
        %8189 = vmatmul.mubr.f32.gmra.mrb[0].mxu0 %v7490
        %v8190 = vpop.f32.mrb[0].mxu0
        %v8191 = vadd.f32 %v7806, %v8190
        %v8192 = vpop.f32.mrb[0].mxu0
        %8193 = vmatprep.mubr.f32.mxu0 0.0
        %8194 = vmatmul.mubr.f32.gmra.mrb[0].mxu0 %v7493
        %v8195 = vpop.f32.mrb[0].mxu0
        %v8196 = vadd.f32 %v7811, %v8195
        %v8197 = vpop.f32.mrb[0].mxu0
        %8198 = vmatprep.mubr.f32.mxu0 0.0
        %8199 = vmatmul.mubr.f32.gmra.mrb[0].mxu0 %v7496
        %v8200 = vpop.f32.mrb[0].mxu0
        %v8201 = vadd.f32 %v7816, %v8200
        %v8202 = vpop.f32.mrb[0].mxu0
        %8203 = vmatprep.mubr.f32.mxu0 0.0
        %8204 = vmatmul.mubr.f32.gmra.mrb[0].mxu0 %v7499
        %v8205 = vpop.f32.mrb[0].mxu0
        %v8206 = vadd.f32 %v7821, %v8205
        %v8207 = vpop.f32.mrb[0].mxu0
        %8208 = vmatprep.mubr.f32.mxu0 0.0
        %8209 = vmatmul.mubr.f32.gmra.mrb[0].mxu0 %v7502
        %v8210 = vpop.f32.mrb[0].mxu0
        %v8211 = vadd.f32 %v7826, %v8210
        %v8212 = vpop.f32.mrb[0].mxu0
        %8213 = vmatprep.mubr.f32.mxu0 0.0
        %8214 = vmatmul.mubr.f32.gmra.mrb[0].mxu0 %v7505
        %v8215 = vpop.f32.mrb[0].mxu0
        %v8216 = vadd.f32 %v7831, %v8215
        %v8217 = vpop.f32.mrb[0].mxu0
        %8218 = vmatprep.mubr.f32.mxu0 0.0
        %8219 = vmatmul.mubr.f32.gmra.mrb[0].mxu0 %v7508
        %v8220 = vpop.f32.mrb[0].mxu0
        %v8221 = vadd.f32 %v7836, %v8220
        %v8222 = vpop.f32.mrb[0].mxu0
        %8223 = vmatprep.mubr.f32.mxu0 0.0
        %8224 = vmatmul.mubr.f32.gmra.mrb[0].mxu0 %v7511
        %v8225 = vpop.f32.mrb[0].mxu0
        %v8226 = vadd.f32 %v7841, %v8225
        %v8227 = vpop.f32.mrb[0].mxu0
        %8228 = vmatprep.mubr.f32.mxu0 0.0
        %8229 = vmatmul.mubr.f32.gmra.mrb[0].mxu0 %v7514
        %v8230 = vpop.f32.mrb[0].mxu0
        %v8231 = vadd.f32 %v7846, %v8230
        %v8232 = vpop.f32.mrb[0].mxu0
        %8233 = vmatprep.mubr.f32.mxu0 0.0
        %8234 = vmatmul.mubr.f32.gmra.mrb[0].mxu0 %v7517
        %v8235 = vpop.f32.mrb[0].mxu0
        %v8236 = vadd.f32 %v7851, %v8235
        %v8237 = vpop.f32.mrb[0].mxu0
        %8238 = vmatprep.mubr.f32.mxu0 0.0
        %8239 = vmatmul.mubr.f32.gmra.mrb[0].mxu0 %v7520
        %v8240 = vpop.f32.mrb[0].mxu0
        %v8241 = vadd.f32 %v7856, %v8240
        %v8242 = vpop.f32.mrb[0].mxu0
        %8243 = vmatprep.mubr.f32.mxu0 0.0
        %8244 = vmatmul.mubr.f32.gmra.mrb[0].mxu0 %v7523
        %v8245 = vpop.f32.mrb[0].mxu0
        %v8246 = vadd.f32 %v7861, %v8245
        %v8247 = vpop.f32.mrb[0].mxu0
        %8248 = vmatprep.mubr.f32.mxu0 0.0
        %8249 = vmatmul.mubr.f32.gmra.mrb[0].mxu0 %v7526
        %v8250 = vpop.f32.mrb[0].mxu0
        %v8251 = vadd.f32 %v7866, %v8250
        %v8252 = vpop.f32.mrb[0].mxu0
        %8253 = vmatprep.mubr.f32.mxu0 0.0
        %8254 = vmatmul.mubr.f32.gmra.mrb[0].mxu0 %v7529
        %v8255 = vpop.f32.mrb[0].mxu0
        %v8256 = vadd.f32 %v7871, %v8255
        %v8257 = vpop.f32.mrb[0].mxu0
        %8258 = vmatprep.mubr.f32.mxu0 0.0
        %8259 = vmatmul.mubr.f32.gmra.mrb[0].mxu0 %v7532
        %v8260 = vpop.f32.mrb[0].mxu0
        %v8261 = vadd.f32 %v7876, %v8260
        %v8262 = vpop.f32.mrb[0].mxu0
        %8263 = vmatprep.mubr.f32.mxu0 0.0
        %8264 = vmatmul.mubr.f32.gmra.mrb[0].mxu0 %v7535
        %v8265 = vpop.f32.mrb[0].mxu0
        %v8266 = vadd.f32 %v7881, %v8265
        %v8267 = vpop.f32.mrb[0].mxu0
        %8268 = vmatprep.mubr.f32.mxu0 0.0
        %8269 = vmatmul.mubr.f32.gmra.mrb[0].mxu0 %v7538
        %v8270 = vpop.f32.mrb[0].mxu0
        %v8271 = vadd.f32 %v7886, %v8270
        %v8272 = vpop.f32.mrb[0].mxu0
        %8273 = vmatprep.mubr.f32.mxu0 0.0
        %8274 = vmatmul.mubr.f32.gmra.mrb[0].mxu0 %v7541
        %v8275 = vpop.f32.mrb[0].mxu0
        %v8276 = vadd.f32 %v7891, %v8275
        %v8277 = vpop.f32.mrb[0].mxu0
        %8278 = vmatprep.mubr.f32.mxu0 0.0
        %8279 = vmatmul.mubr.f32.gmra.mrb[0].mxu0 %v7544
        %v8280 = vpop.f32.mrb[0].mxu0
        %v8281 = vadd.f32 %v7896, %v8280
        %v8282 = vpop.f32.mrb[0].mxu0
        %8283 = vmatprep.mubr.f32.mxu0 0.0
        %8284 = vmatmul.mubr.f32.gmra.mrb[0].mxu0 %v7547
        %v8285 = vpop.f32.mrb[0].mxu0
        %v8286 = vadd.f32 %v7901, %v8285
        %v8287 = vpop.f32.mrb[0].mxu0
        %8288 = vmatprep.mubr.f32.mxu0 0.0
        %8289 = vmatmul.mubr.f32.gmra.mrb[0].mxu0 %v7550
        %v8290 = vpop.f32.mrb[0].mxu0
        %v8291 = vadd.f32 %v7906, %v8290
        %v8292 = vpop.f32.mrb[0].mxu0
        %8293 = vmatprep.mubr.f32.mxu0 0.0
        %8294 = vmatmul.mubr.f32.gmra.mrb[0].mxu0 %v7553
        %v8295 = vpop.f32.mrb[0].mxu0
        %v8296 = vadd.f32 %v7911, %v8295
        %v8297 = vpop.f32.mrb[0].mxu0
        %8298 = vmatprep.mubr.f32.mxu0 0.0
        %8299 = vmatmul.mubr.f32.gmra.mrb[0].mxu0 %v7556
        %v8300 = vpop.f32.mrb[0].mxu0
        %v8301 = vadd.f32 %v7916, %v8300
        %v8302 = vpop.f32.mrb[0].mxu0
        %8303 = vmatprep.mubr.f32.mxu0 0.0
        %8304 = vmatmul.mubr.f32.gmra.mrb[0].mxu0 %v7559
        %v8305 = vpop.f32.mrb[0].mxu0
        %v8306 = vadd.f32 %v7921, %v8305
        %v8307 = vpop.f32.mrb[0].mxu0
        %8308 = vmatprep.mubr.f32.mxu0 0.0
        %8309 = vmatmul.mubr.f32.gmra.mrb[0].mxu0 %v7562
        %v8310 = vpop.f32.mrb[0].mxu0
        %v8311 = vadd.f32 %v7926, %v8310
        %v8312 = vpop.f32.mrb[0].mxu0
        %8313 = vmatprep.mubr.f32.mxu0 0.0
        %8314 = vmatmul.mubr.f32.gmra.mrb[0].mxu0 %v7565
        %v8315 = vpop.f32.mrb[0].mxu0
        %v8316 = vadd.f32 %v7931, %v8315
        %v8317 = vpop.f32.mrb[0].mxu0
        %8318 = vmatprep.mubr.f32.mxu0 0.0
        %8319 = vmatmul.mubr.f32.gmra.mrb[0].mxu0 %v7568
        %v8320 = vpop.f32.mrb[0].mxu0
        %v8321 = vadd.f32 %v7936, %v8320
        %v8322 = vpop.f32.mrb[0].mxu0
        %8323 = vmatprep.mubr.f32.mxu0 0.0
        %8324 = vmatmul.mubr.f32.gmra.mrb[0].mxu0 %v7571
        %v8325 = vpop.f32.mrb[0].mxu0
        %v8326 = vadd.f32 %v7941, %v8325
        %v8327 = vpop.f32.mrb[0].mxu0
        %8328 = vmatprep.mubr.f32.mxu0 0.0
        %8329 = vmatmul.mubr.f32.gmra.mrb[0].mxu0 %v7574
        %v8330 = vpop.f32.mrb[0].mxu0
        %v8331 = vadd.f32 %v7946, %v8330
        %v8332 = vpop.f32.mrb[0].mxu0
        %8333 = vmatprep.mubr.f32.mxu0 0.0
        %8334 = vmatmul.mubr.f32.gmra.mrb[0].mxu0 %v7577
        %v8335 = vpop.f32.mrb[0].mxu0
        %v8336 = vadd.f32 %v7951, %v8335
        %v8337 = vpop.f32.mrb[0].mxu0
        %8338 = vmatprep.mubr.f32.mxu0 0.0
        %8339 = vmatmul.mubr.f32.gmra.mrb[0].mxu0 %v7580
        %v8340 = vpop.f32.mrb[0].mxu0
        %v8341 = vadd.f32 %v7956, %v8340
        %v8342 = vpop.f32.mrb[0].mxu0
        %8343 = vmatprep.mubr.f32.mxu0 0.0
        %8344 = vmatmul.mubr.f32.gmra.mrb[0].mxu0 %v7583
        %v8345 = vpop.f32.mrb[0].mxu0
        %v8346 = vadd.f32 %v7961, %v8345
        %v8347 = vpop.f32.mrb[0].mxu0
        %8348 = vmatprep.mubr.f32.mxu0 0.0
        %8349 = vmatmul.mubr.f32.gmra.mrb[0].mxu0 %v7586
        %v8350 = vpop.f32.mrb[0].mxu0
        %v8351 = vadd.f32 %v7966, %v8350
        %v8352 = vpop.f32.mrb[0].mxu0
        %8353 = vmatprep.mubr.f32.mxu0 0.0
        %8354 = vmatmul.mubr.f32.gmra.mrb[0].mxu0 %v7589
        %v8355 = vpop.f32.mrb[0].mxu0
        %v8356 = vadd.f32 %v7971, %v8355
        %v8357 = vpop.f32.mrb[0].mxu0
        %8358 = vmatprep.mubr.f32.mxu0 0.0
        %8359 = vmatmul.mubr.f32.gmra.mrb[0].mxu0 %v7592
        %v8360 = vpop.f32.mrb[0].mxu0
        %v8361 = vadd.f32 %v7976, %v8360
        %v8362 = vpop.f32.mrb[0].mxu0
        %8363 = vdwg.mxu0
        %v8364 = vmax.f32 %v8046, 0.0
        %v8365 = vmax.f32 %v8051, 0.0
        %v8366 = vmax.f32 %v8056, 0.0
        %v8367 = vmax.f32 %v8061, 0.0
        %v8368 = vmax.f32 %v8066, 0.0
        %v8369 = vmax.f32 %v8071, 0.0
        %v8370 = vmax.f32 %v8076, 0.0
        %v8371 = vmax.f32 %v8081, 0.0
        %v8372 = vmax.f32 %v8086, 0.0
        %v8373 = vmax.f32 %v8091, 0.0
        %v8374 = vmax.f32 %v8096, 0.0
        %v8375 = vmax.f32 %v8101, 0.0
        %v8376 = vmax.f32 %v8106, 0.0
        %v8377 = vmax.f32 %v8111, 0.0
        %v8378 = vmax.f32 %v8116, 0.0
        %v8379 = vmax.f32 %v8121, 0.0
        %v8380 = vmax.f32 %v8126, 0.0
        %v8381 = vmax.f32 %v8131, 0.0
        %v8382 = vmax.f32 %v8136, 0.0
        %v8383 = vmax.f32 %v8141, 0.0
        %v8384 = vmax.f32 %v8146, 0.0
        %v8385 = vmax.f32 %v8151, 0.0
        %v8386 = vmax.f32 %v8156, 0.0
        %v8387 = vmax.f32 %v8161, 0.0
        %v8388 = vmax.f32 %v8166, 0.0
        %v8389 = vmax.f32 %v8171, 0.0
        %v8390 = vmax.f32 %v8176, 0.0
        %v8391 = vmax.f32 %v8181, 0.0
        %v8392 = vmax.f32 %v8186, 0.0
        %v8393 = vmax.f32 %v8191, 0.0
        %v8394 = vmax.f32 %v8196, 0.0
        %v8395 = vmax.f32 %v8201, 0.0
        %v8396 = vmax.f32 %v8206, 0.0
        %v8397 = vmax.f32 %v8211, 0.0
        %v8398 = vmax.f32 %v8216, 0.0
        %v8399 = vmax.f32 %v8221, 0.0
        %v8400 = vmax.f32 %v8226, 0.0
        %v8401 = vmax.f32 %v8231, 0.0
        %v8402 = vmax.f32 %v8236, 0.0
        %v8403 = vmax.f32 %v8241, 0.0
        %v8404 = vmax.f32 %v8246, 0.0
        %v8405 = vmax.f32 %v8251, 0.0
        %v8406 = vmax.f32 %v8256, 0.0
        %v8407 = vmax.f32 %v8261, 0.0
        %v8408 = vmax.f32 %v8266, 0.0
        %v8409 = vmax.f32 %v8271, 0.0
        %v8410 = vmax.f32 %v8276, 0.0
        %v8411 = vmax.f32 %v8281, 0.0
        %v8412 = vmax.f32 %v8286, 0.0
        %v8413 = vmax.f32 %v8291, 0.0
        %v8414 = vmax.f32 %v8296, 0.0
        %v8415 = vmax.f32 %v8301, 0.0
        %v8416 = vmax.f32 %v8306, 0.0
        %v8417 = vmax.f32 %v8311, 0.0
        %v8418 = vmax.f32 %v8316, 0.0
        %v8419 = vmax.f32 %v8321, 0.0
        %v8420 = vmax.f32 %v8326, 0.0
        %v8421 = vmax.f32 %v8331, 0.0
        %v8422 = vmax.f32 %v8336, 0.0
        %v8423 = vmax.f32 %v8341, 0.0
        %v8424 = vmax.f32 %v8346, 0.0
        %v8425 = vmax.f32 %v8351, 0.0
        %v8426 = vmax.f32 %v8356, 0.0
        %v8427 = vmax.f32 %v8361, 0.0
        %vm8428 = vcmask 523264
        %8429 = vst.msk [vmem:[#allocation5] sm:$0xff] %vm8428, %v8364
        %8430 = vst.msk [vmem:[#allocation5 + $0x8] sm:$0xff] %vm8428, %v8365
        %8431 = vst.msk [vmem:[#allocation5 + $0x10] sm:$0xff] %vm8428, %v8366
        %8432 = vst.msk [vmem:[#allocation5 + $0x18] sm:$0xff] %vm8428, %v8367
        %8433 = vst.msk [vmem:[#allocation5 + $0x20] sm:$0xff] %vm8428, %v8368
        %8434 = vst.msk [vmem:[#allocation5 + $0x28] sm:$0xff] %vm8428, %v8369
        %8435 = vst.msk [vmem:[#allocation5 + $0x30] sm:$0xff] %vm8428, %v8370
        %8436 = vst.msk [vmem:[#allocation5 + $0x38] sm:$0xff] %vm8428, %v8371
        %8437 = vst.msk [vmem:[#allocation5 + $0x40] sm:$0xff] %vm8428, %v8372
        %8438 = vst.msk [vmem:[#allocation5 + $0x48] sm:$0xff] %vm8428, %v8373
        %8439 = vst.msk [vmem:[#allocation5 + $0x50] sm:$0xff] %vm8428, %v8374
        %8440 = vst.msk [vmem:[#allocation5 + $0x58] sm:$0xff] %vm8428, %v8375
        %8441 = vst.msk [vmem:[#allocation5 + $0x60] sm:$0xff] %vm8428, %v8376
        %8442 = vst.msk [vmem:[#allocation5 + $0x68] sm:$0xff] %vm8428, %v8377
        %8443 = vst.msk [vmem:[#allocation5 + $0x70] sm:$0xff] %vm8428, %v8378
        %8444 = vst.msk [vmem:[#allocation5 + $0x78] sm:$0xff] %vm8428, %v8379
        %8445 = vst.msk [vmem:[#allocation5 + $0x80] sm:$0xff] %vm8428, %v8380
        %8446 = vst.msk [vmem:[#allocation5 + $0x88] sm:$0xff] %vm8428, %v8381
        %8447 = vst.msk [vmem:[#allocation5 + $0x90] sm:$0xff] %vm8428, %v8382
        %8448 = vst.msk [vmem:[#allocation5 + $0x98] sm:$0xff] %vm8428, %v8383
        %8449 = vst.msk [vmem:[#allocation5 + $0xa0] sm:$0xff] %vm8428, %v8384
        %8450 = vst.msk [vmem:[#allocation5 + $0xa8] sm:$0xff] %vm8428, %v8385
        %8451 = vst.msk [vmem:[#allocation5 + $0xb0] sm:$0xff] %vm8428, %v8386
        %8452 = vst.msk [vmem:[#allocation5 + $0xb8] sm:$0xff] %vm8428, %v8387
        %8453 = vst.msk [vmem:[#allocation5 + $0xc0] sm:$0xff] %vm8428, %v8388
        %8454 = vst.msk [vmem:[#allocation5 + $0xc8] sm:$0xff] %vm8428, %v8389
        %8455 = vst.msk [vmem:[#allocation5 + $0xd0] sm:$0xff] %vm8428, %v8390
        %8456 = vst.msk [vmem:[#allocation5 + $0xd8] sm:$0xff] %vm8428, %v8391
        %8457 = vst.msk [vmem:[#allocation5 + $0xe0] sm:$0xff] %vm8428, %v8392
        %8458 = vst.msk [vmem:[#allocation5 + $0xe8] sm:$0xff] %vm8428, %v8393
        %8459 = vst.msk [vmem:[#allocation5 + $0xf0] sm:$0xff] %vm8428, %v8394
        %8460 = vst.msk [vmem:[#allocation5 + $0xf8] sm:$0xff] %vm8428, %v8395
        %8461 = vst.msk [vmem:[#allocation5 + $0x100] sm:$0xff] %vm8428, %v8396
        %8462 = vst.msk [vmem:[#allocation5 + $0x108] sm:$0xff] %vm8428, %v8397
        %8463 = vst.msk [vmem:[#allocation5 + $0x110] sm:$0xff] %vm8428, %v8398
        %8464 = vst.msk [vmem:[#allocation5 + $0x118] sm:$0xff] %vm8428, %v8399
        %8465 = vst.msk [vmem:[#allocation5 + $0x120] sm:$0xff] %vm8428, %v8400
        %8466 = vst.msk [vmem:[#allocation5 + $0x128] sm:$0xff] %vm8428, %v8401
        %8467 = vst.msk [vmem:[#allocation5 + $0x130] sm:$0xff] %vm8428, %v8402
        %8468 = vst.msk [vmem:[#allocation5 + $0x138] sm:$0xff] %vm8428, %v8403
        %8469 = vst.msk [vmem:[#allocation5 + $0x140] sm:$0xff] %vm8428, %v8404
        %8470 = vst.msk [vmem:[#allocation5 + $0x148] sm:$0xff] %vm8428, %v8405
        %8471 = vst.msk [vmem:[#allocation5 + $0x150] sm:$0xff] %vm8428, %v8406
        %8472 = vst.msk [vmem:[#allocation5 + $0x158] sm:$0xff] %vm8428, %v8407
        %8473 = vst.msk [vmem:[#allocation5 + $0x160] sm:$0xff] %vm8428, %v8408
        %8474 = vst.msk [vmem:[#allocation5 + $0x168] sm:$0xff] %vm8428, %v8409
        %8475 = vst.msk [vmem:[#allocation5 + $0x170] sm:$0xff] %vm8428, %v8410
        %8476 = vst.msk [vmem:[#allocation5 + $0x178] sm:$0xff] %vm8428, %v8411
        %8477 = vst.msk [vmem:[#allocation5 + $0x180] sm:$0xff] %vm8428, %v8412
        %8478 = vst.msk [vmem:[#allocation5 + $0x188] sm:$0xff] %vm8428, %v8413
        %8479 = vst.msk [vmem:[#allocation5 + $0x190] sm:$0xff] %vm8428, %v8414
        %8480 = vst.msk [vmem:[#allocation5 + $0x198] sm:$0xff] %vm8428, %v8415
        %8481 = vst.msk [vmem:[#allocation5 + $0x1a0] sm:$0xff] %vm8428, %v8416
        %8482 = vst.msk [vmem:[#allocation5 + $0x1a8] sm:$0xff] %vm8428, %v8417
        %8483 = vst.msk [vmem:[#allocation5 + $0x1b0] sm:$0xff] %vm8428, %v8418
        %8484 = vst.msk [vmem:[#allocation5 + $0x1b8] sm:$0xff] %vm8428, %v8419
        %8485 = vst.msk [vmem:[#allocation5 + $0x1c0] sm:$0xff] %vm8428, %v8420
        %8486 = vst.msk [vmem:[#allocation5 + $0x1c8] sm:$0xff] %vm8428, %v8421
        %8487 = vst.msk [vmem:[#allocation5 + $0x1d0] sm:$0xff] %vm8428, %v8422
        %8488 = vst.msk [vmem:[#allocation5 + $0x1d8] sm:$0xff] %vm8428, %v8423
        %8489 = vst.msk [vmem:[#allocation5 + $0x1e0] sm:$0xff] %vm8428, %v8424
        %8490 = vst.msk [vmem:[#allocation5 + $0x1e8] sm:$0xff] %vm8428, %v8425
        %8491 = vst.msk [vmem:[#allocation5 + $0x1f0] sm:$0xff] %vm8428, %v8426
        %8492 = vst.msk [vmem:[#allocation5 + $0x1f8] sm:$0xff] %vm8428, %v8427
        %v8493 = vld [vmem:[#allocation5] ss:$2 sm:$0xf]
        %s8494 = scalar_lea.vmem [#allocation5], 16
        %v8495 = vld [vmem:[%s8494] ss:$2 sm:$0xf]
        %s8496 = scalar_lea.vmem [#allocation5], 32
        %v8497 = vld [vmem:[%s8496] ss:$2 sm:$0xf]
        %s8498 = scalar_lea.vmem [#allocation5], 48
        %v8499 = vld [vmem:[%s8498] ss:$2 sm:$0xf]
        %s8500 = scalar_lea.vmem [#allocation5], 64
        %v8501 = vld [vmem:[%s8500] ss:$2 sm:$0xf]
        %s8502 = scalar_lea.vmem [#allocation5], 80
        %v8503 = vld [vmem:[%s8502] ss:$2 sm:$0xf]
        %s8504 = scalar_lea.vmem [#allocation5], 96
        %v8505 = vld [vmem:[%s8504] ss:$2 sm:$0xf]
        %s8506 = scalar_lea.vmem [#allocation5], 112
        %v8507 = vld [vmem:[%s8506] ss:$2 sm:$0xf]
        %s8508 = scalar_lea.vmem [#allocation5], 128
        %v8509 = vld [vmem:[%s8508] ss:$2 sm:$0xf]
        %s8510 = scalar_lea.vmem [#allocation5], 144
        %v8511 = vld [vmem:[%s8510] ss:$2 sm:$0xf]
        %s8512 = scalar_lea.vmem [#allocation5], 160
        %v8513 = vld [vmem:[%s8512] ss:$2 sm:$0xf]
        %s8514 = scalar_lea.vmem [#allocation5], 176
        %v8515 = vld [vmem:[%s8514] ss:$2 sm:$0xf]
        %s8516 = scalar_lea.vmem [#allocation5], 192
        %v8517 = vld [vmem:[%s8516] ss:$2 sm:$0xf]
        %s8518 = scalar_lea.vmem [#allocation5], 208
        %v8519 = vld [vmem:[%s8518] ss:$2 sm:$0xf]
        %s8520 = scalar_lea.vmem [#allocation5], 224
        %v8521 = vld [vmem:[%s8520] ss:$2 sm:$0xf]
        %s8522 = scalar_lea.vmem [#allocation5], 240
        %v8523 = vld [vmem:[%s8522] ss:$2 sm:$0xf]
        %s8524 = scalar_lea.vmem [#allocation5], 256
        %v8525 = vld [vmem:[%s8524] ss:$2 sm:$0xf]
        %s8526 = scalar_lea.vmem [#allocation5], 272
        %v8527 = vld [vmem:[%s8526] ss:$2 sm:$0xf]
        %s8528 = scalar_lea.vmem [#allocation5], 288
        %v8529 = vld [vmem:[%s8528] ss:$2 sm:$0xf]
        %s8530 = scalar_lea.vmem [#allocation5], 304
        %v8531 = vld [vmem:[%s8530] ss:$2 sm:$0xf]
        %s8532 = scalar_lea.vmem [#allocation5], 320
        %v8533 = vld [vmem:[%s8532] ss:$2 sm:$0xf]
        %s8534 = scalar_lea.vmem [#allocation5], 336
        %v8535 = vld [vmem:[%s8534] ss:$2 sm:$0xf]
        %s8536 = scalar_lea.vmem [#allocation5], 352
        %v8537 = vld [vmem:[%s8536] ss:$2 sm:$0xf]
        %s8538 = scalar_lea.vmem [#allocation5], 368
        %v8539 = vld [vmem:[%s8538] ss:$2 sm:$0xf]
        %s8540 = scalar_lea.vmem [#allocation5], 384
        %v8541 = vld [vmem:[%s8540] ss:$2 sm:$0xf]
        %s8542 = scalar_lea.vmem [#allocation5], 400
        %v8543 = vld [vmem:[%s8542] ss:$2 sm:$0xf]
        %s8544 = scalar_lea.vmem [#allocation5], 416
        %v8545 = vld [vmem:[%s8544] ss:$2 sm:$0xf]
        %s8546 = scalar_lea.vmem [#allocation5], 432
        %v8547 = vld [vmem:[%s8546] ss:$2 sm:$0xf]
        %s8548 = scalar_lea.vmem [#allocation5], 448
        %v8549 = vld [vmem:[%s8548] ss:$2 sm:$0xf]
        %s8550 = scalar_lea.vmem [#allocation5], 464
        %v8551 = vld [vmem:[%s8550] ss:$2 sm:$0xf]
        %s8552 = scalar_lea.vmem [#allocation5], 480
        %v8553 = vld [vmem:[%s8552] ss:$2 sm:$0xf]
        %s8554 = scalar_lea.vmem [#allocation5], 496
        %v8555 = vld [vmem:[%s8554] ss:$2 sm:$0xf]
        %s8556 = scalar_lea.vmem [#allocation5], 1
        %v8557 = vld [vmem:[%s8556] ss:$2 sm:$0xf]
        %s8558 = scalar_lea.vmem [#allocation5], 17
        %v8559 = vld [vmem:[%s8558] ss:$2 sm:$0xf]
        %s8560 = scalar_lea.vmem [#allocation5], 33
        %v8561 = vld [vmem:[%s8560] ss:$2 sm:$0xf]
        %s8562 = scalar_lea.vmem [#allocation5], 49
        %v8563 = vld [vmem:[%s8562] ss:$2 sm:$0xf]
        %s8564 = scalar_lea.vmem [#allocation5], 65
        %v8565 = vld [vmem:[%s8564] ss:$2 sm:$0xf]
        %s8566 = scalar_lea.vmem [#allocation5], 81
        %v8567 = vld [vmem:[%s8566] ss:$2 sm:$0xf]
        %s8568 = scalar_lea.vmem [#allocation5], 97
        %v8569 = vld [vmem:[%s8568] ss:$2 sm:$0xf]
        %s8570 = scalar_lea.vmem [#allocation5], 113
        %v8571 = vld [vmem:[%s8570] ss:$2 sm:$0xf]
        %s8572 = scalar_lea.vmem [#allocation5], 129
        %v8573 = vld [vmem:[%s8572] ss:$2 sm:$0xf]
        %s8574 = scalar_lea.vmem [#allocation5], 145
        %v8575 = vld [vmem:[%s8574] ss:$2 sm:$0xf]
        %s8576 = scalar_lea.vmem [#allocation5], 161
        %v8577 = vld [vmem:[%s8576] ss:$2 sm:$0xf]
        %s8578 = scalar_lea.vmem [#allocation5], 177
        %v8579 = vld [vmem:[%s8578] ss:$2 sm:$0xf]
        %s8580 = scalar_lea.vmem [#allocation5], 193
        %v8581 = vld [vmem:[%s8580] ss:$2 sm:$0xf]
        %s8582 = scalar_lea.vmem [#allocation5], 209
        %v8583 = vld [vmem:[%s8582] ss:$2 sm:$0xf]
        %s8584 = scalar_lea.vmem [#allocation5], 225
        %v8585 = vld [vmem:[%s8584] ss:$2 sm:$0xf]
        %s8586 = scalar_lea.vmem [#allocation5], 241
        %v8587 = vld [vmem:[%s8586] ss:$2 sm:$0xf]
        %s8588 = scalar_lea.vmem [#allocation5], 257
        %v8589 = vld [vmem:[%s8588] ss:$2 sm:$0xf]
        %s8590 = scalar_lea.vmem [#allocation5], 273
        %v8591 = vld [vmem:[%s8590] ss:$2 sm:$0xf]
        %s8592 = scalar_lea.vmem [#allocation5], 289
        %v8593 = vld [vmem:[%s8592] ss:$2 sm:$0xf]
        %s8594 = scalar_lea.vmem [#allocation5], 305
        %v8595 = vld [vmem:[%s8594] ss:$2 sm:$0xf]
        %s8596 = scalar_lea.vmem [#allocation5], 321
        %v8597 = vld [vmem:[%s8596] ss:$2 sm:$0xf]
        %s8598 = scalar_lea.vmem [#allocation5], 337
        %v8599 = vld [vmem:[%s8598] ss:$2 sm:$0xf]
        %s8600 = scalar_lea.vmem [#allocation5], 353
        %v8601 = vld [vmem:[%s8600] ss:$2 sm:$0xf]
        %s8602 = scalar_lea.vmem [#allocation5], 369
        %v8603 = vld [vmem:[%s8602] ss:$2 sm:$0xf]
        %s8604 = scalar_lea.vmem [#allocation5], 385
        %v8605 = vld [vmem:[%s8604] ss:$2 sm:$0xf]
        %s8606 = scalar_lea.vmem [#allocation5], 401
        %v8607 = vld [vmem:[%s8606] ss:$2 sm:$0xf]
        %s8608 = scalar_lea.vmem [#allocation5], 417
        %v8609 = vld [vmem:[%s8608] ss:$2 sm:$0xf]
        %s8610 = scalar_lea.vmem [#allocation5], 433
        %v8611 = vld [vmem:[%s8610] ss:$2 sm:$0xf]
        %s8612 = scalar_lea.vmem [#allocation5], 449
        %v8613 = vld [vmem:[%s8612] ss:$2 sm:$0xf]
        %s8614 = scalar_lea.vmem [#allocation5], 465
        %v8615 = vld [vmem:[%s8614] ss:$2 sm:$0xf]
        %s8616 = scalar_lea.vmem [#allocation5], 481
        %v8617 = vld [vmem:[%s8616] ss:$2 sm:$0xf]
        %s8618 = scalar_lea.vmem [#allocation5], 497
        %v8619 = vld [vmem:[%s8618] ss:$2 sm:$0xf]
        %v8620 = vmax.f32 %v8493, %v8557
        %v8621 = vmax.f32 %v8495, %v8559
        %v8622 = vmax.f32 %v8497, %v8561
        %v8623 = vmax.f32 %v8499, %v8563
        %v8624 = vmax.f32 %v8501, %v8565
        %v8625 = vmax.f32 %v8503, %v8567
        %v8626 = vmax.f32 %v8505, %v8569
        %v8627 = vmax.f32 %v8507, %v8571
        %v8628 = vmax.f32 %v8509, %v8573
        %v8629 = vmax.f32 %v8511, %v8575
        %v8630 = vmax.f32 %v8513, %v8577
        %v8631 = vmax.f32 %v8515, %v8579
        %v8632 = vmax.f32 %v8517, %v8581
        %v8633 = vmax.f32 %v8519, %v8583
        %v8634 = vmax.f32 %v8521, %v8585
        %v8635 = vmax.f32 %v8523, %v8587
        %v8636 = vmax.f32 %v8525, %v8589
        %v8637 = vmax.f32 %v8527, %v8591
        %v8638 = vmax.f32 %v8529, %v8593
        %v8639 = vmax.f32 %v8531, %v8595
        %v8640 = vmax.f32 %v8533, %v8597
        %v8641 = vmax.f32 %v8535, %v8599
        %v8642 = vmax.f32 %v8537, %v8601
        %v8643 = vmax.f32 %v8539, %v8603
        %v8644 = vmax.f32 %v8541, %v8605
        %v8645 = vmax.f32 %v8543, %v8607
        %v8646 = vmax.f32 %v8545, %v8609
        %v8647 = vmax.f32 %v8547, %v8611
        %v8648 = vmax.f32 %v8549, %v8613
        %v8649 = vmax.f32 %v8551, %v8615
        %v8650 = vmax.f32 %v8553, %v8617
        %v8651 = vmax.f32 %v8555, %v8619
        %s8652 = scalar_lea.vmem [#allocation5], 8
        %v8653 = vld [vmem:[%s8652] ss:$2 sm:$0xf]
        %s8654 = scalar_lea.vmem %s8652, 16 [#allocation5]
        %v8655 = vld [vmem:[%s8654] ss:$2 sm:$0xf]
        %s8656 = scalar_lea.vmem %s8652, 32 [#allocation5]
        %v8657 = vld [vmem:[%s8656] ss:$2 sm:$0xf]
        %s8658 = scalar_lea.vmem %s8652, 48 [#allocation5]
        %v8659 = vld [vmem:[%s8658] ss:$2 sm:$0xf]
        %s8660 = scalar_lea.vmem %s8652, 64 [#allocation5]
        %v8661 = vld [vmem:[%s8660] ss:$2 sm:$0xf]
        %s8662 = scalar_lea.vmem %s8652, 80 [#allocation5]
        %v8663 = vld [vmem:[%s8662] ss:$2 sm:$0xf]
        %s8664 = scalar_lea.vmem %s8652, 96 [#allocation5]
        %v8665 = vld [vmem:[%s8664] ss:$2 sm:$0xf]
        %s8666 = scalar_lea.vmem %s8652, 112 [#allocation5]
        %v8667 = vld [vmem:[%s8666] ss:$2 sm:$0xf]
        %s8668 = scalar_lea.vmem %s8652, 128 [#allocation5]
        %v8669 = vld [vmem:[%s8668] ss:$2 sm:$0xf]
        %s8670 = scalar_lea.vmem %s8652, 144 [#allocation5]
        %v8671 = vld [vmem:[%s8670] ss:$2 sm:$0xf]
        %s8672 = scalar_lea.vmem %s8652, 160 [#allocation5]
        %v8673 = vld [vmem:[%s8672] ss:$2 sm:$0xf]
        %s8674 = scalar_lea.vmem %s8652, 176 [#allocation5]
        %v8675 = vld [vmem:[%s8674] ss:$2 sm:$0xf]
        %s8676 = scalar_lea.vmem %s8652, 192 [#allocation5]
        %v8677 = vld [vmem:[%s8676] ss:$2 sm:$0xf]
        %s8678 = scalar_lea.vmem %s8652, 208 [#allocation5]
        %v8679 = vld [vmem:[%s8678] ss:$2 sm:$0xf]
        %s8680 = scalar_lea.vmem %s8652, 224 [#allocation5]
        %v8681 = vld [vmem:[%s8680] ss:$2 sm:$0xf]
        %s8682 = scalar_lea.vmem %s8652, 240 [#allocation5]
        %v8683 = vld [vmem:[%s8682] ss:$2 sm:$0xf]
        %s8684 = scalar_lea.vmem %s8652, 256 [#allocation5]
        %v8685 = vld [vmem:[%s8684] ss:$2 sm:$0xf]
        %s8686 = scalar_lea.vmem %s8652, 272 [#allocation5]
        %v8687 = vld [vmem:[%s8686] ss:$2 sm:$0xf]
        %s8688 = scalar_lea.vmem %s8652, 288 [#allocation5]
        %v8689 = vld [vmem:[%s8688] ss:$2 sm:$0xf]
        %s8690 = scalar_lea.vmem %s8652, 304 [#allocation5]
        %v8691 = vld [vmem:[%s8690] ss:$2 sm:$0xf]
        %s8692 = scalar_lea.vmem %s8652, 320 [#allocation5]
        %v8693 = vld [vmem:[%s8692] ss:$2 sm:$0xf]
        %s8694 = scalar_lea.vmem %s8652, 336 [#allocation5]
        %v8695 = vld [vmem:[%s8694] ss:$2 sm:$0xf]
        %s8696 = scalar_lea.vmem %s8652, 352 [#allocation5]
        %v8697 = vld [vmem:[%s8696] ss:$2 sm:$0xf]
        %s8698 = scalar_lea.vmem %s8652, 368 [#allocation5]
        %v8699 = vld [vmem:[%s8698] ss:$2 sm:$0xf]
        %s8700 = scalar_lea.vmem %s8652, 384 [#allocation5]
        %v8701 = vld [vmem:[%s8700] ss:$2 sm:$0xf]
        %s8702 = scalar_lea.vmem %s8652, 400 [#allocation5]
        %v8703 = vld [vmem:[%s8702] ss:$2 sm:$0xf]
        %s8704 = scalar_lea.vmem %s8652, 416 [#allocation5]
        %v8705 = vld [vmem:[%s8704] ss:$2 sm:$0xf]
        %s8706 = scalar_lea.vmem %s8652, 432 [#allocation5]
        %v8707 = vld [vmem:[%s8706] ss:$2 sm:$0xf]
        %s8708 = scalar_lea.vmem %s8652, 448 [#allocation5]
        %v8709 = vld [vmem:[%s8708] ss:$2 sm:$0xf]
        %s8710 = scalar_lea.vmem %s8652, 464 [#allocation5]
        %v8711 = vld [vmem:[%s8710] ss:$2 sm:$0xf]
        %s8712 = scalar_lea.vmem %s8652, 480 [#allocation5]
        %v8713 = vld [vmem:[%s8712] ss:$2 sm:$0xf]
        %s8714 = scalar_lea.vmem %s8652, 496 [#allocation5]
        %v8715 = vld [vmem:[%s8714] ss:$2 sm:$0xf]
        %s8716 = scalar_lea.vmem %s8652, 1 [#allocation5]
        %v8717 = vld [vmem:[%s8716] ss:$2 sm:$0xf]
        %s8718 = scalar_lea.vmem %s8652, 17 [#allocation5]
        %v8719 = vld [vmem:[%s8718] ss:$2 sm:$0xf]
        %s8720 = scalar_lea.vmem %s8652, 33 [#allocation5]
        %v8721 = vld [vmem:[%s8720] ss:$2 sm:$0xf]
        %s8722 = scalar_lea.vmem %s8652, 49 [#allocation5]
        %v8723 = vld [vmem:[%s8722] ss:$2 sm:$0xf]
        %s8724 = scalar_lea.vmem %s8652, 65 [#allocation5]
        %v8725 = vld [vmem:[%s8724] ss:$2 sm:$0xf]
        %s8726 = scalar_lea.vmem %s8652, 81 [#allocation5]
        %v8727 = vld [vmem:[%s8726] ss:$2 sm:$0xf]
        %s8728 = scalar_lea.vmem %s8652, 97 [#allocation5]
        %v8729 = vld [vmem:[%s8728] ss:$2 sm:$0xf]
        %s8730 = scalar_lea.vmem %s8652, 113 [#allocation5]
        %v8731 = vld [vmem:[%s8730] ss:$2 sm:$0xf]
        %s8732 = scalar_lea.vmem %s8652, 129 [#allocation5]
        %v8733 = vld [vmem:[%s8732] ss:$2 sm:$0xf]
        %s8734 = scalar_lea.vmem %s8652, 145 [#allocation5]
        %v8735 = vld [vmem:[%s8734] ss:$2 sm:$0xf]
        %s8736 = scalar_lea.vmem %s8652, 161 [#allocation5]
        %v8737 = vld [vmem:[%s8736] ss:$2 sm:$0xf]
        %s8738 = scalar_lea.vmem %s8652, 177 [#allocation5]
        %v8739 = vld [vmem:[%s8738] ss:$2 sm:$0xf]
        %s8740 = scalar_lea.vmem %s8652, 193 [#allocation5]
        %v8741 = vld [vmem:[%s8740] ss:$2 sm:$0xf]
        %s8742 = scalar_lea.vmem %s8652, 209 [#allocation5]
        %v8743 = vld [vmem:[%s8742] ss:$2 sm:$0xf]
        %s8744 = scalar_lea.vmem %s8652, 225 [#allocation5]
        %v8745 = vld [vmem:[%s8744] ss:$2 sm:$0xf]
        %s8746 = scalar_lea.vmem %s8652, 241 [#allocation5]
        %v8747 = vld [vmem:[%s8746] ss:$2 sm:$0xf]
        %s8748 = scalar_lea.vmem %s8652, 257 [#allocation5]
        %v8749 = vld [vmem:[%s8748] ss:$2 sm:$0xf]
        %s8750 = scalar_lea.vmem %s8652, 273 [#allocation5]
        %v8751 = vld [vmem:[%s8750] ss:$2 sm:$0xf]
        %s8752 = scalar_lea.vmem %s8652, 289 [#allocation5]
        %v8753 = vld [vmem:[%s8752] ss:$2 sm:$0xf]
        %s8754 = scalar_lea.vmem %s8652, 305 [#allocation5]
        %v8755 = vld [vmem:[%s8754] ss:$2 sm:$0xf]
        %s8756 = scalar_lea.vmem %s8652, 321 [#allocation5]
        %v8757 = vld [vmem:[%s8756] ss:$2 sm:$0xf]
        %s8758 = scalar_lea.vmem %s8652, 337 [#allocation5]
        %v8759 = vld [vmem:[%s8758] ss:$2 sm:$0xf]
        %s8760 = scalar_lea.vmem %s8652, 353 [#allocation5]
        %v8761 = vld [vmem:[%s8760] ss:$2 sm:$0xf]
        %s8762 = scalar_lea.vmem %s8652, 369 [#allocation5]
        %v8763 = vld [vmem:[%s8762] ss:$2 sm:$0xf]
        %s8764 = scalar_lea.vmem %s8652, 385 [#allocation5]
        %v8765 = vld [vmem:[%s8764] ss:$2 sm:$0xf]
        %s8766 = scalar_lea.vmem %s8652, 401 [#allocation5]
        %v8767 = vld [vmem:[%s8766] ss:$2 sm:$0xf]
        %s8768 = scalar_lea.vmem %s8652, 417 [#allocation5]
        %v8769 = vld [vmem:[%s8768] ss:$2 sm:$0xf]
        %s8770 = scalar_lea.vmem %s8652, 433 [#allocation5]
        %v8771 = vld [vmem:[%s8770] ss:$2 sm:$0xf]
        %s8772 = scalar_lea.vmem %s8652, 449 [#allocation5]
        %v8773 = vld [vmem:[%s8772] ss:$2 sm:$0xf]
        %s8774 = scalar_lea.vmem %s8652, 465 [#allocation5]
        %v8775 = vld [vmem:[%s8774] ss:$2 sm:$0xf]
        %s8776 = scalar_lea.vmem %s8652, 481 [#allocation5]
        %v8777 = vld [vmem:[%s8776] ss:$2 sm:$0xf]
        %s8778 = scalar_lea.vmem %s8652, 497 [#allocation5]
        %v8779 = vld [vmem:[%s8778] ss:$2 sm:$0xf]
        %v8780 = vmax.f32 %v8653, %v8717
        %v8781 = vmax.f32 %v8655, %v8719
        %v8782 = vmax.f32 %v8657, %v8721
        %v8783 = vmax.f32 %v8659, %v8723
        %v8784 = vmax.f32 %v8661, %v8725
        %v8785 = vmax.f32 %v8663, %v8727
        %v8786 = vmax.f32 %v8665, %v8729
        %v8787 = vmax.f32 %v8667, %v8731
        %v8788 = vmax.f32 %v8669, %v8733
        %v8789 = vmax.f32 %v8671, %v8735
        %v8790 = vmax.f32 %v8673, %v8737
        %v8791 = vmax.f32 %v8675, %v8739
        %v8792 = vmax.f32 %v8677, %v8741
        %v8793 = vmax.f32 %v8679, %v8743
        %v8794 = vmax.f32 %v8681, %v8745
        %v8795 = vmax.f32 %v8683, %v8747
        %v8796 = vmax.f32 %v8685, %v8749
        %v8797 = vmax.f32 %v8687, %v8751
        %v8798 = vmax.f32 %v8689, %v8753
        %v8799 = vmax.f32 %v8691, %v8755
        %v8800 = vmax.f32 %v8693, %v8757
        %v8801 = vmax.f32 %v8695, %v8759
        %v8802 = vmax.f32 %v8697, %v8761
        %v8803 = vmax.f32 %v8699, %v8763
        %v8804 = vmax.f32 %v8701, %v8765
        %v8805 = vmax.f32 %v8703, %v8767
        %v8806 = vmax.f32 %v8705, %v8769
        %v8807 = vmax.f32 %v8707, %v8771
        %v8808 = vmax.f32 %v8709, %v8773
        %v8809 = vmax.f32 %v8711, %v8775
        %v8810 = vmax.f32 %v8713, %v8777
        %v8811 = vmax.f32 %v8715, %v8779
        %v8812 = vmax.f32 %v8620, %v8780
        %v8813 = vmax.f32 %v8621, %v8781
        %v8814 = vmax.f32 %v8622, %v8782
        %v8815 = vmax.f32 %v8623, %v8783
        %v8816 = vmax.f32 %v8624, %v8784
        %v8817 = vmax.f32 %v8625, %v8785
        %v8818 = vmax.f32 %v8626, %v8786
        %v8819 = vmax.f32 %v8627, %v8787
        %v8820 = vmax.f32 %v8628, %v8788
        %v8821 = vmax.f32 %v8629, %v8789
        %v8822 = vmax.f32 %v8630, %v8790
        %v8823 = vmax.f32 %v8631, %v8791
        %v8824 = vmax.f32 %v8632, %v8792
        %v8825 = vmax.f32 %v8633, %v8793
        %v8826 = vmax.f32 %v8634, %v8794
        %v8827 = vmax.f32 %v8635, %v8795
        %v8828 = vmax.f32 %v8636, %v8796
        %v8829 = vmax.f32 %v8637, %v8797
        %v8830 = vmax.f32 %v8638, %v8798
        %v8831 = vmax.f32 %v8639, %v8799
        %v8832 = vmax.f32 %v8640, %v8800
        %v8833 = vmax.f32 %v8641, %v8801
        %v8834 = vmax.f32 %v8642, %v8802
        %v8835 = vmax.f32 %v8643, %v8803
        %v8836 = vmax.f32 %v8644, %v8804
        %v8837 = vmax.f32 %v8645, %v8805
        %v8838 = vmax.f32 %v8646, %v8806
        %v8839 = vmax.f32 %v8647, %v8807
        %v8840 = vmax.f32 %v8648, %v8808
        %v8841 = vmax.f32 %v8649, %v8809
        %v8842 = vmax.f32 %v8650, %v8810
        %v8843 = vmax.f32 %v8651, %v8811
        %v8852 = vrot.slane %v8816, 7
        %vm8853 = vcmask 1041409
        %v8854 = vsel %vm8853, %v8852, %v8812
        %v8855 = vrot.slane %v8820, 6
        %vm8856 = vcmask 1042434
        %v8857 = vsel %vm8856, %v8855, %v8854
        %v8858 = vrot.slane %v8824, 5
        %vm8859 = vcmask 1043459
        %v8860 = vsel %vm8859, %v8858, %v8857
        %v8861 = vrot.slane %v8828, 4
        %vm8862 = vcmask 1044484
        %v8863 = vsel %vm8862, %v8861, %v8860
        %v8864 = vrot.slane %v8832, 3
        %vm8865 = vcmask 1045509
        %v8866 = vsel %vm8865, %v8864, %v8863
        %v8867 = vrot.slane %v8836, 2
        %vm8868 = vcmask 1046534
        %v8869 = vsel %vm8868, %v8867, %v8866
        %v8870 = vrot.slane %v8840, 1
        %vm8871 = vcmask 1047559
        %v8872 = vsel %vm8871, %v8870, %v8869
        %8874 = vst.msk [vmem:[#allocation6] sm:$0xff] %vm8428, %v8872
        %v8875 = vrot.slane %v8812, 1
        %v8876 = vsel %vm8853, %v8816, %v8875
        %v8877 = vrot.slane %v8820, 7
        %v8878 = vsel %vm8856, %v8877, %v8876
        %v8879 = vrot.slane %v8824, 6
        %v8880 = vsel %vm8859, %v8879, %v8878
        %v8881 = vrot.slane %v8828, 5
        %v8882 = vsel %vm8862, %v8881, %v8880
        %v8883 = vrot.slane %v8832, 4
        %v8884 = vsel %vm8865, %v8883, %v8882
        %v8885 = vrot.slane %v8836, 3
        %v8886 = vsel %vm8868, %v8885, %v8884
        %v8887 = vrot.slane %v8840, 2
        %v8888 = vsel %vm8871, %v8887, %v8886
        %8889 = vrot.lane.b32.xlu0 %v8888, 64
        %v8890 = vpop.permute.xlu0 %8889
        %vm8892 = vcmask 1048064
        %8893 = vst.msk [vmem:[#allocation6] sm:$0xff] %vm8892, %v8890
        %v8894 = vrot.slane %v8812, 2
        %v8895 = vrot.slane %v8816, 1
        %v8896 = vsel %vm8853, %v8895, %v8894
        %v8897 = vsel %vm8856, %v8820, %v8896
        %v8898 = vrot.slane %v8824, 7
        %v8899 = vsel %vm8859, %v8898, %v8897
        %v8900 = vrot.slane %v8828, 6
        %v8901 = vsel %vm8862, %v8900, %v8899
        %v8902 = vrot.slane %v8832, 5
        %v8903 = vsel %vm8865, %v8902, %v8901
        %v8904 = vrot.slane %v8836, 4
        %v8905 = vsel %vm8868, %v8904, %v8903
        %v8906 = vrot.slane %v8840, 3
        %v8907 = vsel %vm8871, %v8906, %v8905
        %8909 = vst.msk [vmem:[#allocation6 + $0x8] sm:$0xff] %vm8428, %v8907
        %v8910 = vrot.slane %v8812, 3
        %v8911 = vrot.slane %v8816, 2
        %v8912 = vsel %vm8853, %v8911, %v8910
        %v8913 = vrot.slane %v8820, 1
        %v8914 = vsel %vm8856, %v8913, %v8912
        %v8915 = vsel %vm8859, %v8824, %v8914
        %v8916 = vrot.slane %v8828, 7
        %v8917 = vsel %vm8862, %v8916, %v8915
        %v8918 = vrot.slane %v8832, 6
        %v8919 = vsel %vm8865, %v8918, %v8917
        %v8920 = vrot.slane %v8836, 5
        %v8921 = vsel %vm8868, %v8920, %v8919
        %v8922 = vrot.slane %v8840, 4
        %v8923 = vsel %vm8871, %v8922, %v8921
        %8924 = vrot.lane.b32.xlu0 %v8923, 64
        %v8925 = vpop.permute.xlu0 %8924
        %8927 = vst.msk [vmem:[#allocation6 + $0x8] sm:$0xff] %vm8892, %v8925
        %v8936 = vrot.slane %v8817, 7
        %v8937 = vsel %vm8853, %v8936, %v8813
        %v8938 = vrot.slane %v8821, 6
        %v8939 = vsel %vm8856, %v8938, %v8937
        %v8940 = vrot.slane %v8825, 5
        %v8941 = vsel %vm8859, %v8940, %v8939
        %v8942 = vrot.slane %v8829, 4
        %v8943 = vsel %vm8862, %v8942, %v8941
        %v8944 = vrot.slane %v8833, 3
        %v8945 = vsel %vm8865, %v8944, %v8943
        %v8946 = vrot.slane %v8837, 2
        %v8947 = vsel %vm8868, %v8946, %v8945
        %v8948 = vrot.slane %v8841, 1
        %v8949 = vsel %vm8871, %v8948, %v8947
        %8951 = vst.msk [vmem:[#allocation6 + $0x10] sm:$0xff] %vm8428, %v8949
        %v8952 = vrot.slane %v8813, 1
        %v8953 = vsel %vm8853, %v8817, %v8952
        %v8954 = vrot.slane %v8821, 7
        %v8955 = vsel %vm8856, %v8954, %v8953
        %v8956 = vrot.slane %v8825, 6
        %v8957 = vsel %vm8859, %v8956, %v8955
        %v8958 = vrot.slane %v8829, 5
        %v8959 = vsel %vm8862, %v8958, %v8957
        %v8960 = vrot.slane %v8833, 4
        %v8961 = vsel %vm8865, %v8960, %v8959
        %v8962 = vrot.slane %v8837, 3
        %v8963 = vsel %vm8868, %v8962, %v8961
        %v8964 = vrot.slane %v8841, 2
        %v8965 = vsel %vm8871, %v8964, %v8963
        %8966 = vrot.lane.b32.xlu0 %v8965, 64
        %v8967 = vpop.permute.xlu0 %8966
        %8969 = vst.msk [vmem:[#allocation6 + $0x10] sm:$0xff] %vm8892, %v8967
        %v8970 = vrot.slane %v8813, 2
        %v8971 = vrot.slane %v8817, 1
        %v8972 = vsel %vm8853, %v8971, %v8970
        %v8973 = vsel %vm8856, %v8821, %v8972
        %v8974 = vrot.slane %v8825, 7
        %v8975 = vsel %vm8859, %v8974, %v8973
        %v8976 = vrot.slane %v8829, 6
        %v8977 = vsel %vm8862, %v8976, %v8975
        %v8978 = vrot.slane %v8833, 5
        %v8979 = vsel %vm8865, %v8978, %v8977
        %v8980 = vrot.slane %v8837, 4
        %v8981 = vsel %vm8868, %v8980, %v8979
        %v8982 = vrot.slane %v8841, 3
        %v8983 = vsel %vm8871, %v8982, %v8981
        %8985 = vst.msk [vmem:[#allocation6 + $0x18] sm:$0xff] %vm8428, %v8983
        %v8986 = vrot.slane %v8813, 3
        %v8987 = vrot.slane %v8817, 2
        %v8988 = vsel %vm8853, %v8987, %v8986
        %v8989 = vrot.slane %v8821, 1
        %v8990 = vsel %vm8856, %v8989, %v8988
        %v8991 = vsel %vm8859, %v8825, %v8990
        %v8992 = vrot.slane %v8829, 7
        %v8993 = vsel %vm8862, %v8992, %v8991
        %v8994 = vrot.slane %v8833, 6
        %v8995 = vsel %vm8865, %v8994, %v8993
        %v8996 = vrot.slane %v8837, 5
        %v8997 = vsel %vm8868, %v8996, %v8995
        %v8998 = vrot.slane %v8841, 4
        %v8999 = vsel %vm8871, %v8998, %v8997
        %9000 = vrot.lane.b32.xlu0 %v8999, 64
        %v9001 = vpop.permute.xlu0 %9000
        %9003 = vst.msk [vmem:[#allocation6 + $0x18] sm:$0xff] %vm8892, %v9001
        %v9012 = vrot.slane %v8818, 7
        %v9013 = vsel %vm8853, %v9012, %v8814
        %v9014 = vrot.slane %v8822, 6
        %v9015 = vsel %vm8856, %v9014, %v9013
        %v9016 = vrot.slane %v8826, 5
        %v9017 = vsel %vm8859, %v9016, %v9015
        %v9018 = vrot.slane %v8830, 4
        %v9019 = vsel %vm8862, %v9018, %v9017
        %v9020 = vrot.slane %v8834, 3
        %v9021 = vsel %vm8865, %v9020, %v9019
        %v9022 = vrot.slane %v8838, 2
        %v9023 = vsel %vm8868, %v9022, %v9021
        %v9024 = vrot.slane %v8842, 1
        %v9025 = vsel %vm8871, %v9024, %v9023
        %9027 = vst.msk [vmem:[#allocation6 + $0x20] sm:$0xff] %vm8428, %v9025
        %v9028 = vrot.slane %v8814, 1
        %v9029 = vsel %vm8853, %v8818, %v9028
        %v9030 = vrot.slane %v8822, 7
        %v9031 = vsel %vm8856, %v9030, %v9029
        %v9032 = vrot.slane %v8826, 6
        %v9033 = vsel %vm8859, %v9032, %v9031
        %v9034 = vrot.slane %v8830, 5
        %v9035 = vsel %vm8862, %v9034, %v9033
        %v9036 = vrot.slane %v8834, 4
        %v9037 = vsel %vm8865, %v9036, %v9035
        %v9038 = vrot.slane %v8838, 3
        %v9039 = vsel %vm8868, %v9038, %v9037
        %v9040 = vrot.slane %v8842, 2
        %v9041 = vsel %vm8871, %v9040, %v9039
        %9042 = vrot.lane.b32.xlu0 %v9041, 64
        %v9043 = vpop.permute.xlu0 %9042
        %9045 = vst.msk [vmem:[#allocation6 + $0x20] sm:$0xff] %vm8892, %v9043
        %v9046 = vrot.slane %v8814, 2
        %v9047 = vrot.slane %v8818, 1
        %v9048 = vsel %vm8853, %v9047, %v9046
        %v9049 = vsel %vm8856, %v8822, %v9048
        %v9050 = vrot.slane %v8826, 7
        %v9051 = vsel %vm8859, %v9050, %v9049
        %v9052 = vrot.slane %v8830, 6
        %v9053 = vsel %vm8862, %v9052, %v9051
        %v9054 = vrot.slane %v8834, 5
        %v9055 = vsel %vm8865, %v9054, %v9053
        %v9056 = vrot.slane %v8838, 4
        %v9057 = vsel %vm8868, %v9056, %v9055
        %v9058 = vrot.slane %v8842, 3
        %v9059 = vsel %vm8871, %v9058, %v9057
        %9061 = vst.msk [vmem:[#allocation6 + $0x28] sm:$0xff] %vm8428, %v9059
        %v9062 = vrot.slane %v8814, 3
        %v9063 = vrot.slane %v8818, 2
        %v9064 = vsel %vm8853, %v9063, %v9062
        %v9065 = vrot.slane %v8822, 1
        %v9066 = vsel %vm8856, %v9065, %v9064
        %v9067 = vsel %vm8859, %v8826, %v9066
        %v9068 = vrot.slane %v8830, 7
        %v9069 = vsel %vm8862, %v9068, %v9067
        %v9070 = vrot.slane %v8834, 6
        %v9071 = vsel %vm8865, %v9070, %v9069
        %v9072 = vrot.slane %v8838, 5
        %v9073 = vsel %vm8868, %v9072, %v9071
        %v9074 = vrot.slane %v8842, 4
        %v9075 = vsel %vm8871, %v9074, %v9073
        %9076 = vrot.lane.b32.xlu0 %v9075, 64
        %v9077 = vpop.permute.xlu0 %9076
        %9079 = vst.msk [vmem:[#allocation6 + $0x28] sm:$0xff] %vm8892, %v9077
        %v9088 = vrot.slane %v8819, 7
        %v9089 = vsel %vm8853, %v9088, %v8815
        %v9090 = vrot.slane %v8823, 6
        %v9091 = vsel %vm8856, %v9090, %v9089
        %v9092 = vrot.slane %v8827, 5
        %v9093 = vsel %vm8859, %v9092, %v9091
        %v9094 = vrot.slane %v8831, 4
        %v9095 = vsel %vm8862, %v9094, %v9093
        %v9096 = vrot.slane %v8835, 3
        %v9097 = vsel %vm8865, %v9096, %v9095
        %v9098 = vrot.slane %v8839, 2
        %v9099 = vsel %vm8868, %v9098, %v9097
        %v9100 = vrot.slane %v8843, 1
        %v9101 = vsel %vm8871, %v9100, %v9099
        %9103 = vst.msk [vmem:[#allocation6 + $0x30] sm:$0xff] %vm8428, %v9101
        %v9104 = vrot.slane %v8815, 1
        %v9105 = vsel %vm8853, %v8819, %v9104
        %v9106 = vrot.slane %v8823, 7
        %v9107 = vsel %vm8856, %v9106, %v9105
        %v9108 = vrot.slane %v8827, 6
        %v9109 = vsel %vm8859, %v9108, %v9107
        %v9110 = vrot.slane %v8831, 5
        %v9111 = vsel %vm8862, %v9110, %v9109
        %v9112 = vrot.slane %v8835, 4
        %v9113 = vsel %vm8865, %v9112, %v9111
        %v9114 = vrot.slane %v8839, 3
        %v9115 = vsel %vm8868, %v9114, %v9113
        %v9116 = vrot.slane %v8843, 2
        %v9117 = vsel %vm8871, %v9116, %v9115
        %9118 = vrot.lane.b32.xlu0 %v9117, 64
        %v9119 = vpop.permute.xlu0 %9118
        %9121 = vst.msk [vmem:[#allocation6 + $0x30] sm:$0xff] %vm8892, %v9119
        %v9122 = vrot.slane %v8815, 2
        %v9123 = vrot.slane %v8819, 1
        %v9124 = vsel %vm8853, %v9123, %v9122
        %v9125 = vsel %vm8856, %v8823, %v9124
        %v9126 = vrot.slane %v8827, 7
        %v9127 = vsel %vm8859, %v9126, %v9125
        %v9128 = vrot.slane %v8831, 6
        %v9129 = vsel %vm8862, %v9128, %v9127
        %v9130 = vrot.slane %v8835, 5
        %v9131 = vsel %vm8865, %v9130, %v9129
        %v9132 = vrot.slane %v8839, 4
        %v9133 = vsel %vm8868, %v9132, %v9131
        %v9134 = vrot.slane %v8843, 3
        %v9135 = vsel %vm8871, %v9134, %v9133
        %9137 = vst.msk [vmem:[#allocation6 + $0x38] sm:$0xff] %vm8428, %v9135
        %v9138 = vrot.slane %v8815, 3
        %v9139 = vrot.slane %v8819, 2
        %v9140 = vsel %vm8853, %v9139, %v9138
        %v9141 = vrot.slane %v8823, 1
        %v9142 = vsel %vm8856, %v9141, %v9140
        %v9143 = vsel %vm8859, %v8827, %v9142
        %v9144 = vrot.slane %v8831, 7
        %v9145 = vsel %vm8862, %v9144, %v9143
        %v9146 = vrot.slane %v8835, 6
        %v9147 = vsel %vm8865, %v9146, %v9145
        %v9148 = vrot.slane %v8839, 5
        %v9149 = vsel %vm8868, %v9148, %v9147
        %v9150 = vrot.slane %v8843, 4
        %v9151 = vsel %vm8871, %v9150, %v9149
        %9152 = vrot.lane.b32.xlu0 %v9151, 64
        %v9153 = vpop.permute.xlu0 %9152
        %9155 = vst.msk [vmem:[#allocation6 + $0x38] sm:$0xff] %vm8892, %v9153
        %v9156 = vld [vmem:[#allocation6] sm:$0xff]
        %v9157 = vld [vmem:[#allocation6 + $0x8] sm:$0xff]
        %v9158 = vld [vmem:[#allocation6 + $0x10] sm:$0xff]
        %v9159 = vld [vmem:[#allocation6 + $0x18] sm:$0xff]
        %v9160 = vld [vmem:[#allocation6 + $0x20] sm:$0xff]
        %v9161 = vld [vmem:[#allocation6 + $0x28] sm:$0xff]
        %v9162 = vld [vmem:[#allocation6 + $0x30] sm:$0xff]
        %v9163 = vld [vmem:[#allocation6 + $0x38] sm:$0xff]
        %v9164 = vld [vmem:[%s5] sm:$0xff]
        %v9165 = vld [vmem:[%s5 + $0x8] sm:$0xff]
        %v9166 = vld [vmem:[%s5 + $0x10] sm:$0xff]
        %v9167 = vld [vmem:[%s5 + $0x18] sm:$0xff]
        %v9168 = vld [vmem:[%s5 + $0x20] sm:$0xff]
        %v9169 = vld [vmem:[%s5 + $0x28] sm:$0xff]
        %v9170 = vld [vmem:[%s5 + $0x30] sm:$0xff]
        %v9171 = vld [vmem:[%s5 + $0x38] sm:$0xff]
        %v9172 = vld [vmem:[%s5 + $0x40] sm:$0xff]
        %v9173 = vld [vmem:[%s5 + $0x48] sm:$0xff]
        %v9174 = vld [vmem:[%s5 + $0x50] sm:$0xff]
        %v9175 = vld [vmem:[%s5 + $0x58] sm:$0xff]
        %v9176 = vld [vmem:[%s5 + $0x60] sm:$0xff]
        %v9177 = vld [vmem:[%s5 + $0x68] sm:$0xff]
        %v9178 = vld [vmem:[%s5 + $0x70] sm:$0xff]
        %v9179 = vld [vmem:[%s5 + $0x78] sm:$0xff]
        %v9180 = vld [vmem:[%s5 + $0x80] sm:$0xff]
        %v9181 = vld [vmem:[%s5 + $0x88] sm:$0xff]
        %v9182 = vld [vmem:[%s5 + $0x90] sm:$0xff]
        %v9183 = vld [vmem:[%s5 + $0x98] sm:$0xff]
        %v9184 = vld [vmem:[%s5 + $0xa0] sm:$0xff]
        %v9185 = vld [vmem:[%s5 + $0xa8] sm:$0xff]
        %v9186 = vld [vmem:[%s5 + $0xb0] sm:$0xff]
        %v9187 = vld [vmem:[%s5 + $0xb8] sm:$0xff]
        %v9188 = vld [vmem:[%s5 + $0xc0] sm:$0xff]
        %v9189 = vld [vmem:[%s5 + $0xc8] sm:$0xff]
        %v9190 = vld [vmem:[%s5 + $0xd0] sm:$0xff]
        %v9191 = vld [vmem:[%s5 + $0xd8] sm:$0xff]
        %v9192 = vld [vmem:[%s5 + $0xe0] sm:$0xff]
        %v9193 = vld [vmem:[%s5 + $0xe8] sm:$0xff]
        %v9194 = vld [vmem:[%s5 + $0xf0] sm:$0xff]
        %v9195 = vld [vmem:[%s5 + $0xf8] sm:$0xff]
        %v9196 = vld [vmem:[%s5 + $0x100] sm:$0xff]
        %v9197 = vld [vmem:[%s5 + $0x108] sm:$0xff]
        %v9198 = vld [vmem:[%s5 + $0x110] sm:$0xff]
        %v9199 = vld [vmem:[%s5 + $0x118] sm:$0xff]
        %v9200 = vld [vmem:[%s5 + $0x120] sm:$0xff]
        %v9201 = vld [vmem:[%s5 + $0x128] sm:$0xff]
        %v9202 = vld [vmem:[%s5 + $0x130] sm:$0xff]
        %v9203 = vld [vmem:[%s5 + $0x138] sm:$0xff]
        %v9204 = vld [vmem:[%s5 + $0x140] sm:$0xff]
        %v9205 = vld [vmem:[%s5 + $0x148] sm:$0xff]
        %v9206 = vld [vmem:[%s5 + $0x150] sm:$0xff]
        %v9207 = vld [vmem:[%s5 + $0x158] sm:$0xff]
        %v9208 = vld [vmem:[%s5 + $0x160] sm:$0xff]
        %v9209 = vld [vmem:[%s5 + $0x168] sm:$0xff]
        %v9210 = vld [vmem:[%s5 + $0x170] sm:$0xff]
        %v9211 = vld [vmem:[%s5 + $0x178] sm:$0xff]
        %v9212 = vld [vmem:[%s5 + $0x180] sm:$0xff]
        %v9213 = vld [vmem:[%s5 + $0x188] sm:$0xff]
        %v9214 = vld [vmem:[%s5 + $0x190] sm:$0xff]
        %v9215 = vld [vmem:[%s5 + $0x198] sm:$0xff]
        %v9216 = vld [vmem:[%s5 + $0x1a0] sm:$0xff]
        %v9217 = vld [vmem:[%s5 + $0x1a8] sm:$0xff]
        %v9218 = vld [vmem:[%s5 + $0x1b0] sm:$0xff]
        %v9219 = vld [vmem:[%s5 + $0x1b8] sm:$0xff]
        %v9220 = vld [vmem:[%s5 + $0x1c0] sm:$0xff]
        %v9221 = vld [vmem:[%s5 + $0x1c8] sm:$0xff]
        %v9222 = vld [vmem:[%s5 + $0x1d0] sm:$0xff]
        %v9223 = vld [vmem:[%s5 + $0x1d8] sm:$0xff]
        %v9224 = vld [vmem:[%s5 + $0x1e0] sm:$0xff]
        %v9225 = vld [vmem:[%s5 + $0x1e8] sm:$0xff]
        %v9226 = vld [vmem:[%s5 + $0x1f0] sm:$0xff]
        %v9227 = vld [vmem:[%s5 + $0x1f8] sm:$0xff]
        %v9228 = vld [vmem:[%s5 + $0x200] sm:$0xff]
        %v9229 = vld [vmem:[%s5 + $0x208] sm:$0xff]
        %v9230 = vld [vmem:[%s5 + $0x210] sm:$0xff]
        %v9231 = vld [vmem:[%s5 + $0x218] sm:$0xff]
        %v9232 = vld [vmem:[%s5 + $0x220] sm:$0xff]
        %v9233 = vld [vmem:[%s5 + $0x228] sm:$0xff]
        %v9234 = vld [vmem:[%s5 + $0x230] sm:$0xff]
        %v9235 = vld [vmem:[%s5 + $0x238] sm:$0xff]
        %v9236 = vld [vmem:[%s5 + $0x240] sm:$0xff]
        %v9237 = vld [vmem:[%s5 + $0x248] sm:$0xff]
        %v9238 = vld [vmem:[%s5 + $0x250] sm:$0xff]
        %v9239 = vld [vmem:[%s5 + $0x258] sm:$0xff]
        %v9240 = vld [vmem:[%s5 + $0x260] sm:$0xff]
        %v9241 = vld [vmem:[%s5 + $0x268] sm:$0xff]
        %v9242 = vld [vmem:[%s5 + $0x270] sm:$0xff]
        %v9243 = vld [vmem:[%s5 + $0x278] sm:$0xff]
        %v9244 = vld [vmem:[%s5 + $0x280] sm:$0xff]
        %v9245 = vld [vmem:[%s5 + $0x288] sm:$0xff]
        %v9246 = vld [vmem:[%s5 + $0x290] sm:$0xff]
        %v9247 = vld [vmem:[%s5 + $0x298] sm:$0xff]
        %v9248 = vld [vmem:[%s5 + $0x2a0] sm:$0xff]
        %v9249 = vld [vmem:[%s5 + $0x2a8] sm:$0xff]
        %v9250 = vld [vmem:[%s5 + $0x2b0] sm:$0xff]
        %v9251 = vld [vmem:[%s5 + $0x2b8] sm:$0xff]
        %v9252 = vld [vmem:[%s5 + $0x2c0] sm:$0xff]
        %v9253 = vld [vmem:[%s5 + $0x2c8] sm:$0xff]
        %v9254 = vld [vmem:[%s5 + $0x2d0] sm:$0xff]
        %v9255 = vld [vmem:[%s5 + $0x2d8] sm:$0xff]
        %v9256 = vld [vmem:[%s5 + $0x2e0] sm:$0xff]
        %v9257 = vld [vmem:[%s5 + $0x2e8] sm:$0xff]
        %v9258 = vld [vmem:[%s5 + $0x2f0] sm:$0xff]
        %v9259 = vld [vmem:[%s5 + $0x2f8] sm:$0xff]
        %v9260 = vld [vmem:[%s5 + $0x300] sm:$0xff]
        %v9261 = vld [vmem:[%s5 + $0x308] sm:$0xff]
        %v9262 = vld [vmem:[%s5 + $0x310] sm:$0xff]
        %v9263 = vld [vmem:[%s5 + $0x318] sm:$0xff]
        %v9264 = vld [vmem:[%s5 + $0x320] sm:$0xff]
        %v9265 = vld [vmem:[%s5 + $0x328] sm:$0xff]
        %v9266 = vld [vmem:[%s5 + $0x330] sm:$0xff]
        %v9267 = vld [vmem:[%s5 + $0x338] sm:$0xff]
        %v9268 = vld [vmem:[%s5 + $0x340] sm:$0xff]
        %v9269 = vld [vmem:[%s5 + $0x348] sm:$0xff]
        %v9270 = vld [vmem:[%s5 + $0x350] sm:$0xff]
        %v9271 = vld [vmem:[%s5 + $0x358] sm:$0xff]
        %v9272 = vld [vmem:[%s5 + $0x360] sm:$0xff]
        %v9273 = vld [vmem:[%s5 + $0x368] sm:$0xff]
        %v9274 = vld [vmem:[%s5 + $0x370] sm:$0xff]
        %v9275 = vld [vmem:[%s5 + $0x378] sm:$0xff]
        %v9276 = vld [vmem:[%s5 + $0x380] sm:$0xff]
        %v9277 = vld [vmem:[%s5 + $0x388] sm:$0xff]
        %v9278 = vld [vmem:[%s5 + $0x390] sm:$0xff]
        %v9279 = vld [vmem:[%s5 + $0x398] sm:$0xff]
        %v9280 = vld [vmem:[%s5 + $0x3a0] sm:$0xff]
        %v9281 = vld [vmem:[%s5 + $0x3a8] sm:$0xff]
        %v9282 = vld [vmem:[%s5 + $0x3b0] sm:$0xff]
        %v9283 = vld [vmem:[%s5 + $0x3b8] sm:$0xff]
        %v9284 = vld [vmem:[%s5 + $0x3c0] sm:$0xff]
        %v9285 = vld [vmem:[%s5 + $0x3c8] sm:$0xff]
        %v9286 = vld [vmem:[%s5 + $0x3d0] sm:$0xff]
        %v9287 = vld [vmem:[%s5 + $0x3d8] sm:$0xff]
        %v9288 = vld [vmem:[%s5 + $0x3e0] sm:$0xff]
        %v9289 = vld [vmem:[%s5 + $0x3e8] sm:$0xff]
        %v9290 = vld [vmem:[%s5 + $0x3f0] sm:$0xff]
        %v9291 = vld [vmem:[%s5 + $0x3f8] sm:$0xff]
        %v9292 = vld [vmem:[%s6] sm:$0x1]
        %v9294 = vlaneseq
        %v9295 = vshrl.u32 %v9294, 7
        %v9296 = vsub.s32 0, %v9295
        %v9297 = vrot.slane %v9292, %v9296
        %9299 = vmatprep.subr.mxu0 0.0
        %9300 = vmatpush1.msra.mxu0 %v9164
        %9301 = vmatprep.subr.mxu0 0.0
        %9302 = vmatpush1.msra.mxu0 %v9165
        %9303 = vmatprep.subr.mxu0 0.0
        %9304 = vmatpush1.msra.mxu0 %v9166
        %9305 = vmatprep.subr.mxu0 0.0
        %9306 = vmatpush1.msra.mxu0 %v9167
        %9307 = vmatprep.subr.mxu0 0.0
        %9308 = vmatpush1.msra.mxu0 %v9168
        %9309 = vmatprep.subr.mxu0 0.0
        %9310 = vmatpush1.msra.mxu0 %v9169
        %9311 = vmatprep.subr.mxu0 0.0
        %9312 = vmatpush1.msra.mxu0 %v9170
        %9313 = vmatprep.subr.mxu0 0.0
        %9314 = vmatpush1.msra.mxu0 %v9171
        %9315 = vmatprep.subr.mxu0 0.0
        %9316 = vmatpush1.msra.mxu0 %v9172
        %9317 = vmatprep.subr.mxu0 0.0
        %9318 = vmatpush1.msra.mxu0 %v9173
        %9319 = vmatprep.subr.mxu0 0.0
        %9320 = vmatpush1.msra.mxu0 %v9174
        %9321 = vmatprep.subr.mxu0 0.0
        %9322 = vmatpush1.msra.mxu0 %v9175
        %9323 = vmatprep.subr.mxu0 0.0
        %9324 = vmatpush1.msra.mxu0 %v9176
        %9325 = vmatprep.subr.mxu0 0.0
        %9326 = vmatpush1.msra.mxu0 %v9177
        %9327 = vmatprep.subr.mxu0 0.0
        %9328 = vmatpush1.msra.mxu0 %v9178
        %9329 = vmatprep.subr.mxu0 0.0
        %9330 = vmatpush1.msra.mxu0 %v9179
        %9331 = vmatprep.subr.mxu0 0.0
        %9332 = vmatpush1.msra.mxu0 %v9180
        %9333 = vmatprep.subr.mxu0 0.0
        %9334 = vmatpush1.msra.mxu0 %v9181
        %9335 = vmatprep.subr.mxu0 0.0
        %9336 = vmatpush1.msra.mxu0 %v9182
        %9337 = vmatprep.subr.mxu0 0.0
        %9338 = vmatpush1.msra.mxu0 %v9183
        %9339 = vmatprep.subr.mxu0 0.0
        %9340 = vmatpush1.msra.mxu0 %v9184
        %9341 = vmatprep.subr.mxu0 0.0
        %9342 = vmatpush1.msra.mxu0 %v9185
        %9343 = vmatprep.subr.mxu0 0.0
        %9344 = vmatpush1.msra.mxu0 %v9186
        %9345 = vmatprep.subr.mxu0 0.0
        %9346 = vmatpush1.msra.mxu0 %v9187
        %9347 = vmatprep.subr.mxu0 0.0
        %9348 = vmatpush1.msra.mxu0 %v9188
        %9349 = vmatprep.subr.mxu0 0.0
        %9350 = vmatpush1.msra.mxu0 %v9189
        %9351 = vmatprep.subr.mxu0 0.0
        %9352 = vmatpush1.msra.mxu0 %v9190
        %9353 = vmatprep.subr.mxu0 0.0
        %9354 = vmatpush1.msra.mxu0 %v9191
        %9355 = vmatprep.subr.mxu0 0.0
        %9356 = vmatpush1.msra.mxu0 %v9192
        %9357 = vmatprep.subr.mxu0 0.0
        %9358 = vmatpush1.msra.mxu0 %v9193
        %9359 = vmatprep.subr.mxu0 0.0
        %9360 = vmatpush1.msra.mxu0 %v9194
        %9361 = vmatprep.subr.mxu0 0.0
        %9362 = vmatpush1.msra.mxu0 %v9195
        %9363 = vmatprep.mubr.f32.mxu0 %v9157
        %9364 = vmatmul.mubr.f32.gmra.mrb[0].mxu0 %v9156
        %v9365 = vpop.f32.mrb[0].mxu0
        %v9366 = vadd.f32 %v9297, %v9365
        %v9367 = vpop.f32.mrb[0].mxu0
        %9368 = vdwg.mxu0
        %9369 = vmatprep.subr.mxu0 0.0
        %9370 = vmatpush1.msra.mxu0 %v9196
        %9371 = vmatprep.subr.mxu0 0.0
        %9372 = vmatpush1.msra.mxu0 %v9197
        %9373 = vmatprep.subr.mxu0 0.0
        %9374 = vmatpush1.msra.mxu0 %v9198
        %9375 = vmatprep.subr.mxu0 0.0
        %9376 = vmatpush1.msra.mxu0 %v9199
        %9377 = vmatprep.subr.mxu0 0.0
        %9378 = vmatpush1.msra.mxu0 %v9200
        %9379 = vmatprep.subr.mxu0 0.0
        %9380 = vmatpush1.msra.mxu0 %v9201
        %9381 = vmatprep.subr.mxu0 0.0
        %9382 = vmatpush1.msra.mxu0 %v9202
        %9383 = vmatprep.subr.mxu0 0.0
        %9384 = vmatpush1.msra.mxu0 %v9203
        %9385 = vmatprep.subr.mxu0 0.0
        %9386 = vmatpush1.msra.mxu0 %v9204
        %9387 = vmatprep.subr.mxu0 0.0
        %9388 = vmatpush1.msra.mxu0 %v9205
        %9389 = vmatprep.subr.mxu0 0.0
        %9390 = vmatpush1.msra.mxu0 %v9206
        %9391 = vmatprep.subr.mxu0 0.0
        %9392 = vmatpush1.msra.mxu0 %v9207
        %9393 = vmatprep.subr.mxu0 0.0
        %9394 = vmatpush1.msra.mxu0 %v9208
        %9395 = vmatprep.subr.mxu0 0.0
        %9396 = vmatpush1.msra.mxu0 %v9209
        %9397 = vmatprep.subr.mxu0 0.0
        %9398 = vmatpush1.msra.mxu0 %v9210
        %9399 = vmatprep.subr.mxu0 0.0
        %9400 = vmatpush1.msra.mxu0 %v9211
        %9401 = vmatprep.subr.mxu0 0.0
        %9402 = vmatpush1.msra.mxu0 %v9212
        %9403 = vmatprep.subr.mxu0 0.0
        %9404 = vmatpush1.msra.mxu0 %v9213
        %9405 = vmatprep.subr.mxu0 0.0
        %9406 = vmatpush1.msra.mxu0 %v9214
        %9407 = vmatprep.subr.mxu0 0.0
        %9408 = vmatpush1.msra.mxu0 %v9215
        %9409 = vmatprep.subr.mxu0 0.0
        %9410 = vmatpush1.msra.mxu0 %v9216
        %9411 = vmatprep.subr.mxu0 0.0
        %9412 = vmatpush1.msra.mxu0 %v9217
        %9413 = vmatprep.subr.mxu0 0.0
        %9414 = vmatpush1.msra.mxu0 %v9218
        %9415 = vmatprep.subr.mxu0 0.0
        %9416 = vmatpush1.msra.mxu0 %v9219
        %9417 = vmatprep.subr.mxu0 0.0
        %9418 = vmatpush1.msra.mxu0 %v9220
        %9419 = vmatprep.subr.mxu0 0.0
        %9420 = vmatpush1.msra.mxu0 %v9221
        %9421 = vmatprep.subr.mxu0 0.0
        %9422 = vmatpush1.msra.mxu0 %v9222
        %9423 = vmatprep.subr.mxu0 0.0
        %9424 = vmatpush1.msra.mxu0 %v9223
        %9425 = vmatprep.subr.mxu0 0.0
        %9426 = vmatpush1.msra.mxu0 %v9224
        %9427 = vmatprep.subr.mxu0 0.0
        %9428 = vmatpush1.msra.mxu0 %v9225
        %9429 = vmatprep.subr.mxu0 0.0
        %9430 = vmatpush1.msra.mxu0 %v9226
        %9431 = vmatprep.subr.mxu0 0.0
        %9432 = vmatpush1.msra.mxu0 %v9227
        %9433 = vmatprep.mubr.f32.mxu0 %v9159
        %9434 = vmatmul.mubr.f32.gmra.mrb[0].mxu0 %v9158
        %v9435 = vpop.f32.mrb[0].mxu0
        %v9436 = vadd.f32 %v9366, %v9435
        %v9437 = vpop.f32.mrb[0].mxu0
        %9438 = vdwg.mxu0
        %9439 = vmatprep.subr.mxu0 0.0
        %9440 = vmatpush1.msra.mxu0 %v9228
        %9441 = vmatprep.subr.mxu0 0.0
        %9442 = vmatpush1.msra.mxu0 %v9229
        %9443 = vmatprep.subr.mxu0 0.0
        %9444 = vmatpush1.msra.mxu0 %v9230
        %9445 = vmatprep.subr.mxu0 0.0
        %9446 = vmatpush1.msra.mxu0 %v9231
        %9447 = vmatprep.subr.mxu0 0.0
        %9448 = vmatpush1.msra.mxu0 %v9232
        %9449 = vmatprep.subr.mxu0 0.0
        %9450 = vmatpush1.msra.mxu0 %v9233
        %9451 = vmatprep.subr.mxu0 0.0
        %9452 = vmatpush1.msra.mxu0 %v9234
        %9453 = vmatprep.subr.mxu0 0.0
        %9454 = vmatpush1.msra.mxu0 %v9235
        %9455 = vmatprep.subr.mxu0 0.0
        %9456 = vmatpush1.msra.mxu0 %v9236
        %9457 = vmatprep.subr.mxu0 0.0
        %9458 = vmatpush1.msra.mxu0 %v9237
        %9459 = vmatprep.subr.mxu0 0.0
        %9460 = vmatpush1.msra.mxu0 %v9238
        %9461 = vmatprep.subr.mxu0 0.0
        %9462 = vmatpush1.msra.mxu0 %v9239
        %9463 = vmatprep.subr.mxu0 0.0
        %9464 = vmatpush1.msra.mxu0 %v9240
        %9465 = vmatprep.subr.mxu0 0.0
        %9466 = vmatpush1.msra.mxu0 %v9241
        %9467 = vmatprep.subr.mxu0 0.0
        %9468 = vmatpush1.msra.mxu0 %v9242
        %9469 = vmatprep.subr.mxu0 0.0
        %9470 = vmatpush1.msra.mxu0 %v9243
        %9471 = vmatprep.subr.mxu0 0.0
        %9472 = vmatpush1.msra.mxu0 %v9244
        %9473 = vmatprep.subr.mxu0 0.0
        %9474 = vmatpush1.msra.mxu0 %v9245
        %9475 = vmatprep.subr.mxu0 0.0
        %9476 = vmatpush1.msra.mxu0 %v9246
        %9477 = vmatprep.subr.mxu0 0.0
        %9478 = vmatpush1.msra.mxu0 %v9247
        %9479 = vmatprep.subr.mxu0 0.0
        %9480 = vmatpush1.msra.mxu0 %v9248
        %9481 = vmatprep.subr.mxu0 0.0
        %9482 = vmatpush1.msra.mxu0 %v9249
        %9483 = vmatprep.subr.mxu0 0.0
        %9484 = vmatpush1.msra.mxu0 %v9250
        %9485 = vmatprep.subr.mxu0 0.0
        %9486 = vmatpush1.msra.mxu0 %v9251
        %9487 = vmatprep.subr.mxu0 0.0
        %9488 = vmatpush1.msra.mxu0 %v9252
        %9489 = vmatprep.subr.mxu0 0.0
        %9490 = vmatpush1.msra.mxu0 %v9253
        %9491 = vmatprep.subr.mxu0 0.0
        %9492 = vmatpush1.msra.mxu0 %v9254
        %9493 = vmatprep.subr.mxu0 0.0
        %9494 = vmatpush1.msra.mxu0 %v9255
        %9495 = vmatprep.subr.mxu0 0.0
        %9496 = vmatpush1.msra.mxu0 %v9256
        %9497 = vmatprep.subr.mxu0 0.0
        %9498 = vmatpush1.msra.mxu0 %v9257
        %9499 = vmatprep.subr.mxu0 0.0
        %9500 = vmatpush1.msra.mxu0 %v9258
        %9501 = vmatprep.subr.mxu0 0.0
        %9502 = vmatpush1.msra.mxu0 %v9259
        %9503 = vmatprep.mubr.f32.mxu0 %v9161
        %9504 = vmatmul.mubr.f32.gmra.mrb[0].mxu0 %v9160
        %v9505 = vpop.f32.mrb[0].mxu0
        %v9506 = vadd.f32 %v9436, %v9505
        %v9507 = vpop.f32.mrb[0].mxu0
        %9508 = vdwg.mxu0
        %9509 = vmatprep.subr.mxu0 0.0
        %9510 = vmatpush1.msra.mxu0 %v9260
        %9511 = vmatprep.subr.mxu0 0.0
        %9512 = vmatpush1.msra.mxu0 %v9261
        %9513 = vmatprep.subr.mxu0 0.0
        %9514 = vmatpush1.msra.mxu0 %v9262
        %9515 = vmatprep.subr.mxu0 0.0
        %9516 = vmatpush1.msra.mxu0 %v9263
        %9517 = vmatprep.subr.mxu0 0.0
        %9518 = vmatpush1.msra.mxu0 %v9264
        %9519 = vmatprep.subr.mxu0 0.0
        %9520 = vmatpush1.msra.mxu0 %v9265
        %9521 = vmatprep.subr.mxu0 0.0
        %9522 = vmatpush1.msra.mxu0 %v9266
        %9523 = vmatprep.subr.mxu0 0.0
        %9524 = vmatpush1.msra.mxu0 %v9267
        %9525 = vmatprep.subr.mxu0 0.0
        %9526 = vmatpush1.msra.mxu0 %v9268
        %9527 = vmatprep.subr.mxu0 0.0
        %9528 = vmatpush1.msra.mxu0 %v9269
        %9529 = vmatprep.subr.mxu0 0.0
        %9530 = vmatpush1.msra.mxu0 %v9270
        %9531 = vmatprep.subr.mxu0 0.0
        %9532 = vmatpush1.msra.mxu0 %v9271
        %9533 = vmatprep.subr.mxu0 0.0
        %9534 = vmatpush1.msra.mxu0 %v9272
        %9535 = vmatprep.subr.mxu0 0.0
        %9536 = vmatpush1.msra.mxu0 %v9273
        %9537 = vmatprep.subr.mxu0 0.0
        %9538 = vmatpush1.msra.mxu0 %v9274
        %9539 = vmatprep.subr.mxu0 0.0
        %9540 = vmatpush1.msra.mxu0 %v9275
        %9541 = vmatprep.subr.mxu0 0.0
        %9542 = vmatpush1.msra.mxu0 %v9276
        %9543 = vmatprep.subr.mxu0 0.0
        %9544 = vmatpush1.msra.mxu0 %v9277
        %9545 = vmatprep.subr.mxu0 0.0
        %9546 = vmatpush1.msra.mxu0 %v9278
        %9547 = vmatprep.subr.mxu0 0.0
        %9548 = vmatpush1.msra.mxu0 %v9279
        %9549 = vmatprep.subr.mxu0 0.0
        %9550 = vmatpush1.msra.mxu0 %v9280
        %9551 = vmatprep.subr.mxu0 0.0
        %9552 = vmatpush1.msra.mxu0 %v9281
        %9553 = vmatprep.subr.mxu0 0.0
        %9554 = vmatpush1.msra.mxu0 %v9282
        %9555 = vmatprep.subr.mxu0 0.0
        %9556 = vmatpush1.msra.mxu0 %v9283
        %9557 = vmatprep.subr.mxu0 0.0
        %9558 = vmatpush1.msra.mxu0 %v9284
        %9559 = vmatprep.subr.mxu0 0.0
        %9560 = vmatpush1.msra.mxu0 %v9285
        %9561 = vmatprep.subr.mxu0 0.0
        %9562 = vmatpush1.msra.mxu0 %v9286
        %9563 = vmatprep.subr.mxu0 0.0
        %9564 = vmatpush1.msra.mxu0 %v9287
        %9565 = vmatprep.subr.mxu0 0.0
        %9566 = vmatpush1.msra.mxu0 %v9288
        %9567 = vmatprep.subr.mxu0 0.0
        %9568 = vmatpush1.msra.mxu0 %v9289
        %9569 = vmatprep.subr.mxu0 0.0
        %9570 = vmatpush1.msra.mxu0 %v9290
        %9571 = vmatprep.subr.mxu0 0.0
        %9572 = vmatpush1.msra.mxu0 %v9291
        %9573 = vmatprep.mubr.f32.mxu0 %v9163
        %9574 = vmatmul.mubr.f32.gmra.mrb[0].mxu0 %v9162
        %v9575 = vpop.f32.mrb[0].mxu0
        %v9576 = vadd.f32 %v9506, %v9575
        %v9577 = vpop.f32.mrb[0].mxu0
        %9578 = vdwg.mxu0
        %9579 = vst [vmem:[%s358] sm:$0xff] %v9576
        %s9580 = sand.u32 %s181, 1
        %s9581 = scalar_lea.sflag [#allocation9], %s9580
        %s9582 = sand.u32 %s181, 1
        %s9583 = smul.addr %s9582, 8
        %s9584 = scalar_lea.vmem [#allocation8], %s9583
        // Predicated region
        $region72: #{feature_cnn_forward.1} parent=66 // pred_check
          %p9585 = pneg %p191
        $region73: #{feature_cnn_forward.1} parent=66 // pred_check_branch
          %9587 = sbr.rel (%p9585) target = $region75
        $region74: #{feature_cnn_forward.1} parent=66 // pred_region
          %s9589 = ssub.s32 128, 128
          %9590 = vsyncadd %s9581, %s9589
          %s9591 = smul.addr %s21, 128
          %s9592 = scalar_lea.hbm %s7, %s9591
          %s9594 = sshll.u32 %s9584, 4
          %s9595 = int_to_ptr.vmem [resolvable:$true] %s9594
          %9597 = dma.vmem_to_hbm [thread:$0]  %s9595, 128, %s9592, %s9581
        $region75: #{feature_cnn_forward.1} parent=66 // pred_fallthru
          _
      $region67: #{feature_cnn_forward.1} parent=5 // pred_fallthru
        _
      %p9598 = scmp.le.s32.totalorder 2, %s16
      // Predicated region
      $region76: #{feature_cnn_forward.1} parent=5 // pred_check
        %p9599 = pneg %p9598
      $region77: #{feature_cnn_forward.1} parent=5 // pred_check_branch
        %9601 = sbr.rel (%p9599) target = $region79
      $region78: #{feature_cnn_forward.1} parent=5 // pred_region
        %s9602 = ssub.s32 %s16, 2
        // Predicated region
        $region80: #{feature_cnn_forward.1} parent=78 // pred_check
          %p9603 = pneg %p197
        $region81: #{feature_cnn_forward.1} parent=78 // pred_check_branch
          %9605 = sbr.rel (%p9603) target = $region83
        $region82: #{feature_cnn_forward.1} parent=78 // pred_region
          %s9606 = sand.u32 %s182, 1
          %s9607 = scalar_lea.sflag [#allocation9], %s9606
          %s9608 = sand.u32 %s182, 1
          %s9609 = smul.addr %s9608, 8
          %s9610 = scalar_lea.vmem [#allocation8], %s9609
          %9611 = dma.done %s9607, 128
        $region83: #{feature_cnn_forward.1} parent=78 // pred_fallthru
          _
      $region79: #{feature_cnn_forward.1} parent=5 // pred_fallthru
        _
    $region6: #{feature_cnn_forward.1} parent=1 // loop_footer
      %s20 = sadd.s32 1, %s16
    $region7: #{feature_cnn_forward.1} parent=1 // loop_footer_branch
      %15 = sbr.rel target = $region3
    $region8: #{feature_cnn_forward.1} parent=1 // loop_exit
      _
    %9612 = vsyncpa [#allocation9], 1
    %s9613 = scalar_lea.sflag [#allocation9], 1
    %9614 = vsyncpa %s9613, 1

</llo_original>
